<compile_context>
chip_gen: v6e
topology: v6e:2x2x1
jax: 0.10.0
libtpu: 0.0.40
codegen_flags: <defaults>
</compile_context>

<pallas_src>
import functools

import numpy as np

import jax
import jax.numpy as jnp
from jax.experimental import pallas as pl
from jax.experimental.pallas import tpu as pltpu


_SUB = 16  # channel/row granularity: bf16 sublane-tile height; also bias-prefix rows


# ----------------------------------------------------------------------------
# Fused generator kernel (one grid step == Bblk samples)
# ----------------------------------------------------------------------------
def _generator_kernel(
    content_ref, class_ref, mask_ref,
    ce1_w, ce2_w, se1_w, se2_w,
    mlp_w, mlp_b,
    de1_w, de2_w,
    out_ref,
    patch_ref,                      # reused bf16 im2col scratch (VMEM)
    *, H, W, Bblk, eps,
):
    HW = H * W
    N = Bblk * HW
    inv_hw = 1.0 / HW

    # ---- hoisted per-tap boundary masks (exact, host-built 0/1 multipliers) ----
    masks = mask_ref[...]                                   # (8, N) f32
    tap_info = []
    mi = 0
    for dy in (-1, 0, 1):
        for dx in (-1, 0, 1):
            if dy == 0 and dx == 0:
                tap_info.append((0, None))
            else:
                tap_info.append((dy * W + dx, masks[mi:mi + 1, :]))
                mi += 1

    # Bias prefix rows of the im2col matrix: row 0 = ones, rows 1.._SUB-1 = 0.
    # Written ONCE; every prepared conv weight has [bias, 0*(SUB-1)] as its
    # first _SUB columns, so bias is folded into the MXU matmul.
    sub_iota = jax.lax.broadcasted_iota(jnp.int32, (_SUB, N), 0)
    patch_ref[0:_SUB, :] = jnp.where(sub_iota == 0, 1.0, 0.0).astype(jnp.bfloat16)

    def conv3x3(x, w_ref, act):
        # x: (Cin, N) f32, w: (Cout, _SUB + 9*Cin) bf16 (bias folded in).
        cin = x.shape[0]
        for t, (delta, mvec) in enumerate(tap_info):
            if mvec is None:
                tap = x
            else:
                # out[:, p] = x[:, p + delta]; zero outside the image.  Any
                # wrap across sample boundaries is always masked as well.
                tap = pltpu.roll(x, shift=(-delta) % N, axis=1) * mvec
            r0 = _SUB + t * cin                             # static, 16-aligned
            patch_ref[r0:r0 + cin, :] = tap.astype(jnp.bfloat16)
        k = _SUB + 9 * cin
        y = jnp.dot(w_ref[...], patch_ref[0:k, :],
                    preferred_element_type=jnp.float32)     # (Cout, N) f32
        if act == "relu":
            y = jnp.maximum(y, 0.0)
        elif act == "tanh":
            y = jnp.tanh(y)
        return y

    # ---- load Bblk samples as one lane-dense (C, Bblk*HW) tile ----
    def load_flat(ref):
        parts = [ref[b].astype(jnp.float32) for b in range(Bblk)]
        return parts[0] if Bblk == 1 else jnp.concatenate(parts, axis=1)

    content = load_flat(content_ref)
    klass = load_flat(class_ref)

    # Content encoder.
    c = conv3x3(content, ce1_w, "relu")
    c = conv3x3(c, ce2_w, "relu")

    # Class encoder.
    s = conv3x3(klass, se1_w, "relu")
    s = conv3x3(s, se2_w, "relu")

    # GAP + MLP fused: mean_HW(W_mlp @ s) == W_mlp @ mean_HW(s).  Full-width
    # MXU matmul (N = Bblk*HW) instead of a wasted N=1 matvec.
    ada_full = jnp.dot(mlp_w[...], s.astype(jnp.bfloat16),
                       preferred_element_type=jnp.float32)  # (4h, N)

    # Per-sample AdaIN (one-pass stats), then the modulated decoder.
    Cc = c.shape[0]
    d_parts = []
    for b in range(Bblk):
        sl = slice(b * HW, (b + 1) * HW)                    # static lane slice
        ada = jnp.sum(ada_full[:, sl], axis=1, keepdims=True) * inv_hw + mlp_b[...]
        gamma = ada[:Cc, :]
        beta = ada[Cc:, :]
        cb = c[:, sl]
        mean = jnp.sum(cb, axis=1, keepdims=True) * inv_hw
        mean_sq = jnp.sum(cb * cb, axis=1, keepdims=True) * inv_hw
        var = jnp.maximum(mean_sq - mean * mean, 0.0)
        xn = (cb - mean) * jax.lax.rsqrt(var + eps)
        d_parts.append(xn * (1.0 + gamma) + beta)
    d = d_parts[0] if Bblk == 1 else jnp.concatenate(d_parts, axis=1)

    # Decoder + final tanh conv.
    d = conv3x3(d, de1_w, "relu")
    fake = conv3x3(d, de2_w, "tanh")                        # (out_ch, N)

    for b in range(Bblk):
        out_ref[b] = fake[:, b * HW:(b + 1) * HW].astype(out_ref.dtype)


# ----------------------------------------------------------------------------
# Parameter init (same layout/keys as the original port) + matmul-ready prep
# ----------------------------------------------------------------------------
def init_generator_params(key, in_ch=3, hid=16):
    def conv_w(k, cin, cout):
        return (jax.random.normal(k, (3, 3, cin, cout), jnp.float32)
                * (0.1 / jnp.sqrt(cin * 9.0)))

    ks = jax.random.split(key, 8)
    return {
        # content encoder
        "ce1_w": conv_w(ks[0], in_ch, hid), "ce1_b": jnp.zeros((1, hid), jnp.float32),
        "ce2_w": conv_w(ks[1], hid, 2 * hid), "ce2_b": jnp.zeros((1, 2 * hid), jnp.float32),
        # class encoder
        "se1_w": conv_w(ks[2], in_ch, hid), "se1_b": jnp.zeros((1, hid), jnp.float32),
        "se2_w": conv_w(ks[3], hid, 2 * hid), "se2_b": jnp.zeros((1, 2 * hid), jnp.float32),
        # MLP: class code -> (gamma, beta)
        "mlp_w": jax.random.normal(ks[4], (2 * hid, 4 * hid), jnp.float32) * 0.05,
        "mlp_b": jnp.zeros((1, 4 * hid), jnp.float32),
        # decoder
        "de1_w": conv_w(ks[5], 2 * hid, hid), "de1_b": jnp.zeros((1, hid), jnp.float32),
        "de2_w": conv_w(ks[6], hid, in_ch), "de2_b": jnp.zeros((1, in_ch), jnp.float32),
    }


def _prep_conv(w, b, cin_pad=None):
    """(3,3,Cin,Cout),(1,Cout) -> (Cout, _SUB + 9*Cin) bf16, bias folded into col 0."""
    kh, kw, cin, cout = w.shape
    if cin_pad is not None and cin_pad > cin:
        w = jnp.concatenate(
            [w, jnp.zeros((kh, kw, cin_pad - cin, cout), w.dtype)], axis=2)
    wm = jnp.transpose(w, (3, 0, 1, 2)).reshape(cout, -1)           # (Cout, 9*Cin)
    prefix = jnp.concatenate(
        [b.reshape(cout, 1), jnp.zeros((cout, _SUB - 1), w.dtype)], axis=1)
    return jnp.concatenate([prefix, wm], axis=1).astype(jnp.bfloat16)


def prepare_generator_params(params, in_ch=3):
    hid = params["ce1_w"].shape[3]
    assert hid % _SUB == 0, "hid must be a multiple of 16 for aligned bf16 im2col"
    # Pad image channels up to a bf16 sublane-tile (16) so every scratch store
    # is tile-aligned; the pad channels are zero in both inputs and weights.
    cin_pad = max(_SUB, -(-in_ch // _SUB) * _SUB)
    p = {}
    p["ce1_w"] = _prep_conv(params["ce1_w"], params["ce1_b"], cin_pad)
    p["ce2_w"] = _prep_conv(params["ce2_w"], params["ce2_b"])
    p["se1_w"] = _prep_conv(params["se1_w"], params["se1_b"], cin_pad)
    p["se2_w"] = _prep_conv(params["se2_w"], params["se2_b"])
    p["de1_w"] = _prep_conv(params["de1_w"], params["de1_b"])
    p["de2_w"] = _prep_conv(params["de2_w"], params["de2_b"])
    p["mlp_w"] = jnp.transpose(params["mlp_w"], (1, 0)).astype(jnp.bfloat16)  # (4h, 2h)
    p["mlp_b"] = params["mlp_b"].reshape(-1, 1).astype(jnp.float32)           # (4h, 1)
    return p


_PARAM_ORDER = ("ce1_w", "ce2_w", "se1_w", "se2_w",
                "mlp_w", "mlp_b", "de1_w", "de2_w")
_CONV_KEYS = ("ce1_w", "ce2_w", "se1_w", "se2_w", "de1_w", "de2_w")


def _build_tap_masks(H, W, Bblk):
    """Host-built 0/1 multipliers for the 8 non-center 3x3 taps, tiled by Bblk."""
    HW = H * W
    rows = np.arange(HW) // W
    cols = np.arange(HW) % W
    ms = []
    for dy in (-1, 0, 1):
        for dx in (-1, 0, 1):
            if dy == 0 and dx == 0:
                continue
            m = ((rows + dy >= 0) & (rows + dy < H)
                 & (cols + dx >= 0) & (cols + dx < W)).astype(np.float32)
            ms.append(np.tile(m, Bblk))
    return np.stack(ms, axis=0)                                     # (8, Bblk*HW)


def _default_num_blocks(batch):
    """2-way grid on chips with 2 TensorCores (v7x / megacore); else 1 big block."""
    if batch <= 1:
        return 1
    try:
        kind = jax.devices()[0].device_kind.lower()
    except Exception:
        return 1
    return 2 if any(t in kind for t in ("v7", "7x", "v4", "v5p")) else 1


# ----------------------------------------------------------------------------
# Forward wrapper: one pallas_call for the whole generator
# ----------------------------------------------------------------------------
def generator_forward(prepped, content_nchw, class_nchw, *, num_blocks=1):
    B, cin, H, W = content_nchw.shape
    HW = H * W
    cin_pad = (prepped["ce1_w"].shape[1] - _SUB) // 9
    cin_max = max((prepped[k].shape[1] - _SUB) // 9 for k in _CONV_KEYS)
    out_ch = prepped["de2_w"].shape[0]

    num_blocks = max(1, min(int(num_blocks), B))
    Bblk = -(-B // num_blocks)
    B_pad = Bblk * num_blocks
    N = Bblk * HW

    def to_flat(x):
        x = x.reshape(B, cin, HW).astype(jnp.float32)      # free contiguous reshape
        if cin_pad > cin:
            x = jnp.concatenate(
                [x, jnp.zeros((B, cin_pad - cin, HW), jnp.float32)], axis=1)
        if B_pad > B:
            x = jnp.concatenate(
                [x, jnp.zeros((B_pad - B, cin_pad, HW), jnp.float32)], axis=0)
        return x

    content = to_flat(content_nchw)
    klass = to_flat(class_nchw)
    masks = jnp.asarray(_build_tap_masks(H, W, Bblk))      # (8, N) f32

    param_arrays = [prepped[n] for n in _PARAM_ORDER]

    img_spec = pl.BlockSpec((Bblk, cin_pad, HW), lambda i: (i, 0, 0))
    mask_spec = pl.BlockSpec((8, N), lambda i: (0, 0))
    param_specs = [pl.BlockSpec(p.shape, lambda i: (0, 0)) for p in param_arrays]

    kernel = functools.partial(_generator_kernel, H=H, W=W, Bblk=Bblk, eps=1e-5)

    out_flat = pl.pallas_call(
        kernel,
        out_shape=jax.ShapeDtypeStruct((B_pad, out_ch, HW), jnp.float32),
        grid_spec=pltpu.PrefetchScalarGridSpec(
            num_scalar_prefetch=0,
            grid=(num_blocks,),
            in_specs=[img_spec, img_spec, mask_spec] + param_specs,
            out_specs=pl.BlockSpec((Bblk, out_ch, HW), lambda i: (i, 0, 0)),
            scratch_shapes=[pltpu.VMEM((_SUB + 9 * cin_max, N), jnp.bfloat16)],
        ),
        compiler_params=pltpu.CompilerParams(
            dimension_semantics=("parallel",)),             # 2 TCs on v7x/megacore
    )(content, klass, masks, *param_arrays)

    # Free reshape back to NCHW (kernel emitted NCHW-ordered data); drop batch pad.
    return out_flat[:B].reshape(B, out_ch, H, W)


class FUNITTrainerPallas:
    """JAX/Pallas port of FUNIT_Trainer's forward pass (generator only)."""
    # TODO(synk): discriminator, BCE/L1 losses and Adam optimizers are training
    # state used only in dis_update, not in forward(); they are not ported.

    def __init__(self, key, in_ch=3, hid=16):
        self.params = init_generator_params(key, in_ch=in_ch, hid=hid)
        self.prepared = prepare_generator_params(self.params, in_ch=in_ch)
        self._fwd_cache = {}

    def __call__(self, content_image, class_image):
        # eval()/train() toggles have no numerical effect on this generator.
        nb = _default_num_blocks(content_image.shape[0])
        fwd = self._fwd_cache.get(nb)
        if fwd is None:
            fwd = jax.jit(functools.partial(generator_forward, num_blocks=nb))
            self._fwd_cache[nb] = fwd
        return fwd(self.prepared, content_image, class_image)


if __name__ == "__main__":
    key = jax.random.PRNGKey(0)
    k_param, k_content, k_class = jax.random.split(key, 3)

    B, C, H, W = 2, 3, 16, 16
    content_image = jax.random.normal(k_content, (B, C, H, W), jnp.float32)
    class_image = jax.random.normal(k_class, (B, C, H, W), jnp.float32)

    trainer = FUNITTrainerPallas(k_param, in_ch=C, hid=16)
    fake_data = trainer(content_image, class_image)
    fake_data = jax.block_until_ready(fake_data)

    assert fake_data.shape == (B, C, H, W)
    assert bool(jnp.all(jnp.isfinite(fake_data)))
    print("KERNEL_OK")
</pallas_src>

<mosaic_0001>
module attributes {stable_mosaic.version = 11 : i64} {
  func.func @_generator_kernel(%arg0: i32, %arg1: memref<2x16x256xf32, #tpu.memory_space<vmem>>, %arg2: memref<2x16x256xf32, #tpu.memory_space<vmem>>, %arg3: memref<8x512xf32, #tpu.memory_space<vmem>>, %arg4: memref<16x160xbf16, #tpu.memory_space<vmem>>, %arg5: memref<32x160xbf16, #tpu.memory_space<vmem>>, %arg6: memref<16x160xbf16, #tpu.memory_space<vmem>>, %arg7: memref<32x160xbf16, #tpu.memory_space<vmem>>, %arg8: memref<64x32xbf16, #tpu.memory_space<vmem>>, %arg9: memref<64x1xf32, #tpu.memory_space<vmem>>, %arg10: memref<16x304xbf16, #tpu.memory_space<vmem>>, %arg11: memref<3x160xbf16, #tpu.memory_space<vmem>>, %arg12: memref<2x3x256xf32, #tpu.memory_space<vmem>>, %arg13: memref<304x512xbf16, #tpu.memory_space<vmem>>) attributes {dimension_semantics = [#tpu.dimension_semantics<parallel>], iteration_bounds = array<i64: 1>, scalar_prefetch = 0 : i64, scratch_operands = 1 : i64, tpu.core_type = #tpu.core_type<tc>, window_params = [{transform_indices = @transform_0, window_bounds = array<i64: 2, 16, 256>}, {transform_indices = @transform_1, window_bounds = array<i64: 2, 16, 256>}, {pipeline_mode = #tpu.pipeline_mode<synchronous>, transform_indices = @transform_2, window_bounds = array<i64: 8, 512>}, {pipeline_mode = #tpu.pipeline_mode<synchronous>, transform_indices = @transform_3, window_bounds = array<i64: 16, 160>}, {pipeline_mode = #tpu.pipeline_mode<synchronous>, transform_indices = @transform_4, window_bounds = array<i64: 32, 160>}, {pipeline_mode = #tpu.pipeline_mode<synchronous>, transform_indices = @transform_5, window_bounds = array<i64: 16, 160>}, {pipeline_mode = #tpu.pipeline_mode<synchronous>, transform_indices = @transform_6, window_bounds = array<i64: 32, 160>}, {pipeline_mode = #tpu.pipeline_mode<synchronous>, transform_indices = @transform_7, window_bounds = array<i64: 64, 32>}, {pipeline_mode = #tpu.pipeline_mode<synchronous>, transform_indices = @transform_8, window_bounds = array<i64: 64, 1>}, {pipeline_mode = #tpu.pipeline_mode<synchronous>, transform_indices = @transform_9, window_bounds = array<i64: 16, 304>}, {pipeline_mode = #tpu.pipeline_mode<synchronous>, transform_indices = @transform_10, window_bounds = array<i64: 3, 160>}, {transform_indices = @transform_11, window_bounds = array<i64: 2, 3, 256>}]} {
    %c0 = arith.constant 0 : index
    %c0_0 = arith.constant 0 : index
    %0 = vector.load %arg3[%c0, %c0_0] : memref<8x512xf32, #tpu.memory_space<vmem>>, vector<8x512xf32>
    %1 = vector.extract_strided_slice %0 {offsets = [0, 0], sizes = [1, 512], strides = [1, 1]} : vector<8x512xf32> to vector<1x512xf32>
    %2 = vector.extract_strided_slice %0 {offsets = [1, 0], sizes = [1, 512], strides = [1, 1]} : vector<8x512xf32> to vector<1x512xf32>
    %3 = vector.extract_strided_slice %0 {offsets = [2, 0], sizes = [1, 512], strides = [1, 1]} : vector<8x512xf32> to vector<1x512xf32>
    %4 = vector.extract_strided_slice %0 {offsets = [3, 0], sizes = [1, 512], strides = [1, 1]} : vector<8x512xf32> to vector<1x512xf32>
    %5 = vector.extract_strided_slice %0 {offsets = [4, 0], sizes = [1, 512], strides = [1, 1]} : vector<8x512xf32> to vector<1x512xf32>
    %6 = vector.extract_strided_slice %0 {offsets = [5, 0], sizes = [1, 512], strides = [1, 1]} : vector<8x512xf32> to vector<1x512xf32>
    %7 = vector.extract_strided_slice %0 {offsets = [6, 0], sizes = [1, 512], strides = [1, 1]} : vector<8x512xf32> to vector<1x512xf32>
    %8 = vector.extract_strided_slice %0 {offsets = [7, 0], sizes = [1, 512], strides = [1, 1]} : vector<8x512xf32> to vector<1x512xf32>
    %9 = tpu.iota {dimensions = array<i32: 0>} : vector<16x512xi32>
    %c0_i32 = arith.constant 0 : i32
    %10 = vector.broadcast %c0_i32 : i32 to vector<16x512xi32>
    %11 = arith.cmpi eq, %9, %10 : vector<16x512xi32>
    %cst = arith.constant 1.000000e+00 : f32
    %cst_1 = arith.constant 0.000000e+00 : f32
    %12 = vector.broadcast %cst : f32 to vector<16x512xf32>
    %13 = vector.broadcast %cst_1 : f32 to vector<16x512xf32>
    %14 = arith.select %11, %12, %13 : vector<16x512xi1>, vector<16x512xf32>
    %15 = arith.truncf %14 : vector<16x512xf32> to vector<16x512xbf16>
    %c0_2 = arith.constant 0 : index
    %c0_3 = arith.constant 0 : index
    %16 = vector.load %arg13[%c0_2, %c0_3] : memref<304x512xbf16, #tpu.memory_space<vmem>>, vector<16x512xbf16>
    tpu.vector_store %arg13[%c0_2, %c0_3], %15 {strides = array<i32>} : memref<304x512xbf16, #tpu.memory_space<vmem>>, vector<16x512xbf16>,
    %c0_4 = arith.constant 0 : index
    %c0_5 = arith.constant 0 : index
    %c0_6 = arith.constant 0 : index
    %17 = vector.load %arg1[%c0_4, %c0_5, %c0_6] : memref<2x16x256xf32, #tpu.memory_space<vmem>>, vector<1x16x256xf32>
    %18 = vector.shape_cast %17 : vector<1x16x256xf32> to vector<16x256xf32>
    %c1 = arith.constant 1 : index
    %c0_7 = arith.constant 0 : index
    %c0_8 = arith.constant 0 : index
    %19 = vector.load %arg1[%c1, %c0_7, %c0_8] : memref<2x16x256xf32, #tpu.memory_space<vmem>>, vector<1x16x256xf32>
    %20 = vector.shape_cast %19 : vector<1x16x256xf32> to vector<16x256xf32>
    %21 = tpu.concatenate %18, %20 in 1 : vector<16x256xf32>, vector<16x256xf32> -> vector<16x512xf32>
    %c0_9 = arith.constant 0 : index
    %c0_10 = arith.constant 0 : index
    %c0_11 = arith.constant 0 : index
    %22 = vector.load %arg2[%c0_9, %c0_10, %c0_11] : memref<2x16x256xf32, #tpu.memory_space<vmem>>, vector<1x16x256xf32>
    %23 = vector.shape_cast %22 : vector<1x16x256xf32> to vector<16x256xf32>
    %c1_12 = arith.constant 1 : index
    %c0_13 = arith.constant 0 : index
    %c0_14 = arith.constant 0 : index
    %24 = vector.load %arg2[%c1_12, %c0_13, %c0_14] : memref<2x16x256xf32, #tpu.memory_space<vmem>>, vector<1x16x256xf32>
    %25 = vector.shape_cast %24 : vector<1x16x256xf32> to vector<16x256xf32>
    %26 = tpu.concatenate %23, %25 in 1 : vector<16x256xf32>, vector<16x256xf32> -> vector<16x512xf32>
    %c17_i32 = arith.constant 17 : i32
    %27 = tpu.dynamic_rotate %21 by %c17_i32 dim 1 : vector<16x512xf32>, i32 -> vector<16x512xf32>
    %28 = vector.broadcast %1 : vector<1x512xf32> to vector<16x512xf32>
    %29 = arith.mulf %27, %28 : vector<16x512xf32>
    %30 = arith.truncf %29 : vector<16x512xf32> to vector<16x512xbf16>
    %c16 = arith.constant 16 : index
    %c0_15 = arith.constant 0 : index
    %31 = vector.load %arg13[%c16, %c0_15] : memref<304x512xbf16, #tpu.memory_space<vmem>>, vector<16x512xbf16>
    tpu.vector_store %arg13[%c16, %c0_15], %30 {strides = array<i32>} : memref<304x512xbf16, #tpu.memory_space<vmem>>, vector<16x512xbf16>,
    %c16_i32 = arith.constant 16 : i32
    %32 = tpu.dynamic_rotate %21 by %c16_i32 dim 1 : vector<16x512xf32>, i32 -> vector<16x512xf32>
    %33 = vector.broadcast %2 : vector<1x512xf32> to vector<16x512xf32>
    %34 = arith.mulf %32, %33 : vector<16x512xf32>
    %35 = arith.truncf %34 : vector<16x512xf32> to vector<16x512xbf16>
    %c32 = arith.constant 32 : index
    %c0_16 = arith.constant 0 : index
    %36 = vector.load %arg13[%c32, %c0_16] : memref<304x512xbf16, #tpu.memory_space<vmem>>, vector<16x512xbf16>
    tpu.vector_store %arg13[%c32, %c0_16], %35 {strides = array<i32>} : memref<304x512xbf16, #tpu.memory_space<vmem>>, vector<16x512xbf16>,
    %c15_i32 = arith.constant 15 : i32
    %37 = tpu.dynamic_rotate %21 by %c15_i32 dim 1 : vector<16x512xf32>, i32 -> vector<16x512xf32>
    %38 = vector.broadcast %3 : vector<1x512xf32> to vector<16x512xf32>
    %39 = arith.mulf %37, %38 : vector<16x512xf32>
    %40 = arith.truncf %39 : vector<16x512xf32> to vector<16x512xbf16>
    %c48 = arith.constant 48 : index
    %c0_17 = arith.constant 0 : index
    %41 = vector.load %arg13[%c48, %c0_17] : memref<304x512xbf16, #tpu.memory_space<vmem>>, vector<16x512xbf16>
    tpu.vector_store %arg13[%c48, %c0_17], %40 {strides = array<i32>} : memref<304x512xbf16, #tpu.memory_space<vmem>>, vector<16x512xbf16>,
    %c1_i32 = arith.constant 1 : i32
    %42 = tpu.dynamic_rotate %21 by %c1_i32 dim 1 : vector<16x512xf32>, i32 -> vector<16x512xf32>
    %43 = vector.broadcast %4 : vector<1x512xf32> to vector<16x512xf32>
    %44 = arith.mulf %42, %43 : vector<16x512xf32>
    %45 = arith.truncf %44 : vector<16x512xf32> to vector<16x512xbf16>
    %c64 = arith.constant 64 : index
    %c0_18 = arith.constant 0 : index
    %46 = vector.load %arg13[%c64, %c0_18] : memref<304x512xbf16, #tpu.memory_space<vmem>>, vector<16x512xbf16>
    tpu.vector_store %arg13[%c64, %c0_18], %45 {strides = array<i32>} : memref<304x512xbf16, #tpu.memory_space<vmem>>, vector<16x512xbf16>,
    %47 = arith.truncf %21 : vector<16x512xf32> to vector<16x512xbf16>
    %c80 = arith.constant 80 : index
    %c0_19 = arith.constant 0 : index
    %48 = vector.load %arg13[%c80, %c0_19] : memref<304x512xbf16, #tpu.memory_space<vmem>>, vector<16x512xbf16>
    tpu.vector_store %arg13[%c80, %c0_19], %47 {strides = array<i32>} : memref<304x512xbf16, #tpu.memory_space<vmem>>, vector<16x512xbf16>,
    %c511_i32 = arith.constant 511 : i32
    %49 = tpu.dynamic_rotate %21 by %c511_i32 dim 1 : vector<16x512xf32>, i32 -> vector<16x512xf32>
    %50 = vector.broadcast %5 : vector<1x512xf32> to vector<16x512xf32>
    %51 = arith.mulf %49, %50 : vector<16x512xf32>
    %52 = arith.truncf %51 : vector<16x512xf32> to vector<16x512xbf16>
    %c96 = arith.constant 96 : index
    %c0_20 = arith.constant 0 : index
    %53 = vector.load %arg13[%c96, %c0_20] : memref<304x512xbf16, #tpu.memory_space<vmem>>, vector<16x512xbf16>
    tpu.vector_store %arg13[%c96, %c0_20], %52 {strides = array<i32>} : memref<304x512xbf16, #tpu.memory_space<vmem>>, vector<16x512xbf16>,
    %c497_i32 = arith.constant 497 : i32
    %54 = tpu.dynamic_rotate %21 by %c497_i32 dim 1 : vector<16x512xf32>, i32 -> vector<16x512xf32>
    %55 = vector.broadcast %6 : vector<1x512xf32> to vector<16x512xf32>
    %56 = arith.mulf %54, %55 : vector<16x512xf32>
    %57 = arith.truncf %56 : vector<16x512xf32> to vector<16x512xbf16>
    %c112 = arith.constant 112 : index
    %c0_21 = arith.constant 0 : index
    %58 = vector.load %arg13[%c112, %c0_21] : memref<304x512xbf16, #tpu.memory_space<vmem>>, vector<16x512xbf16>
    tpu.vector_store %arg13[%c112, %c0_21], %57 {strides = array<i32>} : memref<304x512xbf16, #tpu.memory_space<vmem>>, vector<16x512xbf16>,
    %c496_i32 = arith.constant 496 : i32
    %59 = tpu.dynamic_rotate %21 by %c496_i32 dim 1 : vector<16x512xf32>, i32 -> vector<16x512xf32>
    %60 = vector.broadcast %7 : vector<1x512xf32> to vector<16x512xf32>
    %61 = arith.mulf %59, %60 : vector<16x512xf32>
    %62 = arith.truncf %61 : vector<16x512xf32> to vector<16x512xbf16>
    %c128 = arith.constant 128 : index
    %c0_22 = arith.constant 0 : index
    %63 = vector.load %arg13[%c128, %c0_22] : memref<304x512xbf16, #tpu.memory_space<vmem>>, vector<16x512xbf16>
    tpu.vector_store %arg13[%c128, %c0_22], %62 {strides = array<i32>} : memref<304x512xbf16, #tpu.memory_space<vmem>>, vector<16x512xbf16>,
    %c495_i32 = arith.constant 495 : i32
    %64 = tpu.dynamic_rotate %21 by %c495_i32 dim 1 : vector<16x512xf32>, i32 -> vector<16x512xf32>
    %65 = vector.broadcast %8 : vector<1x512xf32> to vector<16x512xf32>
    %66 = arith.mulf %64, %65 : vector<16x512xf32>
    %67 = arith.truncf %66 : vector<16x512xf32> to vector<16x512xbf16>
    %c144 = arith.constant 144 : index
    %c0_23 = arith.constant 0 : index
    %68 = vector.load %arg13[%c144, %c0_23] : memref<304x512xbf16, #tpu.memory_space<vmem>>, vector<16x512xbf16>
    tpu.vector_store %arg13[%c144, %c0_23], %67 {strides = array<i32>} : memref<304x512xbf16, #tpu.memory_space<vmem>>, vector<16x512xbf16>,
    %c0_24 = arith.constant 0 : index
    %c0_25 = arith.constant 0 : index
    %69 = vector.load %arg4[%c0_24, %c0_25] : memref<16x160xbf16, #tpu.memory_space<vmem>>, vector<16x160xbf16>
    %c0_26 = arith.constant 0 : index
    %c0_27 = arith.constant 0 : index
    %70 = vector.load %arg13[%c0_26, %c0_27] : memref<304x512xbf16, #tpu.memory_space<vmem>>, vector<160x512xbf16>
    %cst_28 = arith.constant dense<0.000000e+00> : vector<16x512xf32>
    %71 = tpu.matmul %69, %70, %cst_28 {dimension_numbers = #tpu.dot_dimension_numbers<[1], [0], [0], [1], [0, 0, 1, 1], [], []>} : vector<16x160xbf16>, vector<160x512xbf16>, vector<16x512xf32> -> vector<16x512xf32>
    %cst_29 = arith.constant 0.000000e+00 : f32
    %72 = vector.broadcast %cst_29 : f32 to vector<16x512xf32>
    %73 = arith.maximumf %71, %72 : vector<16x512xf32>
    %c17_i32_30 = arith.constant 17 : i32
    %74 = tpu.dynamic_rotate %73 by %c17_i32_30 dim 1 : vector<16x512xf32>, i32 -> vector<16x512xf32>
    %75 = vector.broadcast %1 : vector<1x512xf32> to vector<16x512xf32>
    %76 = arith.mulf %74, %75 : vector<16x512xf32>
    %77 = arith.truncf %76 : vector<16x512xf32> to vector<16x512xbf16>
    %c16_31 = arith.constant 16 : index
    %c0_32 = arith.constant 0 : index
    %78 = vector.load %arg13[%c16_31, %c0_32] : memref<304x512xbf16, #tpu.memory_space<vmem>>, vector<16x512xbf16>
    tpu.vector_store %arg13[%c16_31, %c0_32], %77 {strides = array<i32>} : memref<304x512xbf16, #tpu.memory_space<vmem>>, vector<16x512xbf16>,
    %c16_i32_33 = arith.constant 16 : i32
    %79 = tpu.dynamic_rotate %73 by %c16_i32_33 dim 1 : vector<16x512xf32>, i32 -> vector<16x512xf32>
    %80 = vector.broadcast %2 : vector<1x512xf32> to vector<16x512xf32>
    %81 = arith.mulf %79, %80 : vector<16x512xf32>
    %82 = arith.truncf %81 : vector<16x512xf32> to vector<16x512xbf16>
    %c32_34 = arith.constant 32 : index
    %c0_35 = arith.constant 0 : index
    %83 = vector.load %arg13[%c32_34, %c0_35] : memref<304x512xbf16, #tpu.memory_space<vmem>>, vector<16x512xbf16>
    tpu.vector_store %arg13[%c32_34, %c0_35], %82 {strides = array<i32>} : memref<304x512xbf16, #tpu.memory_space<vmem>>, vector<16x512xbf16>,
    %c15_i32_36 = arith.constant 15 : i32
    %84 = tpu.dynamic_rotate %73 by %c15_i32_36 dim 1 : vector<16x512xf32>, i32 -> vector<16x512xf32>
    %85 = vector.broadcast %3 : vector<1x512xf32> to vector<16x512xf32>
    %86 = arith.mulf %84, %85 : vector<16x512xf32>
    %87 = arith.truncf %86 : vector<16x512xf32> to vector<16x512xbf16>
    %c48_37 = arith.constant 48 : index
    %c0_38 = arith.constant 0 : index
    %88 = vector.load %arg13[%c48_37, %c0_38] : memref<304x512xbf16, #tpu.memory_space<vmem>>, vector<16x512xbf16>
    tpu.vector_store %arg13[%c48_37, %c0_38], %87 {strides = array<i32>} : memref<304x512xbf16, #tpu.memory_space<vmem>>, vector<16x512xbf16>,
    %c1_i32_39 = arith.constant 1 : i32
    %89 = tpu.dynamic_rotate %73 by %c1_i32_39 dim 1 : vector<16x512xf32>, i32 -> vector<16x512xf32>
    %90 = vector.broadcast %4 : vector<1x512xf32> to vector<16x512xf32>
    %91 = arith.mulf %89, %90 : vector<16x512xf32>
    %92 = arith.truncf %91 : vector<16x512xf32> to vector<16x512xbf16>
    %c64_40 = arith.constant 64 : index
    %c0_41 = arith.constant 0 : index
    %93 = vector.load %arg13[%c64_40, %c0_41] : memref<304x512xbf16, #tpu.memory_space<vmem>>, vector<16x512xbf16>
    tpu.vector_store %arg13[%c64_40, %c0_41], %92 {strides = array<i32>} : memref<304x512xbf16, #tpu.memory_space<vmem>>, vector<16x512xbf16>,
    %94 = arith.truncf %73 : vector<16x512xf32> to vector<16x512xbf16>
    %c80_42 = arith.constant 80 : index
    %c0_43 = arith.constant 0 : index
    %95 = vector.load %arg13[%c80_42, %c0_43] : memref<304x512xbf16, #tpu.memory_space<vmem>>, vector<16x512xbf16>
    tpu.vector_store %arg13[%c80_42, %c0_43], %94 {strides = array<i32>} : memref<304x512xbf16, #tpu.memory_space<vmem>>, vector<16x512xbf16>,
    %c511_i32_44 = arith.constant 511 : i32
    %96 = tpu.dynamic_rotate %73 by %c511_i32_44 dim 1 : vector<16x512xf32>, i32 -> vector<16x512xf32>
    %97 = vector.broadcast %5 : vector<1x512xf32> to vector<16x512xf32>
    %98 = arith.mulf %96, %97 : vector<16x512xf32>
    %99 = arith.truncf %98 : vector<16x512xf32> to vector<16x512xbf16>
    %c96_45 = arith.constant 96 : index
    %c0_46 = arith.constant 0 : index
    %100 = vector.load %arg13[%c96_45, %c0_46] : memref<304x512xbf16, #tpu.memory_space<vmem>>, vector<16x512xbf16>
    tpu.vector_store %arg13[%c96_45, %c0_46], %99 {strides = array<i32>} : memref<304x512xbf16, #tpu.memory_space<vmem>>, vector<16x512xbf16>,
    %c497_i32_47 = arith.constant 497 : i32
    %101 = tpu.dynamic_rotate %73 by %c497_i32_47 dim 1 : vector<16x512xf32>, i32 -> vector<16x512xf32>
    %102 = vector.broadcast %6 : vector<1x512xf32> to vector<16x512xf32>
    %103 = arith.mulf %101, %102 : vector<16x512xf32>
    %104 = arith.truncf %103 : vector<16x512xf32> to vector<16x512xbf16>
    %c112_48 = arith.constant 112 : index
    %c0_49 = arith.constant 0 : index
    %105 = vector.load %arg13[%c112_48, %c0_49] : memref<304x512xbf16, #tpu.memory_space<vmem>>, vector<16x512xbf16>
    tpu.vector_store %arg13[%c112_48, %c0_49], %104 {strides = array<i32>} : memref<304x512xbf16, #tpu.memory_space<vmem>>, vector<16x512xbf16>,
    %c496_i32_50 = arith.constant 496 : i32
    %106 = tpu.dynamic_rotate %73 by %c496_i32_50 dim 1 : vector<16x512xf32>, i32 -> vector<16x512xf32>
    %107 = vector.broadcast %7 : vector<1x512xf32> to vector<16x512xf32>
    %108 = arith.mulf %106, %107 : vector<16x512xf32>
    %109 = arith.truncf %108 : vector<16x512xf32> to vector<16x512xbf16>
    %c128_51 = arith.constant 128 : index
    %c0_52 = arith.constant 0 : index
    %110 = vector.load %arg13[%c128_51, %c0_52] : memref<304x512xbf16, #tpu.memory_space<vmem>>, vector<16x512xbf16>
    tpu.vector_store %arg13[%c128_51, %c0_52], %109 {strides = array<i32>} : memref<304x512xbf16, #tpu.memory_space<vmem>>, vector<16x512xbf16>,
    %c495_i32_53 = arith.constant 495 : i32
    %111 = tpu.dynamic_rotate %73 by %c495_i32_53 dim 1 : vector<16x512xf32>, i32 -> vector<16x512xf32>
    %112 = vector.broadcast %8 : vector<1x512xf32> to vector<16x512xf32>
    %113 = arith.mulf %111, %112 : vector<16x512xf32>
    %114 = arith.truncf %113 : vector<16x512xf32> to vector<16x512xbf16>
    %c144_54 = arith.constant 144 : index
    %c0_55 = arith.constant 0 : index
    %115 = vector.load %arg13[%c144_54, %c0_55] : memref<304x512xbf16, #tpu.memory_space<vmem>>, vector<16x512xbf16>
    tpu.vector_store %arg13[%c144_54, %c0_55], %114 {strides = array<i32>} : memref<304x512xbf16, #tpu.memory_space<vmem>>, vector<16x512xbf16>,
    %c0_56 = arith.constant 0 : index
    %c0_57 = arith.constant 0 : index
    %116 = vector.load %arg5[%c0_56, %c0_57] : memref<32x160xbf16, #tpu.memory_space<vmem>>, vector<32x160xbf16>
    %c0_58 = arith.constant 0 : index
    %c0_59 = arith.constant 0 : index
    %117 = vector.load %arg13[%c0_58, %c0_59] : memref<304x512xbf16, #tpu.memory_space<vmem>>, vector<160x512xbf16>
    %cst_60 = arith.constant dense<0.000000e+00> : vector<32x512xf32>
    %118 = tpu.matmul %116, %117, %cst_60 {dimension_numbers = #tpu.dot_dimension_numbers<[1], [0], [0], [1], [0, 0, 1, 1], [], []>} : vector<32x160xbf16>, vector<160x512xbf16>, vector<32x512xf32> -> vector<32x512xf32>
    %cst_61 = arith.constant 0.000000e+00 : f32
    %119 = vector.broadcast %cst_61 : f32 to vector<32x512xf32>
    %120 = arith.maximumf %118, %119 : vector<32x512xf32>
    %c17_i32_62 = arith.constant 17 : i32
    %121 = tpu.dynamic_rotate %26 by %c17_i32_62 dim 1 : vector<16x512xf32>, i32 -> vector<16x512xf32>
    %122 = vector.broadcast %1 : vector<1x512xf32> to vector<16x512xf32>
    %123 = arith.mulf %121, %122 : vector<16x512xf32>
    %124 = arith.truncf %123 : vector<16x512xf32> to vector<16x512xbf16>
    %c16_63 = arith.constant 16 : index
    %c0_64 = arith.constant 0 : index
    %125 = vector.load %arg13[%c16_63, %c0_64] : memref<304x512xbf16, #tpu.memory_space<vmem>>, vector<16x512xbf16>
    tpu.vector_store %arg13[%c16_63, %c0_64], %124 {strides = array<i32>} : memref<304x512xbf16, #tpu.memory_space<vmem>>, vector<16x512xbf16>,
    %c16_i32_65 = arith.constant 16 : i32
    %126 = tpu.dynamic_rotate %26 by %c16_i32_65 dim 1 : vector<16x512xf32>, i32 -> vector<16x512xf32>
    %127 = vector.broadcast %2 : vector<1x512xf32> to vector<16x512xf32>
    %128 = arith.mulf %126, %127 : vector<16x512xf32>
    %129 = arith.truncf %128 : vector<16x512xf32> to vector<16x512xbf16>
    %c32_66 = arith.constant 32 : index
    %c0_67 = arith.constant 0 : index
    %130 = vector.load %arg13[%c32_66, %c0_67] : memref<304x512xbf16, #tpu.memory_space<vmem>>, vector<16x512xbf16>
    tpu.vector_store %arg13[%c32_66, %c0_67], %129 {strides = array<i32>} : memref<304x512xbf16, #tpu.memory_space<vmem>>, vector<16x512xbf16>,
    %c15_i32_68 = arith.constant 15 : i32
    %131 = tpu.dynamic_rotate %26 by %c15_i32_68 dim 1 : vector<16x512xf32>, i32 -> vector<16x512xf32>
    %132 = vector.broadcast %3 : vector<1x512xf32> to vector<16x512xf32>
    %133 = arith.mulf %131, %132 : vector<16x512xf32>
    %134 = arith.truncf %133 : vector<16x512xf32> to vector<16x512xbf16>
    %c48_69 = arith.constant 48 : index
    %c0_70 = arith.constant 0 : index
    %135 = vector.load %arg13[%c48_69, %c0_70] : memref<304x512xbf16, #tpu.memory_space<vmem>>, vector<16x512xbf16>
    tpu.vector_store %arg13[%c48_69, %c0_70], %134 {strides = array<i32>} : memref<304x512xbf16, #tpu.memory_space<vmem>>, vector<16x512xbf16>,
    %c1_i32_71 = arith.constant 1 : i32
    %136 = tpu.dynamic_rotate %26 by %c1_i32_71 dim 1 : vector<16x512xf32>, i32 -> vector<16x512xf32>
    %137 = vector.broadcast %4 : vector<1x512xf32> to vector<16x512xf32>
    %138 = arith.mulf %136, %137 : vector<16x512xf32>
    %139 = arith.truncf %138 : vector<16x512xf32> to vector<16x512xbf16>
    %c64_72 = arith.constant 64 : index
    %c0_73 = arith.constant 0 : index
    %140 = vector.load %arg13[%c64_72, %c0_73] : memref<304x512xbf16, #tpu.memory_space<vmem>>, vector<16x512xbf16>
    tpu.vector_store %arg13[%c64_72, %c0_73], %139 {strides = array<i32>} : memref<304x512xbf16, #tpu.memory_space<vmem>>, vector<16x512xbf16>,
    %141 = arith.truncf %26 : vector<16x512xf32> to vector<16x512xbf16>
    %c80_74 = arith.constant 80 : index
    %c0_75 = arith.constant 0 : index
    %142 = vector.load %arg13[%c80_74, %c0_75] : memref<304x512xbf16, #tpu.memory_space<vmem>>, vector<16x512xbf16>
    tpu.vector_store %arg13[%c80_74, %c0_75], %141 {strides = array<i32>} : memref<304x512xbf16, #tpu.memory_space<vmem>>, vector<16x512xbf16>,
    %c511_i32_76 = arith.constant 511 : i32
    %143 = tpu.dynamic_rotate %26 by %c511_i32_76 dim 1 : vector<16x512xf32>, i32 -> vector<16x512xf32>
    %144 = vector.broadcast %5 : vector<1x512xf32> to vector<16x512xf32>
    %145 = arith.mulf %143, %144 : vector<16x512xf32>
    %146 = arith.truncf %145 : vector<16x512xf32> to vector<16x512xbf16>
    %c96_77 = arith.constant 96 : index
    %c0_78 = arith.constant 0 : index
    %147 = vector.load %arg13[%c96_77, %c0_78] : memref<304x512xbf16, #tpu.memory_space<vmem>>, vector<16x512xbf16>
    tpu.vector_store %arg13[%c96_77, %c0_78], %146 {strides = array<i32>} : memref<304x512xbf16, #tpu.memory_space<vmem>>, vector<16x512xbf16>,
    %c497_i32_79 = arith.constant 497 : i32
    %148 = tpu.dynamic_rotate %26 by %c497_i32_79 dim 1 : vector<16x512xf32>, i32 -> vector<16x512xf32>
    %149 = vector.broadcast %6 : vector<1x512xf32> to vector<16x512xf32>
    %150 = arith.mulf %148, %149 : vector<16x512xf32>
    %151 = arith.truncf %150 : vector<16x512xf32> to vector<16x512xbf16>
    %c112_80 = arith.constant 112 : index
    %c0_81 = arith.constant 0 : index
    %152 = vector.load %arg13[%c112_80, %c0_81] : memref<304x512xbf16, #tpu.memory_space<vmem>>, vector<16x512xbf16>
    tpu.vector_store %arg13[%c112_80, %c0_81], %151 {strides = array<i32>} : memref<304x512xbf16, #tpu.memory_space<vmem>>, vector<16x512xbf16>,
    %c496_i32_82 = arith.constant 496 : i32
    %153 = tpu.dynamic_rotate %26 by %c496_i32_82 dim 1 : vector<16x512xf32>, i32 -> vector<16x512xf32>
    %154 = vector.broadcast %7 : vector<1x512xf32> to vector<16x512xf32>
    %155 = arith.mulf %153, %154 : vector<16x512xf32>
    %156 = arith.truncf %155 : vector<16x512xf32> to vector<16x512xbf16>
    %c128_83 = arith.constant 128 : index
    %c0_84 = arith.constant 0 : index
    %157 = vector.load %arg13[%c128_83, %c0_84] : memref<304x512xbf16, #tpu.memory_space<vmem>>, vector<16x512xbf16>
    tpu.vector_store %arg13[%c128_83, %c0_84], %156 {strides = array<i32>} : memref<304x512xbf16, #tpu.memory_space<vmem>>, vector<16x512xbf16>,
    %c495_i32_85 = arith.constant 495 : i32
    %158 = tpu.dynamic_rotate %26 by %c495_i32_85 dim 1 : vector<16x512xf32>, i32 -> vector<16x512xf32>
    %159 = vector.broadcast %8 : vector<1x512xf32> to vector<16x512xf32>
    %160 = arith.mulf %158, %159 : vector<16x512xf32>
    %161 = arith.truncf %160 : vector<16x512xf32> to vector<16x512xbf16>
    %c144_86 = arith.constant 144 : index
    %c0_87 = arith.constant 0 : index
    %162 = vector.load %arg13[%c144_86, %c0_87] : memref<304x512xbf16, #tpu.memory_space<vmem>>, vector<16x512xbf16>
    tpu.vector_store %arg13[%c144_86, %c0_87], %161 {strides = array<i32>} : memref<304x512xbf16, #tpu.memory_space<vmem>>, vector<16x512xbf16>,
    %c0_88 = arith.constant 0 : index
    %c0_89 = arith.constant 0 : index
    %163 = vector.load %arg6[%c0_88, %c0_89] : memref<16x160xbf16, #tpu.memory_space<vmem>>, vector<16x160xbf16>
    %c0_90 = arith.constant 0 : index
    %c0_91 = arith.constant 0 : index
    %164 = vector.load %arg13[%c0_90, %c0_91] : memref<304x512xbf16, #tpu.memory_space<vmem>>, vector<160x512xbf16>
    %cst_92 = arith.constant dense<0.000000e+00> : vector<16x512xf32>
    %165 = tpu.matmul %163, %164, %cst_92 {dimension_numbers = #tpu.dot_dimension_numbers<[1], [0], [0], [1], [0, 0, 1, 1], [], []>} : vector<16x160xbf16>, vector<160x512xbf16>, vector<16x512xf32> -> vector<16x512xf32>
    %cst_93 = arith.constant 0.000000e+00 : f32
    %166 = vector.broadcast %cst_93 : f32 to vector<16x512xf32>
    %167 = arith.maximumf %165, %166 : vector<16x512xf32>
    %c17_i32_94 = arith.constant 17 : i32
    %168 = tpu.dynamic_rotate %167 by %c17_i32_94 dim 1 : vector<16x512xf32>, i32 -> vector<16x512xf32>
    %169 = vector.broadcast %1 : vector<1x512xf32> to vector<16x512xf32>
    %170 = arith.mulf %168, %169 : vector<16x512xf32>
    %171 = arith.truncf %170 : vector<16x512xf32> to vector<16x512xbf16>
    %c16_95 = arith.constant 16 : index
    %c0_96 = arith.constant 0 : index
    %172 = vector.load %arg13[%c16_95, %c0_96] : memref<304x512xbf16, #tpu.memory_space<vmem>>, vector<16x512xbf16>
    tpu.vector_store %arg13[%c16_95, %c0_96], %171 {strides = array<i32>} : memref<304x512xbf16, #tpu.memory_space<vmem>>, vector<16x512xbf16>,
    %c16_i32_97 = arith.constant 16 : i32
    %173 = tpu.dynamic_rotate %167 by %c16_i32_97 dim 1 : vector<16x512xf32>, i32 -> vector<16x512xf32>
    %174 = vector.broadcast %2 : vector<1x512xf32> to vector<16x512xf32>
    %175 = arith.mulf %173, %174 : vector<16x512xf32>
    %176 = arith.truncf %175 : vector<16x512xf32> to vector<16x512xbf16>
    %c32_98 = arith.constant 32 : index
    %c0_99 = arith.constant 0 : index
    %177 = vector.load %arg13[%c32_98, %c0_99] : memref<304x512xbf16, #tpu.memory_space<vmem>>, vector<16x512xbf16>
    tpu.vector_store %arg13[%c32_98, %c0_99], %176 {strides = array<i32>} : memref<304x512xbf16, #tpu.memory_space<vmem>>, vector<16x512xbf16>,
    %c15_i32_100 = arith.constant 15 : i32
    %178 = tpu.dynamic_rotate %167 by %c15_i32_100 dim 1 : vector<16x512xf32>, i32 -> vector<16x512xf32>
    %179 = vector.broadcast %3 : vector<1x512xf32> to vector<16x512xf32>
    %180 = arith.mulf %178, %179 : vector<16x512xf32>
    %181 = arith.truncf %180 : vector<16x512xf32> to vector<16x512xbf16>
    %c48_101 = arith.constant 48 : index
    %c0_102 = arith.constant 0 : index
    %182 = vector.load %arg13[%c48_101, %c0_102] : memref<304x512xbf16, #tpu.memory_space<vmem>>, vector<16x512xbf16>
    tpu.vector_store %arg13[%c48_101, %c0_102], %181 {strides = array<i32>} : memref<304x512xbf16, #tpu.memory_space<vmem>>, vector<16x512xbf16>,
    %c1_i32_103 = arith.constant 1 : i32
    %183 = tpu.dynamic_rotate %167 by %c1_i32_103 dim 1 : vector<16x512xf32>, i32 -> vector<16x512xf32>
    %184 = vector.broadcast %4 : vector<1x512xf32> to vector<16x512xf32>
    %185 = arith.mulf %183, %184 : vector<16x512xf32>
    %186 = arith.truncf %185 : vector<16x512xf32> to vector<16x512xbf16>
    %c64_104 = arith.constant 64 : index
    %c0_105 = arith.constant 0 : index
    %187 = vector.load %arg13[%c64_104, %c0_105] : memref<304x512xbf16, #tpu.memory_space<vmem>>, vector<16x512xbf16>
    tpu.vector_store %arg13[%c64_104, %c0_105], %186 {strides = array<i32>} : memref<304x512xbf16, #tpu.memory_space<vmem>>, vector<16x512xbf16>,
    %188 = arith.truncf %167 : vector<16x512xf32> to vector<16x512xbf16>
    %c80_106 = arith.constant 80 : index
    %c0_107 = arith.constant 0 : index
    %189 = vector.load %arg13[%c80_106, %c0_107] : memref<304x512xbf16, #tpu.memory_space<vmem>>, vector<16x512xbf16>
    tpu.vector_store %arg13[%c80_106, %c0_107], %188 {strides = array<i32>} : memref<304x512xbf16, #tpu.memory_space<vmem>>, vector<16x512xbf16>,
    %c511_i32_108 = arith.constant 511 : i32
    %190 = tpu.dynamic_rotate %167 by %c511_i32_108 dim 1 : vector<16x512xf32>, i32 -> vector<16x512xf32>
    %191 = vector.broadcast %5 : vector<1x512xf32> to vector<16x512xf32>
    %192 = arith.mulf %190, %191 : vector<16x512xf32>
    %193 = arith.truncf %192 : vector<16x512xf32> to vector<16x512xbf16>
    %c96_109 = arith.constant 96 : index
    %c0_110 = arith.constant 0 : index
    %194 = vector.load %arg13[%c96_109, %c0_110] : memref<304x512xbf16, #tpu.memory_space<vmem>>, vector<16x512xbf16>
    tpu.vector_store %arg13[%c96_109, %c0_110], %193 {strides = array<i32>} : memref<304x512xbf16, #tpu.memory_space<vmem>>, vector<16x512xbf16>,
    %c497_i32_111 = arith.constant 497 : i32
    %195 = tpu.dynamic_rotate %167 by %c497_i32_111 dim 1 : vector<16x512xf32>, i32 -> vector<16x512xf32>
    %196 = vector.broadcast %6 : vector<1x512xf32> to vector<16x512xf32>
    %197 = arith.mulf %195, %196 : vector<16x512xf32>
    %198 = arith.truncf %197 : vector<16x512xf32> to vector<16x512xbf16>
    %c112_112 = arith.constant 112 : index
    %c0_113 = arith.constant 0 : index
    %199 = vector.load %arg13[%c112_112, %c0_113] : memref<304x512xbf16, #tpu.memory_space<vmem>>, vector<16x512xbf16>
    tpu.vector_store %arg13[%c112_112, %c0_113], %198 {strides = array<i32>} : memref<304x512xbf16, #tpu.memory_space<vmem>>, vector<16x512xbf16>,
    %c496_i32_114 = arith.constant 496 : i32
    %200 = tpu.dynamic_rotate %167 by %c496_i32_114 dim 1 : vector<16x512xf32>, i32 -> vector<16x512xf32>
    %201 = vector.broadcast %7 : vector<1x512xf32> to vector<16x512xf32>
    %202 = arith.mulf %200, %201 : vector<16x512xf32>
    %203 = arith.truncf %202 : vector<16x512xf32> to vector<16x512xbf16>
    %c128_115 = arith.constant 128 : index
    %c0_116 = arith.constant 0 : index
    %204 = vector.load %arg13[%c128_115, %c0_116] : memref<304x512xbf16, #tpu.memory_space<vmem>>, vector<16x512xbf16>
    tpu.vector_store %arg13[%c128_115, %c0_116], %203 {strides = array<i32>} : memref<304x512xbf16, #tpu.memory_space<vmem>>, vector<16x512xbf16>,
    %c495_i32_117 = arith.constant 495 : i32
    %205 = tpu.dynamic_rotate %167 by %c495_i32_117 dim 1 : vector<16x512xf32>, i32 -> vector<16x512xf32>
    %206 = vector.broadcast %8 : vector<1x512xf32> to vector<16x512xf32>
    %207 = arith.mulf %205, %206 : vector<16x512xf32>
    %208 = arith.truncf %207 : vector<16x512xf32> to vector<16x512xbf16>
    %c144_118 = arith.constant 144 : index
    %c0_119 = arith.constant 0 : index
    %209 = vector.load %arg13[%c144_118, %c0_119] : memref<304x512xbf16, #tpu.memory_space<vmem>>, vector<16x512xbf16>
    tpu.vector_store %arg13[%c144_118, %c0_119], %208 {strides = array<i32>} : memref<304x512xbf16, #tpu.memory_space<vmem>>, vector<16x512xbf16>,
    %c0_120 = arith.constant 0 : index
    %c0_121 = arith.constant 0 : index
    %210 = vector.load %arg7[%c0_120, %c0_121] : memref<32x160xbf16, #tpu.memory_space<vmem>>, vector<32x160xbf16>
    %c0_122 = arith.constant 0 : index
    %c0_123 = arith.constant 0 : index
    %211 = vector.load %arg13[%c0_122, %c0_123] : memref<304x512xbf16, #tpu.memory_space<vmem>>, vector<160x512xbf16>
    %cst_124 = arith.constant dense<0.000000e+00> : vector<32x512xf32>
    %212 = tpu.matmul %210, %211, %cst_124 {dimension_numbers = #tpu.dot_dimension_numbers<[1], [0], [0], [1], [0, 0, 1, 1], [], []>} : vector<32x160xbf16>, vector<160x512xbf16>, vector<32x512xf32> -> vector<32x512xf32>
    %cst_125 = arith.constant 0.000000e+00 : f32
    %213 = vector.broadcast %cst_125 : f32 to vector<32x512xf32>
    %214 = arith.maximumf %212, %213 : vector<32x512xf32>
    %c0_126 = arith.constant 0 : index
    %c0_127 = arith.constant 0 : index
    %215 = vector.load %arg8[%c0_126, %c0_127] : memref<64x32xbf16, #tpu.memory_space<vmem>>, vector<64x32xbf16>
    %216 = arith.truncf %214 : vector<32x512xf32> to vector<32x512xbf16>
    %cst_128 = arith.constant dense<0.000000e+00> : vector<64x512xf32>
    %217 = tpu.matmul %215, %216, %cst_128 {dimension_numbers = #tpu.dot_dimension_numbers<[1], [0], [0], [1], [0, 0, 1, 1], [], []>} : vector<64x32xbf16>, vector<32x512xbf16>, vector<64x512xf32> -> vector<64x512xf32>
    %218 = vector.extract_strided_slice %217 {offsets = [0, 0], sizes = [64, 256], strides = [1, 1]} : vector<64x512xf32> to vector<64x256xf32>
    %cst_129 = arith.constant dense<0.000000e+00> : vector<64xf32>
    %219 = vector.multi_reduction <add>, %218, %cst_129 [1] : vector<64x256xf32> to vector<64xf32>
    %220 = vector.shape_cast %219 : vector<64xf32> to vector<64x1xf32>
    %cst_130 = arith.constant 3.906250e-03 : f32
    %221 = vector.broadcast %cst_130 : f32 to vector<64x1xf32>
    %222 = arith.mulf %220, %221 : vector<64x1xf32>
    %c0_131 = arith.constant 0 : index
    %c0_132 = arith.constant 0 : index
    %223 = vector.load %arg9[%c0_131, %c0_132] : memref<64x1xf32, #tpu.memory_space<vmem>>, vector<64x1xf32>
    %224 = arith.addf %222, %223 : vector<64x1xf32>
    %225 = vector.extract_strided_slice %224 {offsets = [0, 0], sizes = [32, 1], strides = [1, 1]} : vector<64x1xf32> to vector<32x1xf32>
    %226 = vector.extract_strided_slice %224 {offsets = [32, 0], sizes = [32, 1], strides = [1, 1]} : vector<64x1xf32> to vector<32x1xf32>
    %227 = vector.extract_strided_slice %120 {offsets = [0, 0], sizes = [32, 256], strides = [1, 1]} : vector<32x512xf32> to vector<32x256xf32>
    %cst_133 = arith.constant dense<0.000000e+00> : vector<32xf32>
    %228 = vector.multi_reduction <add>, %227, %cst_133 [1] : vector<32x256xf32> to vector<32xf32>
    %229 = vector.shape_cast %228 : vector<32xf32> to vector<32x1xf32>
    %cst_134 = arith.constant 3.906250e-03 : f32
    %230 = vector.broadcast %cst_134 : f32 to vector<32x1xf32>
    %231 = arith.mulf %229, %230 : vector<32x1xf32>
    %232 = arith.mulf %227, %227 : vector<32x256xf32>
    %cst_135 = arith.constant dense<0.000000e+00> : vector<32xf32>
    %233 = vector.multi_reduction <add>, %232, %cst_135 [1] : vector<32x256xf32> to vector<32xf32>
    %234 = vector.shape_cast %233 : vector<32xf32> to vector<32x1xf32>
    %cst_136 = arith.constant 3.906250e-03 : f32
    %235 = vector.broadcast %cst_136 : f32 to vector<32x1xf32>
    %236 = arith.mulf %234, %235 : vector<32x1xf32>
    %237 = arith.mulf %231, %231 : vector<32x1xf32>
    %238 = arith.subf %236, %237 : vector<32x1xf32>
    %cst_137 = arith.constant 0.000000e+00 : f32
    %239 = vector.broadcast %cst_137 : f32 to vector<32x1xf32>
    %240 = arith.maximumf %238, %239 : vector<32x1xf32>
    %241 = vector.broadcast %231 : vector<32x1xf32> to vector<32x256xf32>
    %242 = arith.subf %227, %241 : vector<32x256xf32>
    %cst_138 = arith.constant 9.99999974E-6 : f32
    %243 = vector.broadcast %cst_138 : f32 to vector<32x1xf32>
    %244 = arith.addf %240, %243 : vector<32x1xf32>
    %245 = math.rsqrt %244 : vector<32x1xf32>
    %246 = vector.broadcast %245 : vector<32x1xf32> to vector<32x256xf32>
    %247 = arith.mulf %242, %246 : vector<32x256xf32>
    %cst_139 = arith.constant 1.000000e+00 : f32
    %248 = vector.broadcast %cst_139 : f32 to vector<32x1xf32>
    %249 = arith.addf %248, %225 : vector<32x1xf32>
    %250 = vector.broadcast %249 : vector<32x1xf32> to vector<32x256xf32>
    %251 = arith.mulf %247, %250 : vector<32x256xf32>
    %252 = vector.broadcast %226 : vector<32x1xf32> to vector<32x256xf32>
    %253 = arith.addf %251, %252 : vector<32x256xf32>
    %254 = vector.extract_strided_slice %217 {offsets = [0, 256], sizes = [64, 256], strides = [1, 1]} : vector<64x512xf32> to vector<64x256xf32>
    %cst_140 = arith.constant dense<0.000000e+00> : vector<64xf32>
    %255 = vector.multi_reduction <add>, %254, %cst_140 [1] : vector<64x256xf32> to vector<64xf32>
    %256 = vector.shape_cast %255 : vector<64xf32> to vector<64x1xf32>
    %cst_141 = arith.constant 3.906250e-03 : f32
    %257 = vector.broadcast %cst_141 : f32 to vector<64x1xf32>
    %258 = arith.mulf %256, %257 : vector<64x1xf32>
    %c0_142 = arith.constant 0 : index
    %c0_143 = arith.constant 0 : index
    %259 = vector.load %arg9[%c0_142, %c0_143] : memref<64x1xf32, #tpu.memory_space<vmem>>, vector<64x1xf32>
    %260 = arith.addf %258, %259 : vector<64x1xf32>
    %261 = vector.extract_strided_slice %260 {offsets = [0, 0], sizes = [32, 1], strides = [1, 1]} : vector<64x1xf32> to vector<32x1xf32>
    %262 = vector.extract_strided_slice %260 {offsets = [32, 0], sizes = [32, 1], strides = [1, 1]} : vector<64x1xf32> to vector<32x1xf32>
    %263 = vector.extract_strided_slice %120 {offsets = [0, 256], sizes = [32, 256], strides = [1, 1]} : vector<32x512xf32> to vector<32x256xf32>
    %cst_144 = arith.constant dense<0.000000e+00> : vector<32xf32>
    %264 = vector.multi_reduction <add>, %263, %cst_144 [1] : vector<32x256xf32> to vector<32xf32>
    %265 = vector.shape_cast %264 : vector<32xf32> to vector<32x1xf32>
    %cst_145 = arith.constant 3.906250e-03 : f32
    %266 = vector.broadcast %cst_145 : f32 to vector<32x1xf32>
    %267 = arith.mulf %265, %266 : vector<32x1xf32>
    %268 = arith.mulf %263, %263 : vector<32x256xf32>
    %cst_146 = arith.constant dense<0.000000e+00> : vector<32xf32>
    %269 = vector.multi_reduction <add>, %268, %cst_146 [1] : vector<32x256xf32> to vector<32xf32>
    %270 = vector.shape_cast %269 : vector<32xf32> to vector<32x1xf32>
    %cst_147 = arith.constant 3.906250e-03 : f32
    %271 = vector.broadcast %cst_147 : f32 to vector<32x1xf32>
    %272 = arith.mulf %270, %271 : vector<32x1xf32>
    %273 = arith.mulf %267, %267 : vector<32x1xf32>
    %274 = arith.subf %272, %273 : vector<32x1xf32>
    %cst_148 = arith.constant 0.000000e+00 : f32
    %275 = vector.broadcast %cst_148 : f32 to vector<32x1xf32>
    %276 = arith.maximumf %274, %275 : vector<32x1xf32>
    %277 = vector.broadcast %267 : vector<32x1xf32> to vector<32x256xf32>
    %278 = arith.subf %263, %277 : vector<32x256xf32>
    %cst_149 = arith.constant 9.99999974E-6 : f32
    %279 = vector.broadcast %cst_149 : f32 to vector<32x1xf32>
    %280 = arith.addf %276, %279 : vector<32x1xf32>
    %281 = math.rsqrt %280 : vector<32x1xf32>
    %282 = vector.broadcast %281 : vector<32x1xf32> to vector<32x256xf32>
    %283 = arith.mulf %278, %282 : vector<32x256xf32>
    %cst_150 = arith.constant 1.000000e+00 : f32
    %284 = vector.broadcast %cst_150 : f32 to vector<32x1xf32>
    %285 = arith.addf %284, %261 : vector<32x1xf32>
    %286 = vector.broadcast %285 : vector<32x1xf32> to vector<32x256xf32>
    %287 = arith.mulf %283, %286 : vector<32x256xf32>
    %288 = vector.broadcast %262 : vector<32x1xf32> to vector<32x256xf32>
    %289 = arith.addf %287, %288 : vector<32x256xf32>
    %290 = tpu.concatenate %253, %289 in 1 : vector<32x256xf32>, vector<32x256xf32> -> vector<32x512xf32>
    %c17_i32_151 = arith.constant 17 : i32
    %291 = tpu.dynamic_rotate %290 by %c17_i32_151 dim 1 : vector<32x512xf32>, i32 -> vector<32x512xf32>
    %292 = vector.broadcast %1 : vector<1x512xf32> to vector<32x512xf32>
    %293 = arith.mulf %291, %292 : vector<32x512xf32>
    %294 = arith.truncf %293 : vector<32x512xf32> to vector<32x512xbf16>
    %c16_152 = arith.constant 16 : index
    %c0_153 = arith.constant 0 : index
    %295 = vector.load %arg13[%c16_152, %c0_153] : memref<304x512xbf16, #tpu.memory_space<vmem>>, vector<32x512xbf16>
    tpu.vector_store %arg13[%c16_152, %c0_153], %294 {strides = array<i32>} : memref<304x512xbf16, #tpu.memory_space<vmem>>, vector<32x512xbf16>,
    %c16_i32_154 = arith.constant 16 : i32
    %296 = tpu.dynamic_rotate %290 by %c16_i32_154 dim 1 : vector<32x512xf32>, i32 -> vector<32x512xf32>
    %297 = vector.broadcast %2 : vector<1x512xf32> to vector<32x512xf32>
    %298 = arith.mulf %296, %297 : vector<32x512xf32>
    %299 = arith.truncf %298 : vector<32x512xf32> to vector<32x512xbf16>
    %c48_155 = arith.constant 48 : index
    %c0_156 = arith.constant 0 : index
    %300 = vector.load %arg13[%c48_155, %c0_156] : memref<304x512xbf16, #tpu.memory_space<vmem>>, vector<32x512xbf16>
    tpu.vector_store %arg13[%c48_155, %c0_156], %299 {strides = array<i32>} : memref<304x512xbf16, #tpu.memory_space<vmem>>, vector<32x512xbf16>,
    %c15_i32_157 = arith.constant 15 : i32
    %301 = tpu.dynamic_rotate %290 by %c15_i32_157 dim 1 : vector<32x512xf32>, i32 -> vector<32x512xf32>
    %302 = vector.broadcast %3 : vector<1x512xf32> to vector<32x512xf32>
    %303 = arith.mulf %301, %302 : vector<32x512xf32>
    %304 = arith.truncf %303 : vector<32x512xf32> to vector<32x512xbf16>
    %c80_158 = arith.constant 80 : index
    %c0_159 = arith.constant 0 : index
    %305 = vector.load %arg13[%c80_158, %c0_159] : memref<304x512xbf16, #tpu.memory_space<vmem>>, vector<32x512xbf16>
    tpu.vector_store %arg13[%c80_158, %c0_159], %304 {strides = array<i32>} : memref<304x512xbf16, #tpu.memory_space<vmem>>, vector<32x512xbf16>,
    %c1_i32_160 = arith.constant 1 : i32
    %306 = tpu.dynamic_rotate %290 by %c1_i32_160 dim 1 : vector<32x512xf32>, i32 -> vector<32x512xf32>
    %307 = vector.broadcast %4 : vector<1x512xf32> to vector<32x512xf32>
    %308 = arith.mulf %306, %307 : vector<32x512xf32>
    %309 = arith.truncf %308 : vector<32x512xf32> to vector<32x512xbf16>
    %c112_161 = arith.constant 112 : index
    %c0_162 = arith.constant 0 : index
    %310 = vector.load %arg13[%c112_161, %c0_162] : memref<304x512xbf16, #tpu.memory_space<vmem>>, vector<32x512xbf16>
    tpu.vector_store %arg13[%c112_161, %c0_162], %309 {strides = array<i32>} : memref<304x512xbf16, #tpu.memory_space<vmem>>, vector<32x512xbf16>,
    %311 = arith.truncf %290 : vector<32x512xf32> to vector<32x512xbf16>
    %c144_163 = arith.constant 144 : index
    %c0_164 = arith.constant 0 : index
    %312 = vector.load %arg13[%c144_163, %c0_164] : memref<304x512xbf16, #tpu.memory_space<vmem>>, vector<32x512xbf16>
    tpu.vector_store %arg13[%c144_163, %c0_164], %311 {strides = array<i32>} : memref<304x512xbf16, #tpu.memory_space<vmem>>, vector<32x512xbf16>,
    %c511_i32_165 = arith.constant 511 : i32
    %313 = tpu.dynamic_rotate %290 by %c511_i32_165 dim 1 : vector<32x512xf32>, i32 -> vector<32x512xf32>
    %314 = vector.broadcast %5 : vector<1x512xf32> to vector<32x512xf32>
    %315 = arith.mulf %313, %314 : vector<32x512xf32>
    %316 = arith.truncf %315 : vector<32x512xf32> to vector<32x512xbf16>
    %c176 = arith.constant 176 : index
    %c0_166 = arith.constant 0 : index
    %317 = vector.load %arg13[%c176, %c0_166] : memref<304x512xbf16, #tpu.memory_space<vmem>>, vector<32x512xbf16>
    tpu.vector_store %arg13[%c176, %c0_166], %316 {strides = array<i32>} : memref<304x512xbf16, #tpu.memory_space<vmem>>, vector<32x512xbf16>,
    %c497_i32_167 = arith.constant 497 : i32
    %318 = tpu.dynamic_rotate %290 by %c497_i32_167 dim 1 : vector<32x512xf32>, i32 -> vector<32x512xf32>
    %319 = vector.broadcast %6 : vector<1x512xf32> to vector<32x512xf32>
    %320 = arith.mulf %318, %319 : vector<32x512xf32>
    %321 = arith.truncf %320 : vector<32x512xf32> to vector<32x512xbf16>
    %c208 = arith.constant 208 : index
    %c0_168 = arith.constant 0 : index
    %322 = vector.load %arg13[%c208, %c0_168] : memref<304x512xbf16, #tpu.memory_space<vmem>>, vector<32x512xbf16>
    tpu.vector_store %arg13[%c208, %c0_168], %321 {strides = array<i32>} : memref<304x512xbf16, #tpu.memory_space<vmem>>, vector<32x512xbf16>,
    %c496_i32_169 = arith.constant 496 : i32
    %323 = tpu.dynamic_rotate %290 by %c496_i32_169 dim 1 : vector<32x512xf32>, i32 -> vector<32x512xf32>
    %324 = vector.broadcast %7 : vector<1x512xf32> to vector<32x512xf32>
    %325 = arith.mulf %323, %324 : vector<32x512xf32>
    %326 = arith.truncf %325 : vector<32x512xf32> to vector<32x512xbf16>
    %c240 = arith.constant 240 : index
    %c0_170 = arith.constant 0 : index
    %327 = vector.load %arg13[%c240, %c0_170] : memref<304x512xbf16, #tpu.memory_space<vmem>>, vector<32x512xbf16>
    tpu.vector_store %arg13[%c240, %c0_170], %326 {strides = array<i32>} : memref<304x512xbf16, #tpu.memory_space<vmem>>, vector<32x512xbf16>,
    %c495_i32_171 = arith.constant 495 : i32
    %328 = tpu.dynamic_rotate %290 by %c495_i32_171 dim 1 : vector<32x512xf32>, i32 -> vector<32x512xf32>
    %329 = vector.broadcast %8 : vector<1x512xf32> to vector<32x512xf32>
    %330 = arith.mulf %328, %329 : vector<32x512xf32>
    %331 = arith.truncf %330 : vector<32x512xf32> to vector<32x512xbf16>
    %c272 = arith.constant 272 : index
    %c0_172 = arith.constant 0 : index
    %332 = vector.load %arg13[%c272, %c0_172] : memref<304x512xbf16, #tpu.memory_space<vmem>>, vector<32x512xbf16>
    tpu.vector_store %arg13[%c272, %c0_172], %331 {strides = array<i32>} : memref<304x512xbf16, #tpu.memory_space<vmem>>, vector<32x512xbf16>,
    %c0_173 = arith.constant 0 : index
    %c0_174 = arith.constant 0 : index
    %333 = vector.load %arg10[%c0_173, %c0_174] : memref<16x304xbf16, #tpu.memory_space<vmem>>, vector<16x304xbf16>
    %c0_175 = arith.constant 0 : index
    %c0_176 = arith.constant 0 : index
    %334 = vector.load %arg13[%c0_175, %c0_176] : memref<304x512xbf16, #tpu.memory_space<vmem>>, vector<304x512xbf16>
    %cst_177 = arith.constant dense<0.000000e+00> : vector<16x512xf32>
    %335 = tpu.matmul %333, %334, %cst_177 {dimension_numbers = #tpu.dot_dimension_numbers<[1], [0], [0], [1], [0, 0, 1, 1], [], []>} : vector<16x304xbf16>, vector<304x512xbf16>, vector<16x512xf32> -> vector<16x512xf32>
    %cst_178 = arith.constant 0.000000e+00 : f32
    %336 = vector.broadcast %cst_178 : f32 to vector<16x512xf32>
    %337 = arith.maximumf %335, %336 : vector<16x512xf32>
    %c17_i32_179 = arith.constant 17 : i32
    %338 = tpu.dynamic_rotate %337 by %c17_i32_179 dim 1 : vector<16x512xf32>, i32 -> vector<16x512xf32>
    %339 = vector.broadcast %1 : vector<1x512xf32> to vector<16x512xf32>
    %340 = arith.mulf %338, %339 : vector<16x512xf32>
    %341 = arith.truncf %340 : vector<16x512xf32> to vector<16x512xbf16>
    %c16_180 = arith.constant 16 : index
    %c0_181 = arith.constant 0 : index
    %342 = vector.load %arg13[%c16_180, %c0_181] : memref<304x512xbf16, #tpu.memory_space<vmem>>, vector<16x512xbf16>
    tpu.vector_store %arg13[%c16_180, %c0_181], %341 {strides = array<i32>} : memref<304x512xbf16, #tpu.memory_space<vmem>>, vector<16x512xbf16>,
    %c16_i32_182 = arith.constant 16 : i32
    %343 = tpu.dynamic_rotate %337 by %c16_i32_182 dim 1 : vector<16x512xf32>, i32 -> vector<16x512xf32>
    %344 = vector.broadcast %2 : vector<1x512xf32> to vector<16x512xf32>
    %345 = arith.mulf %343, %344 : vector<16x512xf32>
    %346 = arith.truncf %345 : vector<16x512xf32> to vector<16x512xbf16>
    %c32_183 = arith.constant 32 : index
    %c0_184 = arith.constant 0 : index
    %347 = vector.load %arg13[%c32_183, %c0_184] : memref<304x512xbf16, #tpu.memory_space<vmem>>, vector<16x512xbf16>
    tpu.vector_store %arg13[%c32_183, %c0_184], %346 {strides = array<i32>} : memref<304x512xbf16, #tpu.memory_space<vmem>>, vector<16x512xbf16>,
    %c15_i32_185 = arith.constant 15 : i32
    %348 = tpu.dynamic_rotate %337 by %c15_i32_185 dim 1 : vector<16x512xf32>, i32 -> vector<16x512xf32>
    %349 = vector.broadcast %3 : vector<1x512xf32> to vector<16x512xf32>
    %350 = arith.mulf %348, %349 : vector<16x512xf32>
    %351 = arith.truncf %350 : vector<16x512xf32> to vector<16x512xbf16>
    %c48_186 = arith.constant 48 : index
    %c0_187 = arith.constant 0 : index
    %352 = vector.load %arg13[%c48_186, %c0_187] : memref<304x512xbf16, #tpu.memory_space<vmem>>, vector<16x512xbf16>
    tpu.vector_store %arg13[%c48_186, %c0_187], %351 {strides = array<i32>} : memref<304x512xbf16, #tpu.memory_space<vmem>>, vector<16x512xbf16>,
    %c1_i32_188 = arith.constant 1 : i32
    %353 = tpu.dynamic_rotate %337 by %c1_i32_188 dim 1 : vector<16x512xf32>, i32 -> vector<16x512xf32>
    %354 = vector.broadcast %4 : vector<1x512xf32> to vector<16x512xf32>
    %355 = arith.mulf %353, %354 : vector<16x512xf32>
    %356 = arith.truncf %355 : vector<16x512xf32> to vector<16x512xbf16>
    %c64_189 = arith.constant 64 : index
    %c0_190 = arith.constant 0 : index
    %357 = vector.load %arg13[%c64_189, %c0_190] : memref<304x512xbf16, #tpu.memory_space<vmem>>, vector<16x512xbf16>
    tpu.vector_store %arg13[%c64_189, %c0_190], %356 {strides = array<i32>} : memref<304x512xbf16, #tpu.memory_space<vmem>>, vector<16x512xbf16>,
    %358 = arith.truncf %337 : vector<16x512xf32> to vector<16x512xbf16>
    %c80_191 = arith.constant 80 : index
    %c0_192 = arith.constant 0 : index
    %359 = vector.load %arg13[%c80_191, %c0_192] : memref<304x512xbf16, #tpu.memory_space<vmem>>, vector<16x512xbf16>
    tpu.vector_store %arg13[%c80_191, %c0_192], %358 {strides = array<i32>} : memref<304x512xbf16, #tpu.memory_space<vmem>>, vector<16x512xbf16>,
    %c511_i32_193 = arith.constant 511 : i32
    %360 = tpu.dynamic_rotate %337 by %c511_i32_193 dim 1 : vector<16x512xf32>, i32 -> vector<16x512xf32>
    %361 = vector.broadcast %5 : vector<1x512xf32> to vector<16x512xf32>
    %362 = arith.mulf %360, %361 : vector<16x512xf32>
    %363 = arith.truncf %362 : vector<16x512xf32> to vector<16x512xbf16>
    %c96_194 = arith.constant 96 : index
    %c0_195 = arith.constant 0 : index
    %364 = vector.load %arg13[%c96_194, %c0_195] : memref<304x512xbf16, #tpu.memory_space<vmem>>, vector<16x512xbf16>
    tpu.vector_store %arg13[%c96_194, %c0_195], %363 {strides = array<i32>} : memref<304x512xbf16, #tpu.memory_space<vmem>>, vector<16x512xbf16>,
    %c497_i32_196 = arith.constant 497 : i32
    %365 = tpu.dynamic_rotate %337 by %c497_i32_196 dim 1 : vector<16x512xf32>, i32 -> vector<16x512xf32>
    %366 = vector.broadcast %6 : vector<1x512xf32> to vector<16x512xf32>
    %367 = arith.mulf %365, %366 : vector<16x512xf32>
    %368 = arith.truncf %367 : vector<16x512xf32> to vector<16x512xbf16>
    %c112_197 = arith.constant 112 : index
    %c0_198 = arith.constant 0 : index
    %369 = vector.load %arg13[%c112_197, %c0_198] : memref<304x512xbf16, #tpu.memory_space<vmem>>, vector<16x512xbf16>
    tpu.vector_store %arg13[%c112_197, %c0_198], %368 {strides = array<i32>} : memref<304x512xbf16, #tpu.memory_space<vmem>>, vector<16x512xbf16>,
    %c496_i32_199 = arith.constant 496 : i32
    %370 = tpu.dynamic_rotate %337 by %c496_i32_199 dim 1 : vector<16x512xf32>, i32 -> vector<16x512xf32>
    %371 = vector.broadcast %7 : vector<1x512xf32> to vector<16x512xf32>
    %372 = arith.mulf %370, %371 : vector<16x512xf32>
    %373 = arith.truncf %372 : vector<16x512xf32> to vector<16x512xbf16>
    %c128_200 = arith.constant 128 : index
    %c0_201 = arith.constant 0 : index
    %374 = vector.load %arg13[%c128_200, %c0_201] : memref<304x512xbf16, #tpu.memory_space<vmem>>, vector<16x512xbf16>
    tpu.vector_store %arg13[%c128_200, %c0_201], %373 {strides = array<i32>} : memref<304x512xbf16, #tpu.memory_space<vmem>>, vector<16x512xbf16>,
    %c495_i32_202 = arith.constant 495 : i32
    %375 = tpu.dynamic_rotate %337 by %c495_i32_202 dim 1 : vector<16x512xf32>, i32 -> vector<16x512xf32>
    %376 = vector.broadcast %8 : vector<1x512xf32> to vector<16x512xf32>
    %377 = arith.mulf %375, %376 : vector<16x512xf32>
    %378 = arith.truncf %377 : vector<16x512xf32> to vector<16x512xbf16>
    %c144_203 = arith.constant 144 : index
    %c0_204 = arith.constant 0 : index
    %379 = vector.load %arg13[%c144_203, %c0_204] : memref<304x512xbf16, #tpu.memory_space<vmem>>, vector<16x512xbf16>
    tpu.vector_store %arg13[%c144_203, %c0_204], %378 {strides = array<i32>} : memref<304x512xbf16, #tpu.memory_space<vmem>>, vector<16x512xbf16>,
    %c0_205 = arith.constant 0 : index
    %c0_206 = arith.constant 0 : index
    %380 = vector.load %arg11[%c0_205, %c0_206] : memref<3x160xbf16, #tpu.memory_space<vmem>>, vector<3x160xbf16>
    %c0_207 = arith.constant 0 : index
    %c0_208 = arith.constant 0 : index
    %381 = vector.load %arg13[%c0_207, %c0_208] : memref<304x512xbf16, #tpu.memory_space<vmem>>, vector<160x512xbf16>
    %cst_209 = arith.constant dense<0.000000e+00> : vector<3x512xf32>
    %382 = tpu.matmul %380, %381, %cst_209 {dimension_numbers = #tpu.dot_dimension_numbers<[1], [0], [0], [1], [0, 0, 1, 1], [], []>} : vector<3x160xbf16>, vector<160x512xbf16>, vector<3x512xf32> -> vector<3x512xf32>
    %383 = math.tanh %382 : vector<3x512xf32>
    %384 = vector.extract_strided_slice %383 {offsets = [0, 0], sizes = [3, 256], strides = [1, 1]} : vector<3x512xf32> to vector<3x256xf32>
    %c0_210 = arith.constant 0 : index
    %c0_211 = arith.constant 0 : index
    %c0_212 = arith.constant 0 : index
    %385 = vector.load %arg12[%c0_210, %c0_211, %c0_212] : memref<2x3x256xf32, #tpu.memory_space<vmem>>, vector<1x3x256xf32>
    %386 = vector.shape_cast %385 : vector<1x3x256xf32> to vector<3x256xf32>
    %387 = vector.shape_cast %384 : vector<3x256xf32> to vector<1x3x256xf32>
    tpu.vector_store %arg12[%c0_210, %c0_211, %c0_212], %387 {strides = array<i32>} : memref<2x3x256xf32, #tpu.memory_space<vmem>>, vector<1x3x256xf32>,
    %388 = vector.extract_strided_slice %383 {offsets = [0, 256], sizes = [3, 256], strides = [1, 1]} : vector<3x512xf32> to vector<3x256xf32>
    %c1_213 = arith.constant 1 : index
    %c0_214 = arith.constant 0 : index
    %c0_215 = arith.constant 0 : index
    %389 = vector.load %arg12[%c1_213, %c0_214, %c0_215] : memref<2x3x256xf32, #tpu.memory_space<vmem>>, vector<1x3x256xf32>
    %390 = vector.shape_cast %389 : vector<1x3x256xf32> to vector<3x256xf32>
    %391 = vector.shape_cast %388 : vector<3x256xf32> to vector<1x3x256xf32>
    tpu.vector_store %arg12[%c1_213, %c0_214, %c0_215], %391 {strides = array<i32>} : memref<2x3x256xf32, #tpu.memory_space<vmem>>, vector<1x3x256xf32>,
    return
  }
  func.func @transform_0(%arg0: i32) -> (i32, i32, i32) {
    %c0_i32 = arith.constant 0 : i32
    %c0_i32_0 = arith.constant 0 : i32
    %c0_i32_1 = arith.constant 0 : i32
    return %arg0, %c0_i32, %c0_i32_0 : i32, i32, i32
  }
  func.func @transform_1(%arg0: i32) -> (i32, i32, i32) {
    %c0_i32 = arith.constant 0 : i32
    %c0_i32_0 = arith.constant 0 : i32
    %c0_i32_1 = arith.constant 0 : i32
    return %arg0, %c0_i32, %c0_i32_0 : i32, i32, i32
  }
  func.func @transform_2(%arg0: i32) -> (i32, i32) {
    %c0_i32 = arith.constant 0 : i32
    %c0_i32_0 = arith.constant 0 : i32
    %c0_i32_1 = arith.constant 0 : i32
    return %c0_i32, %c0_i32_0 : i32, i32
  }
  func.func @transform_3(%arg0: i32) -> (i32, i32) {
    %c0_i32 = arith.constant 0 : i32
    %c0_i32_0 = arith.constant 0 : i32
    %c0_i32_1 = arith.constant 0 : i32
    return %c0_i32, %c0_i32_0 : i32, i32
  }
  func.func @transform_4(%arg0: i32) -> (i32, i32) {
    %c0_i32 = arith.constant 0 : i32
    %c0_i32_0 = arith.constant 0 : i32
    %c0_i32_1 = arith.constant 0 : i32
    return %c0_i32, %c0_i32_0 : i32, i32
  }
  func.func @transform_5(%arg0: i32) -> (i32, i32) {
    %c0_i32 = arith.constant 0 : i32
    %c0_i32_0 = arith.constant 0 : i32
    %c0_i32_1 = arith.constant 0 : i32
    return %c0_i32, %c0_i32_0 : i32, i32
  }
  func.func @transform_6(%arg0: i32) -> (i32, i32) {
    %c0_i32 = arith.constant 0 : i32
    %c0_i32_0 = arith.constant 0 : i32
    %c0_i32_1 = arith.constant 0 : i32
    return %c0_i32, %c0_i32_0 : i32, i32
  }
  func.func @transform_7(%arg0: i32) -> (i32, i32) {
    %c0_i32 = arith.constant 0 : i32
    %c0_i32_0 = arith.constant 0 : i32
    %c0_i32_1 = arith.constant 0 : i32
    return %c0_i32, %c0_i32_0 : i32, i32
  }
  func.func @transform_8(%arg0: i32) -> (i32, i32) {
    %c0_i32 = arith.constant 0 : i32
    %c0_i32_0 = arith.constant 0 : i32
    %c0_i32_1 = arith.constant 0 : i32
    return %c0_i32, %c0_i32_0 : i32, i32
  }
  func.func @transform_9(%arg0: i32) -> (i32, i32) {
    %c0_i32 = arith.constant 0 : i32
    %c0_i32_0 = arith.constant 0 : i32
    %c0_i32_1 = arith.constant 0 : i32
    return %c0_i32, %c0_i32_0 : i32, i32
  }
  func.func @transform_10(%arg0: i32) -> (i32, i32) {
    %c0_i32 = arith.constant 0 : i32
    %c0_i32_0 = arith.constant 0 : i32
    %c0_i32_1 = arith.constant 0 : i32
    return %c0_i32, %c0_i32_0 : i32, i32
  }
  func.func @transform_11(%arg0: i32) -> (i32, i32, i32) {
    %c0_i32 = arith.constant 0 : i32
    %c0_i32_0 = arith.constant 0 : i32
    %c0_i32_1 = arith.constant 0 : i32
    return %arg0, %c0_i32, %c0_i32_0 : i32, i32, i32
  }
}

</mosaic_0001>

<llo_original>
// kernel: generator_forward.1
$region0: #{generator_forward.1}
  #allocation0 [shape = 'u32[]', space=smem, size = 0x4, offset = 0x4, fixed_abs, tag = 'smem constant byte address 0x4 - core index']
  #allocation1 [shape = 'u32[144,128]{1,0:T(1,128)}', space=vmem, size = 0x12000, scoped, tag = 'internal scratch']
  #allocation2 [shape = 'bf16[304,512]{1,0:T(8,128)(2,1)}', space=vmem, size = 0x4c000, scoped, tag = 'scratch operand']
  %s0 = inlined_call_operand.vmem [shape: f32[2,16,256], index: 0, kind: input, shape index: {}]
  %s1 = inlined_call_operand.vmem [shape: f32[2,16,256], index: 1, kind: input, shape index: {}]
  %s2 = inlined_call_operand.vmem [shape: f32[8,512], index: 2, kind: input, shape index: {}]
  %s3 = inlined_call_operand.vmem [shape: bf16[16,160], index: 3, kind: input, shape index: {}]
  %s4 = inlined_call_operand.vmem [shape: bf16[32,160], index: 4, kind: input, shape index: {}]
  %s5 = inlined_call_operand.vmem [shape: bf16[16,160], index: 5, kind: input, shape index: {}]
  %s6 = inlined_call_operand.vmem [shape: bf16[32,160], index: 6, kind: input, shape index: {}]
  %s7 = inlined_call_operand.vmem [shape: bf16[64,32], index: 7, kind: input, shape index: {}]
  %s8 = inlined_call_operand.vmem [shape: f32[64,1], index: 8, kind: input, shape index: {}]
  %s9 = inlined_call_operand.vmem [shape: bf16[16,304], index: 9, kind: input, shape index: {}]
  %s10 = inlined_call_operand.vmem [shape: bf16[3,160], index: 10, kind: input, shape index: {}]
  %s11 = inlined_call_operand.vmem [shape: f32[2,3,256], index: 11, kind: output, shape index: {}]
  %s12 = sld [smem:[#allocation0]]
  $region54: #{generator_forward.1} parent=0
    _
  %s14 = ssub.s32 1, %s12
  %s15 = scalar_select 0, %s14, %s12
  // Predicated region
  $region2: #{generator_forward.1} parent=0 // pred_check
    _
  $region3: #{generator_forward.1} parent=0 // pred_check_branch
    %17 = sbr.rel (0) target = $region5
  $region4: #{generator_forward.1} parent=0 // pred_region
    _
  $region5: #{generator_forward.1} parent=0 // pred_fallthru
    _
  // Predicated region
  $region6: #{generator_forward.1} parent=0 // pred_check
    _
  $region7: #{generator_forward.1} parent=0 // pred_check_branch
    %19 = sbr.rel (0) target = $region9
  $region8: #{generator_forward.1} parent=0 // pred_region
    _
  $region9: #{generator_forward.1} parent=0 // pred_fallthru
    _
  // Predicated region
  $region10: #{generator_forward.1} parent=0 // pred_check
    _
  $region11: #{generator_forward.1} parent=0 // pred_check_branch
    %21 = sbr.rel (0) target = $region13
  $region12: #{generator_forward.1} parent=0 // pred_region
    _
  $region13: #{generator_forward.1} parent=0 // pred_fallthru
    _
  // Predicated region
  $region14: #{generator_forward.1} parent=0 // pred_check
    _
  $region15: #{generator_forward.1} parent=0 // pred_check_branch
    %23 = sbr.rel (0) target = $region17
  $region16: #{generator_forward.1} parent=0 // pred_region
    _
  $region17: #{generator_forward.1} parent=0 // pred_fallthru
    _
  // Predicated region
  $region18: #{generator_forward.1} parent=0 // pred_check
    _
  $region19: #{generator_forward.1} parent=0 // pred_check_branch
    %25 = sbr.rel (0) target = $region21
  $region20: #{generator_forward.1} parent=0 // pred_region
    _
  $region21: #{generator_forward.1} parent=0 // pred_fallthru
    _
  // Predicated region
  $region22: #{generator_forward.1} parent=0 // pred_check
    _
  $region23: #{generator_forward.1} parent=0 // pred_check_branch
    %27 = sbr.rel (0) target = $region25
  $region24: #{generator_forward.1} parent=0 // pred_region
    _
  $region25: #{generator_forward.1} parent=0 // pred_fallthru
    _
  // Predicated region
  $region26: #{generator_forward.1} parent=0 // pred_check
    _
  $region27: #{generator_forward.1} parent=0 // pred_check_branch
    %29 = sbr.rel (0) target = $region29
  $region28: #{generator_forward.1} parent=0 // pred_region
    _
  $region29: #{generator_forward.1} parent=0 // pred_fallthru
    _
  // Predicated region
  $region30: #{generator_forward.1} parent=0 // pred_check
    _
  $region31: #{generator_forward.1} parent=0 // pred_check_branch
    %31 = sbr.rel (0) target = $region33
  $region32: #{generator_forward.1} parent=0 // pred_region
    _
  $region33: #{generator_forward.1} parent=0 // pred_fallthru
    _
  // Predicated region
  $region34: #{generator_forward.1} parent=0 // pred_check
    _
  $region35: #{generator_forward.1} parent=0 // pred_check_branch
    %33 = sbr.rel (0) target = $region37
  $region36: #{generator_forward.1} parent=0 // pred_region
    _
  $region37: #{generator_forward.1} parent=0 // pred_fallthru
    _
  // Predicated region
  $region38: #{generator_forward.1} parent=0 // pred_check
    _
  $region39: #{generator_forward.1} parent=0 // pred_check_branch
    %35 = sbr.rel (0) target = $region41
  $region40: #{generator_forward.1} parent=0 // pred_region
    _
  $region41: #{generator_forward.1} parent=0 // pred_fallthru
    _
  // Predicated region
  $region42: #{generator_forward.1} parent=0 // pred_check
    _
  $region43: #{generator_forward.1} parent=0 // pred_check_branch
    %37 = sbr.rel (0) target = $region45
  $region44: #{generator_forward.1} parent=0 // pred_region
    _
  $region45: #{generator_forward.1} parent=0 // pred_fallthru
    _
  %v39 = vld [vmem:[%s2] sm:$0xff]
  %v40 = vld [vmem:[%s2 + $0x8] sm:$0xff]
  %v41 = vld [vmem:[%s2 + $0x10] sm:$0xff]
  %v42 = vld [vmem:[%s2 + $0x18] sm:$0xff]
  %v43 = vlaneseq
  %v44 = vshrl.u32 %v43, 7
  %v45 = vadd.s32 %v44, 8
  %vm46 = vcmp.eq.s32.totalorder %v44, 0
  %vm47 = vcmp.eq.s32.totalorder %v45, 0
  %v48 = vsel %vm46, 1.0, 0.0
  %v49 = vsel %vm47, 1.0, 0.0
  %v50 = vpack.c.bf16 %v49, %v48
  %v53 = vunpack.c.l.s4 839922192
  %v54 = vunpack.c.0.s8 %v53
  %v55 = vlaneseq
  %v56 = vshrl.u32 %v55, 7
  %v57 = vsub.s32 %v54, %v56
  %v58 = vrot.slane %v50, %v57
  %v60 = vunpack.c.l.s4 1985246804
  %v61 = vunpack.c.0.s8 %v60
  %v62 = vlaneseq
  %v63 = vshrl.u32 %v62, 7
  %v64 = vsub.s32 %v61, %v63
  %v65 = vrot.slane %v50, %v64
  %68 = vst [vmem:[#allocation2] sm:$0xff] %v58
  %69 = vst [vmem:[#allocation2 + $0x8] sm:$0xff] %v58
  %70 = vst [vmem:[#allocation2 + $0x10] sm:$0xff] %v65
  %71 = vst [vmem:[#allocation2 + $0x18] sm:$0xff] %v65
  %v72 = vld [vmem:[%s0] sm:$0xff]
  %v73 = vld [vmem:[%s0 + $0x8] sm:$0xff]
  %v74 = vld [vmem:[%s0 + $0x10] sm:$0xff]
  %v75 = vld [vmem:[%s0 + $0x18] sm:$0xff]
  %s76 = scalar_lea.vmem %s0, 32
  %v77 = vld [vmem:[%s76] sm:$0xff]
  %v78 = vld [vmem:[%s76 + $0x8] sm:$0xff]
  %v79 = vld [vmem:[%s76 + $0x10] sm:$0xff]
  %v80 = vld [vmem:[%s76 + $0x18] sm:$0xff]
  %v81 = vld [vmem:[%s1] sm:$0xff]
  %v82 = vld [vmem:[%s1 + $0x8] sm:$0xff]
  %v83 = vld [vmem:[%s1 + $0x10] sm:$0xff]
  %v84 = vld [vmem:[%s1 + $0x18] sm:$0xff]
  %s85 = scalar_lea.vmem %s1, 32
  %v86 = vld [vmem:[%s85] sm:$0xff]
  %v87 = vld [vmem:[%s85 + $0x8] sm:$0xff]
  %v88 = vld [vmem:[%s85 + $0x10] sm:$0xff]
  %v89 = vld [vmem:[%s85 + $0x18] sm:$0xff]
  %90 = vrot.lane.b32.xlu0 %v72, 17
  %v91 = vpop.permute.xlu0 %90
  %92 = vrot.lane.b32.xlu0 %v74, 17
  %v93 = vpop.permute.xlu0 %92
  %94 = vrot.lane.b32.xlu0 %v73, 17
  %v95 = vpop.permute.xlu0 %94
  %96 = vrot.lane.b32.xlu0 %v75, 17
  %v97 = vpop.permute.xlu0 %96
  %98 = vrot.lane.b32.xlu0 %v77, 17
  %v99 = vpop.permute.xlu0 %98
  %100 = vrot.lane.b32.xlu0 %v79, 17
  %v101 = vpop.permute.xlu0 %100
  %102 = vrot.lane.b32.xlu0 %v78, 17
  %v103 = vpop.permute.xlu0 %102
  %104 = vrot.lane.b32.xlu0 %v80, 17
  %v105 = vpop.permute.xlu0 %104
  %v106 = vlaneseq
  %v107 = vand.u32 %v106, 127
  %vm108 = vcmp.lt.s32.totalorder %v107, 17
  %v109 = vsel %vm108, %v99, %v103
  %v110 = vsel %vm108, %v101, %v105
  %v111 = vsel %vm108, %v95, %v99
  %v112 = vsel %vm108, %v97, %v101
  %v113 = vsel %vm108, %v91, %v95
  %v114 = vsel %vm108, %v93, %v97
  %v115 = vsel %vm108, %v103, %v91
  %v116 = vsel %vm108, %v105, %v93
  %v117 = vlaneseq
  %v118 = vshrl.u32 %v117, 7
  %v119 = vsub.s32 0, %v118
  %v120 = vrot.slane %v39, %v119
  %v121 = vlaneseq
  %v122 = vshrl.u32 %v121, 7
  %v123 = vsub.s32 0, %v122
  %v124 = vrot.slane %v40, %v123
  %v125 = vlaneseq
  %v126 = vshrl.u32 %v125, 7
  %v127 = vsub.s32 0, %v126
  %v128 = vrot.slane %v41, %v127
  %v129 = vlaneseq
  %v130 = vshrl.u32 %v129, 7
  %v131 = vsub.s32 0, %v130
  %v132 = vrot.slane %v42, %v131
  %v133 = vmul.f32 %v115, %v120
  %v134 = vmul.f32 %v113, %v124
  %v135 = vmul.f32 %v111, %v128
  %v136 = vmul.f32 %v109, %v132
  %v137 = vmul.f32 %v116, %v120
  %v138 = vmul.f32 %v114, %v124
  %v139 = vmul.f32 %v112, %v128
  %v140 = vmul.f32 %v110, %v132
  %v141 = vpack.c.bf16 %v137, %v133
  %v142 = vpack.c.bf16 %v138, %v134
  %v143 = vpack.c.bf16 %v139, %v135
  %v144 = vpack.c.bf16 %v140, %v136
  %v149 = vunpack.c.l.b16 %v141
  %v150 = vunpack.c.l.b16 %v142
  %v151 = vunpack.c.l.b16 %v143
  %v152 = vunpack.c.l.b16 %v144
  %v153 = vunpack.c.h.b16 %v141
  %v154 = vunpack.c.h.b16 %v142
  %v155 = vunpack.c.h.b16 %v143
  %v156 = vunpack.c.h.b16 %v144
  %v157 = vpack.c.b16 %v150, %v149
  %v158 = vpack.c.b16 %v152, %v151
  %v159 = vpack.c.b16 %v154, %v153
  %v160 = vpack.c.b16 %v156, %v155
  %165 = vst [vmem:[#allocation2 + $0x20] sm:$0xff] %v157
  %166 = vst [vmem:[#allocation2 + $0x28] sm:$0xff] %v158
  %167 = vst [vmem:[#allocation2 + $0x30] sm:$0xff] %v159
  %168 = vst [vmem:[#allocation2 + $0x38] sm:$0xff] %v160
  %169 = vrot.lane.b32.xlu0 %v72, 16
  %v170 = vpop.permute.xlu0 %169
  %171 = vrot.lane.b32.xlu0 %v74, 16
  %v172 = vpop.permute.xlu0 %171
  %173 = vrot.lane.b32.xlu0 %v73, 16
  %v174 = vpop.permute.xlu0 %173
  %175 = vrot.lane.b32.xlu0 %v75, 16
  %v176 = vpop.permute.xlu0 %175
  %177 = vrot.lane.b32.xlu0 %v77, 16
  %v178 = vpop.permute.xlu0 %177
  %179 = vrot.lane.b32.xlu0 %v79, 16
  %v180 = vpop.permute.xlu0 %179
  %181 = vrot.lane.b32.xlu0 %v78, 16
  %v182 = vpop.permute.xlu0 %181
  %183 = vrot.lane.b32.xlu0 %v80, 16
  %v184 = vpop.permute.xlu0 %183
  %vm185 = vcmp.lt.s32.totalorder %v107, 16
  %v186 = vsel %vm185, %v178, %v182
  %v187 = vsel %vm185, %v180, %v184
  %v188 = vsel %vm185, %v174, %v178
  %v189 = vsel %vm185, %v176, %v180
  %v190 = vsel %vm185, %v170, %v174
  %v191 = vsel %vm185, %v172, %v176
  %v192 = vsel %vm185, %v182, %v170
  %v193 = vsel %vm185, %v184, %v172
  %v194 = vlaneseq
  %v195 = vshrl.u32 %v194, 7
  %v196 = vsub.s32 1, %v195
  %v197 = vrot.slane %v39, %v196
  %v198 = vlaneseq
  %v199 = vshrl.u32 %v198, 7
  %v200 = vsub.s32 1, %v199
  %v201 = vrot.slane %v40, %v200
  %v202 = vlaneseq
  %v203 = vshrl.u32 %v202, 7
  %v204 = vsub.s32 1, %v203
  %v205 = vrot.slane %v41, %v204
  %v206 = vlaneseq
  %v207 = vshrl.u32 %v206, 7
  %v208 = vsub.s32 1, %v207
  %v209 = vrot.slane %v42, %v208
  %v210 = vmul.f32 %v192, %v197
  %v211 = vmul.f32 %v190, %v201
  %v212 = vmul.f32 %v188, %v205
  %v213 = vmul.f32 %v186, %v209
  %v214 = vmul.f32 %v193, %v197
  %v215 = vmul.f32 %v191, %v201
  %v216 = vmul.f32 %v189, %v205
  %v217 = vmul.f32 %v187, %v209
  %v218 = vpack.c.bf16 %v214, %v210
  %v219 = vpack.c.bf16 %v215, %v211
  %v220 = vpack.c.bf16 %v216, %v212
  %v221 = vpack.c.bf16 %v217, %v213
  %v226 = vunpack.c.l.b16 %v218
  %v227 = vunpack.c.l.b16 %v219
  %v228 = vunpack.c.l.b16 %v220
  %v229 = vunpack.c.l.b16 %v221
  %v230 = vunpack.c.h.b16 %v218
  %v231 = vunpack.c.h.b16 %v219
  %v232 = vunpack.c.h.b16 %v220
  %v233 = vunpack.c.h.b16 %v221
  %v234 = vpack.c.b16 %v227, %v226
  %v235 = vpack.c.b16 %v229, %v228
  %v236 = vpack.c.b16 %v231, %v230
  %v237 = vpack.c.b16 %v233, %v232
  %242 = vst [vmem:[#allocation2 + $0x40] sm:$0xff] %v234
  %243 = vst [vmem:[#allocation2 + $0x48] sm:$0xff] %v235
  %244 = vst [vmem:[#allocation2 + $0x50] sm:$0xff] %v236
  %245 = vst [vmem:[#allocation2 + $0x58] sm:$0xff] %v237
  %246 = vrot.lane.b32.xlu0 %v72, 15
  %v247 = vpop.permute.xlu0 %246
  %248 = vrot.lane.b32.xlu0 %v74, 15
  %v249 = vpop.permute.xlu0 %248
  %250 = vrot.lane.b32.xlu0 %v73, 15
  %v251 = vpop.permute.xlu0 %250
  %252 = vrot.lane.b32.xlu0 %v75, 15
  %v253 = vpop.permute.xlu0 %252
  %254 = vrot.lane.b32.xlu0 %v77, 15
  %v255 = vpop.permute.xlu0 %254
  %256 = vrot.lane.b32.xlu0 %v79, 15
  %v257 = vpop.permute.xlu0 %256
  %258 = vrot.lane.b32.xlu0 %v78, 15
  %v259 = vpop.permute.xlu0 %258
  %260 = vrot.lane.b32.xlu0 %v80, 15
  %v261 = vpop.permute.xlu0 %260
  %vm262 = vcmp.lt.s32.totalorder %v107, 15
  %v263 = vsel %vm262, %v255, %v259
  %v264 = vsel %vm262, %v257, %v261
  %v265 = vsel %vm262, %v251, %v255
  %v266 = vsel %vm262, %v253, %v257
  %v267 = vsel %vm262, %v247, %v251
  %v268 = vsel %vm262, %v249, %v253
  %v269 = vsel %vm262, %v259, %v247
  %v270 = vsel %vm262, %v261, %v249
  %v271 = vlaneseq
  %v272 = vshrl.u32 %v271, 7
  %v273 = vsub.s32 2, %v272
  %v274 = vrot.slane %v39, %v273
  %v275 = vlaneseq
  %v276 = vshrl.u32 %v275, 7
  %v277 = vsub.s32 2, %v276
  %v278 = vrot.slane %v40, %v277
  %v279 = vlaneseq
  %v280 = vshrl.u32 %v279, 7
  %v281 = vsub.s32 2, %v280
  %v282 = vrot.slane %v41, %v281
  %v283 = vlaneseq
  %v284 = vshrl.u32 %v283, 7
  %v285 = vsub.s32 2, %v284
  %v286 = vrot.slane %v42, %v285
  %v287 = vmul.f32 %v269, %v274
  %v288 = vmul.f32 %v267, %v278
  %v289 = vmul.f32 %v265, %v282
  %v290 = vmul.f32 %v263, %v286
  %v291 = vmul.f32 %v270, %v274
  %v292 = vmul.f32 %v268, %v278
  %v293 = vmul.f32 %v266, %v282
  %v294 = vmul.f32 %v264, %v286
  %v295 = vpack.c.bf16 %v291, %v287
  %v296 = vpack.c.bf16 %v292, %v288
  %v297 = vpack.c.bf16 %v293, %v289
  %v298 = vpack.c.bf16 %v294, %v290
  %v303 = vunpack.c.l.b16 %v295
  %v304 = vunpack.c.l.b16 %v296
  %v305 = vunpack.c.l.b16 %v297
  %v306 = vunpack.c.l.b16 %v298
  %v307 = vunpack.c.h.b16 %v295
  %v308 = vunpack.c.h.b16 %v296
  %v309 = vunpack.c.h.b16 %v297
  %v310 = vunpack.c.h.b16 %v298
  %v311 = vpack.c.b16 %v304, %v303
  %v312 = vpack.c.b16 %v306, %v305
  %v313 = vpack.c.b16 %v308, %v307
  %v314 = vpack.c.b16 %v310, %v309
  %319 = vst [vmem:[#allocation2 + $0x60] sm:$0xff] %v311
  %320 = vst [vmem:[#allocation2 + $0x68] sm:$0xff] %v312
  %321 = vst [vmem:[#allocation2 + $0x70] sm:$0xff] %v313
  %322 = vst [vmem:[#allocation2 + $0x78] sm:$0xff] %v314
  %323 = vrot.lane.b32.xlu0 %v72, 1
  %v324 = vpop.permute.xlu0 %323
  %325 = vrot.lane.b32.xlu0 %v74, 1
  %v326 = vpop.permute.xlu0 %325
  %327 = vrot.lane.b32.xlu0 %v73, 1
  %v328 = vpop.permute.xlu0 %327
  %329 = vrot.lane.b32.xlu0 %v75, 1
  %v330 = vpop.permute.xlu0 %329
  %331 = vrot.lane.b32.xlu0 %v77, 1
  %v332 = vpop.permute.xlu0 %331
  %333 = vrot.lane.b32.xlu0 %v79, 1
  %v334 = vpop.permute.xlu0 %333
  %335 = vrot.lane.b32.xlu0 %v78, 1
  %v336 = vpop.permute.xlu0 %335
  %337 = vrot.lane.b32.xlu0 %v80, 1
  %v338 = vpop.permute.xlu0 %337
  %vm339 = vcmp.lt.s32.totalorder %v107, 1
  %v340 = vsel %vm339, %v332, %v336
  %v341 = vsel %vm339, %v334, %v338
  %v342 = vsel %vm339, %v328, %v332
  %v343 = vsel %vm339, %v330, %v334
  %v344 = vsel %vm339, %v324, %v328
  %v345 = vsel %vm339, %v326, %v330
  %v346 = vsel %vm339, %v336, %v324
  %v347 = vsel %vm339, %v338, %v326
  %v348 = vlaneseq
  %v349 = vshrl.u32 %v348, 7
  %v350 = vsub.s32 3, %v349
  %v351 = vrot.slane %v39, %v350
  %v352 = vlaneseq
  %v353 = vshrl.u32 %v352, 7
  %v354 = vsub.s32 3, %v353
  %v355 = vrot.slane %v40, %v354
  %v356 = vlaneseq
  %v357 = vshrl.u32 %v356, 7
  %v358 = vsub.s32 3, %v357
  %v359 = vrot.slane %v41, %v358
  %v360 = vlaneseq
  %v361 = vshrl.u32 %v360, 7
  %v362 = vsub.s32 3, %v361
  %v363 = vrot.slane %v42, %v362
  %v364 = vmul.f32 %v346, %v351
  %v365 = vmul.f32 %v344, %v355
  %v366 = vmul.f32 %v342, %v359
  %v367 = vmul.f32 %v340, %v363
  %v368 = vmul.f32 %v347, %v351
  %v369 = vmul.f32 %v345, %v355
  %v370 = vmul.f32 %v343, %v359
  %v371 = vmul.f32 %v341, %v363
  %v372 = vpack.c.bf16 %v368, %v364
  %v373 = vpack.c.bf16 %v369, %v365
  %v374 = vpack.c.bf16 %v370, %v366
  %v375 = vpack.c.bf16 %v371, %v367
  %v380 = vunpack.c.l.b16 %v372
  %v381 = vunpack.c.l.b16 %v373
  %v382 = vunpack.c.l.b16 %v374
  %v383 = vunpack.c.l.b16 %v375
  %v384 = vunpack.c.h.b16 %v372
  %v385 = vunpack.c.h.b16 %v373
  %v386 = vunpack.c.h.b16 %v374
  %v387 = vunpack.c.h.b16 %v375
  %v388 = vpack.c.b16 %v381, %v380
  %v389 = vpack.c.b16 %v383, %v382
  %v390 = vpack.c.b16 %v385, %v384
  %v391 = vpack.c.b16 %v387, %v386
  %396 = vst [vmem:[#allocation2 + $0x80] sm:$0xff] %v388
  %397 = vst [vmem:[#allocation2 + $0x88] sm:$0xff] %v389
  %398 = vst [vmem:[#allocation2 + $0x90] sm:$0xff] %v390
  %399 = vst [vmem:[#allocation2 + $0x98] sm:$0xff] %v391
  %v400 = vpack.c.bf16 %v74, %v72
  %v401 = vpack.c.bf16 %v75, %v73
  %v402 = vpack.c.bf16 %v79, %v77
  %v403 = vpack.c.bf16 %v80, %v78
  %v408 = vunpack.c.l.b16 %v400
  %v409 = vunpack.c.l.b16 %v401
  %v410 = vunpack.c.l.b16 %v402
  %v411 = vunpack.c.l.b16 %v403
  %v412 = vunpack.c.h.b16 %v400
  %v413 = vunpack.c.h.b16 %v401
  %v414 = vunpack.c.h.b16 %v402
  %v415 = vunpack.c.h.b16 %v403
  %v416 = vpack.c.b16 %v409, %v408
  %v417 = vpack.c.b16 %v411, %v410
  %v418 = vpack.c.b16 %v413, %v412
  %v419 = vpack.c.b16 %v415, %v414
  %424 = vst [vmem:[#allocation2 + $0xa0] sm:$0xff] %v416
  %425 = vst [vmem:[#allocation2 + $0xa8] sm:$0xff] %v417
  %426 = vst [vmem:[#allocation2 + $0xb0] sm:$0xff] %v418
  %427 = vst [vmem:[#allocation2 + $0xb8] sm:$0xff] %v419
  %428 = vrot.lane.b32.xlu0 %v72, 127
  %v429 = vpop.permute.xlu0 %428
  %430 = vrot.lane.b32.xlu0 %v74, 127
  %v431 = vpop.permute.xlu0 %430
  %432 = vrot.lane.b32.xlu0 %v73, 127
  %v433 = vpop.permute.xlu0 %432
  %434 = vrot.lane.b32.xlu0 %v75, 127
  %v435 = vpop.permute.xlu0 %434
  %436 = vrot.lane.b32.xlu0 %v77, 127
  %v437 = vpop.permute.xlu0 %436
  %438 = vrot.lane.b32.xlu0 %v79, 127
  %v439 = vpop.permute.xlu0 %438
  %440 = vrot.lane.b32.xlu0 %v78, 127
  %v441 = vpop.permute.xlu0 %440
  %442 = vrot.lane.b32.xlu0 %v80, 127
  %v443 = vpop.permute.xlu0 %442
  %vm444 = vcmp.lt.s32.totalorder %v107, 127
  %v445 = vsel %vm444, %v437, %v441
  %v446 = vsel %vm444, %v439, %v443
  %v447 = vsel %vm444, %v433, %v437
  %v448 = vsel %vm444, %v435, %v439
  %v449 = vsel %vm444, %v429, %v433
  %v450 = vsel %vm444, %v431, %v435
  %v451 = vsel %vm444, %v441, %v429
  %v452 = vsel %vm444, %v443, %v431
  %v453 = vlaneseq
  %v454 = vshrl.u32 %v453, 7
  %v455 = vsub.s32 4, %v454
  %v456 = vrot.slane %v39, %v455
  %v457 = vlaneseq
  %v458 = vshrl.u32 %v457, 7
  %v459 = vsub.s32 4, %v458
  %v460 = vrot.slane %v40, %v459
  %v461 = vlaneseq
  %v462 = vshrl.u32 %v461, 7
  %v463 = vsub.s32 4, %v462
  %v464 = vrot.slane %v41, %v463
  %v465 = vlaneseq
  %v466 = vshrl.u32 %v465, 7
  %v467 = vsub.s32 4, %v466
  %v468 = vrot.slane %v42, %v467
  %v469 = vmul.f32 %v449, %v456
  %v470 = vmul.f32 %v447, %v460
  %v471 = vmul.f32 %v445, %v464
  %v472 = vmul.f32 %v451, %v468
  %v473 = vmul.f32 %v450, %v456
  %v474 = vmul.f32 %v448, %v460
  %v475 = vmul.f32 %v446, %v464
  %v476 = vmul.f32 %v452, %v468
  %v477 = vpack.c.bf16 %v473, %v469
  %v478 = vpack.c.bf16 %v474, %v470
  %v479 = vpack.c.bf16 %v475, %v471
  %v480 = vpack.c.bf16 %v476, %v472
  %v485 = vunpack.c.l.b16 %v477
  %v486 = vunpack.c.l.b16 %v478
  %v487 = vunpack.c.l.b16 %v479
  %v488 = vunpack.c.l.b16 %v480
  %v489 = vunpack.c.h.b16 %v477
  %v490 = vunpack.c.h.b16 %v478
  %v491 = vunpack.c.h.b16 %v479
  %v492 = vunpack.c.h.b16 %v480
  %v493 = vpack.c.b16 %v486, %v485
  %v494 = vpack.c.b16 %v488, %v487
  %v495 = vpack.c.b16 %v490, %v489
  %v496 = vpack.c.b16 %v492, %v491
  %501 = vst [vmem:[#allocation2 + $0xc0] sm:$0xff] %v493
  %502 = vst [vmem:[#allocation2 + $0xc8] sm:$0xff] %v494
  %503 = vst [vmem:[#allocation2 + $0xd0] sm:$0xff] %v495
  %504 = vst [vmem:[#allocation2 + $0xd8] sm:$0xff] %v496
  %505 = vrot.lane.b32.xlu0 %v72, 113
  %v506 = vpop.permute.xlu0 %505
  %507 = vrot.lane.b32.xlu0 %v74, 113
  %v508 = vpop.permute.xlu0 %507
  %509 = vrot.lane.b32.xlu0 %v73, 113
  %v510 = vpop.permute.xlu0 %509
  %511 = vrot.lane.b32.xlu0 %v75, 113
  %v512 = vpop.permute.xlu0 %511
  %513 = vrot.lane.b32.xlu0 %v77, 113
  %v514 = vpop.permute.xlu0 %513
  %515 = vrot.lane.b32.xlu0 %v79, 113
  %v516 = vpop.permute.xlu0 %515
  %517 = vrot.lane.b32.xlu0 %v78, 113
  %v518 = vpop.permute.xlu0 %517
  %519 = vrot.lane.b32.xlu0 %v80, 113
  %v520 = vpop.permute.xlu0 %519
  %vm521 = vcmp.lt.s32.totalorder %v107, 113
  %v522 = vsel %vm521, %v514, %v518
  %v523 = vsel %vm521, %v516, %v520
  %v524 = vsel %vm521, %v510, %v514
  %v525 = vsel %vm521, %v512, %v516
  %v526 = vsel %vm521, %v506, %v510
  %v527 = vsel %vm521, %v508, %v512
  %v528 = vsel %vm521, %v518, %v506
  %v529 = vsel %vm521, %v520, %v508
  %v530 = vlaneseq
  %v531 = vshrl.u32 %v530, 7
  %v532 = vsub.s32 5, %v531
  %v533 = vrot.slane %v39, %v532
  %v534 = vlaneseq
  %v535 = vshrl.u32 %v534, 7
  %v536 = vsub.s32 5, %v535
  %v537 = vrot.slane %v40, %v536
  %v538 = vlaneseq
  %v539 = vshrl.u32 %v538, 7
  %v540 = vsub.s32 5, %v539
  %v541 = vrot.slane %v41, %v540
  %v542 = vlaneseq
  %v543 = vshrl.u32 %v542, 7
  %v544 = vsub.s32 5, %v543
  %v545 = vrot.slane %v42, %v544
  %v546 = vmul.f32 %v526, %v533
  %v547 = vmul.f32 %v524, %v537
  %v548 = vmul.f32 %v522, %v541
  %v549 = vmul.f32 %v528, %v545
  %v550 = vmul.f32 %v527, %v533
  %v551 = vmul.f32 %v525, %v537
  %v552 = vmul.f32 %v523, %v541
  %v553 = vmul.f32 %v529, %v545
  %v554 = vpack.c.bf16 %v550, %v546
  %v555 = vpack.c.bf16 %v551, %v547
  %v556 = vpack.c.bf16 %v552, %v548
  %v557 = vpack.c.bf16 %v553, %v549
  %v562 = vunpack.c.l.b16 %v554
  %v563 = vunpack.c.l.b16 %v555
  %v564 = vunpack.c.l.b16 %v556
  %v565 = vunpack.c.l.b16 %v557
  %v566 = vunpack.c.h.b16 %v554
  %v567 = vunpack.c.h.b16 %v555
  %v568 = vunpack.c.h.b16 %v556
  %v569 = vunpack.c.h.b16 %v557
  %v570 = vpack.c.b16 %v563, %v562
  %v571 = vpack.c.b16 %v565, %v564
  %v572 = vpack.c.b16 %v567, %v566
  %v573 = vpack.c.b16 %v569, %v568
  %578 = vst [vmem:[#allocation2 + $0xe0] sm:$0xff] %v570
  %579 = vst [vmem:[#allocation2 + $0xe8] sm:$0xff] %v571
  %580 = vst [vmem:[#allocation2 + $0xf0] sm:$0xff] %v572
  %581 = vst [vmem:[#allocation2 + $0xf8] sm:$0xff] %v573
  %582 = vrot.lane.b32.xlu0 %v72, 112
  %v583 = vpop.permute.xlu0 %582
  %584 = vrot.lane.b32.xlu0 %v74, 112
  %v585 = vpop.permute.xlu0 %584
  %586 = vrot.lane.b32.xlu0 %v73, 112
  %v587 = vpop.permute.xlu0 %586
  %588 = vrot.lane.b32.xlu0 %v75, 112
  %v589 = vpop.permute.xlu0 %588
  %590 = vrot.lane.b32.xlu0 %v77, 112
  %v591 = vpop.permute.xlu0 %590
  %592 = vrot.lane.b32.xlu0 %v79, 112
  %v593 = vpop.permute.xlu0 %592
  %594 = vrot.lane.b32.xlu0 %v78, 112
  %v595 = vpop.permute.xlu0 %594
  %596 = vrot.lane.b32.xlu0 %v80, 112
  %v597 = vpop.permute.xlu0 %596
  %vm598 = vcmp.lt.s32.totalorder %v107, 112
  %v599 = vsel %vm598, %v591, %v595
  %v600 = vsel %vm598, %v593, %v597
  %v601 = vsel %vm598, %v587, %v591
  %v602 = vsel %vm598, %v589, %v593
  %v603 = vsel %vm598, %v583, %v587
  %v604 = vsel %vm598, %v585, %v589
  %v605 = vsel %vm598, %v595, %v583
  %v606 = vsel %vm598, %v597, %v585
  %v607 = vlaneseq
  %v608 = vshrl.u32 %v607, 7
  %v609 = vsub.s32 6, %v608
  %v610 = vrot.slane %v39, %v609
  %v611 = vlaneseq
  %v612 = vshrl.u32 %v611, 7
  %v613 = vsub.s32 6, %v612
  %v614 = vrot.slane %v40, %v613
  %v615 = vlaneseq
  %v616 = vshrl.u32 %v615, 7
  %v617 = vsub.s32 6, %v616
  %v618 = vrot.slane %v41, %v617
  %v619 = vlaneseq
  %v620 = vshrl.u32 %v619, 7
  %v621 = vsub.s32 6, %v620
  %v622 = vrot.slane %v42, %v621
  %v623 = vmul.f32 %v603, %v610
  %v624 = vmul.f32 %v601, %v614
  %v625 = vmul.f32 %v599, %v618
  %v626 = vmul.f32 %v605, %v622
  %v627 = vmul.f32 %v604, %v610
  %v628 = vmul.f32 %v602, %v614
  %v629 = vmul.f32 %v600, %v618
  %v630 = vmul.f32 %v606, %v622
  %v631 = vpack.c.bf16 %v627, %v623
  %v632 = vpack.c.bf16 %v628, %v624
  %v633 = vpack.c.bf16 %v629, %v625
  %v634 = vpack.c.bf16 %v630, %v626
  %v639 = vunpack.c.l.b16 %v631
  %v640 = vunpack.c.l.b16 %v632
  %v641 = vunpack.c.l.b16 %v633
  %v642 = vunpack.c.l.b16 %v634
  %v643 = vunpack.c.h.b16 %v631
  %v644 = vunpack.c.h.b16 %v632
  %v645 = vunpack.c.h.b16 %v633
  %v646 = vunpack.c.h.b16 %v634
  %v647 = vpack.c.b16 %v640, %v639
  %v648 = vpack.c.b16 %v642, %v641
  %v649 = vpack.c.b16 %v644, %v643
  %v650 = vpack.c.b16 %v646, %v645
  %655 = vst [vmem:[#allocation2 + $0x100] sm:$0xff] %v647
  %656 = vst [vmem:[#allocation2 + $0x108] sm:$0xff] %v648
  %657 = vst [vmem:[#allocation2 + $0x110] sm:$0xff] %v649
  %658 = vst [vmem:[#allocation2 + $0x118] sm:$0xff] %v650
  %659 = vrot.lane.b32.xlu0 %v72, 111
  %v660 = vpop.permute.xlu0 %659
  %661 = vrot.lane.b32.xlu0 %v74, 111
  %v662 = vpop.permute.xlu0 %661
  %663 = vrot.lane.b32.xlu0 %v73, 111
  %v664 = vpop.permute.xlu0 %663
  %665 = vrot.lane.b32.xlu0 %v75, 111
  %v666 = vpop.permute.xlu0 %665
  %667 = vrot.lane.b32.xlu0 %v77, 111
  %v668 = vpop.permute.xlu0 %667
  %669 = vrot.lane.b32.xlu0 %v79, 111
  %v670 = vpop.permute.xlu0 %669
  %671 = vrot.lane.b32.xlu0 %v78, 111
  %v672 = vpop.permute.xlu0 %671
  %673 = vrot.lane.b32.xlu0 %v80, 111
  %v674 = vpop.permute.xlu0 %673
  %vm675 = vcmp.lt.s32.totalorder %v107, 111
  %v676 = vsel %vm675, %v668, %v672
  %v677 = vsel %vm675, %v670, %v674
  %v678 = vsel %vm675, %v664, %v668
  %v679 = vsel %vm675, %v666, %v670
  %v680 = vsel %vm675, %v660, %v664
  %v681 = vsel %vm675, %v662, %v666
  %v682 = vsel %vm675, %v672, %v660
  %v683 = vsel %vm675, %v674, %v662
  %v684 = vlaneseq
  %v685 = vshrl.u32 %v684, 7
  %v686 = vsub.s32 7, %v685
  %v687 = vrot.slane %v39, %v686
  %v688 = vlaneseq
  %v689 = vshrl.u32 %v688, 7
  %v690 = vsub.s32 7, %v689
  %v691 = vrot.slane %v40, %v690
  %v692 = vlaneseq
  %v693 = vshrl.u32 %v692, 7
  %v694 = vsub.s32 7, %v693
  %v695 = vrot.slane %v41, %v694
  %v696 = vlaneseq
  %v697 = vshrl.u32 %v696, 7
  %v698 = vsub.s32 7, %v697
  %v699 = vrot.slane %v42, %v698
  %v700 = vmul.f32 %v680, %v687
  %v701 = vmul.f32 %v678, %v691
  %v702 = vmul.f32 %v676, %v695
  %v703 = vmul.f32 %v682, %v699
  %v704 = vmul.f32 %v681, %v687
  %v705 = vmul.f32 %v679, %v691
  %v706 = vmul.f32 %v677, %v695
  %v707 = vmul.f32 %v683, %v699
  %v708 = vpack.c.bf16 %v704, %v700
  %v709 = vpack.c.bf16 %v705, %v701
  %v710 = vpack.c.bf16 %v706, %v702
  %v711 = vpack.c.bf16 %v707, %v703
  %v716 = vunpack.c.l.b16 %v708
  %v717 = vunpack.c.l.b16 %v709
  %v718 = vunpack.c.l.b16 %v710
  %v719 = vunpack.c.l.b16 %v711
  %v720 = vunpack.c.h.b16 %v708
  %v721 = vunpack.c.h.b16 %v709
  %v722 = vunpack.c.h.b16 %v710
  %v723 = vunpack.c.h.b16 %v711
  %v724 = vpack.c.b16 %v717, %v716
  %v725 = vpack.c.b16 %v719, %v718
  %v726 = vpack.c.b16 %v721, %v720
  %v727 = vpack.c.b16 %v723, %v722
  %732 = vst [vmem:[#allocation2 + $0x120] sm:$0xff] %v724
  %733 = vst [vmem:[#allocation2 + $0x128] sm:$0xff] %v725
  %734 = vst [vmem:[#allocation2 + $0x130] sm:$0xff] %v726
  %735 = vst [vmem:[#allocation2 + $0x138] sm:$0xff] %v727
  %v736 = vld [vmem:[%s3] sm:$0xff]
  %v737 = vld [vmem:[%s3 + $0x8] sm:$0xff]
  %v738 = vld [vmem:[#allocation2] sm:$0xff]
  %v739 = vld [vmem:[#allocation2 + $0x8] sm:$0xff]
  %v740 = vld [vmem:[#allocation2 + $0x10] sm:$0xff]
  %v741 = vld [vmem:[#allocation2 + $0x18] sm:$0xff]
  %v742 = vld [vmem:[#allocation2 + $0x20] sm:$0xff]
  %v743 = vld [vmem:[#allocation2 + $0x28] sm:$0xff]
  %v744 = vld [vmem:[#allocation2 + $0x30] sm:$0xff]
  %v745 = vld [vmem:[#allocation2 + $0x38] sm:$0xff]
  %v746 = vld [vmem:[#allocation2 + $0x40] sm:$0xff]
  %v747 = vld [vmem:[#allocation2 + $0x48] sm:$0xff]
  %v748 = vld [vmem:[#allocation2 + $0x50] sm:$0xff]
  %v749 = vld [vmem:[#allocation2 + $0x58] sm:$0xff]
  %v750 = vld [vmem:[#allocation2 + $0x60] sm:$0xff]
  %v751 = vld [vmem:[#allocation2 + $0x68] sm:$0xff]
  %v752 = vld [vmem:[#allocation2 + $0x70] sm:$0xff]
  %v753 = vld [vmem:[#allocation2 + $0x78] sm:$0xff]
  %v754 = vld [vmem:[#allocation2 + $0x80] sm:$0xff]
  %v755 = vld [vmem:[#allocation2 + $0x88] sm:$0xff]
  %v756 = vld [vmem:[#allocation2 + $0x90] sm:$0xff]
  %v757 = vld [vmem:[#allocation2 + $0x98] sm:$0xff]
  %v758 = vld [vmem:[#allocation2 + $0xa0] sm:$0xff]
  %v759 = vld [vmem:[#allocation2 + $0xa8] sm:$0xff]
  %v760 = vld [vmem:[#allocation2 + $0xb0] sm:$0xff]
  %v761 = vld [vmem:[#allocation2 + $0xb8] sm:$0xff]
  %v762 = vld [vmem:[#allocation2 + $0xc0] sm:$0xff]
  %v763 = vld [vmem:[#allocation2 + $0xc8] sm:$0xff]
  %v764 = vld [vmem:[#allocation2 + $0xd0] sm:$0xff]
  %v765 = vld [vmem:[#allocation2 + $0xd8] sm:$0xff]
  %v766 = vld [vmem:[#allocation2 + $0xe0] sm:$0xff]
  %v767 = vld [vmem:[#allocation2 + $0xe8] sm:$0xff]
  %v768 = vld [vmem:[#allocation2 + $0xf0] sm:$0xff]
  %v769 = vld [vmem:[#allocation2 + $0xf8] sm:$0xff]
  %v770 = vld [vmem:[#allocation2 + $0x100] sm:$0xff]
  %v771 = vld [vmem:[#allocation2 + $0x108] sm:$0xff]
  %v772 = vld [vmem:[#allocation2 + $0x110] sm:$0xff]
  %v773 = vld [vmem:[#allocation2 + $0x118] sm:$0xff]
  %v774 = vld [vmem:[#allocation2 + $0x120] sm:$0xff]
  %v775 = vld [vmem:[#allocation2 + $0x128] sm:$0xff]
  %v776 = vld [vmem:[#allocation2 + $0x130] sm:$0xff]
  %v777 = vld [vmem:[#allocation2 + $0x138] sm:$0xff]
  %v780 = vunpack.c.l.b16 %v736
  %v781 = vunpack.c.h.b16 %v736
  %v782 = vunpack.c.l.b16 %v737
  %v783 = vunpack.c.h.b16 %v737
  %v784 = vpack.c.b16 %v782, %v780
  %v785 = vpack.c.b16 %v783, %v781
  %v827 = vunpack.c.l.b16 %v738
  %v828 = vunpack.c.h.b16 %v738
  %v829 = vunpack.c.l.b16 %v739
  %v830 = vunpack.c.h.b16 %v739
  %v831 = vunpack.c.l.b16 %v740
  %v832 = vunpack.c.h.b16 %v740
  %v833 = vunpack.c.l.b16 %v741
  %v834 = vunpack.c.h.b16 %v741
  %v835 = vunpack.c.l.b16 %v742
  %v836 = vunpack.c.h.b16 %v742
  %v837 = vunpack.c.l.b16 %v743
  %v838 = vunpack.c.h.b16 %v743
  %v839 = vunpack.c.l.b16 %v744
  %v840 = vunpack.c.h.b16 %v744
  %v841 = vunpack.c.l.b16 %v745
  %v842 = vunpack.c.h.b16 %v745
  %v843 = vunpack.c.l.b16 %v746
  %v844 = vunpack.c.h.b16 %v746
  %v845 = vunpack.c.l.b16 %v747
  %v846 = vunpack.c.h.b16 %v747
  %v847 = vunpack.c.l.b16 %v748
  %v848 = vunpack.c.h.b16 %v748
  %v849 = vunpack.c.l.b16 %v749
  %v850 = vunpack.c.h.b16 %v749
  %v851 = vunpack.c.l.b16 %v750
  %v852 = vunpack.c.h.b16 %v750
  %v853 = vunpack.c.l.b16 %v751
  %v854 = vunpack.c.h.b16 %v751
  %v855 = vunpack.c.l.b16 %v752
  %v856 = vunpack.c.h.b16 %v752
  %v857 = vunpack.c.l.b16 %v753
  %v858 = vunpack.c.h.b16 %v753
  %v859 = vunpack.c.l.b16 %v754
  %v860 = vunpack.c.h.b16 %v754
  %v861 = vunpack.c.l.b16 %v755
  %v862 = vunpack.c.h.b16 %v755
  %v863 = vunpack.c.l.b16 %v756
  %v864 = vunpack.c.h.b16 %v756
  %v865 = vunpack.c.l.b16 %v757
  %v866 = vunpack.c.h.b16 %v757
  %v867 = vunpack.c.l.b16 %v758
  %v868 = vunpack.c.h.b16 %v758
  %v869 = vunpack.c.l.b16 %v759
  %v870 = vunpack.c.h.b16 %v759
  %v871 = vunpack.c.l.b16 %v760
  %v872 = vunpack.c.h.b16 %v760
  %v873 = vunpack.c.l.b16 %v761
  %v874 = vunpack.c.h.b16 %v761
  %v875 = vunpack.c.l.b16 %v762
  %v876 = vunpack.c.h.b16 %v762
  %v877 = vunpack.c.l.b16 %v763
  %v878 = vunpack.c.h.b16 %v763
  %v879 = vunpack.c.l.b16 %v764
  %v880 = vunpack.c.h.b16 %v764
  %v881 = vunpack.c.l.b16 %v765
  %v882 = vunpack.c.h.b16 %v765
  %v883 = vunpack.c.l.b16 %v766
  %v884 = vunpack.c.h.b16 %v766
  %v885 = vunpack.c.l.b16 %v767
  %v886 = vunpack.c.h.b16 %v767
  %v887 = vunpack.c.l.b16 %v768
  %v888 = vunpack.c.h.b16 %v768
  %v889 = vunpack.c.l.b16 %v769
  %v890 = vunpack.c.h.b16 %v769
  %v891 = vunpack.c.l.b16 %v770
  %v892 = vunpack.c.h.b16 %v770
  %v893 = vunpack.c.l.b16 %v771
  %v894 = vunpack.c.h.b16 %v771
  %v895 = vunpack.c.l.b16 %v772
  %v896 = vunpack.c.h.b16 %v772
  %v897 = vunpack.c.l.b16 %v773
  %v898 = vunpack.c.h.b16 %v773
  %v899 = vunpack.c.l.b16 %v774
  %v900 = vunpack.c.h.b16 %v774
  %v901 = vunpack.c.l.b16 %v775
  %v902 = vunpack.c.h.b16 %v775
  %v903 = vunpack.c.l.b16 %v776
  %v904 = vunpack.c.h.b16 %v776
  %v905 = vunpack.c.l.b16 %v777
  %v906 = vunpack.c.h.b16 %v777
  %v907 = vpack.c.b16 %v831, %v827
  %v908 = vpack.c.b16 %v832, %v828
  %v909 = vpack.c.b16 %v833, %v829
  %v910 = vpack.c.b16 %v834, %v830
  %v911 = vpack.c.b16 %v839, %v835
  %v912 = vpack.c.b16 %v840, %v836
  %v913 = vpack.c.b16 %v841, %v837
  %v914 = vpack.c.b16 %v842, %v838
  %v915 = vpack.c.b16 %v847, %v843
  %v916 = vpack.c.b16 %v848, %v844
  %v917 = vpack.c.b16 %v849, %v845
  %v918 = vpack.c.b16 %v850, %v846
  %v919 = vpack.c.b16 %v855, %v851
  %v920 = vpack.c.b16 %v856, %v852
  %v921 = vpack.c.b16 %v857, %v853
  %v922 = vpack.c.b16 %v858, %v854
  %v923 = vpack.c.b16 %v863, %v859
  %v924 = vpack.c.b16 %v864, %v860
  %v925 = vpack.c.b16 %v865, %v861
  %v926 = vpack.c.b16 %v866, %v862
  %v927 = vpack.c.b16 %v871, %v867
  %v928 = vpack.c.b16 %v872, %v868
  %v929 = vpack.c.b16 %v873, %v869
  %v930 = vpack.c.b16 %v874, %v870
  %v931 = vpack.c.b16 %v879, %v875
  %v932 = vpack.c.b16 %v880, %v876
  %v933 = vpack.c.b16 %v881, %v877
  %v934 = vpack.c.b16 %v882, %v878
  %v935 = vpack.c.b16 %v887, %v883
  %v936 = vpack.c.b16 %v888, %v884
  %v937 = vpack.c.b16 %v889, %v885
  %v938 = vpack.c.b16 %v890, %v886
  %v939 = vpack.c.b16 %v895, %v891
  %v940 = vpack.c.b16 %v896, %v892
  %v941 = vpack.c.b16 %v897, %v893
  %v942 = vpack.c.b16 %v898, %v894
  %v943 = vpack.c.b16 %v903, %v899
  %v944 = vpack.c.b16 %v904, %v900
  %v945 = vpack.c.b16 %v905, %v901
  %v946 = vpack.c.b16 %v906, %v902
  %vm987 = vcmask 261120
  %v989 = vsel %vm987, %v785, 0
  %991 = vmatprep.subr.bf16.mxu0 %v936
  %992 = vmatpush1.bf16.msra.mxu0 %v935
  %993 = vmatprep.subr.bf16.mxu0 %v932
  %994 = vmatpush1.bf16.msra.mxu0 %v931
  %995 = vmatprep.subr.bf16.mxu0 %v928
  %996 = vmatpush1.bf16.msra.mxu0 %v927
  %997 = vmatprep.subr.bf16.mxu0 %v924
  %998 = vmatpush1.bf16.msra.mxu0 %v923
  %999 = vmatprep.subr.bf16.mxu0 %v920
  %1000 = vmatpush1.bf16.msra.mxu0 %v919
  %1001 = vmatprep.subr.bf16.mxu0 %v916
  %1002 = vmatpush1.bf16.msra.mxu0 %v915
  %1003 = vmatprep.subr.bf16.mxu0 %v912
  %1004 = vmatpush1.bf16.msra.mxu0 %v911
  %1005 = vmatprep.subr.bf16.mxu0 %v908
  %1006 = vmatpush1.bf16.msra.mxu0 %v907
  %1007 = vmatprep.subr.bf16.mxu0 0
  %1008 = vmatpush2.bf16.msra.mxu0 0
  %1009 = vmatprep.subr.bf16.mxu0 0
  %1010 = vmatpush2.bf16.msra.mxu0 0
  %1011 = vmatprep.subr.bf16.mxu0 0
  %1012 = vmatpush2.bf16.msra.mxu0 0
  %1013 = vmatprep.subr.bf16.mxu0 0
  %1014 = vmatpush2.bf16.msra.mxu0 0
  %1015 = vmatprep.subr.bf16.mxu0 0
  %1016 = vmatpush2.bf16.msra.mxu0 0
  %1017 = vmatprep.subr.bf16.mxu0 0
  %1018 = vmatpush2.bf16.msra.mxu0 0
  %1019 = vmatprep.subr.bf16.mxu0 %v944
  %1020 = vmatpush2.bf16.msra.mxu0 %v943
  %1021 = vmatprep.subr.bf16.mxu0 %v940
  %1022 = vmatpush2.bf16.msra.mxu0 %v939
  %1023 = vmatprep.mubr.bf16.mxu0 %v989
  %1024 = vmatmul.mubr.bf16.gmra.mxu0 %v784
  %v1025 = vpop.f32.mrf.mxu0
  %v1026 = vadd.f32 0.0, %v1025
  %v1027 = vpop.f32.mrf.mxu0
  %v1028 = vadd.f32 0.0, %v1027
  %v1029 = vpop.f32.mrf.mxu0
  %v1030 = vadd.f32 0.0, %v1029
  %v1031 = vpop.f32.mrf.mxu0
  %v1032 = vadd.f32 0.0, %v1031
  %1033 = vdwg.mxu0
  %1034 = vmatprep.subr.bf16.mxu0 %v938
  %1035 = vmatpush1.bf16.msra.mxu0 %v937
  %1036 = vmatprep.subr.bf16.mxu0 %v934
  %1037 = vmatpush1.bf16.msra.mxu0 %v933
  %1038 = vmatprep.subr.bf16.mxu0 %v930
  %1039 = vmatpush1.bf16.msra.mxu0 %v929
  %1040 = vmatprep.subr.bf16.mxu0 %v926
  %1041 = vmatpush1.bf16.msra.mxu0 %v925
  %1042 = vmatprep.subr.bf16.mxu0 %v922
  %1043 = vmatpush1.bf16.msra.mxu0 %v921
  %1044 = vmatprep.subr.bf16.mxu0 %v918
  %1045 = vmatpush1.bf16.msra.mxu0 %v917
  %1046 = vmatprep.subr.bf16.mxu0 %v914
  %1047 = vmatpush1.bf16.msra.mxu0 %v913
  %1048 = vmatprep.subr.bf16.mxu0 %v910
  %1049 = vmatpush1.bf16.msra.mxu0 %v909
  %1050 = vmatprep.subr.bf16.mxu0 0
  %1051 = vmatpush2.bf16.msra.mxu0 0
  %1052 = vmatprep.subr.bf16.mxu0 0
  %1053 = vmatpush2.bf16.msra.mxu0 0
  %1054 = vmatprep.subr.bf16.mxu0 0
  %1055 = vmatpush2.bf16.msra.mxu0 0
  %1056 = vmatprep.subr.bf16.mxu0 0
  %1057 = vmatpush2.bf16.msra.mxu0 0
  %1058 = vmatprep.subr.bf16.mxu0 0
  %1059 = vmatpush2.bf16.msra.mxu0 0
  %1060 = vmatprep.subr.bf16.mxu0 0
  %1061 = vmatpush2.bf16.msra.mxu0 0
  %1062 = vmatprep.subr.bf16.mxu0 %v946
  %1063 = vmatpush2.bf16.msra.mxu0 %v945
  %1064 = vmatprep.subr.bf16.mxu0 %v942
  %1065 = vmatpush2.bf16.msra.mxu0 %v941
  %1066 = vmatprep.mubr.bf16.mxu0 %v989
  %1067 = vmatmul.mubr.bf16.gmra.mxu0 %v784
  %v1068 = vpop.f32.mrf.mxu0
  %v1069 = vadd.f32 0.0, %v1068
  %v1070 = vpop.f32.mrf.mxu0
  %v1071 = vadd.f32 0.0, %v1070
  %v1072 = vpop.f32.mrf.mxu0
  %v1073 = vadd.f32 0.0, %v1072
  %v1074 = vpop.f32.mrf.mxu0
  %v1075 = vadd.f32 0.0, %v1074
  %1076 = vdwg.mxu0
  %v1077 = vmax.f32 %v1026, 0.0
  %v1078 = vmax.f32 %v1028, 0.0
  %v1079 = vmax.f32 %v1069, 0.0
  %v1080 = vmax.f32 %v1071, 0.0
  %v1081 = vmax.f32 %v1030, 0.0
  %v1082 = vmax.f32 %v1032, 0.0
  %v1083 = vmax.f32 %v1073, 0.0
  %v1084 = vmax.f32 %v1075, 0.0
  %1085 = vrot.lane.b32.xlu0 %v1077, 17
  %v1086 = vpop.permute.xlu0 %1085
  %1087 = vrot.lane.b32.xlu0 %v1081, 17
  %v1088 = vpop.permute.xlu0 %1087
  %1089 = vrot.lane.b32.xlu0 %v1078, 17
  %v1090 = vpop.permute.xlu0 %1089
  %1091 = vrot.lane.b32.xlu0 %v1082, 17
  %v1092 = vpop.permute.xlu0 %1091
  %1093 = vrot.lane.b32.xlu0 %v1079, 17
  %v1094 = vpop.permute.xlu0 %1093
  %1095 = vrot.lane.b32.xlu0 %v1083, 17
  %v1096 = vpop.permute.xlu0 %1095
  %1097 = vrot.lane.b32.xlu0 %v1080, 17
  %v1098 = vpop.permute.xlu0 %1097
  %1099 = vrot.lane.b32.xlu0 %v1084, 17
  %v1100 = vpop.permute.xlu0 %1099
  %v1101 = vsel %vm108, %v1094, %v1098
  %v1102 = vsel %vm108, %v1096, %v1100
  %v1103 = vsel %vm108, %v1090, %v1094
  %v1104 = vsel %vm108, %v1092, %v1096
  %v1105 = vsel %vm108, %v1086, %v1090
  %v1106 = vsel %vm108, %v1088, %v1092
  %v1107 = vsel %vm108, %v1098, %v1086
  %v1108 = vsel %vm108, %v1100, %v1088
  %v1109 = vmul.f32 %v1107, %v120
  %v1110 = vmul.f32 %v1105, %v124
  %v1111 = vmul.f32 %v1103, %v128
  %v1112 = vmul.f32 %v1101, %v132
  %v1113 = vmul.f32 %v1108, %v120
  %v1114 = vmul.f32 %v1106, %v124
  %v1115 = vmul.f32 %v1104, %v128
  %v1116 = vmul.f32 %v1102, %v132
  %v1117 = vpack.c.bf16 %v1113, %v1109
  %v1118 = vpack.c.bf16 %v1114, %v1110
  %v1119 = vpack.c.bf16 %v1115, %v1111
  %v1120 = vpack.c.bf16 %v1116, %v1112
  %v1125 = vunpack.c.l.b16 %v1117
  %v1126 = vunpack.c.l.b16 %v1118
  %v1127 = vunpack.c.l.b16 %v1119
  %v1128 = vunpack.c.l.b16 %v1120
  %v1129 = vunpack.c.h.b16 %v1117
  %v1130 = vunpack.c.h.b16 %v1118
  %v1131 = vunpack.c.h.b16 %v1119
  %v1132 = vunpack.c.h.b16 %v1120
  %v1133 = vpack.c.b16 %v1126, %v1125
  %v1134 = vpack.c.b16 %v1128, %v1127
  %v1135 = vpack.c.b16 %v1130, %v1129
  %v1136 = vpack.c.b16 %v1132, %v1131
  %1141 = vst [vmem:[#allocation2 + $0x20] sm:$0xff] %v1133
  %1142 = vst [vmem:[#allocation2 + $0x28] sm:$0xff] %v1134
  %1143 = vst [vmem:[#allocation2 + $0x30] sm:$0xff] %v1135
  %1144 = vst [vmem:[#allocation2 + $0x38] sm:$0xff] %v1136
  %1145 = vrot.lane.b32.xlu0 %v1077, 16
  %v1146 = vpop.permute.xlu0 %1145
  %1147 = vrot.lane.b32.xlu0 %v1081, 16
  %v1148 = vpop.permute.xlu0 %1147
  %1149 = vrot.lane.b32.xlu0 %v1078, 16
  %v1150 = vpop.permute.xlu0 %1149
  %1151 = vrot.lane.b32.xlu0 %v1082, 16
  %v1152 = vpop.permute.xlu0 %1151
  %1153 = vrot.lane.b32.xlu0 %v1079, 16
  %v1154 = vpop.permute.xlu0 %1153
  %1155 = vrot.lane.b32.xlu0 %v1083, 16
  %v1156 = vpop.permute.xlu0 %1155
  %1157 = vrot.lane.b32.xlu0 %v1080, 16
  %v1158 = vpop.permute.xlu0 %1157
  %1159 = vrot.lane.b32.xlu0 %v1084, 16
  %v1160 = vpop.permute.xlu0 %1159
  %v1161 = vsel %vm185, %v1154, %v1158
  %v1162 = vsel %vm185, %v1156, %v1160
  %v1163 = vsel %vm185, %v1150, %v1154
  %v1164 = vsel %vm185, %v1152, %v1156
  %v1165 = vsel %vm185, %v1146, %v1150
  %v1166 = vsel %vm185, %v1148, %v1152
  %v1167 = vsel %vm185, %v1158, %v1146
  %v1168 = vsel %vm185, %v1160, %v1148
  %v1169 = vmul.f32 %v1167, %v197
  %v1170 = vmul.f32 %v1165, %v201
  %v1171 = vmul.f32 %v1163, %v205
  %v1172 = vmul.f32 %v1161, %v209
  %v1173 = vmul.f32 %v1168, %v197
  %v1174 = vmul.f32 %v1166, %v201
  %v1175 = vmul.f32 %v1164, %v205
  %v1176 = vmul.f32 %v1162, %v209
  %v1177 = vpack.c.bf16 %v1173, %v1169
  %v1178 = vpack.c.bf16 %v1174, %v1170
  %v1179 = vpack.c.bf16 %v1175, %v1171
  %v1180 = vpack.c.bf16 %v1176, %v1172
  %v1185 = vunpack.c.l.b16 %v1177
  %v1186 = vunpack.c.l.b16 %v1178
  %v1187 = vunpack.c.l.b16 %v1179
  %v1188 = vunpack.c.l.b16 %v1180
  %v1189 = vunpack.c.h.b16 %v1177
  %v1190 = vunpack.c.h.b16 %v1178
  %v1191 = vunpack.c.h.b16 %v1179
  %v1192 = vunpack.c.h.b16 %v1180
  %v1193 = vpack.c.b16 %v1186, %v1185
  %v1194 = vpack.c.b16 %v1188, %v1187
  %v1195 = vpack.c.b16 %v1190, %v1189
  %v1196 = vpack.c.b16 %v1192, %v1191
  %1201 = vst [vmem:[#allocation2 + $0x40] sm:$0xff] %v1193
  %1202 = vst [vmem:[#allocation2 + $0x48] sm:$0xff] %v1194
  %1203 = vst [vmem:[#allocation2 + $0x50] sm:$0xff] %v1195
  %1204 = vst [vmem:[#allocation2 + $0x58] sm:$0xff] %v1196
  %1205 = vrot.lane.b32.xlu0 %v1077, 15
  %v1206 = vpop.permute.xlu0 %1205
  %1207 = vrot.lane.b32.xlu0 %v1081, 15
  %v1208 = vpop.permute.xlu0 %1207
  %1209 = vrot.lane.b32.xlu0 %v1078, 15
  %v1210 = vpop.permute.xlu0 %1209
  %1211 = vrot.lane.b32.xlu0 %v1082, 15
  %v1212 = vpop.permute.xlu0 %1211
  %1213 = vrot.lane.b32.xlu0 %v1079, 15
  %v1214 = vpop.permute.xlu0 %1213
  %1215 = vrot.lane.b32.xlu0 %v1083, 15
  %v1216 = vpop.permute.xlu0 %1215
  %1217 = vrot.lane.b32.xlu0 %v1080, 15
  %v1218 = vpop.permute.xlu0 %1217
  %1219 = vrot.lane.b32.xlu0 %v1084, 15
  %v1220 = vpop.permute.xlu0 %1219
  %v1221 = vsel %vm262, %v1214, %v1218
  %v1222 = vsel %vm262, %v1216, %v1220
  %v1223 = vsel %vm262, %v1210, %v1214
  %v1224 = vsel %vm262, %v1212, %v1216
  %v1225 = vsel %vm262, %v1206, %v1210
  %v1226 = vsel %vm262, %v1208, %v1212
  %v1227 = vsel %vm262, %v1218, %v1206
  %v1228 = vsel %vm262, %v1220, %v1208
  %v1229 = vmul.f32 %v1227, %v274
  %v1230 = vmul.f32 %v1225, %v278
  %v1231 = vmul.f32 %v1223, %v282
  %v1232 = vmul.f32 %v1221, %v286
  %v1233 = vmul.f32 %v1228, %v274
  %v1234 = vmul.f32 %v1226, %v278
  %v1235 = vmul.f32 %v1224, %v282
  %v1236 = vmul.f32 %v1222, %v286
  %v1237 = vpack.c.bf16 %v1233, %v1229
  %v1238 = vpack.c.bf16 %v1234, %v1230
  %v1239 = vpack.c.bf16 %v1235, %v1231
  %v1240 = vpack.c.bf16 %v1236, %v1232
  %v1245 = vunpack.c.l.b16 %v1237
  %v1246 = vunpack.c.l.b16 %v1238
  %v1247 = vunpack.c.l.b16 %v1239
  %v1248 = vunpack.c.l.b16 %v1240
  %v1249 = vunpack.c.h.b16 %v1237
  %v1250 = vunpack.c.h.b16 %v1238
  %v1251 = vunpack.c.h.b16 %v1239
  %v1252 = vunpack.c.h.b16 %v1240
  %v1253 = vpack.c.b16 %v1246, %v1245
  %v1254 = vpack.c.b16 %v1248, %v1247
  %v1255 = vpack.c.b16 %v1250, %v1249
  %v1256 = vpack.c.b16 %v1252, %v1251
  %1261 = vst [vmem:[#allocation2 + $0x60] sm:$0xff] %v1253
  %1262 = vst [vmem:[#allocation2 + $0x68] sm:$0xff] %v1254
  %1263 = vst [vmem:[#allocation2 + $0x70] sm:$0xff] %v1255
  %1264 = vst [vmem:[#allocation2 + $0x78] sm:$0xff] %v1256
  %1265 = vrot.lane.b32.xlu0 %v1077, 1
  %v1266 = vpop.permute.xlu0 %1265
  %1267 = vrot.lane.b32.xlu0 %v1081, 1
  %v1268 = vpop.permute.xlu0 %1267
  %1269 = vrot.lane.b32.xlu0 %v1078, 1
  %v1270 = vpop.permute.xlu0 %1269
  %1271 = vrot.lane.b32.xlu0 %v1082, 1
  %v1272 = vpop.permute.xlu0 %1271
  %1273 = vrot.lane.b32.xlu0 %v1079, 1
  %v1274 = vpop.permute.xlu0 %1273
  %1275 = vrot.lane.b32.xlu0 %v1083, 1
  %v1276 = vpop.permute.xlu0 %1275
  %1277 = vrot.lane.b32.xlu0 %v1080, 1
  %v1278 = vpop.permute.xlu0 %1277
  %1279 = vrot.lane.b32.xlu0 %v1084, 1
  %v1280 = vpop.permute.xlu0 %1279
  %v1281 = vsel %vm339, %v1274, %v1278
  %v1282 = vsel %vm339, %v1276, %v1280
  %v1283 = vsel %vm339, %v1270, %v1274
  %v1284 = vsel %vm339, %v1272, %v1276
  %v1285 = vsel %vm339, %v1266, %v1270
  %v1286 = vsel %vm339, %v1268, %v1272
  %v1287 = vsel %vm339, %v1278, %v1266
  %v1288 = vsel %vm339, %v1280, %v1268
  %v1289 = vmul.f32 %v1287, %v351
  %v1290 = vmul.f32 %v1285, %v355
  %v1291 = vmul.f32 %v1283, %v359
  %v1292 = vmul.f32 %v1281, %v363
  %v1293 = vmul.f32 %v1288, %v351
  %v1294 = vmul.f32 %v1286, %v355
  %v1295 = vmul.f32 %v1284, %v359
  %v1296 = vmul.f32 %v1282, %v363
  %v1297 = vpack.c.bf16 %v1293, %v1289
  %v1298 = vpack.c.bf16 %v1294, %v1290
  %v1299 = vpack.c.bf16 %v1295, %v1291
  %v1300 = vpack.c.bf16 %v1296, %v1292
  %v1305 = vunpack.c.l.b16 %v1297
  %v1306 = vunpack.c.l.b16 %v1298
  %v1307 = vunpack.c.l.b16 %v1299
  %v1308 = vunpack.c.l.b16 %v1300
  %v1309 = vunpack.c.h.b16 %v1297
  %v1310 = vunpack.c.h.b16 %v1298
  %v1311 = vunpack.c.h.b16 %v1299
  %v1312 = vunpack.c.h.b16 %v1300
  %v1313 = vpack.c.b16 %v1306, %v1305
  %v1314 = vpack.c.b16 %v1308, %v1307
  %v1315 = vpack.c.b16 %v1310, %v1309
  %v1316 = vpack.c.b16 %v1312, %v1311
  %1321 = vst [vmem:[#allocation2 + $0x80] sm:$0xff] %v1313
  %1322 = vst [vmem:[#allocation2 + $0x88] sm:$0xff] %v1314
  %1323 = vst [vmem:[#allocation2 + $0x90] sm:$0xff] %v1315
  %1324 = vst [vmem:[#allocation2 + $0x98] sm:$0xff] %v1316
  %v1325 = vpack.c.bf16 %v1081, %v1077
  %v1326 = vpack.c.bf16 %v1082, %v1078
  %v1327 = vpack.c.bf16 %v1083, %v1079
  %v1328 = vpack.c.bf16 %v1084, %v1080
  %v1333 = vunpack.c.l.b16 %v1325
  %v1334 = vunpack.c.l.b16 %v1326
  %v1335 = vunpack.c.l.b16 %v1327
  %v1336 = vunpack.c.l.b16 %v1328
  %v1337 = vunpack.c.h.b16 %v1325
  %v1338 = vunpack.c.h.b16 %v1326
  %v1339 = vunpack.c.h.b16 %v1327
  %v1340 = vunpack.c.h.b16 %v1328
  %v1341 = vpack.c.b16 %v1334, %v1333
  %v1342 = vpack.c.b16 %v1336, %v1335
  %v1343 = vpack.c.b16 %v1338, %v1337
  %v1344 = vpack.c.b16 %v1340, %v1339
  %1349 = vst [vmem:[#allocation2 + $0xa0] sm:$0xff] %v1341
  %1350 = vst [vmem:[#allocation2 + $0xa8] sm:$0xff] %v1342
  %1351 = vst [vmem:[#allocation2 + $0xb0] sm:$0xff] %v1343
  %1352 = vst [vmem:[#allocation2 + $0xb8] sm:$0xff] %v1344
  %1353 = vrot.lane.b32.xlu0 %v1077, 127
  %v1354 = vpop.permute.xlu0 %1353
  %1355 = vrot.lane.b32.xlu0 %v1081, 127
  %v1356 = vpop.permute.xlu0 %1355
  %1357 = vrot.lane.b32.xlu0 %v1078, 127
  %v1358 = vpop.permute.xlu0 %1357
  %1359 = vrot.lane.b32.xlu0 %v1082, 127
  %v1360 = vpop.permute.xlu0 %1359
  %1361 = vrot.lane.b32.xlu0 %v1079, 127
  %v1362 = vpop.permute.xlu0 %1361
  %1363 = vrot.lane.b32.xlu0 %v1083, 127
  %v1364 = vpop.permute.xlu0 %1363
  %1365 = vrot.lane.b32.xlu0 %v1080, 127
  %v1366 = vpop.permute.xlu0 %1365
  %1367 = vrot.lane.b32.xlu0 %v1084, 127
  %v1368 = vpop.permute.xlu0 %1367
  %v1369 = vsel %vm444, %v1362, %v1366
  %v1370 = vsel %vm444, %v1364, %v1368
  %v1371 = vsel %vm444, %v1358, %v1362
  %v1372 = vsel %vm444, %v1360, %v1364
  %v1373 = vsel %vm444, %v1354, %v1358
  %v1374 = vsel %vm444, %v1356, %v1360
  %v1375 = vsel %vm444, %v1366, %v1354
  %v1376 = vsel %vm444, %v1368, %v1356
  %v1377 = vmul.f32 %v1373, %v456
  %v1378 = vmul.f32 %v1371, %v460
  %v1379 = vmul.f32 %v1369, %v464
  %v1380 = vmul.f32 %v1375, %v468
  %v1381 = vmul.f32 %v1374, %v456
  %v1382 = vmul.f32 %v1372, %v460
  %v1383 = vmul.f32 %v1370, %v464
  %v1384 = vmul.f32 %v1376, %v468
  %v1385 = vpack.c.bf16 %v1381, %v1377
  %v1386 = vpack.c.bf16 %v1382, %v1378
  %v1387 = vpack.c.bf16 %v1383, %v1379
  %v1388 = vpack.c.bf16 %v1384, %v1380
  %v1393 = vunpack.c.l.b16 %v1385
  %v1394 = vunpack.c.l.b16 %v1386
  %v1395 = vunpack.c.l.b16 %v1387
  %v1396 = vunpack.c.l.b16 %v1388
  %v1397 = vunpack.c.h.b16 %v1385
  %v1398 = vunpack.c.h.b16 %v1386
  %v1399 = vunpack.c.h.b16 %v1387
  %v1400 = vunpack.c.h.b16 %v1388
  %v1401 = vpack.c.b16 %v1394, %v1393
  %v1402 = vpack.c.b16 %v1396, %v1395
  %v1403 = vpack.c.b16 %v1398, %v1397
  %v1404 = vpack.c.b16 %v1400, %v1399
  %1409 = vst [vmem:[#allocation2 + $0xc0] sm:$0xff] %v1401
  %1410 = vst [vmem:[#allocation2 + $0xc8] sm:$0xff] %v1402
  %1411 = vst [vmem:[#allocation2 + $0xd0] sm:$0xff] %v1403
  %1412 = vst [vmem:[#allocation2 + $0xd8] sm:$0xff] %v1404
  %1413 = vrot.lane.b32.xlu0 %v1077, 113
  %v1414 = vpop.permute.xlu0 %1413
  %1415 = vrot.lane.b32.xlu0 %v1081, 113
  %v1416 = vpop.permute.xlu0 %1415
  %1417 = vrot.lane.b32.xlu0 %v1078, 113
  %v1418 = vpop.permute.xlu0 %1417
  %1419 = vrot.lane.b32.xlu0 %v1082, 113
  %v1420 = vpop.permute.xlu0 %1419
  %1421 = vrot.lane.b32.xlu0 %v1079, 113
  %v1422 = vpop.permute.xlu0 %1421
  %1423 = vrot.lane.b32.xlu0 %v1083, 113
  %v1424 = vpop.permute.xlu0 %1423
  %1425 = vrot.lane.b32.xlu0 %v1080, 113
  %v1426 = vpop.permute.xlu0 %1425
  %1427 = vrot.lane.b32.xlu0 %v1084, 113
  %v1428 = vpop.permute.xlu0 %1427
  %v1429 = vsel %vm521, %v1422, %v1426
  %v1430 = vsel %vm521, %v1424, %v1428
  %v1431 = vsel %vm521, %v1418, %v1422
  %v1432 = vsel %vm521, %v1420, %v1424
  %v1433 = vsel %vm521, %v1414, %v1418
  %v1434 = vsel %vm521, %v1416, %v1420
  %v1435 = vsel %vm521, %v1426, %v1414
  %v1436 = vsel %vm521, %v1428, %v1416
  %v1437 = vmul.f32 %v1433, %v533
  %v1438 = vmul.f32 %v1431, %v537
  %v1439 = vmul.f32 %v1429, %v541
  %v1440 = vmul.f32 %v1435, %v545
  %v1441 = vmul.f32 %v1434, %v533
  %v1442 = vmul.f32 %v1432, %v537
  %v1443 = vmul.f32 %v1430, %v541
  %v1444 = vmul.f32 %v1436, %v545
  %v1445 = vpack.c.bf16 %v1441, %v1437
  %v1446 = vpack.c.bf16 %v1442, %v1438
  %v1447 = vpack.c.bf16 %v1443, %v1439
  %v1448 = vpack.c.bf16 %v1444, %v1440
  %v1453 = vunpack.c.l.b16 %v1445
  %v1454 = vunpack.c.l.b16 %v1446
  %v1455 = vunpack.c.l.b16 %v1447
  %v1456 = vunpack.c.l.b16 %v1448
  %v1457 = vunpack.c.h.b16 %v1445
  %v1458 = vunpack.c.h.b16 %v1446
  %v1459 = vunpack.c.h.b16 %v1447
  %v1460 = vunpack.c.h.b16 %v1448
  %v1461 = vpack.c.b16 %v1454, %v1453
  %v1462 = vpack.c.b16 %v1456, %v1455
  %v1463 = vpack.c.b16 %v1458, %v1457
  %v1464 = vpack.c.b16 %v1460, %v1459
  %1469 = vst [vmem:[#allocation2 + $0xe0] sm:$0xff] %v1461
  %1470 = vst [vmem:[#allocation2 + $0xe8] sm:$0xff] %v1462
  %1471 = vst [vmem:[#allocation2 + $0xf0] sm:$0xff] %v1463
  %1472 = vst [vmem:[#allocation2 + $0xf8] sm:$0xff] %v1464
  %1473 = vrot.lane.b32.xlu0 %v1077, 112
  %v1474 = vpop.permute.xlu0 %1473
  %1475 = vrot.lane.b32.xlu0 %v1081, 112
  %v1476 = vpop.permute.xlu0 %1475
  %1477 = vrot.lane.b32.xlu0 %v1078, 112
  %v1478 = vpop.permute.xlu0 %1477
  %1479 = vrot.lane.b32.xlu0 %v1082, 112
  %v1480 = vpop.permute.xlu0 %1479
  %1481 = vrot.lane.b32.xlu0 %v1079, 112
  %v1482 = vpop.permute.xlu0 %1481
  %1483 = vrot.lane.b32.xlu0 %v1083, 112
  %v1484 = vpop.permute.xlu0 %1483
  %1485 = vrot.lane.b32.xlu0 %v1080, 112
  %v1486 = vpop.permute.xlu0 %1485
  %1487 = vrot.lane.b32.xlu0 %v1084, 112
  %v1488 = vpop.permute.xlu0 %1487
  %v1489 = vsel %vm598, %v1482, %v1486
  %v1490 = vsel %vm598, %v1484, %v1488
  %v1491 = vsel %vm598, %v1478, %v1482
  %v1492 = vsel %vm598, %v1480, %v1484
  %v1493 = vsel %vm598, %v1474, %v1478
  %v1494 = vsel %vm598, %v1476, %v1480
  %v1495 = vsel %vm598, %v1486, %v1474
  %v1496 = vsel %vm598, %v1488, %v1476
  %v1497 = vmul.f32 %v1493, %v610
  %v1498 = vmul.f32 %v1491, %v614
  %v1499 = vmul.f32 %v1489, %v618
  %v1500 = vmul.f32 %v1495, %v622
  %v1501 = vmul.f32 %v1494, %v610
  %v1502 = vmul.f32 %v1492, %v614
  %v1503 = vmul.f32 %v1490, %v618
  %v1504 = vmul.f32 %v1496, %v622
  %v1505 = vpack.c.bf16 %v1501, %v1497
  %v1506 = vpack.c.bf16 %v1502, %v1498
  %v1507 = vpack.c.bf16 %v1503, %v1499
  %v1508 = vpack.c.bf16 %v1504, %v1500
  %v1513 = vunpack.c.l.b16 %v1505
  %v1514 = vunpack.c.l.b16 %v1506
  %v1515 = vunpack.c.l.b16 %v1507
  %v1516 = vunpack.c.l.b16 %v1508
  %v1517 = vunpack.c.h.b16 %v1505
  %v1518 = vunpack.c.h.b16 %v1506
  %v1519 = vunpack.c.h.b16 %v1507
  %v1520 = vunpack.c.h.b16 %v1508
  %v1521 = vpack.c.b16 %v1514, %v1513
  %v1522 = vpack.c.b16 %v1516, %v1515
  %v1523 = vpack.c.b16 %v1518, %v1517
  %v1524 = vpack.c.b16 %v1520, %v1519
  %1529 = vst [vmem:[#allocation2 + $0x100] sm:$0xff] %v1521
  %1530 = vst [vmem:[#allocation2 + $0x108] sm:$0xff] %v1522
  %1531 = vst [vmem:[#allocation2 + $0x110] sm:$0xff] %v1523
  %1532 = vst [vmem:[#allocation2 + $0x118] sm:$0xff] %v1524
  %1533 = vrot.lane.b32.xlu0 %v1077, 111
  %v1534 = vpop.permute.xlu0 %1533
  %1535 = vrot.lane.b32.xlu0 %v1081, 111
  %v1536 = vpop.permute.xlu0 %1535
  %1537 = vrot.lane.b32.xlu0 %v1078, 111
  %v1538 = vpop.permute.xlu0 %1537
  %1539 = vrot.lane.b32.xlu0 %v1082, 111
  %v1540 = vpop.permute.xlu0 %1539
  %1541 = vrot.lane.b32.xlu0 %v1079, 111
  %v1542 = vpop.permute.xlu0 %1541
  %1543 = vrot.lane.b32.xlu0 %v1083, 111
  %v1544 = vpop.permute.xlu0 %1543
  %1545 = vrot.lane.b32.xlu0 %v1080, 111
  %v1546 = vpop.permute.xlu0 %1545
  %1547 = vrot.lane.b32.xlu0 %v1084, 111
  %v1548 = vpop.permute.xlu0 %1547
  %v1549 = vsel %vm675, %v1542, %v1546
  %v1550 = vsel %vm675, %v1544, %v1548
  %v1551 = vsel %vm675, %v1538, %v1542
  %v1552 = vsel %vm675, %v1540, %v1544
  %v1553 = vsel %vm675, %v1534, %v1538
  %v1554 = vsel %vm675, %v1536, %v1540
  %v1555 = vsel %vm675, %v1546, %v1534
  %v1556 = vsel %vm675, %v1548, %v1536
  %v1557 = vmul.f32 %v1553, %v687
  %v1558 = vmul.f32 %v1551, %v691
  %v1559 = vmul.f32 %v1549, %v695
  %v1560 = vmul.f32 %v1555, %v699
  %v1561 = vmul.f32 %v1554, %v687
  %v1562 = vmul.f32 %v1552, %v691
  %v1563 = vmul.f32 %v1550, %v695
  %v1564 = vmul.f32 %v1556, %v699
  %v1565 = vpack.c.bf16 %v1561, %v1557
  %v1566 = vpack.c.bf16 %v1562, %v1558
  %v1567 = vpack.c.bf16 %v1563, %v1559
  %v1568 = vpack.c.bf16 %v1564, %v1560
  %v1573 = vunpack.c.l.b16 %v1565
  %v1574 = vunpack.c.l.b16 %v1566
  %v1575 = vunpack.c.l.b16 %v1567
  %v1576 = vunpack.c.l.b16 %v1568
  %v1577 = vunpack.c.h.b16 %v1565
  %v1578 = vunpack.c.h.b16 %v1566
  %v1579 = vunpack.c.h.b16 %v1567
  %v1580 = vunpack.c.h.b16 %v1568
  %v1581 = vpack.c.b16 %v1574, %v1573
  %v1582 = vpack.c.b16 %v1576, %v1575
  %v1583 = vpack.c.b16 %v1578, %v1577
  %v1584 = vpack.c.b16 %v1580, %v1579
  %1589 = vst [vmem:[#allocation2 + $0x120] sm:$0xff] %v1581
  %1590 = vst [vmem:[#allocation2 + $0x128] sm:$0xff] %v1582
  %1591 = vst [vmem:[#allocation2 + $0x130] sm:$0xff] %v1583
  %1592 = vst [vmem:[#allocation2 + $0x138] sm:$0xff] %v1584
  %v1593 = vld [vmem:[%s4] sm:$0xff]
  %v1594 = vld [vmem:[%s4 + $0x8] sm:$0xff]
  %v1595 = vld [vmem:[%s4 + $0x10] sm:$0xff]
  %v1596 = vld [vmem:[%s4 + $0x18] sm:$0xff]
  %v1597 = vld [vmem:[#allocation2] sm:$0xff]
  %v1598 = vld [vmem:[#allocation2 + $0x8] sm:$0xff]
  %v1599 = vld [vmem:[#allocation2 + $0x10] sm:$0xff]
  %v1600 = vld [vmem:[#allocation2 + $0x18] sm:$0xff]
  %v1601 = vld [vmem:[#allocation2 + $0x20] sm:$0xff]
  %v1602 = vld [vmem:[#allocation2 + $0x28] sm:$0xff]
  %v1603 = vld [vmem:[#allocation2 + $0x30] sm:$0xff]
  %v1604 = vld [vmem:[#allocation2 + $0x38] sm:$0xff]
  %v1605 = vld [vmem:[#allocation2 + $0x40] sm:$0xff]
  %v1606 = vld [vmem:[#allocation2 + $0x48] sm:$0xff]
  %v1607 = vld [vmem:[#allocation2 + $0x50] sm:$0xff]
  %v1608 = vld [vmem:[#allocation2 + $0x58] sm:$0xff]
  %v1609 = vld [vmem:[#allocation2 + $0x60] sm:$0xff]
  %v1610 = vld [vmem:[#allocation2 + $0x68] sm:$0xff]
  %v1611 = vld [vmem:[#allocation2 + $0x70] sm:$0xff]
  %v1612 = vld [vmem:[#allocation2 + $0x78] sm:$0xff]
  %v1613 = vld [vmem:[#allocation2 + $0x80] sm:$0xff]
  %v1614 = vld [vmem:[#allocation2 + $0x88] sm:$0xff]
  %v1615 = vld [vmem:[#allocation2 + $0x90] sm:$0xff]
  %v1616 = vld [vmem:[#allocation2 + $0x98] sm:$0xff]
  %v1617 = vld [vmem:[#allocation2 + $0xa0] sm:$0xff]
  %v1618 = vld [vmem:[#allocation2 + $0xa8] sm:$0xff]
  %v1619 = vld [vmem:[#allocation2 + $0xb0] sm:$0xff]
  %v1620 = vld [vmem:[#allocation2 + $0xb8] sm:$0xff]
  %v1621 = vld [vmem:[#allocation2 + $0xc0] sm:$0xff]
  %v1622 = vld [vmem:[#allocation2 + $0xc8] sm:$0xff]
  %v1623 = vld [vmem:[#allocation2 + $0xd0] sm:$0xff]
  %v1624 = vld [vmem:[#allocation2 + $0xd8] sm:$0xff]
  %v1625 = vld [vmem:[#allocation2 + $0xe0] sm:$0xff]
  %v1626 = vld [vmem:[#allocation2 + $0xe8] sm:$0xff]
  %v1627 = vld [vmem:[#allocation2 + $0xf0] sm:$0xff]
  %v1628 = vld [vmem:[#allocation2 + $0xf8] sm:$0xff]
  %v1629 = vld [vmem:[#allocation2 + $0x100] sm:$0xff]
  %v1630 = vld [vmem:[#allocation2 + $0x108] sm:$0xff]
  %v1631 = vld [vmem:[#allocation2 + $0x110] sm:$0xff]
  %v1632 = vld [vmem:[#allocation2 + $0x118] sm:$0xff]
  %v1633 = vld [vmem:[#allocation2 + $0x120] sm:$0xff]
  %v1634 = vld [vmem:[#allocation2 + $0x128] sm:$0xff]
  %v1635 = vld [vmem:[#allocation2 + $0x130] sm:$0xff]
  %v1636 = vld [vmem:[#allocation2 + $0x138] sm:$0xff]
  %v1641 = vunpack.c.l.b16 %v1593
  %v1642 = vunpack.c.h.b16 %v1593
  %v1643 = vunpack.c.l.b16 %v1594
  %v1644 = vunpack.c.h.b16 %v1594
  %v1645 = vunpack.c.l.b16 %v1595
  %v1646 = vunpack.c.h.b16 %v1595
  %v1647 = vunpack.c.l.b16 %v1596
  %v1648 = vunpack.c.h.b16 %v1596
  %v1649 = vpack.c.b16 %v1643, %v1641
  %v1650 = vpack.c.b16 %v1644, %v1642
  %v1651 = vpack.c.b16 %v1647, %v1645
  %v1652 = vpack.c.b16 %v1648, %v1646
  %v1695 = vunpack.c.l.b16 %v1597
  %v1696 = vunpack.c.h.b16 %v1597
  %v1697 = vunpack.c.l.b16 %v1598
  %v1698 = vunpack.c.h.b16 %v1598
  %v1699 = vunpack.c.l.b16 %v1599
  %v1700 = vunpack.c.h.b16 %v1599
  %v1701 = vunpack.c.l.b16 %v1600
  %v1702 = vunpack.c.h.b16 %v1600
  %v1703 = vunpack.c.l.b16 %v1601
  %v1704 = vunpack.c.h.b16 %v1601
  %v1705 = vunpack.c.l.b16 %v1602
  %v1706 = vunpack.c.h.b16 %v1602
  %v1707 = vunpack.c.l.b16 %v1603
  %v1708 = vunpack.c.h.b16 %v1603
  %v1709 = vunpack.c.l.b16 %v1604
  %v1710 = vunpack.c.h.b16 %v1604
  %v1711 = vunpack.c.l.b16 %v1605
  %v1712 = vunpack.c.h.b16 %v1605
  %v1713 = vunpack.c.l.b16 %v1606
  %v1714 = vunpack.c.h.b16 %v1606
  %v1715 = vunpack.c.l.b16 %v1607
  %v1716 = vunpack.c.h.b16 %v1607
  %v1717 = vunpack.c.l.b16 %v1608
  %v1718 = vunpack.c.h.b16 %v1608
  %v1719 = vunpack.c.l.b16 %v1609
  %v1720 = vunpack.c.h.b16 %v1609
  %v1721 = vunpack.c.l.b16 %v1610
  %v1722 = vunpack.c.h.b16 %v1610
  %v1723 = vunpack.c.l.b16 %v1611
  %v1724 = vunpack.c.h.b16 %v1611
  %v1725 = vunpack.c.l.b16 %v1612
  %v1726 = vunpack.c.h.b16 %v1612
  %v1727 = vunpack.c.l.b16 %v1613
  %v1728 = vunpack.c.h.b16 %v1613
  %v1729 = vunpack.c.l.b16 %v1614
  %v1730 = vunpack.c.h.b16 %v1614
  %v1731 = vunpack.c.l.b16 %v1615
  %v1732 = vunpack.c.h.b16 %v1615
  %v1733 = vunpack.c.l.b16 %v1616
  %v1734 = vunpack.c.h.b16 %v1616
  %v1735 = vunpack.c.l.b16 %v1617
  %v1736 = vunpack.c.h.b16 %v1617
  %v1737 = vunpack.c.l.b16 %v1618
  %v1738 = vunpack.c.h.b16 %v1618
  %v1739 = vunpack.c.l.b16 %v1619
  %v1740 = vunpack.c.h.b16 %v1619
  %v1741 = vunpack.c.l.b16 %v1620
  %v1742 = vunpack.c.h.b16 %v1620
  %v1743 = vunpack.c.l.b16 %v1621
  %v1744 = vunpack.c.h.b16 %v1621
  %v1745 = vunpack.c.l.b16 %v1622
  %v1746 = vunpack.c.h.b16 %v1622
  %v1747 = vunpack.c.l.b16 %v1623
  %v1748 = vunpack.c.h.b16 %v1623
  %v1749 = vunpack.c.l.b16 %v1624
  %v1750 = vunpack.c.h.b16 %v1624
  %v1751 = vunpack.c.l.b16 %v1625
  %v1752 = vunpack.c.h.b16 %v1625
  %v1753 = vunpack.c.l.b16 %v1626
  %v1754 = vunpack.c.h.b16 %v1626
  %v1755 = vunpack.c.l.b16 %v1627
  %v1756 = vunpack.c.h.b16 %v1627
  %v1757 = vunpack.c.l.b16 %v1628
  %v1758 = vunpack.c.h.b16 %v1628
  %v1759 = vunpack.c.l.b16 %v1629
  %v1760 = vunpack.c.h.b16 %v1629
  %v1761 = vunpack.c.l.b16 %v1630
  %v1762 = vunpack.c.h.b16 %v1630
  %v1763 = vunpack.c.l.b16 %v1631
  %v1764 = vunpack.c.h.b16 %v1631
  %v1765 = vunpack.c.l.b16 %v1632
  %v1766 = vunpack.c.h.b16 %v1632
  %v1767 = vunpack.c.l.b16 %v1633
  %v1768 = vunpack.c.h.b16 %v1633
  %v1769 = vunpack.c.l.b16 %v1634
  %v1770 = vunpack.c.h.b16 %v1634
  %v1771 = vunpack.c.l.b16 %v1635
  %v1772 = vunpack.c.h.b16 %v1635
  %v1773 = vunpack.c.l.b16 %v1636
  %v1774 = vunpack.c.h.b16 %v1636
  %v1775 = vpack.c.b16 %v1699, %v1695
  %v1776 = vpack.c.b16 %v1700, %v1696
  %v1777 = vpack.c.b16 %v1701, %v1697
  %v1778 = vpack.c.b16 %v1702, %v1698
  %v1779 = vpack.c.b16 %v1707, %v1703
  %v1780 = vpack.c.b16 %v1708, %v1704
  %v1781 = vpack.c.b16 %v1709, %v1705
  %v1782 = vpack.c.b16 %v1710, %v1706
  %v1783 = vpack.c.b16 %v1715, %v1711
  %v1784 = vpack.c.b16 %v1716, %v1712
  %v1785 = vpack.c.b16 %v1717, %v1713
  %v1786 = vpack.c.b16 %v1718, %v1714
  %v1787 = vpack.c.b16 %v1723, %v1719
  %v1788 = vpack.c.b16 %v1724, %v1720
  %v1789 = vpack.c.b16 %v1725, %v1721
  %v1790 = vpack.c.b16 %v1726, %v1722
  %v1791 = vpack.c.b16 %v1731, %v1727
  %v1792 = vpack.c.b16 %v1732, %v1728
  %v1793 = vpack.c.b16 %v1733, %v1729
  %v1794 = vpack.c.b16 %v1734, %v1730
  %v1795 = vpack.c.b16 %v1739, %v1735
  %v1796 = vpack.c.b16 %v1740, %v1736
  %v1797 = vpack.c.b16 %v1741, %v1737
  %v1798 = vpack.c.b16 %v1742, %v1738
  %v1799 = vpack.c.b16 %v1747, %v1743
  %v1800 = vpack.c.b16 %v1748, %v1744
  %v1801 = vpack.c.b16 %v1749, %v1745
  %v1802 = vpack.c.b16 %v1750, %v1746
  %v1803 = vpack.c.b16 %v1755, %v1751
  %v1804 = vpack.c.b16 %v1756, %v1752
  %v1805 = vpack.c.b16 %v1757, %v1753
  %v1806 = vpack.c.b16 %v1758, %v1754
  %v1807 = vpack.c.b16 %v1763, %v1759
  %v1808 = vpack.c.b16 %v1764, %v1760
  %v1809 = vpack.c.b16 %v1765, %v1761
  %v1810 = vpack.c.b16 %v1766, %v1762
  %v1811 = vpack.c.b16 %v1771, %v1767
  %v1812 = vpack.c.b16 %v1772, %v1768
  %v1813 = vpack.c.b16 %v1773, %v1769
  %v1814 = vpack.c.b16 %v1774, %v1770
  %v1856 = vsel %vm987, %v1650, 0
  %v1859 = vsel %vm987, %v1652, 0
  %1861 = vmatprep.subr.bf16.mxu0 %v1804
  %1862 = vmatpush1.bf16.msra.mxu0 %v1803
  %1863 = vmatprep.subr.bf16.mxu0 %v1800
  %1864 = vmatpush1.bf16.msra.mxu0 %v1799
  %1865 = vmatprep.subr.bf16.mxu0 %v1796
  %1866 = vmatpush1.bf16.msra.mxu0 %v1795
  %1867 = vmatprep.subr.bf16.mxu0 %v1792
  %1868 = vmatpush1.bf16.msra.mxu0 %v1791
  %1869 = vmatprep.subr.bf16.mxu0 %v1788
  %1870 = vmatpush1.bf16.msra.mxu0 %v1787
  %1871 = vmatprep.subr.bf16.mxu0 %v1784
  %1872 = vmatpush1.bf16.msra.mxu0 %v1783
  %1873 = vmatprep.subr.bf16.mxu0 %v1780
  %1874 = vmatpush1.bf16.msra.mxu0 %v1779
  %1875 = vmatprep.subr.bf16.mxu0 %v1776
  %1876 = vmatpush1.bf16.msra.mxu0 %v1775
  %1877 = vmatprep.subr.bf16.mxu0 0
  %1878 = vmatpush2.bf16.msra.mxu0 0
  %1879 = vmatprep.subr.bf16.mxu0 0
  %1880 = vmatpush2.bf16.msra.mxu0 0
  %1881 = vmatprep.subr.bf16.mxu0 0
  %1882 = vmatpush2.bf16.msra.mxu0 0
  %1883 = vmatprep.subr.bf16.mxu0 0
  %1884 = vmatpush2.bf16.msra.mxu0 0
  %1885 = vmatprep.subr.bf16.mxu0 0
  %1886 = vmatpush2.bf16.msra.mxu0 0
  %1887 = vmatprep.subr.bf16.mxu0 0
  %1888 = vmatpush2.bf16.msra.mxu0 0
  %1889 = vmatprep.subr.bf16.mxu0 %v1812
  %1890 = vmatpush2.bf16.msra.mxu0 %v1811
  %1891 = vmatprep.subr.bf16.mxu0 %v1808
  %1892 = vmatpush2.bf16.msra.mxu0 %v1807
  %1893 = vmatprep.mubr.bf16.mxu0 %v1856
  %1894 = vmatmul.mubr.bf16.gmra.mxu0 %v1649
  %v1895 = vpop.f32.mrf.mxu0
  %v1896 = vadd.f32 0.0, %v1895
  %v1897 = vpop.f32.mrf.mxu0
  %v1898 = vadd.f32 0.0, %v1897
  %v1899 = vpop.f32.mrf.mxu0
  %v1900 = vadd.f32 0.0, %v1899
  %v1901 = vpop.f32.mrf.mxu0
  %v1902 = vadd.f32 0.0, %v1901
  %1903 = vmatprep.mubr.bf16.mxu0 %v1859
  %1904 = vmatmul.mubr.bf16.gmra.mxu0 %v1651
  %v1905 = vpop.f32.mrf.mxu0
  %v1906 = vadd.f32 0.0, %v1905
  %v1907 = vpop.f32.mrf.mxu0
  %v1908 = vadd.f32 0.0, %v1907
  %v1909 = vpop.f32.mrf.mxu0
  %v1910 = vadd.f32 0.0, %v1909
  %v1911 = vpop.f32.mrf.mxu0
  %v1912 = vadd.f32 0.0, %v1911
  %1913 = vdwg.mxu0
  %1914 = vmatprep.subr.bf16.mxu0 %v1806
  %1915 = vmatpush1.bf16.msra.mxu0 %v1805
  %1916 = vmatprep.subr.bf16.mxu0 %v1802
  %1917 = vmatpush1.bf16.msra.mxu0 %v1801
  %1918 = vmatprep.subr.bf16.mxu0 %v1798
  %1919 = vmatpush1.bf16.msra.mxu0 %v1797
  %1920 = vmatprep.subr.bf16.mxu0 %v1794
  %1921 = vmatpush1.bf16.msra.mxu0 %v1793
  %1922 = vmatprep.subr.bf16.mxu0 %v1790
  %1923 = vmatpush1.bf16.msra.mxu0 %v1789
  %1924 = vmatprep.subr.bf16.mxu0 %v1786
  %1925 = vmatpush1.bf16.msra.mxu0 %v1785
  %1926 = vmatprep.subr.bf16.mxu0 %v1782
  %1927 = vmatpush1.bf16.msra.mxu0 %v1781
  %1928 = vmatprep.subr.bf16.mxu0 %v1778
  %1929 = vmatpush1.bf16.msra.mxu0 %v1777
  %1930 = vmatprep.subr.bf16.mxu0 0
  %1931 = vmatpush2.bf16.msra.mxu0 0
  %1932 = vmatprep.subr.bf16.mxu0 0
  %1933 = vmatpush2.bf16.msra.mxu0 0
  %1934 = vmatprep.subr.bf16.mxu0 0
  %1935 = vmatpush2.bf16.msra.mxu0 0
  %1936 = vmatprep.subr.bf16.mxu0 0
  %1937 = vmatpush2.bf16.msra.mxu0 0
  %1938 = vmatprep.subr.bf16.mxu0 0
  %1939 = vmatpush2.bf16.msra.mxu0 0
  %1940 = vmatprep.subr.bf16.mxu0 0
  %1941 = vmatpush2.bf16.msra.mxu0 0
  %1942 = vmatprep.subr.bf16.mxu0 %v1814
  %1943 = vmatpush2.bf16.msra.mxu0 %v1813
  %1944 = vmatprep.subr.bf16.mxu0 %v1810
  %1945 = vmatpush2.bf16.msra.mxu0 %v1809
  %1946 = vmatprep.mubr.bf16.mxu0 %v1856
  %1947 = vmatmul.mubr.bf16.gmra.mxu0 %v1649
  %v1948 = vpop.f32.mrf.mxu0
  %v1949 = vadd.f32 0.0, %v1948
  %v1950 = vpop.f32.mrf.mxu0
  %v1951 = vadd.f32 0.0, %v1950
  %v1952 = vpop.f32.mrf.mxu0
  %v1953 = vadd.f32 0.0, %v1952
  %v1954 = vpop.f32.mrf.mxu0
  %v1955 = vadd.f32 0.0, %v1954
  %1956 = vmatprep.mubr.bf16.mxu0 %v1859
  %1957 = vmatmul.mubr.bf16.gmra.mxu0 %v1651
  %v1958 = vpop.f32.mrf.mxu0
  %v1959 = vadd.f32 0.0, %v1958
  %v1960 = vpop.f32.mrf.mxu0
  %v1961 = vadd.f32 0.0, %v1960
  %v1962 = vpop.f32.mrf.mxu0
  %v1963 = vadd.f32 0.0, %v1962
  %v1964 = vpop.f32.mrf.mxu0
  %v1965 = vadd.f32 0.0, %v1964
  %1966 = vdwg.mxu0
  %v1967 = vmax.f32 %v1896, 0.0
  %v1968 = vmax.f32 %v1898, 0.0
  %v1969 = vmax.f32 %v1949, 0.0
  %v1970 = vmax.f32 %v1951, 0.0
  %v1971 = vmax.f32 %v1900, 0.0
  %v1972 = vmax.f32 %v1902, 0.0
  %v1973 = vmax.f32 %v1953, 0.0
  %v1974 = vmax.f32 %v1955, 0.0
  %v1975 = vmax.f32 %v1906, 0.0
  %v1976 = vmax.f32 %v1908, 0.0
  %v1977 = vmax.f32 %v1959, 0.0
  %v1978 = vmax.f32 %v1961, 0.0
  %v1979 = vmax.f32 %v1910, 0.0
  %v1980 = vmax.f32 %v1912, 0.0
  %v1981 = vmax.f32 %v1963, 0.0
  %v1982 = vmax.f32 %v1965, 0.0
  %1983 = vrot.lane.b32.xlu0 %v81, 17
  %v1984 = vpop.permute.xlu0 %1983
  %1985 = vrot.lane.b32.xlu0 %v83, 17
  %v1986 = vpop.permute.xlu0 %1985
  %1987 = vrot.lane.b32.xlu0 %v82, 17
  %v1988 = vpop.permute.xlu0 %1987
  %1989 = vrot.lane.b32.xlu0 %v84, 17
  %v1990 = vpop.permute.xlu0 %1989
  %1991 = vrot.lane.b32.xlu0 %v86, 17
  %v1992 = vpop.permute.xlu0 %1991
  %1993 = vrot.lane.b32.xlu0 %v88, 17
  %v1994 = vpop.permute.xlu0 %1993
  %1995 = vrot.lane.b32.xlu0 %v87, 17
  %v1996 = vpop.permute.xlu0 %1995
  %1997 = vrot.lane.b32.xlu0 %v89, 17
  %v1998 = vpop.permute.xlu0 %1997
  %v1999 = vsel %vm108, %v1992, %v1996
  %v2000 = vsel %vm108, %v1994, %v1998
  %v2001 = vsel %vm108, %v1988, %v1992
  %v2002 = vsel %vm108, %v1990, %v1994
  %v2003 = vsel %vm108, %v1984, %v1988
  %v2004 = vsel %vm108, %v1986, %v1990
  %v2005 = vsel %vm108, %v1996, %v1984
  %v2006 = vsel %vm108, %v1998, %v1986
  %v2007 = vmul.f32 %v2005, %v120
  %v2008 = vmul.f32 %v2003, %v124
  %v2009 = vmul.f32 %v2001, %v128
  %v2010 = vmul.f32 %v1999, %v132
  %v2011 = vmul.f32 %v2006, %v120
  %v2012 = vmul.f32 %v2004, %v124
  %v2013 = vmul.f32 %v2002, %v128
  %v2014 = vmul.f32 %v2000, %v132
  %v2015 = vpack.c.bf16 %v2011, %v2007
  %v2016 = vpack.c.bf16 %v2012, %v2008
  %v2017 = vpack.c.bf16 %v2013, %v2009
  %v2018 = vpack.c.bf16 %v2014, %v2010
  %v2023 = vunpack.c.l.b16 %v2015
  %v2024 = vunpack.c.l.b16 %v2016
  %v2025 = vunpack.c.l.b16 %v2017
  %v2026 = vunpack.c.l.b16 %v2018
  %v2027 = vunpack.c.h.b16 %v2015
  %v2028 = vunpack.c.h.b16 %v2016
  %v2029 = vunpack.c.h.b16 %v2017
  %v2030 = vunpack.c.h.b16 %v2018
  %v2031 = vpack.c.b16 %v2024, %v2023
  %v2032 = vpack.c.b16 %v2026, %v2025
  %v2033 = vpack.c.b16 %v2028, %v2027
  %v2034 = vpack.c.b16 %v2030, %v2029
  %2039 = vst [vmem:[#allocation2 + $0x20] sm:$0xff] %v2031
  %2040 = vst [vmem:[#allocation2 + $0x28] sm:$0xff] %v2032
  %2041 = vst [vmem:[#allocation2 + $0x30] sm:$0xff] %v2033
  %2042 = vst [vmem:[#allocation2 + $0x38] sm:$0xff] %v2034
  %2043 = vrot.lane.b32.xlu0 %v81, 16
  %v2044 = vpop.permute.xlu0 %2043
  %2045 = vrot.lane.b32.xlu0 %v83, 16
  %v2046 = vpop.permute.xlu0 %2045
  %2047 = vrot.lane.b32.xlu0 %v82, 16
  %v2048 = vpop.permute.xlu0 %2047
  %2049 = vrot.lane.b32.xlu0 %v84, 16
  %v2050 = vpop.permute.xlu0 %2049
  %2051 = vrot.lane.b32.xlu0 %v86, 16
  %v2052 = vpop.permute.xlu0 %2051
  %2053 = vrot.lane.b32.xlu0 %v88, 16
  %v2054 = vpop.permute.xlu0 %2053
  %2055 = vrot.lane.b32.xlu0 %v87, 16
  %v2056 = vpop.permute.xlu0 %2055
  %2057 = vrot.lane.b32.xlu0 %v89, 16
  %v2058 = vpop.permute.xlu0 %2057
  %v2059 = vsel %vm185, %v2052, %v2056
  %v2060 = vsel %vm185, %v2054, %v2058
  %v2061 = vsel %vm185, %v2048, %v2052
  %v2062 = vsel %vm185, %v2050, %v2054
  %v2063 = vsel %vm185, %v2044, %v2048
  %v2064 = vsel %vm185, %v2046, %v2050
  %v2065 = vsel %vm185, %v2056, %v2044
  %v2066 = vsel %vm185, %v2058, %v2046
  %v2067 = vmul.f32 %v2065, %v197
  %v2068 = vmul.f32 %v2063, %v201
  %v2069 = vmul.f32 %v2061, %v205
  %v2070 = vmul.f32 %v2059, %v209
  %v2071 = vmul.f32 %v2066, %v197
  %v2072 = vmul.f32 %v2064, %v201
  %v2073 = vmul.f32 %v2062, %v205
  %v2074 = vmul.f32 %v2060, %v209
  %v2075 = vpack.c.bf16 %v2071, %v2067
  %v2076 = vpack.c.bf16 %v2072, %v2068
  %v2077 = vpack.c.bf16 %v2073, %v2069
  %v2078 = vpack.c.bf16 %v2074, %v2070
  %v2083 = vunpack.c.l.b16 %v2075
  %v2084 = vunpack.c.l.b16 %v2076
  %v2085 = vunpack.c.l.b16 %v2077
  %v2086 = vunpack.c.l.b16 %v2078
  %v2087 = vunpack.c.h.b16 %v2075
  %v2088 = vunpack.c.h.b16 %v2076
  %v2089 = vunpack.c.h.b16 %v2077
  %v2090 = vunpack.c.h.b16 %v2078
  %v2091 = vpack.c.b16 %v2084, %v2083
  %v2092 = vpack.c.b16 %v2086, %v2085
  %v2093 = vpack.c.b16 %v2088, %v2087
  %v2094 = vpack.c.b16 %v2090, %v2089
  %2099 = vst [vmem:[#allocation2 + $0x40] sm:$0xff] %v2091
  %2100 = vst [vmem:[#allocation2 + $0x48] sm:$0xff] %v2092
  %2101 = vst [vmem:[#allocation2 + $0x50] sm:$0xff] %v2093
  %2102 = vst [vmem:[#allocation2 + $0x58] sm:$0xff] %v2094
  %2103 = vrot.lane.b32.xlu0 %v81, 15
  %v2104 = vpop.permute.xlu0 %2103
  %2105 = vrot.lane.b32.xlu0 %v83, 15
  %v2106 = vpop.permute.xlu0 %2105
  %2107 = vrot.lane.b32.xlu0 %v82, 15
  %v2108 = vpop.permute.xlu0 %2107
  %2109 = vrot.lane.b32.xlu0 %v84, 15
  %v2110 = vpop.permute.xlu0 %2109
  %2111 = vrot.lane.b32.xlu0 %v86, 15
  %v2112 = vpop.permute.xlu0 %2111
  %2113 = vrot.lane.b32.xlu0 %v88, 15
  %v2114 = vpop.permute.xlu0 %2113
  %2115 = vrot.lane.b32.xlu0 %v87, 15
  %v2116 = vpop.permute.xlu0 %2115
  %2117 = vrot.lane.b32.xlu0 %v89, 15
  %v2118 = vpop.permute.xlu0 %2117
  %v2119 = vsel %vm262, %v2112, %v2116
  %v2120 = vsel %vm262, %v2114, %v2118
  %v2121 = vsel %vm262, %v2108, %v2112
  %v2122 = vsel %vm262, %v2110, %v2114
  %v2123 = vsel %vm262, %v2104, %v2108
  %v2124 = vsel %vm262, %v2106, %v2110
  %v2125 = vsel %vm262, %v2116, %v2104
  %v2126 = vsel %vm262, %v2118, %v2106
  %v2127 = vmul.f32 %v2125, %v274
  %v2128 = vmul.f32 %v2123, %v278
  %v2129 = vmul.f32 %v2121, %v282
  %v2130 = vmul.f32 %v2119, %v286
  %v2131 = vmul.f32 %v2126, %v274
  %v2132 = vmul.f32 %v2124, %v278
  %v2133 = vmul.f32 %v2122, %v282
  %v2134 = vmul.f32 %v2120, %v286
  %v2135 = vpack.c.bf16 %v2131, %v2127
  %v2136 = vpack.c.bf16 %v2132, %v2128
  %v2137 = vpack.c.bf16 %v2133, %v2129
  %v2138 = vpack.c.bf16 %v2134, %v2130
  %v2143 = vunpack.c.l.b16 %v2135
  %v2144 = vunpack.c.l.b16 %v2136
  %v2145 = vunpack.c.l.b16 %v2137
  %v2146 = vunpack.c.l.b16 %v2138
  %v2147 = vunpack.c.h.b16 %v2135
  %v2148 = vunpack.c.h.b16 %v2136
  %v2149 = vunpack.c.h.b16 %v2137
  %v2150 = vunpack.c.h.b16 %v2138
  %v2151 = vpack.c.b16 %v2144, %v2143
  %v2152 = vpack.c.b16 %v2146, %v2145
  %v2153 = vpack.c.b16 %v2148, %v2147
  %v2154 = vpack.c.b16 %v2150, %v2149
  %2159 = vst [vmem:[#allocation2 + $0x60] sm:$0xff] %v2151
  %2160 = vst [vmem:[#allocation2 + $0x68] sm:$0xff] %v2152
  %2161 = vst [vmem:[#allocation2 + $0x70] sm:$0xff] %v2153
  %2162 = vst [vmem:[#allocation2 + $0x78] sm:$0xff] %v2154
  %2163 = vrot.lane.b32.xlu0 %v81, 1
  %v2164 = vpop.permute.xlu0 %2163
  %2165 = vrot.lane.b32.xlu0 %v83, 1
  %v2166 = vpop.permute.xlu0 %2165
  %2167 = vrot.lane.b32.xlu0 %v82, 1
  %v2168 = vpop.permute.xlu0 %2167
  %2169 = vrot.lane.b32.xlu0 %v84, 1
  %v2170 = vpop.permute.xlu0 %2169
  %2171 = vrot.lane.b32.xlu0 %v86, 1
  %v2172 = vpop.permute.xlu0 %2171
  %2173 = vrot.lane.b32.xlu0 %v88, 1
  %v2174 = vpop.permute.xlu0 %2173
  %2175 = vrot.lane.b32.xlu0 %v87, 1
  %v2176 = vpop.permute.xlu0 %2175
  %2177 = vrot.lane.b32.xlu0 %v89, 1
  %v2178 = vpop.permute.xlu0 %2177
  %v2179 = vsel %vm339, %v2172, %v2176
  %v2180 = vsel %vm339, %v2174, %v2178
  %v2181 = vsel %vm339, %v2168, %v2172
  %v2182 = vsel %vm339, %v2170, %v2174
  %v2183 = vsel %vm339, %v2164, %v2168
  %v2184 = vsel %vm339, %v2166, %v2170
  %v2185 = vsel %vm339, %v2176, %v2164
  %v2186 = vsel %vm339, %v2178, %v2166
  %v2187 = vmul.f32 %v2185, %v351
  %v2188 = vmul.f32 %v2183, %v355
  %v2189 = vmul.f32 %v2181, %v359
  %v2190 = vmul.f32 %v2179, %v363
  %v2191 = vmul.f32 %v2186, %v351
  %v2192 = vmul.f32 %v2184, %v355
  %v2193 = vmul.f32 %v2182, %v359
  %v2194 = vmul.f32 %v2180, %v363
  %v2195 = vpack.c.bf16 %v2191, %v2187
  %v2196 = vpack.c.bf16 %v2192, %v2188
  %v2197 = vpack.c.bf16 %v2193, %v2189
  %v2198 = vpack.c.bf16 %v2194, %v2190
  %v2203 = vunpack.c.l.b16 %v2195
  %v2204 = vunpack.c.l.b16 %v2196
  %v2205 = vunpack.c.l.b16 %v2197
  %v2206 = vunpack.c.l.b16 %v2198
  %v2207 = vunpack.c.h.b16 %v2195
  %v2208 = vunpack.c.h.b16 %v2196
  %v2209 = vunpack.c.h.b16 %v2197
  %v2210 = vunpack.c.h.b16 %v2198
  %v2211 = vpack.c.b16 %v2204, %v2203
  %v2212 = vpack.c.b16 %v2206, %v2205
  %v2213 = vpack.c.b16 %v2208, %v2207
  %v2214 = vpack.c.b16 %v2210, %v2209
  %2219 = vst [vmem:[#allocation2 + $0x80] sm:$0xff] %v2211
  %2220 = vst [vmem:[#allocation2 + $0x88] sm:$0xff] %v2212
  %2221 = vst [vmem:[#allocation2 + $0x90] sm:$0xff] %v2213
  %2222 = vst [vmem:[#allocation2 + $0x98] sm:$0xff] %v2214
  %v2223 = vpack.c.bf16 %v83, %v81
  %v2224 = vpack.c.bf16 %v84, %v82
  %v2225 = vpack.c.bf16 %v88, %v86
  %v2226 = vpack.c.bf16 %v89, %v87
  %v2231 = vunpack.c.l.b16 %v2223
  %v2232 = vunpack.c.l.b16 %v2224
  %v2233 = vunpack.c.l.b16 %v2225
  %v2234 = vunpack.c.l.b16 %v2226
  %v2235 = vunpack.c.h.b16 %v2223
  %v2236 = vunpack.c.h.b16 %v2224
  %v2237 = vunpack.c.h.b16 %v2225
  %v2238 = vunpack.c.h.b16 %v2226
  %v2239 = vpack.c.b16 %v2232, %v2231
  %v2240 = vpack.c.b16 %v2234, %v2233
  %v2241 = vpack.c.b16 %v2236, %v2235
  %v2242 = vpack.c.b16 %v2238, %v2237
  %2247 = vst [vmem:[#allocation2 + $0xa0] sm:$0xff] %v2239
  %2248 = vst [vmem:[#allocation2 + $0xa8] sm:$0xff] %v2240
  %2249 = vst [vmem:[#allocation2 + $0xb0] sm:$0xff] %v2241
  %2250 = vst [vmem:[#allocation2 + $0xb8] sm:$0xff] %v2242
  %2251 = vrot.lane.b32.xlu0 %v81, 127
  %v2252 = vpop.permute.xlu0 %2251
  %2253 = vrot.lane.b32.xlu0 %v83, 127
  %v2254 = vpop.permute.xlu0 %2253
  %2255 = vrot.lane.b32.xlu0 %v82, 127
  %v2256 = vpop.permute.xlu0 %2255
  %2257 = vrot.lane.b32.xlu0 %v84, 127
  %v2258 = vpop.permute.xlu0 %2257
  %2259 = vrot.lane.b32.xlu0 %v86, 127
  %v2260 = vpop.permute.xlu0 %2259
  %2261 = vrot.lane.b32.xlu0 %v88, 127
  %v2262 = vpop.permute.xlu0 %2261
  %2263 = vrot.lane.b32.xlu0 %v87, 127
  %v2264 = vpop.permute.xlu0 %2263
  %2265 = vrot.lane.b32.xlu0 %v89, 127
  %v2266 = vpop.permute.xlu0 %2265
  %v2267 = vsel %vm444, %v2260, %v2264
  %v2268 = vsel %vm444, %v2262, %v2266
  %v2269 = vsel %vm444, %v2256, %v2260
  %v2270 = vsel %vm444, %v2258, %v2262
  %v2271 = vsel %vm444, %v2252, %v2256
  %v2272 = vsel %vm444, %v2254, %v2258
  %v2273 = vsel %vm444, %v2264, %v2252
  %v2274 = vsel %vm444, %v2266, %v2254
  %v2275 = vmul.f32 %v2271, %v456
  %v2276 = vmul.f32 %v2269, %v460
  %v2277 = vmul.f32 %v2267, %v464
  %v2278 = vmul.f32 %v2273, %v468
  %v2279 = vmul.f32 %v2272, %v456
  %v2280 = vmul.f32 %v2270, %v460
  %v2281 = vmul.f32 %v2268, %v464
  %v2282 = vmul.f32 %v2274, %v468
  %v2283 = vpack.c.bf16 %v2279, %v2275
  %v2284 = vpack.c.bf16 %v2280, %v2276
  %v2285 = vpack.c.bf16 %v2281, %v2277
  %v2286 = vpack.c.bf16 %v2282, %v2278
  %v2291 = vunpack.c.l.b16 %v2283
  %v2292 = vunpack.c.l.b16 %v2284
  %v2293 = vunpack.c.l.b16 %v2285
  %v2294 = vunpack.c.l.b16 %v2286
  %v2295 = vunpack.c.h.b16 %v2283
  %v2296 = vunpack.c.h.b16 %v2284
  %v2297 = vunpack.c.h.b16 %v2285
  %v2298 = vunpack.c.h.b16 %v2286
  %v2299 = vpack.c.b16 %v2292, %v2291
  %v2300 = vpack.c.b16 %v2294, %v2293
  %v2301 = vpack.c.b16 %v2296, %v2295
  %v2302 = vpack.c.b16 %v2298, %v2297
  %2307 = vst [vmem:[#allocation2 + $0xc0] sm:$0xff] %v2299
  %2308 = vst [vmem:[#allocation2 + $0xc8] sm:$0xff] %v2300
  %2309 = vst [vmem:[#allocation2 + $0xd0] sm:$0xff] %v2301
  %2310 = vst [vmem:[#allocation2 + $0xd8] sm:$0xff] %v2302
  %2311 = vrot.lane.b32.xlu0 %v81, 113
  %v2312 = vpop.permute.xlu0 %2311
  %2313 = vrot.lane.b32.xlu0 %v83, 113
  %v2314 = vpop.permute.xlu0 %2313
  %2315 = vrot.lane.b32.xlu0 %v82, 113
  %v2316 = vpop.permute.xlu0 %2315
  %2317 = vrot.lane.b32.xlu0 %v84, 113
  %v2318 = vpop.permute.xlu0 %2317
  %2319 = vrot.lane.b32.xlu0 %v86, 113
  %v2320 = vpop.permute.xlu0 %2319
  %2321 = vrot.lane.b32.xlu0 %v88, 113
  %v2322 = vpop.permute.xlu0 %2321
  %2323 = vrot.lane.b32.xlu0 %v87, 113
  %v2324 = vpop.permute.xlu0 %2323
  %2325 = vrot.lane.b32.xlu0 %v89, 113
  %v2326 = vpop.permute.xlu0 %2325
  %v2327 = vsel %vm521, %v2320, %v2324
  %v2328 = vsel %vm521, %v2322, %v2326
  %v2329 = vsel %vm521, %v2316, %v2320
  %v2330 = vsel %vm521, %v2318, %v2322
  %v2331 = vsel %vm521, %v2312, %v2316
  %v2332 = vsel %vm521, %v2314, %v2318
  %v2333 = vsel %vm521, %v2324, %v2312
  %v2334 = vsel %vm521, %v2326, %v2314
  %v2335 = vmul.f32 %v2331, %v533
  %v2336 = vmul.f32 %v2329, %v537
  %v2337 = vmul.f32 %v2327, %v541
  %v2338 = vmul.f32 %v2333, %v545
  %v2339 = vmul.f32 %v2332, %v533
  %v2340 = vmul.f32 %v2330, %v537
  %v2341 = vmul.f32 %v2328, %v541
  %v2342 = vmul.f32 %v2334, %v545
  %v2343 = vpack.c.bf16 %v2339, %v2335
  %v2344 = vpack.c.bf16 %v2340, %v2336
  %v2345 = vpack.c.bf16 %v2341, %v2337
  %v2346 = vpack.c.bf16 %v2342, %v2338
  %v2351 = vunpack.c.l.b16 %v2343
  %v2352 = vunpack.c.l.b16 %v2344
  %v2353 = vunpack.c.l.b16 %v2345
  %v2354 = vunpack.c.l.b16 %v2346
  %v2355 = vunpack.c.h.b16 %v2343
  %v2356 = vunpack.c.h.b16 %v2344
  %v2357 = vunpack.c.h.b16 %v2345
  %v2358 = vunpack.c.h.b16 %v2346
  %v2359 = vpack.c.b16 %v2352, %v2351
  %v2360 = vpack.c.b16 %v2354, %v2353
  %v2361 = vpack.c.b16 %v2356, %v2355
  %v2362 = vpack.c.b16 %v2358, %v2357
  %2367 = vst [vmem:[#allocation2 + $0xe0] sm:$0xff] %v2359
  %2368 = vst [vmem:[#allocation2 + $0xe8] sm:$0xff] %v2360
  %2369 = vst [vmem:[#allocation2 + $0xf0] sm:$0xff] %v2361
  %2370 = vst [vmem:[#allocation2 + $0xf8] sm:$0xff] %v2362
  %2371 = vrot.lane.b32.xlu0 %v81, 112
  %v2372 = vpop.permute.xlu0 %2371
  %2373 = vrot.lane.b32.xlu0 %v83, 112
  %v2374 = vpop.permute.xlu0 %2373
  %2375 = vrot.lane.b32.xlu0 %v82, 112
  %v2376 = vpop.permute.xlu0 %2375
  %2377 = vrot.lane.b32.xlu0 %v84, 112
  %v2378 = vpop.permute.xlu0 %2377
  %2379 = vrot.lane.b32.xlu0 %v86, 112
  %v2380 = vpop.permute.xlu0 %2379
  %2381 = vrot.lane.b32.xlu0 %v88, 112
  %v2382 = vpop.permute.xlu0 %2381
  %2383 = vrot.lane.b32.xlu0 %v87, 112
  %v2384 = vpop.permute.xlu0 %2383
  %2385 = vrot.lane.b32.xlu0 %v89, 112
  %v2386 = vpop.permute.xlu0 %2385
  %v2387 = vsel %vm598, %v2380, %v2384
  %v2388 = vsel %vm598, %v2382, %v2386
  %v2389 = vsel %vm598, %v2376, %v2380
  %v2390 = vsel %vm598, %v2378, %v2382
  %v2391 = vsel %vm598, %v2372, %v2376
  %v2392 = vsel %vm598, %v2374, %v2378
  %v2393 = vsel %vm598, %v2384, %v2372
  %v2394 = vsel %vm598, %v2386, %v2374
  %v2395 = vmul.f32 %v2391, %v610
  %v2396 = vmul.f32 %v2389, %v614
  %v2397 = vmul.f32 %v2387, %v618
  %v2398 = vmul.f32 %v2393, %v622
  %v2399 = vmul.f32 %v2392, %v610
  %v2400 = vmul.f32 %v2390, %v614
  %v2401 = vmul.f32 %v2388, %v618
  %v2402 = vmul.f32 %v2394, %v622
  %v2403 = vpack.c.bf16 %v2399, %v2395
  %v2404 = vpack.c.bf16 %v2400, %v2396
  %v2405 = vpack.c.bf16 %v2401, %v2397
  %v2406 = vpack.c.bf16 %v2402, %v2398
  %v2411 = vunpack.c.l.b16 %v2403
  %v2412 = vunpack.c.l.b16 %v2404
  %v2413 = vunpack.c.l.b16 %v2405
  %v2414 = vunpack.c.l.b16 %v2406
  %v2415 = vunpack.c.h.b16 %v2403
  %v2416 = vunpack.c.h.b16 %v2404
  %v2417 = vunpack.c.h.b16 %v2405
  %v2418 = vunpack.c.h.b16 %v2406
  %v2419 = vpack.c.b16 %v2412, %v2411
  %v2420 = vpack.c.b16 %v2414, %v2413
  %v2421 = vpack.c.b16 %v2416, %v2415
  %v2422 = vpack.c.b16 %v2418, %v2417
  %2427 = vst [vmem:[#allocation2 + $0x100] sm:$0xff] %v2419
  %2428 = vst [vmem:[#allocation2 + $0x108] sm:$0xff] %v2420
  %2429 = vst [vmem:[#allocation2 + $0x110] sm:$0xff] %v2421
  %2430 = vst [vmem:[#allocation2 + $0x118] sm:$0xff] %v2422
  %2431 = vrot.lane.b32.xlu0 %v81, 111
  %v2432 = vpop.permute.xlu0 %2431
  %2433 = vrot.lane.b32.xlu0 %v83, 111
  %v2434 = vpop.permute.xlu0 %2433
  %2435 = vrot.lane.b32.xlu0 %v82, 111
  %v2436 = vpop.permute.xlu0 %2435
  %2437 = vrot.lane.b32.xlu0 %v84, 111
  %v2438 = vpop.permute.xlu0 %2437
  %2439 = vrot.lane.b32.xlu0 %v86, 111
  %v2440 = vpop.permute.xlu0 %2439
  %2441 = vrot.lane.b32.xlu0 %v88, 111
  %v2442 = vpop.permute.xlu0 %2441
  %2443 = vrot.lane.b32.xlu0 %v87, 111
  %v2444 = vpop.permute.xlu0 %2443
  %2445 = vrot.lane.b32.xlu0 %v89, 111
  %v2446 = vpop.permute.xlu0 %2445
  %v2447 = vsel %vm675, %v2440, %v2444
  %v2448 = vsel %vm675, %v2442, %v2446
  %v2449 = vsel %vm675, %v2436, %v2440
  %v2450 = vsel %vm675, %v2438, %v2442
  %v2451 = vsel %vm675, %v2432, %v2436
  %v2452 = vsel %vm675, %v2434, %v2438
  %v2453 = vsel %vm675, %v2444, %v2432
  %v2454 = vsel %vm675, %v2446, %v2434
  %v2455 = vmul.f32 %v2451, %v687
  %v2456 = vmul.f32 %v2449, %v691
  %v2457 = vmul.f32 %v2447, %v695
  %v2458 = vmul.f32 %v2453, %v699
  %v2459 = vmul.f32 %v2452, %v687
  %v2460 = vmul.f32 %v2450, %v691
  %v2461 = vmul.f32 %v2448, %v695
  %v2462 = vmul.f32 %v2454, %v699
  %v2463 = vpack.c.bf16 %v2459, %v2455
  %v2464 = vpack.c.bf16 %v2460, %v2456
  %v2465 = vpack.c.bf16 %v2461, %v2457
  %v2466 = vpack.c.bf16 %v2462, %v2458
  %v2471 = vunpack.c.l.b16 %v2463
  %v2472 = vunpack.c.l.b16 %v2464
  %v2473 = vunpack.c.l.b16 %v2465
  %v2474 = vunpack.c.l.b16 %v2466
  %v2475 = vunpack.c.h.b16 %v2463
  %v2476 = vunpack.c.h.b16 %v2464
  %v2477 = vunpack.c.h.b16 %v2465
  %v2478 = vunpack.c.h.b16 %v2466
  %v2479 = vpack.c.b16 %v2472, %v2471
  %v2480 = vpack.c.b16 %v2474, %v2473
  %v2481 = vpack.c.b16 %v2476, %v2475
  %v2482 = vpack.c.b16 %v2478, %v2477
  %2487 = vst [vmem:[#allocation2 + $0x120] sm:$0xff] %v2479
  %2488 = vst [vmem:[#allocation2 + $0x128] sm:$0xff] %v2480
  %2489 = vst [vmem:[#allocation2 + $0x130] sm:$0xff] %v2481
  %2490 = vst [vmem:[#allocation2 + $0x138] sm:$0xff] %v2482
  %v2491 = vld [vmem:[%s5] sm:$0xff]
  %v2492 = vld [vmem:[%s5 + $0x8] sm:$0xff]
  %v2493 = vld [vmem:[#allocation2] sm:$0xff]
  %v2494 = vld [vmem:[#allocation2 + $0x8] sm:$0xff]
  %v2495 = vld [vmem:[#allocation2 + $0x10] sm:$0xff]
  %v2496 = vld [vmem:[#allocation2 + $0x18] sm:$0xff]
  %v2497 = vld [vmem:[#allocation2 + $0x20] sm:$0xff]
  %v2498 = vld [vmem:[#allocation2 + $0x28] sm:$0xff]
  %v2499 = vld [vmem:[#allocation2 + $0x30] sm:$0xff]
  %v2500 = vld [vmem:[#allocation2 + $0x38] sm:$0xff]
  %v2501 = vld [vmem:[#allocation2 + $0x40] sm:$0xff]
  %v2502 = vld [vmem:[#allocation2 + $0x48] sm:$0xff]
  %v2503 = vld [vmem:[#allocation2 + $0x50] sm:$0xff]
  %v2504 = vld [vmem:[#allocation2 + $0x58] sm:$0xff]
  %v2505 = vld [vmem:[#allocation2 + $0x60] sm:$0xff]
  %v2506 = vld [vmem:[#allocation2 + $0x68] sm:$0xff]
  %v2507 = vld [vmem:[#allocation2 + $0x70] sm:$0xff]
  %v2508 = vld [vmem:[#allocation2 + $0x78] sm:$0xff]
  %v2509 = vld [vmem:[#allocation2 + $0x80] sm:$0xff]
  %v2510 = vld [vmem:[#allocation2 + $0x88] sm:$0xff]
  %v2511 = vld [vmem:[#allocation2 + $0x90] sm:$0xff]
  %v2512 = vld [vmem:[#allocation2 + $0x98] sm:$0xff]
  %v2513 = vld [vmem:[#allocation2 + $0xa0] sm:$0xff]
  %v2514 = vld [vmem:[#allocation2 + $0xa8] sm:$0xff]
  %v2515 = vld [vmem:[#allocation2 + $0xb0] sm:$0xff]
  %v2516 = vld [vmem:[#allocation2 + $0xb8] sm:$0xff]
  %v2517 = vld [vmem:[#allocation2 + $0xc0] sm:$0xff]
  %v2518 = vld [vmem:[#allocation2 + $0xc8] sm:$0xff]
  %v2519 = vld [vmem:[#allocation2 + $0xd0] sm:$0xff]
  %v2520 = vld [vmem:[#allocation2 + $0xd8] sm:$0xff]
  %v2521 = vld [vmem:[#allocation2 + $0xe0] sm:$0xff]
  %v2522 = vld [vmem:[#allocation2 + $0xe8] sm:$0xff]
  %v2523 = vld [vmem:[#allocation2 + $0xf0] sm:$0xff]
  %v2524 = vld [vmem:[#allocation2 + $0xf8] sm:$0xff]
  %v2525 = vld [vmem:[#allocation2 + $0x100] sm:$0xff]
  %v2526 = vld [vmem:[#allocation2 + $0x108] sm:$0xff]
  %v2527 = vld [vmem:[#allocation2 + $0x110] sm:$0xff]
  %v2528 = vld [vmem:[#allocation2 + $0x118] sm:$0xff]
  %v2529 = vld [vmem:[#allocation2 + $0x120] sm:$0xff]
  %v2530 = vld [vmem:[#allocation2 + $0x128] sm:$0xff]
  %v2531 = vld [vmem:[#allocation2 + $0x130] sm:$0xff]
  %v2532 = vld [vmem:[#allocation2 + $0x138] sm:$0xff]
  %v2535 = vunpack.c.l.b16 %v2491
  %v2536 = vunpack.c.h.b16 %v2491
  %v2537 = vunpack.c.l.b16 %v2492
  %v2538 = vunpack.c.h.b16 %v2492
  %v2539 = vpack.c.b16 %v2537, %v2535
  %v2540 = vpack.c.b16 %v2538, %v2536
  %v2582 = vunpack.c.l.b16 %v2493
  %v2583 = vunpack.c.h.b16 %v2493
  %v2584 = vunpack.c.l.b16 %v2494
  %v2585 = vunpack.c.h.b16 %v2494
  %v2586 = vunpack.c.l.b16 %v2495
  %v2587 = vunpack.c.h.b16 %v2495
  %v2588 = vunpack.c.l.b16 %v2496
  %v2589 = vunpack.c.h.b16 %v2496
  %v2590 = vunpack.c.l.b16 %v2497
  %v2591 = vunpack.c.h.b16 %v2497
  %v2592 = vunpack.c.l.b16 %v2498
  %v2593 = vunpack.c.h.b16 %v2498
  %v2594 = vunpack.c.l.b16 %v2499
  %v2595 = vunpack.c.h.b16 %v2499
  %v2596 = vunpack.c.l.b16 %v2500
  %v2597 = vunpack.c.h.b16 %v2500
  %v2598 = vunpack.c.l.b16 %v2501
  %v2599 = vunpack.c.h.b16 %v2501
  %v2600 = vunpack.c.l.b16 %v2502
  %v2601 = vunpack.c.h.b16 %v2502
  %v2602 = vunpack.c.l.b16 %v2503
  %v2603 = vunpack.c.h.b16 %v2503
  %v2604 = vunpack.c.l.b16 %v2504
  %v2605 = vunpack.c.h.b16 %v2504
  %v2606 = vunpack.c.l.b16 %v2505
  %v2607 = vunpack.c.h.b16 %v2505
  %v2608 = vunpack.c.l.b16 %v2506
  %v2609 = vunpack.c.h.b16 %v2506
  %v2610 = vunpack.c.l.b16 %v2507
  %v2611 = vunpack.c.h.b16 %v2507
  %v2612 = vunpack.c.l.b16 %v2508
  %v2613 = vunpack.c.h.b16 %v2508
  %v2614 = vunpack.c.l.b16 %v2509
  %v2615 = vunpack.c.h.b16 %v2509
  %v2616 = vunpack.c.l.b16 %v2510
  %v2617 = vunpack.c.h.b16 %v2510
  %v2618 = vunpack.c.l.b16 %v2511
  %v2619 = vunpack.c.h.b16 %v2511
  %v2620 = vunpack.c.l.b16 %v2512
  %v2621 = vunpack.c.h.b16 %v2512
  %v2622 = vunpack.c.l.b16 %v2513
  %v2623 = vunpack.c.h.b16 %v2513
  %v2624 = vunpack.c.l.b16 %v2514
  %v2625 = vunpack.c.h.b16 %v2514
  %v2626 = vunpack.c.l.b16 %v2515
  %v2627 = vunpack.c.h.b16 %v2515
  %v2628 = vunpack.c.l.b16 %v2516
  %v2629 = vunpack.c.h.b16 %v2516
  %v2630 = vunpack.c.l.b16 %v2517
  %v2631 = vunpack.c.h.b16 %v2517
  %v2632 = vunpack.c.l.b16 %v2518
  %v2633 = vunpack.c.h.b16 %v2518
  %v2634 = vunpack.c.l.b16 %v2519
  %v2635 = vunpack.c.h.b16 %v2519
  %v2636 = vunpack.c.l.b16 %v2520
  %v2637 = vunpack.c.h.b16 %v2520
  %v2638 = vunpack.c.l.b16 %v2521
  %v2639 = vunpack.c.h.b16 %v2521
  %v2640 = vunpack.c.l.b16 %v2522
  %v2641 = vunpack.c.h.b16 %v2522
  %v2642 = vunpack.c.l.b16 %v2523
  %v2643 = vunpack.c.h.b16 %v2523
  %v2644 = vunpack.c.l.b16 %v2524
  %v2645 = vunpack.c.h.b16 %v2524
  %v2646 = vunpack.c.l.b16 %v2525
  %v2647 = vunpack.c.h.b16 %v2525
  %v2648 = vunpack.c.l.b16 %v2526
  %v2649 = vunpack.c.h.b16 %v2526
  %v2650 = vunpack.c.l.b16 %v2527
  %v2651 = vunpack.c.h.b16 %v2527
  %v2652 = vunpack.c.l.b16 %v2528
  %v2653 = vunpack.c.h.b16 %v2528
  %v2654 = vunpack.c.l.b16 %v2529
  %v2655 = vunpack.c.h.b16 %v2529
  %v2656 = vunpack.c.l.b16 %v2530
  %v2657 = vunpack.c.h.b16 %v2530
  %v2658 = vunpack.c.l.b16 %v2531
  %v2659 = vunpack.c.h.b16 %v2531
  %v2660 = vunpack.c.l.b16 %v2532
  %v2661 = vunpack.c.h.b16 %v2532
  %v2662 = vpack.c.b16 %v2586, %v2582
  %v2663 = vpack.c.b16 %v2587, %v2583
  %v2664 = vpack.c.b16 %v2588, %v2584
  %v2665 = vpack.c.b16 %v2589, %v2585
  %v2666 = vpack.c.b16 %v2594, %v2590
  %v2667 = vpack.c.b16 %v2595, %v2591
  %v2668 = vpack.c.b16 %v2596, %v2592
  %v2669 = vpack.c.b16 %v2597, %v2593
  %v2670 = vpack.c.b16 %v2602, %v2598
  %v2671 = vpack.c.b16 %v2603, %v2599
  %v2672 = vpack.c.b16 %v2604, %v2600
  %v2673 = vpack.c.b16 %v2605, %v2601
  %v2674 = vpack.c.b16 %v2610, %v2606
  %v2675 = vpack.c.b16 %v2611, %v2607
  %v2676 = vpack.c.b16 %v2612, %v2608
  %v2677 = vpack.c.b16 %v2613, %v2609
  %v2678 = vpack.c.b16 %v2618, %v2614
  %v2679 = vpack.c.b16 %v2619, %v2615
  %v2680 = vpack.c.b16 %v2620, %v2616
  %v2681 = vpack.c.b16 %v2621, %v2617
  %v2682 = vpack.c.b16 %v2626, %v2622
  %v2683 = vpack.c.b16 %v2627, %v2623
  %v2684 = vpack.c.b16 %v2628, %v2624
  %v2685 = vpack.c.b16 %v2629, %v2625
  %v2686 = vpack.c.b16 %v2634, %v2630
  %v2687 = vpack.c.b16 %v2635, %v2631
  %v2688 = vpack.c.b16 %v2636, %v2632
  %v2689 = vpack.c.b16 %v2637, %v2633
  %v2690 = vpack.c.b16 %v2642, %v2638
  %v2691 = vpack.c.b16 %v2643, %v2639
  %v2692 = vpack.c.b16 %v2644, %v2640
  %v2693 = vpack.c.b16 %v2645, %v2641
  %v2694 = vpack.c.b16 %v2650, %v2646
  %v2695 = vpack.c.b16 %v2651, %v2647
  %v2696 = vpack.c.b16 %v2652, %v2648
  %v2697 = vpack.c.b16 %v2653, %v2649
  %v2698 = vpack.c.b16 %v2658, %v2654
  %v2699 = vpack.c.b16 %v2659, %v2655
  %v2700 = vpack.c.b16 %v2660, %v2656
  %v2701 = vpack.c.b16 %v2661, %v2657
  %v2743 = vsel %vm987, %v2540, 0
  %2745 = vmatprep.subr.bf16.mxu0 %v2691
  %2746 = vmatpush1.bf16.msra.mxu0 %v2690
  %2747 = vmatprep.subr.bf16.mxu0 %v2687
  %2748 = vmatpush1.bf16.msra.mxu0 %v2686
  %2749 = vmatprep.subr.bf16.mxu0 %v2683
  %2750 = vmatpush1.bf16.msra.mxu0 %v2682
  %2751 = vmatprep.subr.bf16.mxu0 %v2679
  %2752 = vmatpush1.bf16.msra.mxu0 %v2678
  %2753 = vmatprep.subr.bf16.mxu0 %v2675
  %2754 = vmatpush1.bf16.msra.mxu0 %v2674
  %2755 = vmatprep.subr.bf16.mxu0 %v2671
  %2756 = vmatpush1.bf16.msra.mxu0 %v2670
  %2757 = vmatprep.subr.bf16.mxu0 %v2667
  %2758 = vmatpush1.bf16.msra.mxu0 %v2666
  %2759 = vmatprep.subr.bf16.mxu0 %v2663
  %2760 = vmatpush1.bf16.msra.mxu0 %v2662
  %2761 = vmatprep.subr.bf16.mxu0 0
  %2762 = vmatpush2.bf16.msra.mxu0 0
  %2763 = vmatprep.subr.bf16.mxu0 0
  %2764 = vmatpush2.bf16.msra.mxu0 0
  %2765 = vmatprep.subr.bf16.mxu0 0
  %2766 = vmatpush2.bf16.msra.mxu0 0
  %2767 = vmatprep.subr.bf16.mxu0 0
  %2768 = vmatpush2.bf16.msra.mxu0 0
  %2769 = vmatprep.subr.bf16.mxu0 0
  %2770 = vmatpush2.bf16.msra.mxu0 0
  %2771 = vmatprep.subr.bf16.mxu0 0
  %2772 = vmatpush2.bf16.msra.mxu0 0
  %2773 = vmatprep.subr.bf16.mxu0 %v2699
  %2774 = vmatpush2.bf16.msra.mxu0 %v2698
  %2775 = vmatprep.subr.bf16.mxu0 %v2695
  %2776 = vmatpush2.bf16.msra.mxu0 %v2694
  %2777 = vmatprep.mubr.bf16.mxu0 %v2743
  %2778 = vmatmul.mubr.bf16.gmra.mxu0 %v2539
  %v2779 = vpop.f32.mrf.mxu0
  %v2780 = vadd.f32 0.0, %v2779
  %v2781 = vpop.f32.mrf.mxu0
  %v2782 = vadd.f32 0.0, %v2781
  %v2783 = vpop.f32.mrf.mxu0
  %v2784 = vadd.f32 0.0, %v2783
  %v2785 = vpop.f32.mrf.mxu0
  %v2786 = vadd.f32 0.0, %v2785
  %2787 = vdwg.mxu0
  %2788 = vmatprep.subr.bf16.mxu0 %v2693
  %2789 = vmatpush1.bf16.msra.mxu0 %v2692
  %2790 = vmatprep.subr.bf16.mxu0 %v2689
  %2791 = vmatpush1.bf16.msra.mxu0 %v2688
  %2792 = vmatprep.subr.bf16.mxu0 %v2685
  %2793 = vmatpush1.bf16.msra.mxu0 %v2684
  %2794 = vmatprep.subr.bf16.mxu0 %v2681
  %2795 = vmatpush1.bf16.msra.mxu0 %v2680
  %2796 = vmatprep.subr.bf16.mxu0 %v2677
  %2797 = vmatpush1.bf16.msra.mxu0 %v2676
  %2798 = vmatprep.subr.bf16.mxu0 %v2673
  %2799 = vmatpush1.bf16.msra.mxu0 %v2672
  %2800 = vmatprep.subr.bf16.mxu0 %v2669
  %2801 = vmatpush1.bf16.msra.mxu0 %v2668
  %2802 = vmatprep.subr.bf16.mxu0 %v2665
  %2803 = vmatpush1.bf16.msra.mxu0 %v2664
  %2804 = vmatprep.subr.bf16.mxu0 0
  %2805 = vmatpush2.bf16.msra.mxu0 0
  %2806 = vmatprep.subr.bf16.mxu0 0
  %2807 = vmatpush2.bf16.msra.mxu0 0
  %2808 = vmatprep.subr.bf16.mxu0 0
  %2809 = vmatpush2.bf16.msra.mxu0 0
  %2810 = vmatprep.subr.bf16.mxu0 0
  %2811 = vmatpush2.bf16.msra.mxu0 0
  %2812 = vmatprep.subr.bf16.mxu0 0
  %2813 = vmatpush2.bf16.msra.mxu0 0
  %2814 = vmatprep.subr.bf16.mxu0 0
  %2815 = vmatpush2.bf16.msra.mxu0 0
  %2816 = vmatprep.subr.bf16.mxu0 %v2701
  %2817 = vmatpush2.bf16.msra.mxu0 %v2700
  %2818 = vmatprep.subr.bf16.mxu0 %v2697
  %2819 = vmatpush2.bf16.msra.mxu0 %v2696
  %2820 = vmatprep.mubr.bf16.mxu0 %v2743
  %2821 = vmatmul.mubr.bf16.gmra.mxu0 %v2539
  %v2822 = vpop.f32.mrf.mxu0
  %v2823 = vadd.f32 0.0, %v2822
  %v2824 = vpop.f32.mrf.mxu0
  %v2825 = vadd.f32 0.0, %v2824
  %v2826 = vpop.f32.mrf.mxu0
  %v2827 = vadd.f32 0.0, %v2826
  %v2828 = vpop.f32.mrf.mxu0
  %v2829 = vadd.f32 0.0, %v2828
  %2830 = vdwg.mxu0
  %v2831 = vmax.f32 %v2780, 0.0
  %v2832 = vmax.f32 %v2782, 0.0
  %v2833 = vmax.f32 %v2823, 0.0
  %v2834 = vmax.f32 %v2825, 0.0
  %v2835 = vmax.f32 %v2784, 0.0
  %v2836 = vmax.f32 %v2786, 0.0
  %v2837 = vmax.f32 %v2827, 0.0
  %v2838 = vmax.f32 %v2829, 0.0
  %2839 = vrot.lane.b32.xlu0 %v2831, 17
  %v2840 = vpop.permute.xlu0 %2839
  %2841 = vrot.lane.b32.xlu0 %v2835, 17
  %v2842 = vpop.permute.xlu0 %2841
  %2843 = vrot.lane.b32.xlu0 %v2832, 17
  %v2844 = vpop.permute.xlu0 %2843
  %2845 = vrot.lane.b32.xlu0 %v2836, 17
  %v2846 = vpop.permute.xlu0 %2845
  %2847 = vrot.lane.b32.xlu0 %v2833, 17
  %v2848 = vpop.permute.xlu0 %2847
  %2849 = vrot.lane.b32.xlu0 %v2837, 17
  %v2850 = vpop.permute.xlu0 %2849
  %2851 = vrot.lane.b32.xlu0 %v2834, 17
  %v2852 = vpop.permute.xlu0 %2851
  %2853 = vrot.lane.b32.xlu0 %v2838, 17
  %v2854 = vpop.permute.xlu0 %2853
  %v2855 = vsel %vm108, %v2848, %v2852
  %v2856 = vsel %vm108, %v2850, %v2854
  %v2857 = vsel %vm108, %v2844, %v2848
  %v2858 = vsel %vm108, %v2846, %v2850
  %v2859 = vsel %vm108, %v2840, %v2844
  %v2860 = vsel %vm108, %v2842, %v2846
  %v2861 = vsel %vm108, %v2852, %v2840
  %v2862 = vsel %vm108, %v2854, %v2842
  %v2863 = vmul.f32 %v2861, %v120
  %v2864 = vmul.f32 %v2859, %v124
  %v2865 = vmul.f32 %v2857, %v128
  %v2866 = vmul.f32 %v2855, %v132
  %v2867 = vmul.f32 %v2862, %v120
  %v2868 = vmul.f32 %v2860, %v124
  %v2869 = vmul.f32 %v2858, %v128
  %v2870 = vmul.f32 %v2856, %v132
  %v2871 = vpack.c.bf16 %v2867, %v2863
  %v2872 = vpack.c.bf16 %v2868, %v2864
  %v2873 = vpack.c.bf16 %v2869, %v2865
  %v2874 = vpack.c.bf16 %v2870, %v2866
  %v2879 = vunpack.c.l.b16 %v2871
  %v2880 = vunpack.c.l.b16 %v2872
  %v2881 = vunpack.c.l.b16 %v2873
  %v2882 = vunpack.c.l.b16 %v2874
  %v2883 = vunpack.c.h.b16 %v2871
  %v2884 = vunpack.c.h.b16 %v2872
  %v2885 = vunpack.c.h.b16 %v2873
  %v2886 = vunpack.c.h.b16 %v2874
  %v2887 = vpack.c.b16 %v2880, %v2879
  %v2888 = vpack.c.b16 %v2882, %v2881
  %v2889 = vpack.c.b16 %v2884, %v2883
  %v2890 = vpack.c.b16 %v2886, %v2885
  %2895 = vst [vmem:[#allocation2 + $0x20] sm:$0xff] %v2887
  %2896 = vst [vmem:[#allocation2 + $0x28] sm:$0xff] %v2888
  %2897 = vst [vmem:[#allocation2 + $0x30] sm:$0xff] %v2889
  %2898 = vst [vmem:[#allocation2 + $0x38] sm:$0xff] %v2890
  %2899 = vrot.lane.b32.xlu0 %v2831, 16
  %v2900 = vpop.permute.xlu0 %2899
  %2901 = vrot.lane.b32.xlu0 %v2835, 16
  %v2902 = vpop.permute.xlu0 %2901
  %2903 = vrot.lane.b32.xlu0 %v2832, 16
  %v2904 = vpop.permute.xlu0 %2903
  %2905 = vrot.lane.b32.xlu0 %v2836, 16
  %v2906 = vpop.permute.xlu0 %2905
  %2907 = vrot.lane.b32.xlu0 %v2833, 16
  %v2908 = vpop.permute.xlu0 %2907
  %2909 = vrot.lane.b32.xlu0 %v2837, 16
  %v2910 = vpop.permute.xlu0 %2909
  %2911 = vrot.lane.b32.xlu0 %v2834, 16
  %v2912 = vpop.permute.xlu0 %2911
  %2913 = vrot.lane.b32.xlu0 %v2838, 16
  %v2914 = vpop.permute.xlu0 %2913
  %v2915 = vsel %vm185, %v2908, %v2912
  %v2916 = vsel %vm185, %v2910, %v2914
  %v2917 = vsel %vm185, %v2904, %v2908
  %v2918 = vsel %vm185, %v2906, %v2910
  %v2919 = vsel %vm185, %v2900, %v2904
  %v2920 = vsel %vm185, %v2902, %v2906
  %v2921 = vsel %vm185, %v2912, %v2900
  %v2922 = vsel %vm185, %v2914, %v2902
  %v2923 = vmul.f32 %v2921, %v197
  %v2924 = vmul.f32 %v2919, %v201
  %v2925 = vmul.f32 %v2917, %v205
  %v2926 = vmul.f32 %v2915, %v209
  %v2927 = vmul.f32 %v2922, %v197
  %v2928 = vmul.f32 %v2920, %v201
  %v2929 = vmul.f32 %v2918, %v205
  %v2930 = vmul.f32 %v2916, %v209
  %v2931 = vpack.c.bf16 %v2927, %v2923
  %v2932 = vpack.c.bf16 %v2928, %v2924
  %v2933 = vpack.c.bf16 %v2929, %v2925
  %v2934 = vpack.c.bf16 %v2930, %v2926
  %v2939 = vunpack.c.l.b16 %v2931
  %v2940 = vunpack.c.l.b16 %v2932
  %v2941 = vunpack.c.l.b16 %v2933
  %v2942 = vunpack.c.l.b16 %v2934
  %v2943 = vunpack.c.h.b16 %v2931
  %v2944 = vunpack.c.h.b16 %v2932
  %v2945 = vunpack.c.h.b16 %v2933
  %v2946 = vunpack.c.h.b16 %v2934
  %v2947 = vpack.c.b16 %v2940, %v2939
  %v2948 = vpack.c.b16 %v2942, %v2941
  %v2949 = vpack.c.b16 %v2944, %v2943
  %v2950 = vpack.c.b16 %v2946, %v2945
  %2955 = vst [vmem:[#allocation2 + $0x40] sm:$0xff] %v2947
  %2956 = vst [vmem:[#allocation2 + $0x48] sm:$0xff] %v2948
  %2957 = vst [vmem:[#allocation2 + $0x50] sm:$0xff] %v2949
  %2958 = vst [vmem:[#allocation2 + $0x58] sm:$0xff] %v2950
  %2959 = vrot.lane.b32.xlu0 %v2831, 15
  %v2960 = vpop.permute.xlu0 %2959
  %2961 = vrot.lane.b32.xlu0 %v2835, 15
  %v2962 = vpop.permute.xlu0 %2961
  %2963 = vrot.lane.b32.xlu0 %v2832, 15
  %v2964 = vpop.permute.xlu0 %2963
  %2965 = vrot.lane.b32.xlu0 %v2836, 15
  %v2966 = vpop.permute.xlu0 %2965
  %2967 = vrot.lane.b32.xlu0 %v2833, 15
  %v2968 = vpop.permute.xlu0 %2967
  %2969 = vrot.lane.b32.xlu0 %v2837, 15
  %v2970 = vpop.permute.xlu0 %2969
  %2971 = vrot.lane.b32.xlu0 %v2834, 15
  %v2972 = vpop.permute.xlu0 %2971
  %2973 = vrot.lane.b32.xlu0 %v2838, 15
  %v2974 = vpop.permute.xlu0 %2973
  %v2975 = vsel %vm262, %v2968, %v2972
  %v2976 = vsel %vm262, %v2970, %v2974
  %v2977 = vsel %vm262, %v2964, %v2968
  %v2978 = vsel %vm262, %v2966, %v2970
  %v2979 = vsel %vm262, %v2960, %v2964
  %v2980 = vsel %vm262, %v2962, %v2966
  %v2981 = vsel %vm262, %v2972, %v2960
  %v2982 = vsel %vm262, %v2974, %v2962
  %v2983 = vmul.f32 %v2981, %v274
  %v2984 = vmul.f32 %v2979, %v278
  %v2985 = vmul.f32 %v2977, %v282
  %v2986 = vmul.f32 %v2975, %v286
  %v2987 = vmul.f32 %v2982, %v274
  %v2988 = vmul.f32 %v2980, %v278
  %v2989 = vmul.f32 %v2978, %v282
  %v2990 = vmul.f32 %v2976, %v286
  %v2991 = vpack.c.bf16 %v2987, %v2983
  %v2992 = vpack.c.bf16 %v2988, %v2984
  %v2993 = vpack.c.bf16 %v2989, %v2985
  %v2994 = vpack.c.bf16 %v2990, %v2986
  %v2999 = vunpack.c.l.b16 %v2991
  %v3000 = vunpack.c.l.b16 %v2992
  %v3001 = vunpack.c.l.b16 %v2993
  %v3002 = vunpack.c.l.b16 %v2994
  %v3003 = vunpack.c.h.b16 %v2991
  %v3004 = vunpack.c.h.b16 %v2992
  %v3005 = vunpack.c.h.b16 %v2993
  %v3006 = vunpack.c.h.b16 %v2994
  %v3007 = vpack.c.b16 %v3000, %v2999
  %v3008 = vpack.c.b16 %v3002, %v3001
  %v3009 = vpack.c.b16 %v3004, %v3003
  %v3010 = vpack.c.b16 %v3006, %v3005
  %3015 = vst [vmem:[#allocation2 + $0x60] sm:$0xff] %v3007
  %3016 = vst [vmem:[#allocation2 + $0x68] sm:$0xff] %v3008
  %3017 = vst [vmem:[#allocation2 + $0x70] sm:$0xff] %v3009
  %3018 = vst [vmem:[#allocation2 + $0x78] sm:$0xff] %v3010
  %3019 = vrot.lane.b32.xlu0 %v2831, 1
  %v3020 = vpop.permute.xlu0 %3019
  %3021 = vrot.lane.b32.xlu0 %v2835, 1
  %v3022 = vpop.permute.xlu0 %3021
  %3023 = vrot.lane.b32.xlu0 %v2832, 1
  %v3024 = vpop.permute.xlu0 %3023
  %3025 = vrot.lane.b32.xlu0 %v2836, 1
  %v3026 = vpop.permute.xlu0 %3025
  %3027 = vrot.lane.b32.xlu0 %v2833, 1
  %v3028 = vpop.permute.xlu0 %3027
  %3029 = vrot.lane.b32.xlu0 %v2837, 1
  %v3030 = vpop.permute.xlu0 %3029
  %3031 = vrot.lane.b32.xlu0 %v2834, 1
  %v3032 = vpop.permute.xlu0 %3031
  %3033 = vrot.lane.b32.xlu0 %v2838, 1
  %v3034 = vpop.permute.xlu0 %3033
  %v3035 = vsel %vm339, %v3028, %v3032
  %v3036 = vsel %vm339, %v3030, %v3034
  %v3037 = vsel %vm339, %v3024, %v3028
  %v3038 = vsel %vm339, %v3026, %v3030
  %v3039 = vsel %vm339, %v3020, %v3024
  %v3040 = vsel %vm339, %v3022, %v3026
  %v3041 = vsel %vm339, %v3032, %v3020
  %v3042 = vsel %vm339, %v3034, %v3022
  %v3043 = vmul.f32 %v3041, %v351
  %v3044 = vmul.f32 %v3039, %v355
  %v3045 = vmul.f32 %v3037, %v359
  %v3046 = vmul.f32 %v3035, %v363
  %v3047 = vmul.f32 %v3042, %v351
  %v3048 = vmul.f32 %v3040, %v355
  %v3049 = vmul.f32 %v3038, %v359
  %v3050 = vmul.f32 %v3036, %v363
  %v3051 = vpack.c.bf16 %v3047, %v3043
  %v3052 = vpack.c.bf16 %v3048, %v3044
  %v3053 = vpack.c.bf16 %v3049, %v3045
  %v3054 = vpack.c.bf16 %v3050, %v3046
  %v3059 = vunpack.c.l.b16 %v3051
  %v3060 = vunpack.c.l.b16 %v3052
  %v3061 = vunpack.c.l.b16 %v3053
  %v3062 = vunpack.c.l.b16 %v3054
  %v3063 = vunpack.c.h.b16 %v3051
  %v3064 = vunpack.c.h.b16 %v3052
  %v3065 = vunpack.c.h.b16 %v3053
  %v3066 = vunpack.c.h.b16 %v3054
  %v3067 = vpack.c.b16 %v3060, %v3059
  %v3068 = vpack.c.b16 %v3062, %v3061
  %v3069 = vpack.c.b16 %v3064, %v3063
  %v3070 = vpack.c.b16 %v3066, %v3065
  %3075 = vst [vmem:[#allocation2 + $0x80] sm:$0xff] %v3067
  %3076 = vst [vmem:[#allocation2 + $0x88] sm:$0xff] %v3068
  %3077 = vst [vmem:[#allocation2 + $0x90] sm:$0xff] %v3069
  %3078 = vst [vmem:[#allocation2 + $0x98] sm:$0xff] %v3070
  %v3079 = vpack.c.bf16 %v2835, %v2831
  %v3080 = vpack.c.bf16 %v2836, %v2832
  %v3081 = vpack.c.bf16 %v2837, %v2833
  %v3082 = vpack.c.bf16 %v2838, %v2834
  %v3087 = vunpack.c.l.b16 %v3079
  %v3088 = vunpack.c.l.b16 %v3080
  %v3089 = vunpack.c.l.b16 %v3081
  %v3090 = vunpack.c.l.b16 %v3082
  %v3091 = vunpack.c.h.b16 %v3079
  %v3092 = vunpack.c.h.b16 %v3080
  %v3093 = vunpack.c.h.b16 %v3081
  %v3094 = vunpack.c.h.b16 %v3082
  %v3095 = vpack.c.b16 %v3088, %v3087
  %v3096 = vpack.c.b16 %v3090, %v3089
  %v3097 = vpack.c.b16 %v3092, %v3091
  %v3098 = vpack.c.b16 %v3094, %v3093
  %3103 = vst [vmem:[#allocation2 + $0xa0] sm:$0xff] %v3095
  %3104 = vst [vmem:[#allocation2 + $0xa8] sm:$0xff] %v3096
  %3105 = vst [vmem:[#allocation2 + $0xb0] sm:$0xff] %v3097
  %3106 = vst [vmem:[#allocation2 + $0xb8] sm:$0xff] %v3098
  %3107 = vrot.lane.b32.xlu0 %v2831, 127
  %v3108 = vpop.permute.xlu0 %3107
  %3109 = vrot.lane.b32.xlu0 %v2835, 127
  %v3110 = vpop.permute.xlu0 %3109
  %3111 = vrot.lane.b32.xlu0 %v2832, 127
  %v3112 = vpop.permute.xlu0 %3111
  %3113 = vrot.lane.b32.xlu0 %v2836, 127
  %v3114 = vpop.permute.xlu0 %3113
  %3115 = vrot.lane.b32.xlu0 %v2833, 127
  %v3116 = vpop.permute.xlu0 %3115
  %3117 = vrot.lane.b32.xlu0 %v2837, 127
  %v3118 = vpop.permute.xlu0 %3117
  %3119 = vrot.lane.b32.xlu0 %v2834, 127
  %v3120 = vpop.permute.xlu0 %3119
  %3121 = vrot.lane.b32.xlu0 %v2838, 127
  %v3122 = vpop.permute.xlu0 %3121
  %v3123 = vsel %vm444, %v3116, %v3120
  %v3124 = vsel %vm444, %v3118, %v3122
  %v3125 = vsel %vm444, %v3112, %v3116
  %v3126 = vsel %vm444, %v3114, %v3118
  %v3127 = vsel %vm444, %v3108, %v3112
  %v3128 = vsel %vm444, %v3110, %v3114
  %v3129 = vsel %vm444, %v3120, %v3108
  %v3130 = vsel %vm444, %v3122, %v3110
  %v3131 = vmul.f32 %v3127, %v456
  %v3132 = vmul.f32 %v3125, %v460
  %v3133 = vmul.f32 %v3123, %v464
  %v3134 = vmul.f32 %v3129, %v468
  %v3135 = vmul.f32 %v3128, %v456
  %v3136 = vmul.f32 %v3126, %v460
  %v3137 = vmul.f32 %v3124, %v464
  %v3138 = vmul.f32 %v3130, %v468
  %v3139 = vpack.c.bf16 %v3135, %v3131
  %v3140 = vpack.c.bf16 %v3136, %v3132
  %v3141 = vpack.c.bf16 %v3137, %v3133
  %v3142 = vpack.c.bf16 %v3138, %v3134
  %v3147 = vunpack.c.l.b16 %v3139
  %v3148 = vunpack.c.l.b16 %v3140
  %v3149 = vunpack.c.l.b16 %v3141
  %v3150 = vunpack.c.l.b16 %v3142
  %v3151 = vunpack.c.h.b16 %v3139
  %v3152 = vunpack.c.h.b16 %v3140
  %v3153 = vunpack.c.h.b16 %v3141
  %v3154 = vunpack.c.h.b16 %v3142
  %v3155 = vpack.c.b16 %v3148, %v3147
  %v3156 = vpack.c.b16 %v3150, %v3149
  %v3157 = vpack.c.b16 %v3152, %v3151
  %v3158 = vpack.c.b16 %v3154, %v3153
  %3163 = vst [vmem:[#allocation2 + $0xc0] sm:$0xff] %v3155
  %3164 = vst [vmem:[#allocation2 + $0xc8] sm:$0xff] %v3156
  %3165 = vst [vmem:[#allocation2 + $0xd0] sm:$0xff] %v3157
  %3166 = vst [vmem:[#allocation2 + $0xd8] sm:$0xff] %v3158
  %3167 = vrot.lane.b32.xlu0 %v2831, 113
  %v3168 = vpop.permute.xlu0 %3167
  %3169 = vrot.lane.b32.xlu0 %v2835, 113
  %v3170 = vpop.permute.xlu0 %3169
  %3171 = vrot.lane.b32.xlu0 %v2832, 113
  %v3172 = vpop.permute.xlu0 %3171
  %3173 = vrot.lane.b32.xlu0 %v2836, 113
  %v3174 = vpop.permute.xlu0 %3173
  %3175 = vrot.lane.b32.xlu0 %v2833, 113
  %v3176 = vpop.permute.xlu0 %3175
  %3177 = vrot.lane.b32.xlu0 %v2837, 113
  %v3178 = vpop.permute.xlu0 %3177
  %3179 = vrot.lane.b32.xlu0 %v2834, 113
  %v3180 = vpop.permute.xlu0 %3179
  %3181 = vrot.lane.b32.xlu0 %v2838, 113
  %v3182 = vpop.permute.xlu0 %3181
  %v3183 = vsel %vm521, %v3176, %v3180
  %v3184 = vsel %vm521, %v3178, %v3182
  %v3185 = vsel %vm521, %v3172, %v3176
  %v3186 = vsel %vm521, %v3174, %v3178
  %v3187 = vsel %vm521, %v3168, %v3172
  %v3188 = vsel %vm521, %v3170, %v3174
  %v3189 = vsel %vm521, %v3180, %v3168
  %v3190 = vsel %vm521, %v3182, %v3170
  %v3191 = vmul.f32 %v3187, %v533
  %v3192 = vmul.f32 %v3185, %v537
  %v3193 = vmul.f32 %v3183, %v541
  %v3194 = vmul.f32 %v3189, %v545
  %v3195 = vmul.f32 %v3188, %v533
  %v3196 = vmul.f32 %v3186, %v537
  %v3197 = vmul.f32 %v3184, %v541
  %v3198 = vmul.f32 %v3190, %v545
  %v3199 = vpack.c.bf16 %v3195, %v3191
  %v3200 = vpack.c.bf16 %v3196, %v3192
  %v3201 = vpack.c.bf16 %v3197, %v3193
  %v3202 = vpack.c.bf16 %v3198, %v3194
  %v3207 = vunpack.c.l.b16 %v3199
  %v3208 = vunpack.c.l.b16 %v3200
  %v3209 = vunpack.c.l.b16 %v3201
  %v3210 = vunpack.c.l.b16 %v3202
  %v3211 = vunpack.c.h.b16 %v3199
  %v3212 = vunpack.c.h.b16 %v3200
  %v3213 = vunpack.c.h.b16 %v3201
  %v3214 = vunpack.c.h.b16 %v3202
  %v3215 = vpack.c.b16 %v3208, %v3207
  %v3216 = vpack.c.b16 %v3210, %v3209
  %v3217 = vpack.c.b16 %v3212, %v3211
  %v3218 = vpack.c.b16 %v3214, %v3213
  %3223 = vst [vmem:[#allocation2 + $0xe0] sm:$0xff] %v3215
  %3224 = vst [vmem:[#allocation2 + $0xe8] sm:$0xff] %v3216
  %3225 = vst [vmem:[#allocation2 + $0xf0] sm:$0xff] %v3217
  %3226 = vst [vmem:[#allocation2 + $0xf8] sm:$0xff] %v3218
  %3227 = vrot.lane.b32.xlu0 %v2831, 112
  %v3228 = vpop.permute.xlu0 %3227
  %3229 = vrot.lane.b32.xlu0 %v2835, 112
  %v3230 = vpop.permute.xlu0 %3229
  %3231 = vrot.lane.b32.xlu0 %v2832, 112
  %v3232 = vpop.permute.xlu0 %3231
  %3233 = vrot.lane.b32.xlu0 %v2836, 112
  %v3234 = vpop.permute.xlu0 %3233
  %3235 = vrot.lane.b32.xlu0 %v2833, 112
  %v3236 = vpop.permute.xlu0 %3235
  %3237 = vrot.lane.b32.xlu0 %v2837, 112
  %v3238 = vpop.permute.xlu0 %3237
  %3239 = vrot.lane.b32.xlu0 %v2834, 112
  %v3240 = vpop.permute.xlu0 %3239
  %3241 = vrot.lane.b32.xlu0 %v2838, 112
  %v3242 = vpop.permute.xlu0 %3241
  %v3243 = vsel %vm598, %v3236, %v3240
  %v3244 = vsel %vm598, %v3238, %v3242
  %v3245 = vsel %vm598, %v3232, %v3236
  %v3246 = vsel %vm598, %v3234, %v3238
  %v3247 = vsel %vm598, %v3228, %v3232
  %v3248 = vsel %vm598, %v3230, %v3234
  %v3249 = vsel %vm598, %v3240, %v3228
  %v3250 = vsel %vm598, %v3242, %v3230
  %v3251 = vmul.f32 %v3247, %v610
  %v3252 = vmul.f32 %v3245, %v614
  %v3253 = vmul.f32 %v3243, %v618
  %v3254 = vmul.f32 %v3249, %v622
  %v3255 = vmul.f32 %v3248, %v610
  %v3256 = vmul.f32 %v3246, %v614
  %v3257 = vmul.f32 %v3244, %v618
  %v3258 = vmul.f32 %v3250, %v622
  %v3259 = vpack.c.bf16 %v3255, %v3251
  %v3260 = vpack.c.bf16 %v3256, %v3252
  %v3261 = vpack.c.bf16 %v3257, %v3253
  %v3262 = vpack.c.bf16 %v3258, %v3254
  %v3267 = vunpack.c.l.b16 %v3259
  %v3268 = vunpack.c.l.b16 %v3260
  %v3269 = vunpack.c.l.b16 %v3261
  %v3270 = vunpack.c.l.b16 %v3262
  %v3271 = vunpack.c.h.b16 %v3259
  %v3272 = vunpack.c.h.b16 %v3260
  %v3273 = vunpack.c.h.b16 %v3261
  %v3274 = vunpack.c.h.b16 %v3262
  %v3275 = vpack.c.b16 %v3268, %v3267
  %v3276 = vpack.c.b16 %v3270, %v3269
  %v3277 = vpack.c.b16 %v3272, %v3271
  %v3278 = vpack.c.b16 %v3274, %v3273
  %3283 = vst [vmem:[#allocation2 + $0x100] sm:$0xff] %v3275
  %3284 = vst [vmem:[#allocation2 + $0x108] sm:$0xff] %v3276
  %3285 = vst [vmem:[#allocation2 + $0x110] sm:$0xff] %v3277
  %3286 = vst [vmem:[#allocation2 + $0x118] sm:$0xff] %v3278
  %3287 = vrot.lane.b32.xlu0 %v2831, 111
  %v3288 = vpop.permute.xlu0 %3287
  %3289 = vrot.lane.b32.xlu0 %v2835, 111
  %v3290 = vpop.permute.xlu0 %3289
  %3291 = vrot.lane.b32.xlu0 %v2832, 111
  %v3292 = vpop.permute.xlu0 %3291
  %3293 = vrot.lane.b32.xlu0 %v2836, 111
  %v3294 = vpop.permute.xlu0 %3293
  %3295 = vrot.lane.b32.xlu0 %v2833, 111
  %v3296 = vpop.permute.xlu0 %3295
  %3297 = vrot.lane.b32.xlu0 %v2837, 111
  %v3298 = vpop.permute.xlu0 %3297
  %3299 = vrot.lane.b32.xlu0 %v2834, 111
  %v3300 = vpop.permute.xlu0 %3299
  %3301 = vrot.lane.b32.xlu0 %v2838, 111
  %v3302 = vpop.permute.xlu0 %3301
  %v3303 = vsel %vm675, %v3296, %v3300
  %v3304 = vsel %vm675, %v3298, %v3302
  %v3305 = vsel %vm675, %v3292, %v3296
  %v3306 = vsel %vm675, %v3294, %v3298
  %v3307 = vsel %vm675, %v3288, %v3292
  %v3308 = vsel %vm675, %v3290, %v3294
  %v3309 = vsel %vm675, %v3300, %v3288
  %v3310 = vsel %vm675, %v3302, %v3290
  %v3311 = vmul.f32 %v3307, %v687
  %v3312 = vmul.f32 %v3305, %v691
  %v3313 = vmul.f32 %v3303, %v695
  %v3314 = vmul.f32 %v3309, %v699
  %v3315 = vmul.f32 %v3308, %v687
  %v3316 = vmul.f32 %v3306, %v691
  %v3317 = vmul.f32 %v3304, %v695
  %v3318 = vmul.f32 %v3310, %v699
  %v3319 = vpack.c.bf16 %v3315, %v3311
  %v3320 = vpack.c.bf16 %v3316, %v3312
  %v3321 = vpack.c.bf16 %v3317, %v3313
  %v3322 = vpack.c.bf16 %v3318, %v3314
  %v3327 = vunpack.c.l.b16 %v3319
  %v3328 = vunpack.c.l.b16 %v3320
  %v3329 = vunpack.c.l.b16 %v3321
  %v3330 = vunpack.c.l.b16 %v3322
  %v3331 = vunpack.c.h.b16 %v3319
  %v3332 = vunpack.c.h.b16 %v3320
  %v3333 = vunpack.c.h.b16 %v3321
  %v3334 = vunpack.c.h.b16 %v3322
  %v3335 = vpack.c.b16 %v3328, %v3327
  %v3336 = vpack.c.b16 %v3330, %v3329
  %v3337 = vpack.c.b16 %v3332, %v3331
  %v3338 = vpack.c.b16 %v3334, %v3333
  %3343 = vst [vmem:[#allocation2 + $0x120] sm:$0xff] %v3335
  %3344 = vst [vmem:[#allocation2 + $0x128] sm:$0xff] %v3336
  %3345 = vst [vmem:[#allocation2 + $0x130] sm:$0xff] %v3337
  %3346 = vst [vmem:[#allocation2 + $0x138] sm:$0xff] %v3338
  %v3347 = vld [vmem:[%s6] sm:$0xff]
  %v3348 = vld [vmem:[%s6 + $0x8] sm:$0xff]
  %v3349 = vld [vmem:[%s6 + $0x10] sm:$0xff]
  %v3350 = vld [vmem:[%s6 + $0x18] sm:$0xff]
  %v3351 = vld [vmem:[#allocation2] sm:$0xff]
  %v3352 = vld [vmem:[#allocation2 + $0x8] sm:$0xff]
  %v3353 = vld [vmem:[#allocation2 + $0x10] sm:$0xff]
  %v3354 = vld [vmem:[#allocation2 + $0x18] sm:$0xff]
  %v3355 = vld [vmem:[#allocation2 + $0x20] sm:$0xff]
  %v3356 = vld [vmem:[#allocation2 + $0x28] sm:$0xff]
  %v3357 = vld [vmem:[#allocation2 + $0x30] sm:$0xff]
  %v3358 = vld [vmem:[#allocation2 + $0x38] sm:$0xff]
  %v3359 = vld [vmem:[#allocation2 + $0x40] sm:$0xff]
  %v3360 = vld [vmem:[#allocation2 + $0x48] sm:$0xff]
  %v3361 = vld [vmem:[#allocation2 + $0x50] sm:$0xff]
  %v3362 = vld [vmem:[#allocation2 + $0x58] sm:$0xff]
  %v3363 = vld [vmem:[#allocation2 + $0x60] sm:$0xff]
  %v3364 = vld [vmem:[#allocation2 + $0x68] sm:$0xff]
  %v3365 = vld [vmem:[#allocation2 + $0x70] sm:$0xff]
  %v3366 = vld [vmem:[#allocation2 + $0x78] sm:$0xff]
  %v3367 = vld [vmem:[#allocation2 + $0x80] sm:$0xff]
  %v3368 = vld [vmem:[#allocation2 + $0x88] sm:$0xff]
  %v3369 = vld [vmem:[#allocation2 + $0x90] sm:$0xff]
  %v3370 = vld [vmem:[#allocation2 + $0x98] sm:$0xff]
  %v3371 = vld [vmem:[#allocation2 + $0xa0] sm:$0xff]
  %v3372 = vld [vmem:[#allocation2 + $0xa8] sm:$0xff]
  %v3373 = vld [vmem:[#allocation2 + $0xb0] sm:$0xff]
  %v3374 = vld [vmem:[#allocation2 + $0xb8] sm:$0xff]
  %v3375 = vld [vmem:[#allocation2 + $0xc0] sm:$0xff]
  %v3376 = vld [vmem:[#allocation2 + $0xc8] sm:$0xff]
  %v3377 = vld [vmem:[#allocation2 + $0xd0] sm:$0xff]
  %v3378 = vld [vmem:[#allocation2 + $0xd8] sm:$0xff]
  %v3379 = vld [vmem:[#allocation2 + $0xe0] sm:$0xff]
  %v3380 = vld [vmem:[#allocation2 + $0xe8] sm:$0xff]
  %v3381 = vld [vmem:[#allocation2 + $0xf0] sm:$0xff]
  %v3382 = vld [vmem:[#allocation2 + $0xf8] sm:$0xff]
  %v3383 = vld [vmem:[#allocation2 + $0x100] sm:$0xff]
  %v3384 = vld [vmem:[#allocation2 + $0x108] sm:$0xff]
  %v3385 = vld [vmem:[#allocation2 + $0x110] sm:$0xff]
  %v3386 = vld [vmem:[#allocation2 + $0x118] sm:$0xff]
  %v3387 = vld [vmem:[#allocation2 + $0x120] sm:$0xff]
  %v3388 = vld [vmem:[#allocation2 + $0x128] sm:$0xff]
  %v3389 = vld [vmem:[#allocation2 + $0x130] sm:$0xff]
  %v3390 = vld [vmem:[#allocation2 + $0x138] sm:$0xff]
  %v3395 = vunpack.c.l.b16 %v3347
  %v3396 = vunpack.c.h.b16 %v3347
  %v3397 = vunpack.c.l.b16 %v3348
  %v3398 = vunpack.c.h.b16 %v3348
  %v3399 = vunpack.c.l.b16 %v3349
  %v3400 = vunpack.c.h.b16 %v3349
  %v3401 = vunpack.c.l.b16 %v3350
  %v3402 = vunpack.c.h.b16 %v3350
  %v3403 = vpack.c.b16 %v3397, %v3395
  %v3404 = vpack.c.b16 %v3398, %v3396
  %v3405 = vpack.c.b16 %v3401, %v3399
  %v3406 = vpack.c.b16 %v3402, %v3400
  %v3449 = vunpack.c.l.b16 %v3351
  %v3450 = vunpack.c.h.b16 %v3351
  %v3451 = vunpack.c.l.b16 %v3352
  %v3452 = vunpack.c.h.b16 %v3352
  %v3453 = vunpack.c.l.b16 %v3353
  %v3454 = vunpack.c.h.b16 %v3353
  %v3455 = vunpack.c.l.b16 %v3354
  %v3456 = vunpack.c.h.b16 %v3354
  %v3457 = vunpack.c.l.b16 %v3355
  %v3458 = vunpack.c.h.b16 %v3355
  %v3459 = vunpack.c.l.b16 %v3356
  %v3460 = vunpack.c.h.b16 %v3356
  %v3461 = vunpack.c.l.b16 %v3357
  %v3462 = vunpack.c.h.b16 %v3357
  %v3463 = vunpack.c.l.b16 %v3358
  %v3464 = vunpack.c.h.b16 %v3358
  %v3465 = vunpack.c.l.b16 %v3359
  %v3466 = vunpack.c.h.b16 %v3359
  %v3467 = vunpack.c.l.b16 %v3360
  %v3468 = vunpack.c.h.b16 %v3360
  %v3469 = vunpack.c.l.b16 %v3361
  %v3470 = vunpack.c.h.b16 %v3361
  %v3471 = vunpack.c.l.b16 %v3362
  %v3472 = vunpack.c.h.b16 %v3362
  %v3473 = vunpack.c.l.b16 %v3363
  %v3474 = vunpack.c.h.b16 %v3363
  %v3475 = vunpack.c.l.b16 %v3364
  %v3476 = vunpack.c.h.b16 %v3364
  %v3477 = vunpack.c.l.b16 %v3365
  %v3478 = vunpack.c.h.b16 %v3365
  %v3479 = vunpack.c.l.b16 %v3366
  %v3480 = vunpack.c.h.b16 %v3366
  %v3481 = vunpack.c.l.b16 %v3367
  %v3482 = vunpack.c.h.b16 %v3367
  %v3483 = vunpack.c.l.b16 %v3368
  %v3484 = vunpack.c.h.b16 %v3368
  %v3485 = vunpack.c.l.b16 %v3369
  %v3486 = vunpack.c.h.b16 %v3369
  %v3487 = vunpack.c.l.b16 %v3370
  %v3488 = vunpack.c.h.b16 %v3370
  %v3489 = vunpack.c.l.b16 %v3371
  %v3490 = vunpack.c.h.b16 %v3371
  %v3491 = vunpack.c.l.b16 %v3372
  %v3492 = vunpack.c.h.b16 %v3372
  %v3493 = vunpack.c.l.b16 %v3373
  %v3494 = vunpack.c.h.b16 %v3373
  %v3495 = vunpack.c.l.b16 %v3374
  %v3496 = vunpack.c.h.b16 %v3374
  %v3497 = vunpack.c.l.b16 %v3375
  %v3498 = vunpack.c.h.b16 %v3375
  %v3499 = vunpack.c.l.b16 %v3376
  %v3500 = vunpack.c.h.b16 %v3376
  %v3501 = vunpack.c.l.b16 %v3377
  %v3502 = vunpack.c.h.b16 %v3377
  %v3503 = vunpack.c.l.b16 %v3378
  %v3504 = vunpack.c.h.b16 %v3378
  %v3505 = vunpack.c.l.b16 %v3379
  %v3506 = vunpack.c.h.b16 %v3379
  %v3507 = vunpack.c.l.b16 %v3380
  %v3508 = vunpack.c.h.b16 %v3380
  %v3509 = vunpack.c.l.b16 %v3381
  %v3510 = vunpack.c.h.b16 %v3381
  %v3511 = vunpack.c.l.b16 %v3382
  %v3512 = vunpack.c.h.b16 %v3382
  %v3513 = vunpack.c.l.b16 %v3383
  %v3514 = vunpack.c.h.b16 %v3383
  %v3515 = vunpack.c.l.b16 %v3384
  %v3516 = vunpack.c.h.b16 %v3384
  %v3517 = vunpack.c.l.b16 %v3385
  %v3518 = vunpack.c.h.b16 %v3385
  %v3519 = vunpack.c.l.b16 %v3386
  %v3520 = vunpack.c.h.b16 %v3386
  %v3521 = vunpack.c.l.b16 %v3387
  %v3522 = vunpack.c.h.b16 %v3387
  %v3523 = vunpack.c.l.b16 %v3388
  %v3524 = vunpack.c.h.b16 %v3388
  %v3525 = vunpack.c.l.b16 %v3389
  %v3526 = vunpack.c.h.b16 %v3389
  %v3527 = vunpack.c.l.b16 %v3390
  %v3528 = vunpack.c.h.b16 %v3390
  %v3529 = vpack.c.b16 %v3453, %v3449
  %v3530 = vpack.c.b16 %v3454, %v3450
  %v3531 = vpack.c.b16 %v3455, %v3451
  %v3532 = vpack.c.b16 %v3456, %v3452
  %v3533 = vpack.c.b16 %v3461, %v3457
  %v3534 = vpack.c.b16 %v3462, %v3458
  %v3535 = vpack.c.b16 %v3463, %v3459
  %v3536 = vpack.c.b16 %v3464, %v3460
  %v3537 = vpack.c.b16 %v3469, %v3465
  %v3538 = vpack.c.b16 %v3470, %v3466
  %v3539 = vpack.c.b16 %v3471, %v3467
  %v3540 = vpack.c.b16 %v3472, %v3468
  %v3541 = vpack.c.b16 %v3477, %v3473
  %v3542 = vpack.c.b16 %v3478, %v3474
  %v3543 = vpack.c.b16 %v3479, %v3475
  %v3544 = vpack.c.b16 %v3480, %v3476
  %v3545 = vpack.c.b16 %v3485, %v3481
  %v3546 = vpack.c.b16 %v3486, %v3482
  %v3547 = vpack.c.b16 %v3487, %v3483
  %v3548 = vpack.c.b16 %v3488, %v3484
  %v3549 = vpack.c.b16 %v3493, %v3489
  %v3550 = vpack.c.b16 %v3494, %v3490
  %v3551 = vpack.c.b16 %v3495, %v3491
  %v3552 = vpack.c.b16 %v3496, %v3492
  %v3553 = vpack.c.b16 %v3501, %v3497
  %v3554 = vpack.c.b16 %v3502, %v3498
  %v3555 = vpack.c.b16 %v3503, %v3499
  %v3556 = vpack.c.b16 %v3504, %v3500
  %v3557 = vpack.c.b16 %v3509, %v3505
  %v3558 = vpack.c.b16 %v3510, %v3506
  %v3559 = vpack.c.b16 %v3511, %v3507
  %v3560 = vpack.c.b16 %v3512, %v3508
  %v3561 = vpack.c.b16 %v3517, %v3513
  %v3562 = vpack.c.b16 %v3518, %v3514
  %v3563 = vpack.c.b16 %v3519, %v3515
  %v3564 = vpack.c.b16 %v3520, %v3516
  %v3565 = vpack.c.b16 %v3525, %v3521
  %v3566 = vpack.c.b16 %v3526, %v3522
  %v3567 = vpack.c.b16 %v3527, %v3523
  %v3568 = vpack.c.b16 %v3528, %v3524
  %v3610 = vsel %vm987, %v3404, 0
  %v3613 = vsel %vm987, %v3406, 0
  %3615 = vmatprep.subr.bf16.mxu0 %v3558
  %3616 = vmatpush1.bf16.msra.mxu0 %v3557
  %3617 = vmatprep.subr.bf16.mxu0 %v3554
  %3618 = vmatpush1.bf16.msra.mxu0 %v3553
  %3619 = vmatprep.subr.bf16.mxu0 %v3550
  %3620 = vmatpush1.bf16.msra.mxu0 %v3549
  %3621 = vmatprep.subr.bf16.mxu0 %v3546
  %3622 = vmatpush1.bf16.msra.mxu0 %v3545
  %3623 = vmatprep.subr.bf16.mxu0 %v3542
  %3624 = vmatpush1.bf16.msra.mxu0 %v3541
  %3625 = vmatprep.subr.bf16.mxu0 %v3538
  %3626 = vmatpush1.bf16.msra.mxu0 %v3537
  %3627 = vmatprep.subr.bf16.mxu0 %v3534
  %3628 = vmatpush1.bf16.msra.mxu0 %v3533
  %3629 = vmatprep.subr.bf16.mxu0 %v3530
  %3630 = vmatpush1.bf16.msra.mxu0 %v3529
  %3631 = vmatprep.subr.bf16.mxu0 0
  %3632 = vmatpush2.bf16.msra.mxu0 0
  %3633 = vmatprep.subr.bf16.mxu0 0
  %3634 = vmatpush2.bf16.msra.mxu0 0
  %3635 = vmatprep.subr.bf16.mxu0 0
  %3636 = vmatpush2.bf16.msra.mxu0 0
  %3637 = vmatprep.subr.bf16.mxu0 0
  %3638 = vmatpush2.bf16.msra.mxu0 0
  %3639 = vmatprep.subr.bf16.mxu0 0
  %3640 = vmatpush2.bf16.msra.mxu0 0
  %3641 = vmatprep.subr.bf16.mxu0 0
  %3642 = vmatpush2.bf16.msra.mxu0 0
  %3643 = vmatprep.subr.bf16.mxu0 %v3566
  %3644 = vmatpush2.bf16.msra.mxu0 %v3565
  %3645 = vmatprep.subr.bf16.mxu0 %v3562
  %3646 = vmatpush2.bf16.msra.mxu0 %v3561
  %3647 = vmatprep.mubr.bf16.mxu0 %v3610
  %3648 = vmatmul.mubr.bf16.gmra.mxu0 %v3403
  %v3649 = vpop.f32.mrf.mxu0
  %v3650 = vadd.f32 0.0, %v3649
  %v3651 = vpop.f32.mrf.mxu0
  %v3652 = vadd.f32 0.0, %v3651
  %v3653 = vpop.f32.mrf.mxu0
  %v3654 = vadd.f32 0.0, %v3653
  %v3655 = vpop.f32.mrf.mxu0
  %v3656 = vadd.f32 0.0, %v3655
  %3657 = vmatprep.mubr.bf16.mxu0 %v3613
  %3658 = vmatmul.mubr.bf16.gmra.mxu0 %v3405
  %v3659 = vpop.f32.mrf.mxu0
  %v3660 = vadd.f32 0.0, %v3659
  %v3661 = vpop.f32.mrf.mxu0
  %v3662 = vadd.f32 0.0, %v3661
  %v3663 = vpop.f32.mrf.mxu0
  %v3664 = vadd.f32 0.0, %v3663
  %v3665 = vpop.f32.mrf.mxu0
  %v3666 = vadd.f32 0.0, %v3665
  %3667 = vdwg.mxu0
  %3668 = vmatprep.subr.bf16.mxu0 %v3560
  %3669 = vmatpush1.bf16.msra.mxu0 %v3559
  %3670 = vmatprep.subr.bf16.mxu0 %v3556
  %3671 = vmatpush1.bf16.msra.mxu0 %v3555
  %3672 = vmatprep.subr.bf16.mxu0 %v3552
  %3673 = vmatpush1.bf16.msra.mxu0 %v3551
  %3674 = vmatprep.subr.bf16.mxu0 %v3548
  %3675 = vmatpush1.bf16.msra.mxu0 %v3547
  %3676 = vmatprep.subr.bf16.mxu0 %v3544
  %3677 = vmatpush1.bf16.msra.mxu0 %v3543
  %3678 = vmatprep.subr.bf16.mxu0 %v3540
  %3679 = vmatpush1.bf16.msra.mxu0 %v3539
  %3680 = vmatprep.subr.bf16.mxu0 %v3536
  %3681 = vmatpush1.bf16.msra.mxu0 %v3535
  %3682 = vmatprep.subr.bf16.mxu0 %v3532
  %3683 = vmatpush1.bf16.msra.mxu0 %v3531
  %3684 = vmatprep.subr.bf16.mxu0 0
  %3685 = vmatpush2.bf16.msra.mxu0 0
  %3686 = vmatprep.subr.bf16.mxu0 0
  %3687 = vmatpush2.bf16.msra.mxu0 0
  %3688 = vmatprep.subr.bf16.mxu0 0
  %3689 = vmatpush2.bf16.msra.mxu0 0
  %3690 = vmatprep.subr.bf16.mxu0 0
  %3691 = vmatpush2.bf16.msra.mxu0 0
  %3692 = vmatprep.subr.bf16.mxu0 0
  %3693 = vmatpush2.bf16.msra.mxu0 0
  %3694 = vmatprep.subr.bf16.mxu0 0
  %3695 = vmatpush2.bf16.msra.mxu0 0
  %3696 = vmatprep.subr.bf16.mxu0 %v3568
  %3697 = vmatpush2.bf16.msra.mxu0 %v3567
  %3698 = vmatprep.subr.bf16.mxu0 %v3564
  %3699 = vmatpush2.bf16.msra.mxu0 %v3563
  %3700 = vmatprep.mubr.bf16.mxu0 %v3610
  %3701 = vmatmul.mubr.bf16.gmra.mxu0 %v3403
  %v3702 = vpop.f32.mrf.mxu0
  %v3703 = vadd.f32 0.0, %v3702
  %v3704 = vpop.f32.mrf.mxu0
  %v3705 = vadd.f32 0.0, %v3704
  %v3706 = vpop.f32.mrf.mxu0
  %v3707 = vadd.f32 0.0, %v3706
  %v3708 = vpop.f32.mrf.mxu0
  %v3709 = vadd.f32 0.0, %v3708
  %3710 = vmatprep.mubr.bf16.mxu0 %v3613
  %3711 = vmatmul.mubr.bf16.gmra.mxu0 %v3405
  %v3712 = vpop.f32.mrf.mxu0
  %v3713 = vadd.f32 0.0, %v3712
  %v3714 = vpop.f32.mrf.mxu0
  %v3715 = vadd.f32 0.0, %v3714
  %v3716 = vpop.f32.mrf.mxu0
  %v3717 = vadd.f32 0.0, %v3716
  %v3718 = vpop.f32.mrf.mxu0
  %v3719 = vadd.f32 0.0, %v3718
  %3720 = vdwg.mxu0
  %v3721 = vmax.f32 %v3650, 0.0
  %v3722 = vmax.f32 %v3652, 0.0
  %v3723 = vmax.f32 %v3703, 0.0
  %v3724 = vmax.f32 %v3705, 0.0
  %v3725 = vmax.f32 %v3654, 0.0
  %v3726 = vmax.f32 %v3656, 0.0
  %v3727 = vmax.f32 %v3707, 0.0
  %v3728 = vmax.f32 %v3709, 0.0
  %v3729 = vmax.f32 %v3660, 0.0
  %v3730 = vmax.f32 %v3662, 0.0
  %v3731 = vmax.f32 %v3713, 0.0
  %v3732 = vmax.f32 %v3715, 0.0
  %v3733 = vmax.f32 %v3664, 0.0
  %v3734 = vmax.f32 %v3666, 0.0
  %v3735 = vmax.f32 %v3717, 0.0
  %v3736 = vmax.f32 %v3719, 0.0
  %v3737 = vld [vmem:[%s7] sm:$0xf]
  %v3738 = vld [vmem:[%s7 + $0x4] sm:$0xf]
  %v3739 = vld [vmem:[%s7 + $0x8] sm:$0xf]
  %v3740 = vld [vmem:[%s7 + $0xc] sm:$0xf]
  %v3741 = vld [vmem:[%s7 + $0x10] sm:$0xf]
  %v3742 = vld [vmem:[%s7 + $0x14] sm:$0xf]
  %v3743 = vld [vmem:[%s7 + $0x18] sm:$0xf]
  %v3744 = vld [vmem:[%s7 + $0x1c] sm:$0xf]
  %v3745 = vpack.c.bf16 %v3725, %v3721
  %v3746 = vpack.c.bf16 %v3726, %v3722
  %v3747 = vpack.c.bf16 %v3727, %v3723
  %v3748 = vpack.c.bf16 %v3728, %v3724
  %v3749 = vpack.c.bf16 %v3733, %v3729
  %v3750 = vpack.c.bf16 %v3734, %v3730
  %v3751 = vpack.c.bf16 %v3735, %v3731
  %v3752 = vpack.c.bf16 %v3736, %v3732
  %v3761 = vunpack.c.l.b16 %v3737
  %v3762 = vunpack.c.l.b16 %v3738
  %v3763 = vunpack.c.l.b16 %v3739
  %v3764 = vunpack.c.l.b16 %v3740
  %v3765 = vunpack.c.l.b16 %v3741
  %v3766 = vunpack.c.l.b16 %v3742
  %v3767 = vunpack.c.l.b16 %v3743
  %v3768 = vunpack.c.l.b16 %v3744
  %v3769 = vpack.c.b16 %v3762, %v3761
  %v3770 = vpack.c.b16 %v3764, %v3763
  %v3771 = vpack.c.b16 %v3766, %v3765
  %v3772 = vpack.c.b16 %v3768, %v3767
  %v3774 = vsel %vm987, %v3769, 0
  %v3777 = vsel %vm987, %v3770, 0
  %v3780 = vsel %vm987, %v3771, 0
  %v3783 = vsel %vm987, %v3772, 0
  %3785 = vmatprep.subr.bf16.mxu0 0
  %3786 = vmatpush1.bf16.msra.mxu0 0
  %3787 = vmatprep.subr.bf16.mxu0 0
  %3788 = vmatpush1.bf16.msra.mxu0 0
  %3789 = vmatprep.subr.bf16.mxu0 0
  %3790 = vmatpush1.bf16.msra.mxu0 0
  %3791 = vmatprep.subr.bf16.mxu0 0
  %3792 = vmatpush1.bf16.msra.mxu0 0
  %3793 = vmatprep.subr.bf16.mxu0 0
  %3794 = vmatpush1.bf16.msra.mxu0 0
  %3795 = vmatprep.subr.bf16.mxu0 0
  %3796 = vmatpush1.bf16.msra.mxu0 0
  %3797 = vmatprep.subr.bf16.mxu0 %v3750
  %3798 = vmatpush1.bf16.msra.mxu0 %v3749
  %3799 = vmatprep.subr.bf16.mxu0 %v3746
  %3800 = vmatpush1.bf16.msra.mxu0 %v3745
  %3801 = vmatprep.subr.bf16.mxu0 0
  %3802 = vmatpush2.bf16.msra.mxu0 0
  %3803 = vmatprep.subr.bf16.mxu0 0
  %3804 = vmatpush2.bf16.msra.mxu0 0
  %3805 = vmatprep.subr.bf16.mxu0 0
  %3806 = vmatpush2.bf16.msra.mxu0 0
  %3807 = vmatprep.subr.bf16.mxu0 0
  %3808 = vmatpush2.bf16.msra.mxu0 0
  %3809 = vmatprep.subr.bf16.mxu0 0
  %3810 = vmatpush2.bf16.msra.mxu0 0
  %3811 = vmatprep.subr.bf16.mxu0 0
  %3812 = vmatpush2.bf16.msra.mxu0 0
  %3813 = vmatprep.subr.bf16.mxu0 0
  %3814 = vmatpush2.bf16.msra.mxu0 0
  %3815 = vmatprep.subr.bf16.mxu0 0
  %3816 = vmatpush2.bf16.msra.mxu0 0
  %3817 = vmatprep.mubr.bf16.mxu0 0
  %3818 = vmatmul.mubr.bf16.gmra.mxu0 %v3774
  %v3819 = vpop.f32.mrf.mxu0
  %v3820 = vadd.f32 0.0, %v3819
  %v3821 = vpop.f32.mrf.mxu0
  %v3822 = vadd.f32 0.0, %v3821
  %v3823 = vpop.f32.mrf.mxu0
  %v3824 = vadd.f32 0.0, %v3823
  %v3825 = vpop.f32.mrf.mxu0
  %v3826 = vadd.f32 0.0, %v3825
  %3827 = vmatprep.mubr.bf16.mxu0 0
  %3828 = vmatmul.mubr.bf16.gmra.mxu0 %v3777
  %v3829 = vpop.f32.mrf.mxu0
  %v3830 = vadd.f32 0.0, %v3829
  %v3831 = vpop.f32.mrf.mxu0
  %v3832 = vadd.f32 0.0, %v3831
  %v3833 = vpop.f32.mrf.mxu0
  %v3834 = vadd.f32 0.0, %v3833
  %v3835 = vpop.f32.mrf.mxu0
  %v3836 = vadd.f32 0.0, %v3835
  %3837 = vmatprep.mubr.bf16.mxu0 0
  %3838 = vmatmul.mubr.bf16.gmra.mxu0 %v3780
  %v3839 = vpop.f32.mrf.mxu0
  %v3840 = vadd.f32 0.0, %v3839
  %v3841 = vpop.f32.mrf.mxu0
  %v3842 = vadd.f32 0.0, %v3841
  %v3843 = vpop.f32.mrf.mxu0
  %v3844 = vadd.f32 0.0, %v3843
  %v3845 = vpop.f32.mrf.mxu0
  %v3846 = vadd.f32 0.0, %v3845
  %3847 = vmatprep.mubr.bf16.mxu0 0
  %3848 = vmatmul.mubr.bf16.gmra.mxu0 %v3783
  %v3849 = vpop.f32.mrf.mxu0
  %v3850 = vadd.f32 0.0, %v3849
  %v3851 = vpop.f32.mrf.mxu0
  %v3852 = vadd.f32 0.0, %v3851
  %v3853 = vpop.f32.mrf.mxu0
  %v3854 = vadd.f32 0.0, %v3853
  %v3855 = vpop.f32.mrf.mxu0
  %v3856 = vadd.f32 0.0, %v3855
  %3857 = vdwg.mxu0
  %3858 = vmatprep.subr.bf16.mxu0 0
  %3859 = vmatpush1.bf16.msra.mxu0 0
  %3860 = vmatprep.subr.bf16.mxu0 0
  %3861 = vmatpush1.bf16.msra.mxu0 0
  %3862 = vmatprep.subr.bf16.mxu0 0
  %3863 = vmatpush1.bf16.msra.mxu0 0
  %3864 = vmatprep.subr.bf16.mxu0 0
  %3865 = vmatpush1.bf16.msra.mxu0 0
  %3866 = vmatprep.subr.bf16.mxu0 0
  %3867 = vmatpush1.bf16.msra.mxu0 0
  %3868 = vmatprep.subr.bf16.mxu0 0
  %3869 = vmatpush1.bf16.msra.mxu0 0
  %3870 = vmatprep.subr.bf16.mxu0 %v3752
  %3871 = vmatpush1.bf16.msra.mxu0 %v3751
  %3872 = vmatprep.subr.bf16.mxu0 %v3748
  %3873 = vmatpush1.bf16.msra.mxu0 %v3747
  %3874 = vmatprep.subr.bf16.mxu0 0
  %3875 = vmatpush2.bf16.msra.mxu0 0
  %3876 = vmatprep.subr.bf16.mxu0 0
  %3877 = vmatpush2.bf16.msra.mxu0 0
  %3878 = vmatprep.subr.bf16.mxu0 0
  %3879 = vmatpush2.bf16.msra.mxu0 0
  %3880 = vmatprep.subr.bf16.mxu0 0
  %3881 = vmatpush2.bf16.msra.mxu0 0
  %3882 = vmatprep.subr.bf16.mxu0 0
  %3883 = vmatpush2.bf16.msra.mxu0 0
  %3884 = vmatprep.subr.bf16.mxu0 0
  %3885 = vmatpush2.bf16.msra.mxu0 0
  %3886 = vmatprep.subr.bf16.mxu0 0
  %3887 = vmatpush2.bf16.msra.mxu0 0
  %3888 = vmatprep.subr.bf16.mxu0 0
  %3889 = vmatpush2.bf16.msra.mxu0 0
  %3890 = vmatprep.mubr.bf16.mxu0 0
  %3891 = vmatmul.mubr.bf16.gmra.mxu0 %v3774
  %v3892 = vpop.f32.mrf.mxu0
  %v3893 = vadd.f32 0.0, %v3892
  %v3894 = vpop.f32.mrf.mxu0
  %v3895 = vadd.f32 0.0, %v3894
  %v3896 = vpop.f32.mrf.mxu0
  %v3897 = vadd.f32 0.0, %v3896
  %v3898 = vpop.f32.mrf.mxu0
  %v3899 = vadd.f32 0.0, %v3898
  %3900 = vmatprep.mubr.bf16.mxu0 0
  %3901 = vmatmul.mubr.bf16.gmra.mxu0 %v3777
  %v3902 = vpop.f32.mrf.mxu0
  %v3903 = vadd.f32 0.0, %v3902
  %v3904 = vpop.f32.mrf.mxu0
  %v3905 = vadd.f32 0.0, %v3904
  %v3906 = vpop.f32.mrf.mxu0
  %v3907 = vadd.f32 0.0, %v3906
  %v3908 = vpop.f32.mrf.mxu0
  %v3909 = vadd.f32 0.0, %v3908
  %3910 = vmatprep.mubr.bf16.mxu0 0
  %3911 = vmatmul.mubr.bf16.gmra.mxu0 %v3780
  %v3912 = vpop.f32.mrf.mxu0
  %v3913 = vadd.f32 0.0, %v3912
  %v3914 = vpop.f32.mrf.mxu0
  %v3915 = vadd.f32 0.0, %v3914
  %v3916 = vpop.f32.mrf.mxu0
  %v3917 = vadd.f32 0.0, %v3916
  %v3918 = vpop.f32.mrf.mxu0
  %v3919 = vadd.f32 0.0, %v3918
  %3920 = vmatprep.mubr.bf16.mxu0 0
  %3921 = vmatmul.mubr.bf16.gmra.mxu0 %v3783
  %v3922 = vpop.f32.mrf.mxu0
  %v3923 = vadd.f32 0.0, %v3922
  %v3924 = vpop.f32.mrf.mxu0
  %v3925 = vadd.f32 0.0, %v3924
  %v3926 = vpop.f32.mrf.mxu0
  %v3927 = vadd.f32 0.0, %v3926
  %v3928 = vpop.f32.mrf.mxu0
  %v3929 = vadd.f32 0.0, %v3928
  %3930 = vdwg.mxu0
  %v3931 = vadd.f32 %v3820, %v3822
  %3932 = vadd.xlane.f32.xlu0 %v3931
  %v3933 = vpop.xlane.xlu0 %3932
  %v3934 = vadd.f32 %v3824, %v3826
  %3935 = vadd.xlane.f32.xlu0 %v3934
  %v3936 = vpop.xlane.xlu0 %3935
  %v3937 = vadd.f32 %v3830, %v3832
  %3938 = vadd.xlane.f32.xlu0 %v3937
  %v3939 = vpop.xlane.xlu0 %3938
  %v3940 = vadd.f32 %v3834, %v3836
  %3941 = vadd.xlane.f32.xlu0 %v3940
  %v3942 = vpop.xlane.xlu0 %3941
  %v3943 = vadd.f32 %v3840, %v3842
  %3944 = vadd.xlane.f32.xlu0 %v3943
  %v3945 = vpop.xlane.xlu0 %3944
  %v3946 = vadd.f32 %v3844, %v3846
  %3947 = vadd.xlane.f32.xlu0 %v3946
  %v3948 = vpop.xlane.xlu0 %3947
  %v3949 = vadd.f32 %v3850, %v3852
  %3950 = vadd.xlane.f32.xlu0 %v3949
  %v3951 = vpop.xlane.xlu0 %3950
  %v3952 = vadd.f32 %v3854, %v3856
  %3953 = vadd.xlane.f32.xlu0 %v3952
  %v3954 = vpop.xlane.xlu0 %3953
  %v3955 = vmul.f32 %v3933, 0.00390625
  %v3956 = vmul.f32 %v3936, 0.00390625
  %v3957 = vmul.f32 %v3939, 0.00390625
  %v3958 = vmul.f32 %v3942, 0.00390625
  %v3959 = vmul.f32 %v3945, 0.00390625
  %v3960 = vmul.f32 %v3948, 0.00390625
  %v3961 = vmul.f32 %v3951, 0.00390625
  %v3962 = vmul.f32 %v3954, 0.00390625
  %v3963 = vld [vmem:[%s8] sm:$0xff]
  %v3964 = vld [vmem:[%s8 + $0x8] sm:$0xff]
  %v3965 = vld [vmem:[%s8 + $0x10] sm:$0xff]
  %v3966 = vld [vmem:[%s8 + $0x18] sm:$0xff]
  %v3967 = vld [vmem:[%s8 + $0x20] sm:$0xff]
  %v3968 = vld [vmem:[%s8 + $0x28] sm:$0xff]
  %v3969 = vld [vmem:[%s8 + $0x30] sm:$0xff]
  %v3970 = vld [vmem:[%s8 + $0x38] sm:$0xff]
  %v3971 = vadd.f32 %v3955, %v3963
  %v3972 = vadd.f32 %v3956, %v3964
  %v3973 = vadd.f32 %v3957, %v3965
  %v3974 = vadd.f32 %v3958, %v3966
  %v3975 = vadd.f32 %v3959, %v3967
  %v3976 = vadd.f32 %v3960, %v3968
  %v3977 = vadd.f32 %v3961, %v3969
  %v3978 = vadd.f32 %v3962, %v3970
  %v3979 = vadd.f32 %v1967, %v1968
  %3980 = vadd.xlane.f32.xlu0 %v3979
  %v3981 = vpop.xlane.xlu0 %3980
  %v3982 = vadd.f32 %v1971, %v1972
  %3983 = vadd.xlane.f32.xlu0 %v3982
  %v3984 = vpop.xlane.xlu0 %3983
  %v3985 = vadd.f32 %v1975, %v1976
  %3986 = vadd.xlane.f32.xlu0 %v3985
  %v3987 = vpop.xlane.xlu0 %3986
  %v3988 = vadd.f32 %v1979, %v1980
  %3989 = vadd.xlane.f32.xlu0 %v3988
  %v3990 = vpop.xlane.xlu0 %3989
  %v3991 = vmul.f32 %v3981, 0.00390625
  %v3992 = vmul.f32 %v3984, 0.00390625
  %v3993 = vmul.f32 %v3987, 0.00390625
  %v3994 = vmul.f32 %v3990, 0.00390625
  %v3995 = vmul.f32 %v1967, %v1967
  %v3996 = vmul.f32 %v1968, %v1968
  %v3997 = vmul.f32 %v1971, %v1971
  %v3998 = vmul.f32 %v1972, %v1972
  %v3999 = vmul.f32 %v1975, %v1975
  %v4000 = vmul.f32 %v1976, %v1976
  %v4001 = vmul.f32 %v1979, %v1979
  %v4002 = vmul.f32 %v1980, %v1980
  %v4003 = vadd.f32 %v3995, %v3996
  %4004 = vadd.xlane.f32.xlu0 %v4003
  %v4005 = vpop.xlane.xlu0 %4004
  %v4006 = vadd.f32 %v3997, %v3998
  %4007 = vadd.xlane.f32.xlu0 %v4006
  %v4008 = vpop.xlane.xlu0 %4007
  %v4009 = vadd.f32 %v3999, %v4000
  %4010 = vadd.xlane.f32.xlu0 %v4009
  %v4011 = vpop.xlane.xlu0 %4010
  %v4012 = vadd.f32 %v4001, %v4002
  %4013 = vadd.xlane.f32.xlu0 %v4012
  %v4014 = vpop.xlane.xlu0 %4013
  %v4015 = vmul.f32 %v4005, 0.00390625
  %v4016 = vmul.f32 %v4008, 0.00390625
  %v4017 = vmul.f32 %v4011, 0.00390625
  %v4018 = vmul.f32 %v4014, 0.00390625
  %v4019 = vmul.f32 %v3991, %v3991
  %v4020 = vmul.f32 %v3992, %v3992
  %v4021 = vmul.f32 %v3993, %v3993
  %v4022 = vmul.f32 %v3994, %v3994
  %v4023 = vsub.f32 %v4015, %v4019
  %v4024 = vsub.f32 %v4016, %v4020
  %v4025 = vsub.f32 %v4017, %v4021
  %v4026 = vsub.f32 %v4018, %v4022
  %v4027 = vmax.f32 %v4023, 0.0
  %v4028 = vmax.f32 %v4024, 0.0
  %v4029 = vmax.f32 %v4025, 0.0
  %v4030 = vmax.f32 %v4026, 0.0
  %v4031 = vsub.f32 %v1967, %v3991
  %v4032 = vsub.f32 %v1968, %v3991
  %v4033 = vsub.f32 %v1971, %v3992
  %v4034 = vsub.f32 %v1972, %v3992
  %v4035 = vsub.f32 %v1975, %v3993
  %v4036 = vsub.f32 %v1976, %v3993
  %v4037 = vsub.f32 %v1979, %v3994
  %v4038 = vsub.f32 %v1980, %v3994
  %v4039 = vadd.f32 %v4027, 1e-05
  %v4040 = vadd.f32 %v4028, 1e-05
  %v4041 = vadd.f32 %v4029, 1e-05
  %v4042 = vadd.f32 %v4030, 1e-05
  %v4043 = vrsqrt.pop %v4039
  %v4044 = vrsqrt.pop %v4040
  %v4045 = vrsqrt.pop %v4041
  %v4046 = vrsqrt.pop %v4042
  %v4047 = vmul.f32 %v4031, %v4043
  %v4048 = vmul.f32 %v4032, %v4043
  %v4049 = vmul.f32 %v4033, %v4044
  %v4050 = vmul.f32 %v4034, %v4044
  %v4051 = vmul.f32 %v4035, %v4045
  %v4052 = vmul.f32 %v4036, %v4045
  %v4053 = vmul.f32 %v4037, %v4046
  %v4054 = vmul.f32 %v4038, %v4046
  %v4055 = vadd.f32 %v3971, 1.0
  %v4056 = vadd.f32 %v3972, 1.0
  %v4057 = vadd.f32 %v3973, 1.0
  %v4058 = vadd.f32 %v3974, 1.0
  %4060 = vset.pattern.permute.xlu0 0
  %4061 = vperm.xlu0 %4060, %v4055
  %v4062 = vpop.permute.xlu0 %4061
  %4065 = vset.pattern.permute.xlu0 0
  %4066 = vperm.xlu0 %4065, %v4056
  %v4067 = vpop.permute.xlu0 %4066
  %4070 = vset.pattern.permute.xlu0 0
  %4071 = vperm.xlu0 %4070, %v4057
  %v4072 = vpop.permute.xlu0 %4071
  %4075 = vset.pattern.permute.xlu0 0
  %4076 = vperm.xlu0 %4075, %v4058
  %v4077 = vpop.permute.xlu0 %4076
  %v4079 = vmul.f32 %v4047, %v4062
  %v4080 = vmul.f32 %v4048, %v4062
  %v4081 = vmul.f32 %v4049, %v4067
  %v4082 = vmul.f32 %v4050, %v4067
  %v4083 = vmul.f32 %v4051, %v4072
  %v4084 = vmul.f32 %v4052, %v4072
  %v4085 = vmul.f32 %v4053, %v4077
  %v4086 = vmul.f32 %v4054, %v4077
  %4088 = vset.pattern.permute.xlu0 0
  %4089 = vperm.xlu0 %4088, %v3975
  %v4090 = vpop.permute.xlu0 %4089
  %4093 = vset.pattern.permute.xlu0 0
  %4094 = vperm.xlu0 %4093, %v3976
  %v4095 = vpop.permute.xlu0 %4094
  %4098 = vset.pattern.permute.xlu0 0
  %4099 = vperm.xlu0 %4098, %v3977
  %v4100 = vpop.permute.xlu0 %4099
  %4103 = vset.pattern.permute.xlu0 0
  %4104 = vperm.xlu0 %4103, %v3978
  %v4105 = vpop.permute.xlu0 %4104
  %v4107 = vadd.f32 %v4079, %v4090
  %v4108 = vadd.f32 %v4080, %v4090
  %v4109 = vadd.f32 %v4081, %v4095
  %v4110 = vadd.f32 %v4082, %v4095
  %v4111 = vadd.f32 %v4083, %v4100
  %v4112 = vadd.f32 %v4084, %v4100
  %v4113 = vadd.f32 %v4085, %v4105
  %v4114 = vadd.f32 %v4086, %v4105
  %v4115 = vadd.f32 %v3893, %v3895
  %4116 = vadd.xlane.f32.xlu0 %v4115
  %v4117 = vpop.xlane.xlu0 %4116
  %v4118 = vadd.f32 %v3897, %v3899
  %4119 = vadd.xlane.f32.xlu0 %v4118
  %v4120 = vpop.xlane.xlu0 %4119
  %v4121 = vadd.f32 %v3903, %v3905
  %4122 = vadd.xlane.f32.xlu0 %v4121
  %v4123 = vpop.xlane.xlu0 %4122
  %v4124 = vadd.f32 %v3907, %v3909
  %4125 = vadd.xlane.f32.xlu0 %v4124
  %v4126 = vpop.xlane.xlu0 %4125
  %v4127 = vadd.f32 %v3913, %v3915
  %4128 = vadd.xlane.f32.xlu0 %v4127
  %v4129 = vpop.xlane.xlu0 %4128
  %v4130 = vadd.f32 %v3917, %v3919
  %4131 = vadd.xlane.f32.xlu0 %v4130
  %v4132 = vpop.xlane.xlu0 %4131
  %v4133 = vadd.f32 %v3923, %v3925
  %4134 = vadd.xlane.f32.xlu0 %v4133
  %v4135 = vpop.xlane.xlu0 %4134
  %v4136 = vadd.f32 %v3927, %v3929
  %4137 = vadd.xlane.f32.xlu0 %v4136
  %v4138 = vpop.xlane.xlu0 %4137
  %v4139 = vmul.f32 %v4117, 0.00390625
  %v4140 = vmul.f32 %v4120, 0.00390625
  %v4141 = vmul.f32 %v4123, 0.00390625
  %v4142 = vmul.f32 %v4126, 0.00390625
  %v4143 = vmul.f32 %v4129, 0.00390625
  %v4144 = vmul.f32 %v4132, 0.00390625
  %v4145 = vmul.f32 %v4135, 0.00390625
  %v4146 = vmul.f32 %v4138, 0.00390625
  %v4147 = vadd.f32 %v4139, %v3963
  %v4148 = vadd.f32 %v4140, %v3964
  %v4149 = vadd.f32 %v4141, %v3965
  %v4150 = vadd.f32 %v4142, %v3966
  %v4151 = vadd.f32 %v4143, %v3967
  %v4152 = vadd.f32 %v4144, %v3968
  %v4153 = vadd.f32 %v4145, %v3969
  %v4154 = vadd.f32 %v4146, %v3970
  %v4155 = vadd.f32 %v1969, %v1970
  %4156 = vadd.xlane.f32.xlu0 %v4155
  %v4157 = vpop.xlane.xlu0 %4156
  %v4158 = vadd.f32 %v1973, %v1974
  %4159 = vadd.xlane.f32.xlu0 %v4158
  %v4160 = vpop.xlane.xlu0 %4159
  %v4161 = vadd.f32 %v1977, %v1978
  %4162 = vadd.xlane.f32.xlu0 %v4161
  %v4163 = vpop.xlane.xlu0 %4162
  %v4164 = vadd.f32 %v1981, %v1982
  %4165 = vadd.xlane.f32.xlu0 %v4164
  %v4166 = vpop.xlane.xlu0 %4165
  %v4167 = vmul.f32 %v4157, 0.00390625
  %v4168 = vmul.f32 %v4160, 0.00390625
  %v4169 = vmul.f32 %v4163, 0.00390625
  %v4170 = vmul.f32 %v4166, 0.00390625
  %v4171 = vmul.f32 %v1969, %v1969
  %v4172 = vmul.f32 %v1970, %v1970
  %v4173 = vmul.f32 %v1973, %v1973
  %v4174 = vmul.f32 %v1974, %v1974
  %v4175 = vmul.f32 %v1977, %v1977
  %v4176 = vmul.f32 %v1978, %v1978
  %v4177 = vmul.f32 %v1981, %v1981
  %v4178 = vmul.f32 %v1982, %v1982
  %v4179 = vadd.f32 %v4171, %v4172
  %4180 = vadd.xlane.f32.xlu0 %v4179
  %v4181 = vpop.xlane.xlu0 %4180
  %v4182 = vadd.f32 %v4173, %v4174
  %4183 = vadd.xlane.f32.xlu0 %v4182
  %v4184 = vpop.xlane.xlu0 %4183
  %v4185 = vadd.f32 %v4175, %v4176
  %4186 = vadd.xlane.f32.xlu0 %v4185
  %v4187 = vpop.xlane.xlu0 %4186
  %v4188 = vadd.f32 %v4177, %v4178
  %4189 = vadd.xlane.f32.xlu0 %v4188
  %v4190 = vpop.xlane.xlu0 %4189
  %v4191 = vmul.f32 %v4181, 0.00390625
  %v4192 = vmul.f32 %v4184, 0.00390625
  %v4193 = vmul.f32 %v4187, 0.00390625
  %v4194 = vmul.f32 %v4190, 0.00390625
  %v4195 = vmul.f32 %v4167, %v4167
  %v4196 = vmul.f32 %v4168, %v4168
  %v4197 = vmul.f32 %v4169, %v4169
  %v4198 = vmul.f32 %v4170, %v4170
  %v4199 = vsub.f32 %v4191, %v4195
  %v4200 = vsub.f32 %v4192, %v4196
  %v4201 = vsub.f32 %v4193, %v4197
  %v4202 = vsub.f32 %v4194, %v4198
  %v4203 = vmax.f32 %v4199, 0.0
  %v4204 = vmax.f32 %v4200, 0.0
  %v4205 = vmax.f32 %v4201, 0.0
  %v4206 = vmax.f32 %v4202, 0.0
  %v4207 = vsub.f32 %v1969, %v4167
  %v4208 = vsub.f32 %v1970, %v4167
  %v4209 = vsub.f32 %v1973, %v4168
  %v4210 = vsub.f32 %v1974, %v4168
  %v4211 = vsub.f32 %v1977, %v4169
  %v4212 = vsub.f32 %v1978, %v4169
  %v4213 = vsub.f32 %v1981, %v4170
  %v4214 = vsub.f32 %v1982, %v4170
  %v4215 = vadd.f32 %v4203, 1e-05
  %v4216 = vadd.f32 %v4204, 1e-05
  %v4217 = vadd.f32 %v4205, 1e-05
  %v4218 = vadd.f32 %v4206, 1e-05
  %v4219 = vrsqrt.pop %v4215
  %v4220 = vrsqrt.pop %v4216
  %v4221 = vrsqrt.pop %v4217
  %v4222 = vrsqrt.pop %v4218
  %v4223 = vmul.f32 %v4207, %v4219
  %v4224 = vmul.f32 %v4208, %v4219
  %v4225 = vmul.f32 %v4209, %v4220
  %v4226 = vmul.f32 %v4210, %v4220
  %v4227 = vmul.f32 %v4211, %v4221
  %v4228 = vmul.f32 %v4212, %v4221
  %v4229 = vmul.f32 %v4213, %v4222
  %v4230 = vmul.f32 %v4214, %v4222
  %v4231 = vadd.f32 %v4147, 1.0
  %v4232 = vadd.f32 %v4148, 1.0
  %v4233 = vadd.f32 %v4149, 1.0
  %v4234 = vadd.f32 %v4150, 1.0
  %4236 = vset.pattern.permute.xlu0 0
  %4237 = vperm.xlu0 %4236, %v4231
  %v4238 = vpop.permute.xlu0 %4237
  %4241 = vset.pattern.permute.xlu0 0
  %4242 = vperm.xlu0 %4241, %v4232
  %v4243 = vpop.permute.xlu0 %4242
  %4246 = vset.pattern.permute.xlu0 0
  %4247 = vperm.xlu0 %4246, %v4233
  %v4248 = vpop.permute.xlu0 %4247
  %4251 = vset.pattern.permute.xlu0 0
  %4252 = vperm.xlu0 %4251, %v4234
  %v4253 = vpop.permute.xlu0 %4252
  %v4255 = vmul.f32 %v4223, %v4238
  %v4256 = vmul.f32 %v4224, %v4238
  %v4257 = vmul.f32 %v4225, %v4243
  %v4258 = vmul.f32 %v4226, %v4243
  %v4259 = vmul.f32 %v4227, %v4248
  %v4260 = vmul.f32 %v4228, %v4248
  %v4261 = vmul.f32 %v4229, %v4253
  %v4262 = vmul.f32 %v4230, %v4253
  %4264 = vset.pattern.permute.xlu0 0
  %4265 = vperm.xlu0 %4264, %v4151
  %v4266 = vpop.permute.xlu0 %4265
  %4269 = vset.pattern.permute.xlu0 0
  %4270 = vperm.xlu0 %4269, %v4152
  %v4271 = vpop.permute.xlu0 %4270
  %4274 = vset.pattern.permute.xlu0 0
  %4275 = vperm.xlu0 %4274, %v4153
  %v4276 = vpop.permute.xlu0 %4275
  %4279 = vset.pattern.permute.xlu0 0
  %4280 = vperm.xlu0 %4279, %v4154
  %v4281 = vpop.permute.xlu0 %4280
  %v4283 = vadd.f32 %v4255, %v4266
  %v4284 = vadd.f32 %v4256, %v4266
  %v4285 = vadd.f32 %v4257, %v4271
  %v4286 = vadd.f32 %v4258, %v4271
  %v4287 = vadd.f32 %v4259, %v4276
  %v4288 = vadd.f32 %v4260, %v4276
  %v4289 = vadd.f32 %v4261, %v4281
  %v4290 = vadd.f32 %v4262, %v4281
  %4291 = vrot.lane.b32.xlu0 %v4107, 17
  %v4292 = vpop.permute.xlu0 %4291
  %4293 = vrot.lane.b32.xlu0 %v4109, 17
  %v4294 = vpop.permute.xlu0 %4293
  %4295 = vrot.lane.b32.xlu0 %v4111, 17
  %v4296 = vpop.permute.xlu0 %4295
  %4297 = vrot.lane.b32.xlu0 %v4113, 17
  %v4298 = vpop.permute.xlu0 %4297
  %4299 = vrot.lane.b32.xlu0 %v4108, 17
  %v4300 = vpop.permute.xlu0 %4299
  %4301 = vrot.lane.b32.xlu0 %v4110, 17
  %v4302 = vpop.permute.xlu0 %4301
  %4303 = vrot.lane.b32.xlu0 %v4112, 17
  %v4304 = vpop.permute.xlu0 %4303
  %4305 = vrot.lane.b32.xlu0 %v4114, 17
  %v4306 = vpop.permute.xlu0 %4305
  %4307 = vrot.lane.b32.xlu0 %v4283, 17
  %v4308 = vpop.permute.xlu0 %4307
  %4309 = vrot.lane.b32.xlu0 %v4285, 17
  %v4310 = vpop.permute.xlu0 %4309
  %4311 = vrot.lane.b32.xlu0 %v4287, 17
  %v4312 = vpop.permute.xlu0 %4311
  %4313 = vrot.lane.b32.xlu0 %v4289, 17
  %v4314 = vpop.permute.xlu0 %4313
  %4315 = vrot.lane.b32.xlu0 %v4284, 17
  %v4316 = vpop.permute.xlu0 %4315
  %4317 = vrot.lane.b32.xlu0 %v4286, 17
  %v4318 = vpop.permute.xlu0 %4317
  %4319 = vrot.lane.b32.xlu0 %v4288, 17
  %v4320 = vpop.permute.xlu0 %4319
  %4321 = vrot.lane.b32.xlu0 %v4290, 17
  %v4322 = vpop.permute.xlu0 %4321
  %v4323 = vsel %vm108, %v4308, %v4316
  %v4324 = vsel %vm108, %v4310, %v4318
  %v4325 = vsel %vm108, %v4312, %v4320
  %v4326 = vsel %vm108, %v4314, %v4322
  %v4327 = vsel %vm108, %v4300, %v4308
  %v4328 = vsel %vm108, %v4302, %v4310
  %v4329 = vsel %vm108, %v4304, %v4312
  %v4330 = vsel %vm108, %v4306, %v4314
  %v4331 = vsel %vm108, %v4292, %v4300
  %v4332 = vsel %vm108, %v4294, %v4302
  %v4333 = vsel %vm108, %v4296, %v4304
  %v4334 = vsel %vm108, %v4298, %v4306
  %v4335 = vsel %vm108, %v4316, %v4292
  %v4336 = vsel %vm108, %v4318, %v4294
  %v4337 = vsel %vm108, %v4320, %v4296
  %v4338 = vsel %vm108, %v4322, %v4298
  %v4339 = vmul.f32 %v4335, %v120
  %v4340 = vmul.f32 %v4331, %v124
  %v4341 = vmul.f32 %v4327, %v128
  %v4342 = vmul.f32 %v4323, %v132
  %v4343 = vmul.f32 %v4336, %v120
  %v4344 = vmul.f32 %v4332, %v124
  %v4345 = vmul.f32 %v4328, %v128
  %v4346 = vmul.f32 %v4324, %v132
  %v4347 = vmul.f32 %v4337, %v120
  %v4348 = vmul.f32 %v4333, %v124
  %v4349 = vmul.f32 %v4329, %v128
  %v4350 = vmul.f32 %v4325, %v132
  %v4351 = vmul.f32 %v4338, %v120
  %v4352 = vmul.f32 %v4334, %v124
  %v4353 = vmul.f32 %v4330, %v128
  %v4354 = vmul.f32 %v4326, %v132
  %v4355 = vpack.c.bf16 %v4343, %v4339
  %v4356 = vpack.c.bf16 %v4344, %v4340
  %v4357 = vpack.c.bf16 %v4345, %v4341
  %v4358 = vpack.c.bf16 %v4346, %v4342
  %v4359 = vpack.c.bf16 %v4351, %v4347
  %v4360 = vpack.c.bf16 %v4352, %v4348
  %v4361 = vpack.c.bf16 %v4353, %v4349
  %v4362 = vpack.c.bf16 %v4354, %v4350
  %v4371 = vunpack.c.l.b16 %v4355
  %v4372 = vunpack.c.l.b16 %v4356
  %v4373 = vunpack.c.l.b16 %v4357
  %v4374 = vunpack.c.l.b16 %v4358
  %v4375 = vunpack.c.h.b16 %v4355
  %v4376 = vunpack.c.h.b16 %v4356
  %v4377 = vunpack.c.h.b16 %v4357
  %v4378 = vunpack.c.h.b16 %v4358
  %v4379 = vunpack.c.l.b16 %v4359
  %v4380 = vunpack.c.l.b16 %v4360
  %v4381 = vunpack.c.l.b16 %v4361
  %v4382 = vunpack.c.l.b16 %v4362
  %v4383 = vunpack.c.h.b16 %v4359
  %v4384 = vunpack.c.h.b16 %v4360
  %v4385 = vunpack.c.h.b16 %v4361
  %v4386 = vunpack.c.h.b16 %v4362
  %v4387 = vpack.c.b16 %v4372, %v4371
  %v4388 = vpack.c.b16 %v4374, %v4373
  %v4389 = vpack.c.b16 %v4376, %v4375
  %v4390 = vpack.c.b16 %v4378, %v4377
  %v4391 = vpack.c.b16 %v4380, %v4379
  %v4392 = vpack.c.b16 %v4382, %v4381
  %v4393 = vpack.c.b16 %v4384, %v4383
  %v4394 = vpack.c.b16 %v4386, %v4385
  %4403 = vst [vmem:[#allocation2 + $0x20] sm:$0xff] %v4387
  %4404 = vst [vmem:[#allocation2 + $0x28] sm:$0xff] %v4388
  %4405 = vst [vmem:[#allocation2 + $0x30] sm:$0xff] %v4389
  %4406 = vst [vmem:[#allocation2 + $0x38] sm:$0xff] %v4390
  %4407 = vst [vmem:[#allocation2 + $0x40] sm:$0xff] %v4391
  %4408 = vst [vmem:[#allocation2 + $0x48] sm:$0xff] %v4392
  %4409 = vst [vmem:[#allocation2 + $0x50] sm:$0xff] %v4393
  %4410 = vst [vmem:[#allocation2 + $0x58] sm:$0xff] %v4394
  %4411 = vrot.lane.b32.xlu0 %v4107, 16
  %v4412 = vpop.permute.xlu0 %4411
  %4413 = vrot.lane.b32.xlu0 %v4109, 16
  %v4414 = vpop.permute.xlu0 %4413
  %4415 = vrot.lane.b32.xlu0 %v4111, 16
  %v4416 = vpop.permute.xlu0 %4415
  %4417 = vrot.lane.b32.xlu0 %v4113, 16
  %v4418 = vpop.permute.xlu0 %4417
  %4419 = vrot.lane.b32.xlu0 %v4108, 16
  %v4420 = vpop.permute.xlu0 %4419
  %4421 = vrot.lane.b32.xlu0 %v4110, 16
  %v4422 = vpop.permute.xlu0 %4421
  %4423 = vrot.lane.b32.xlu0 %v4112, 16
  %v4424 = vpop.permute.xlu0 %4423
  %4425 = vrot.lane.b32.xlu0 %v4114, 16
  %v4426 = vpop.permute.xlu0 %4425
  %4427 = vrot.lane.b32.xlu0 %v4283, 16
  %v4428 = vpop.permute.xlu0 %4427
  %4429 = vrot.lane.b32.xlu0 %v4285, 16
  %v4430 = vpop.permute.xlu0 %4429
  %4431 = vrot.lane.b32.xlu0 %v4287, 16
  %v4432 = vpop.permute.xlu0 %4431
  %4433 = vrot.lane.b32.xlu0 %v4289, 16
  %v4434 = vpop.permute.xlu0 %4433
  %4435 = vrot.lane.b32.xlu0 %v4284, 16
  %v4436 = vpop.permute.xlu0 %4435
  %4437 = vrot.lane.b32.xlu0 %v4286, 16
  %v4438 = vpop.permute.xlu0 %4437
  %4439 = vrot.lane.b32.xlu0 %v4288, 16
  %v4440 = vpop.permute.xlu0 %4439
  %4441 = vrot.lane.b32.xlu0 %v4290, 16
  %v4442 = vpop.permute.xlu0 %4441
  %v4443 = vsel %vm185, %v4428, %v4436
  %v4444 = vsel %vm185, %v4430, %v4438
  %v4445 = vsel %vm185, %v4432, %v4440
  %v4446 = vsel %vm185, %v4434, %v4442
  %v4447 = vsel %vm185, %v4420, %v4428
  %v4448 = vsel %vm185, %v4422, %v4430
  %v4449 = vsel %vm185, %v4424, %v4432
  %v4450 = vsel %vm185, %v4426, %v4434
  %v4451 = vsel %vm185, %v4412, %v4420
  %v4452 = vsel %vm185, %v4414, %v4422
  %v4453 = vsel %vm185, %v4416, %v4424
  %v4454 = vsel %vm185, %v4418, %v4426
  %v4455 = vsel %vm185, %v4436, %v4412
  %v4456 = vsel %vm185, %v4438, %v4414
  %v4457 = vsel %vm185, %v4440, %v4416
  %v4458 = vsel %vm185, %v4442, %v4418
  %v4459 = vmul.f32 %v4455, %v197
  %v4460 = vmul.f32 %v4451, %v201
  %v4461 = vmul.f32 %v4447, %v205
  %v4462 = vmul.f32 %v4443, %v209
  %v4463 = vmul.f32 %v4456, %v197
  %v4464 = vmul.f32 %v4452, %v201
  %v4465 = vmul.f32 %v4448, %v205
  %v4466 = vmul.f32 %v4444, %v209
  %v4467 = vmul.f32 %v4457, %v197
  %v4468 = vmul.f32 %v4453, %v201
  %v4469 = vmul.f32 %v4449, %v205
  %v4470 = vmul.f32 %v4445, %v209
  %v4471 = vmul.f32 %v4458, %v197
  %v4472 = vmul.f32 %v4454, %v201
  %v4473 = vmul.f32 %v4450, %v205
  %v4474 = vmul.f32 %v4446, %v209
  %v4475 = vpack.c.bf16 %v4463, %v4459
  %v4476 = vpack.c.bf16 %v4464, %v4460
  %v4477 = vpack.c.bf16 %v4465, %v4461
  %v4478 = vpack.c.bf16 %v4466, %v4462
  %v4479 = vpack.c.bf16 %v4471, %v4467
  %v4480 = vpack.c.bf16 %v4472, %v4468
  %v4481 = vpack.c.bf16 %v4473, %v4469
  %v4482 = vpack.c.bf16 %v4474, %v4470
  %v4491 = vunpack.c.l.b16 %v4475
  %v4492 = vunpack.c.l.b16 %v4476
  %v4493 = vunpack.c.l.b16 %v4477
  %v4494 = vunpack.c.l.b16 %v4478
  %v4495 = vunpack.c.h.b16 %v4475
  %v4496 = vunpack.c.h.b16 %v4476
  %v4497 = vunpack.c.h.b16 %v4477
  %v4498 = vunpack.c.h.b16 %v4478
  %v4499 = vunpack.c.l.b16 %v4479
  %v4500 = vunpack.c.l.b16 %v4480
  %v4501 = vunpack.c.l.b16 %v4481
  %v4502 = vunpack.c.l.b16 %v4482
  %v4503 = vunpack.c.h.b16 %v4479
  %v4504 = vunpack.c.h.b16 %v4480
  %v4505 = vunpack.c.h.b16 %v4481
  %v4506 = vunpack.c.h.b16 %v4482
  %v4507 = vpack.c.b16 %v4492, %v4491
  %v4508 = vpack.c.b16 %v4494, %v4493
  %v4509 = vpack.c.b16 %v4496, %v4495
  %v4510 = vpack.c.b16 %v4498, %v4497
  %v4511 = vpack.c.b16 %v4500, %v4499
  %v4512 = vpack.c.b16 %v4502, %v4501
  %v4513 = vpack.c.b16 %v4504, %v4503
  %v4514 = vpack.c.b16 %v4506, %v4505
  %4523 = vst [vmem:[#allocation2 + $0x60] sm:$0xff] %v4507
  %4524 = vst [vmem:[#allocation2 + $0x68] sm:$0xff] %v4508
  %4525 = vst [vmem:[#allocation2 + $0x70] sm:$0xff] %v4509
  %4526 = vst [vmem:[#allocation2 + $0x78] sm:$0xff] %v4510
  %4527 = vst [vmem:[#allocation2 + $0x80] sm:$0xff] %v4511
  %4528 = vst [vmem:[#allocation2 + $0x88] sm:$0xff] %v4512
  %4529 = vst [vmem:[#allocation2 + $0x90] sm:$0xff] %v4513
  %4530 = vst [vmem:[#allocation2 + $0x98] sm:$0xff] %v4514
  %4531 = vrot.lane.b32.xlu0 %v4107, 15
  %v4532 = vpop.permute.xlu0 %4531
  %4533 = vrot.lane.b32.xlu0 %v4109, 15
  %v4534 = vpop.permute.xlu0 %4533
  %4535 = vrot.lane.b32.xlu0 %v4111, 15
  %v4536 = vpop.permute.xlu0 %4535
  %4537 = vrot.lane.b32.xlu0 %v4113, 15
  %v4538 = vpop.permute.xlu0 %4537
  %4539 = vrot.lane.b32.xlu0 %v4108, 15
  %v4540 = vpop.permute.xlu0 %4539
  %4541 = vrot.lane.b32.xlu0 %v4110, 15
  %v4542 = vpop.permute.xlu0 %4541
  %4543 = vrot.lane.b32.xlu0 %v4112, 15
  %v4544 = vpop.permute.xlu0 %4543
  %4545 = vrot.lane.b32.xlu0 %v4114, 15
  %v4546 = vpop.permute.xlu0 %4545
  %4547 = vrot.lane.b32.xlu0 %v4283, 15
  %v4548 = vpop.permute.xlu0 %4547
  %4549 = vrot.lane.b32.xlu0 %v4285, 15
  %v4550 = vpop.permute.xlu0 %4549
  %4551 = vrot.lane.b32.xlu0 %v4287, 15
  %v4552 = vpop.permute.xlu0 %4551
  %4553 = vrot.lane.b32.xlu0 %v4289, 15
  %v4554 = vpop.permute.xlu0 %4553
  %4555 = vrot.lane.b32.xlu0 %v4284, 15
  %v4556 = vpop.permute.xlu0 %4555
  %4557 = vrot.lane.b32.xlu0 %v4286, 15
  %v4558 = vpop.permute.xlu0 %4557
  %4559 = vrot.lane.b32.xlu0 %v4288, 15
  %v4560 = vpop.permute.xlu0 %4559
  %4561 = vrot.lane.b32.xlu0 %v4290, 15
  %v4562 = vpop.permute.xlu0 %4561
  %v4563 = vsel %vm262, %v4548, %v4556
  %v4564 = vsel %vm262, %v4550, %v4558
  %v4565 = vsel %vm262, %v4552, %v4560
  %v4566 = vsel %vm262, %v4554, %v4562
  %v4567 = vsel %vm262, %v4540, %v4548
  %v4568 = vsel %vm262, %v4542, %v4550
  %v4569 = vsel %vm262, %v4544, %v4552
  %v4570 = vsel %vm262, %v4546, %v4554
  %v4571 = vsel %vm262, %v4532, %v4540
  %v4572 = vsel %vm262, %v4534, %v4542
  %v4573 = vsel %vm262, %v4536, %v4544
  %v4574 = vsel %vm262, %v4538, %v4546
  %v4575 = vsel %vm262, %v4556, %v4532
  %v4576 = vsel %vm262, %v4558, %v4534
  %v4577 = vsel %vm262, %v4560, %v4536
  %v4578 = vsel %vm262, %v4562, %v4538
  %v4579 = vmul.f32 %v4575, %v274
  %v4580 = vmul.f32 %v4571, %v278
  %v4581 = vmul.f32 %v4567, %v282
  %v4582 = vmul.f32 %v4563, %v286
  %v4583 = vmul.f32 %v4576, %v274
  %v4584 = vmul.f32 %v4572, %v278
  %v4585 = vmul.f32 %v4568, %v282
  %v4586 = vmul.f32 %v4564, %v286
  %v4587 = vmul.f32 %v4577, %v274
  %v4588 = vmul.f32 %v4573, %v278
  %v4589 = vmul.f32 %v4569, %v282
  %v4590 = vmul.f32 %v4565, %v286
  %v4591 = vmul.f32 %v4578, %v274
  %v4592 = vmul.f32 %v4574, %v278
  %v4593 = vmul.f32 %v4570, %v282
  %v4594 = vmul.f32 %v4566, %v286
  %v4595 = vpack.c.bf16 %v4583, %v4579
  %v4596 = vpack.c.bf16 %v4584, %v4580
  %v4597 = vpack.c.bf16 %v4585, %v4581
  %v4598 = vpack.c.bf16 %v4586, %v4582
  %v4599 = vpack.c.bf16 %v4591, %v4587
  %v4600 = vpack.c.bf16 %v4592, %v4588
  %v4601 = vpack.c.bf16 %v4593, %v4589
  %v4602 = vpack.c.bf16 %v4594, %v4590
  %v4611 = vunpack.c.l.b16 %v4595
  %v4612 = vunpack.c.l.b16 %v4596
  %v4613 = vunpack.c.l.b16 %v4597
  %v4614 = vunpack.c.l.b16 %v4598
  %v4615 = vunpack.c.h.b16 %v4595
  %v4616 = vunpack.c.h.b16 %v4596
  %v4617 = vunpack.c.h.b16 %v4597
  %v4618 = vunpack.c.h.b16 %v4598
  %v4619 = vunpack.c.l.b16 %v4599
  %v4620 = vunpack.c.l.b16 %v4600
  %v4621 = vunpack.c.l.b16 %v4601
  %v4622 = vunpack.c.l.b16 %v4602
  %v4623 = vunpack.c.h.b16 %v4599
  %v4624 = vunpack.c.h.b16 %v4600
  %v4625 = vunpack.c.h.b16 %v4601
  %v4626 = vunpack.c.h.b16 %v4602
  %v4627 = vpack.c.b16 %v4612, %v4611
  %v4628 = vpack.c.b16 %v4614, %v4613
  %v4629 = vpack.c.b16 %v4616, %v4615
  %v4630 = vpack.c.b16 %v4618, %v4617
  %v4631 = vpack.c.b16 %v4620, %v4619
  %v4632 = vpack.c.b16 %v4622, %v4621
  %v4633 = vpack.c.b16 %v4624, %v4623
  %v4634 = vpack.c.b16 %v4626, %v4625
  %4643 = vst [vmem:[#allocation2 + $0xa0] sm:$0xff] %v4627
  %4644 = vst [vmem:[#allocation2 + $0xa8] sm:$0xff] %v4628
  %4645 = vst [vmem:[#allocation2 + $0xb0] sm:$0xff] %v4629
  %4646 = vst [vmem:[#allocation2 + $0xb8] sm:$0xff] %v4630
  %4647 = vst [vmem:[#allocation2 + $0xc0] sm:$0xff] %v4631
  %4648 = vst [vmem:[#allocation2 + $0xc8] sm:$0xff] %v4632
  %4649 = vst [vmem:[#allocation2 + $0xd0] sm:$0xff] %v4633
  %4650 = vst [vmem:[#allocation2 + $0xd8] sm:$0xff] %v4634
  %4651 = vrot.lane.b32.xlu0 %v4107, 1
  %v4652 = vpop.permute.xlu0 %4651
  %4653 = vrot.lane.b32.xlu0 %v4109, 1
  %v4654 = vpop.permute.xlu0 %4653
  %4655 = vrot.lane.b32.xlu0 %v4111, 1
  %v4656 = vpop.permute.xlu0 %4655
  %4657 = vrot.lane.b32.xlu0 %v4113, 1
  %v4658 = vpop.permute.xlu0 %4657
  %4659 = vrot.lane.b32.xlu0 %v4108, 1
  %v4660 = vpop.permute.xlu0 %4659
  %4661 = vrot.lane.b32.xlu0 %v4110, 1
  %v4662 = vpop.permute.xlu0 %4661
  %4663 = vrot.lane.b32.xlu0 %v4112, 1
  %v4664 = vpop.permute.xlu0 %4663
  %4665 = vrot.lane.b32.xlu0 %v4114, 1
  %v4666 = vpop.permute.xlu0 %4665
  %4667 = vrot.lane.b32.xlu0 %v4283, 1
  %v4668 = vpop.permute.xlu0 %4667
  %4669 = vrot.lane.b32.xlu0 %v4285, 1
  %v4670 = vpop.permute.xlu0 %4669
  %4671 = vrot.lane.b32.xlu0 %v4287, 1
  %v4672 = vpop.permute.xlu0 %4671
  %4673 = vrot.lane.b32.xlu0 %v4289, 1
  %v4674 = vpop.permute.xlu0 %4673
  %4675 = vrot.lane.b32.xlu0 %v4284, 1
  %v4676 = vpop.permute.xlu0 %4675
  %4677 = vrot.lane.b32.xlu0 %v4286, 1
  %v4678 = vpop.permute.xlu0 %4677
  %4679 = vrot.lane.b32.xlu0 %v4288, 1
  %v4680 = vpop.permute.xlu0 %4679
  %4681 = vrot.lane.b32.xlu0 %v4290, 1
  %v4682 = vpop.permute.xlu0 %4681
  %v4683 = vsel %vm339, %v4668, %v4676
  %v4684 = vsel %vm339, %v4670, %v4678
  %v4685 = vsel %vm339, %v4672, %v4680
  %v4686 = vsel %vm339, %v4674, %v4682
  %v4687 = vsel %vm339, %v4660, %v4668
  %v4688 = vsel %vm339, %v4662, %v4670
  %v4689 = vsel %vm339, %v4664, %v4672
  %v4690 = vsel %vm339, %v4666, %v4674
  %v4691 = vsel %vm339, %v4652, %v4660
  %v4692 = vsel %vm339, %v4654, %v4662
  %v4693 = vsel %vm339, %v4656, %v4664
  %v4694 = vsel %vm339, %v4658, %v4666
  %v4695 = vsel %vm339, %v4676, %v4652
  %v4696 = vsel %vm339, %v4678, %v4654
  %v4697 = vsel %vm339, %v4680, %v4656
  %v4698 = vsel %vm339, %v4682, %v4658
  %v4699 = vmul.f32 %v4695, %v351
  %v4700 = vmul.f32 %v4691, %v355
  %v4701 = vmul.f32 %v4687, %v359
  %v4702 = vmul.f32 %v4683, %v363
  %v4703 = vmul.f32 %v4696, %v351
  %v4704 = vmul.f32 %v4692, %v355
  %v4705 = vmul.f32 %v4688, %v359
  %v4706 = vmul.f32 %v4684, %v363
  %v4707 = vmul.f32 %v4697, %v351
  %v4708 = vmul.f32 %v4693, %v355
  %v4709 = vmul.f32 %v4689, %v359
  %v4710 = vmul.f32 %v4685, %v363
  %v4711 = vmul.f32 %v4698, %v351
  %v4712 = vmul.f32 %v4694, %v355
  %v4713 = vmul.f32 %v4690, %v359
  %v4714 = vmul.f32 %v4686, %v363
  %v4715 = vpack.c.bf16 %v4703, %v4699
  %v4716 = vpack.c.bf16 %v4704, %v4700
  %v4717 = vpack.c.bf16 %v4705, %v4701
  %v4718 = vpack.c.bf16 %v4706, %v4702
  %v4719 = vpack.c.bf16 %v4711, %v4707
  %v4720 = vpack.c.bf16 %v4712, %v4708
  %v4721 = vpack.c.bf16 %v4713, %v4709
  %v4722 = vpack.c.bf16 %v4714, %v4710
  %v4731 = vunpack.c.l.b16 %v4715
  %v4732 = vunpack.c.l.b16 %v4716
  %v4733 = vunpack.c.l.b16 %v4717
  %v4734 = vunpack.c.l.b16 %v4718
  %v4735 = vunpack.c.h.b16 %v4715
  %v4736 = vunpack.c.h.b16 %v4716
  %v4737 = vunpack.c.h.b16 %v4717
  %v4738 = vunpack.c.h.b16 %v4718
  %v4739 = vunpack.c.l.b16 %v4719
  %v4740 = vunpack.c.l.b16 %v4720
  %v4741 = vunpack.c.l.b16 %v4721
  %v4742 = vunpack.c.l.b16 %v4722
  %v4743 = vunpack.c.h.b16 %v4719
  %v4744 = vunpack.c.h.b16 %v4720
  %v4745 = vunpack.c.h.b16 %v4721
  %v4746 = vunpack.c.h.b16 %v4722
  %v4747 = vpack.c.b16 %v4732, %v4731
  %v4748 = vpack.c.b16 %v4734, %v4733
  %v4749 = vpack.c.b16 %v4736, %v4735
  %v4750 = vpack.c.b16 %v4738, %v4737
  %v4751 = vpack.c.b16 %v4740, %v4739
  %v4752 = vpack.c.b16 %v4742, %v4741
  %v4753 = vpack.c.b16 %v4744, %v4743
  %v4754 = vpack.c.b16 %v4746, %v4745
  %4763 = vst [vmem:[#allocation2 + $0xe0] sm:$0xff] %v4747
  %4764 = vst [vmem:[#allocation2 + $0xe8] sm:$0xff] %v4748
  %4765 = vst [vmem:[#allocation2 + $0xf0] sm:$0xff] %v4749
  %4766 = vst [vmem:[#allocation2 + $0xf8] sm:$0xff] %v4750
  %4767 = vst [vmem:[#allocation2 + $0x100] sm:$0xff] %v4751
  %4768 = vst [vmem:[#allocation2 + $0x108] sm:$0xff] %v4752
  %4769 = vst [vmem:[#allocation2 + $0x110] sm:$0xff] %v4753
  %4770 = vst [vmem:[#allocation2 + $0x118] sm:$0xff] %v4754
  %v4771 = vpack.c.bf16 %v4109, %v4107
  %v4772 = vpack.c.bf16 %v4110, %v4108
  %v4773 = vpack.c.bf16 %v4285, %v4283
  %v4774 = vpack.c.bf16 %v4286, %v4284
  %v4775 = vpack.c.bf16 %v4113, %v4111
  %v4776 = vpack.c.bf16 %v4114, %v4112
  %v4777 = vpack.c.bf16 %v4289, %v4287
  %v4778 = vpack.c.bf16 %v4290, %v4288
  %v4787 = vunpack.c.l.b16 %v4771
  %v4788 = vunpack.c.l.b16 %v4772
  %v4789 = vunpack.c.l.b16 %v4773
  %v4790 = vunpack.c.l.b16 %v4774
  %v4791 = vunpack.c.h.b16 %v4771
  %v4792 = vunpack.c.h.b16 %v4772
  %v4793 = vunpack.c.h.b16 %v4773
  %v4794 = vunpack.c.h.b16 %v4774
  %v4795 = vunpack.c.l.b16 %v4775
  %v4796 = vunpack.c.l.b16 %v4776
  %v4797 = vunpack.c.l.b16 %v4777
  %v4798 = vunpack.c.l.b16 %v4778
  %v4799 = vunpack.c.h.b16 %v4775
  %v4800 = vunpack.c.h.b16 %v4776
  %v4801 = vunpack.c.h.b16 %v4777
  %v4802 = vunpack.c.h.b16 %v4778
  %v4803 = vpack.c.b16 %v4788, %v4787
  %v4804 = vpack.c.b16 %v4790, %v4789
  %v4805 = vpack.c.b16 %v4792, %v4791
  %v4806 = vpack.c.b16 %v4794, %v4793
  %v4807 = vpack.c.b16 %v4796, %v4795
  %v4808 = vpack.c.b16 %v4798, %v4797
  %v4809 = vpack.c.b16 %v4800, %v4799
  %v4810 = vpack.c.b16 %v4802, %v4801
  %4819 = vst [vmem:[#allocation2 + $0x120] sm:$0xff] %v4803
  %4820 = vst [vmem:[#allocation2 + $0x128] sm:$0xff] %v4804
  %4821 = vst [vmem:[#allocation2 + $0x130] sm:$0xff] %v4805
  %4822 = vst [vmem:[#allocation2 + $0x138] sm:$0xff] %v4806
  %4823 = vst [vmem:[#allocation2 + $0x140] sm:$0xff] %v4807
  %4824 = vst [vmem:[#allocation2 + $0x148] sm:$0xff] %v4808
  %4825 = vst [vmem:[#allocation2 + $0x150] sm:$0xff] %v4809
  %4826 = vst [vmem:[#allocation2 + $0x158] sm:$0xff] %v4810
  %4827 = vrot.lane.b32.xlu0 %v4107, 127
  %v4828 = vpop.permute.xlu0 %4827
  %4829 = vrot.lane.b32.xlu0 %v4109, 127
  %v4830 = vpop.permute.xlu0 %4829
  %4831 = vrot.lane.b32.xlu0 %v4111, 127
  %v4832 = vpop.permute.xlu0 %4831
  %4833 = vrot.lane.b32.xlu0 %v4113, 127
  %v4834 = vpop.permute.xlu0 %4833
  %4835 = vrot.lane.b32.xlu0 %v4108, 127
  %v4836 = vpop.permute.xlu0 %4835
  %4837 = vrot.lane.b32.xlu0 %v4110, 127
  %v4838 = vpop.permute.xlu0 %4837
  %4839 = vrot.lane.b32.xlu0 %v4112, 127
  %v4840 = vpop.permute.xlu0 %4839
  %4841 = vrot.lane.b32.xlu0 %v4114, 127
  %v4842 = vpop.permute.xlu0 %4841
  %4843 = vrot.lane.b32.xlu0 %v4283, 127
  %v4844 = vpop.permute.xlu0 %4843
  %4845 = vrot.lane.b32.xlu0 %v4285, 127
  %v4846 = vpop.permute.xlu0 %4845
  %4847 = vrot.lane.b32.xlu0 %v4287, 127
  %v4848 = vpop.permute.xlu0 %4847
  %4849 = vrot.lane.b32.xlu0 %v4289, 127
  %v4850 = vpop.permute.xlu0 %4849
  %4851 = vrot.lane.b32.xlu0 %v4284, 127
  %v4852 = vpop.permute.xlu0 %4851
  %4853 = vrot.lane.b32.xlu0 %v4286, 127
  %v4854 = vpop.permute.xlu0 %4853
  %4855 = vrot.lane.b32.xlu0 %v4288, 127
  %v4856 = vpop.permute.xlu0 %4855
  %4857 = vrot.lane.b32.xlu0 %v4290, 127
  %v4858 = vpop.permute.xlu0 %4857
  %v4859 = vsel %vm444, %v4844, %v4852
  %v4860 = vsel %vm444, %v4846, %v4854
  %v4861 = vsel %vm444, %v4848, %v4856
  %v4862 = vsel %vm444, %v4850, %v4858
  %v4863 = vsel %vm444, %v4836, %v4844
  %v4864 = vsel %vm444, %v4838, %v4846
  %v4865 = vsel %vm444, %v4840, %v4848
  %v4866 = vsel %vm444, %v4842, %v4850
  %v4867 = vsel %vm444, %v4828, %v4836
  %v4868 = vsel %vm444, %v4830, %v4838
  %v4869 = vsel %vm444, %v4832, %v4840
  %v4870 = vsel %vm444, %v4834, %v4842
  %v4871 = vsel %vm444, %v4852, %v4828
  %v4872 = vsel %vm444, %v4854, %v4830
  %v4873 = vsel %vm444, %v4856, %v4832
  %v4874 = vsel %vm444, %v4858, %v4834
  %v4875 = vmul.f32 %v4867, %v456
  %v4876 = vmul.f32 %v4863, %v460
  %v4877 = vmul.f32 %v4859, %v464
  %v4878 = vmul.f32 %v4871, %v468
  %v4879 = vmul.f32 %v4868, %v456
  %v4880 = vmul.f32 %v4864, %v460
  %v4881 = vmul.f32 %v4860, %v464
  %v4882 = vmul.f32 %v4872, %v468
  %v4883 = vmul.f32 %v4869, %v456
  %v4884 = vmul.f32 %v4865, %v460
  %v4885 = vmul.f32 %v4861, %v464
  %v4886 = vmul.f32 %v4873, %v468
  %v4887 = vmul.f32 %v4870, %v456
  %v4888 = vmul.f32 %v4866, %v460
  %v4889 = vmul.f32 %v4862, %v464
  %v4890 = vmul.f32 %v4874, %v468
  %v4891 = vpack.c.bf16 %v4879, %v4875
  %v4892 = vpack.c.bf16 %v4880, %v4876
  %v4893 = vpack.c.bf16 %v4881, %v4877
  %v4894 = vpack.c.bf16 %v4882, %v4878
  %v4895 = vpack.c.bf16 %v4887, %v4883
  %v4896 = vpack.c.bf16 %v4888, %v4884
  %v4897 = vpack.c.bf16 %v4889, %v4885
  %v4898 = vpack.c.bf16 %v4890, %v4886
  %v4907 = vunpack.c.l.b16 %v4891
  %v4908 = vunpack.c.l.b16 %v4892
  %v4909 = vunpack.c.l.b16 %v4893
  %v4910 = vunpack.c.l.b16 %v4894
  %v4911 = vunpack.c.h.b16 %v4891
  %v4912 = vunpack.c.h.b16 %v4892
  %v4913 = vunpack.c.h.b16 %v4893
  %v4914 = vunpack.c.h.b16 %v4894
  %v4915 = vunpack.c.l.b16 %v4895
  %v4916 = vunpack.c.l.b16 %v4896
  %v4917 = vunpack.c.l.b16 %v4897
  %v4918 = vunpack.c.l.b16 %v4898
  %v4919 = vunpack.c.h.b16 %v4895
  %v4920 = vunpack.c.h.b16 %v4896
  %v4921 = vunpack.c.h.b16 %v4897
  %v4922 = vunpack.c.h.b16 %v4898
  %v4923 = vpack.c.b16 %v4908, %v4907
  %v4924 = vpack.c.b16 %v4910, %v4909
  %v4925 = vpack.c.b16 %v4912, %v4911
  %v4926 = vpack.c.b16 %v4914, %v4913
  %v4927 = vpack.c.b16 %v4916, %v4915
  %v4928 = vpack.c.b16 %v4918, %v4917
  %v4929 = vpack.c.b16 %v4920, %v4919
  %v4930 = vpack.c.b16 %v4922, %v4921
  %4939 = vst [vmem:[#allocation2 + $0x160] sm:$0xff] %v4923
  %4940 = vst [vmem:[#allocation2 + $0x168] sm:$0xff] %v4924
  %4941 = vst [vmem:[#allocation2 + $0x170] sm:$0xff] %v4925
  %4942 = vst [vmem:[#allocation2 + $0x178] sm:$0xff] %v4926
  %4943 = vst [vmem:[#allocation2 + $0x180] sm:$0xff] %v4927
  %4944 = vst [vmem:[#allocation2 + $0x188] sm:$0xff] %v4928
  %4945 = vst [vmem:[#allocation2 + $0x190] sm:$0xff] %v4929
  %4946 = vst [vmem:[#allocation2 + $0x198] sm:$0xff] %v4930
  %4947 = vrot.lane.b32.xlu0 %v4107, 113
  %v4948 = vpop.permute.xlu0 %4947
  %4949 = vrot.lane.b32.xlu0 %v4109, 113
  %v4950 = vpop.permute.xlu0 %4949
  %4951 = vrot.lane.b32.xlu0 %v4111, 113
  %v4952 = vpop.permute.xlu0 %4951
  %4953 = vrot.lane.b32.xlu0 %v4113, 113
  %v4954 = vpop.permute.xlu0 %4953
  %4955 = vrot.lane.b32.xlu0 %v4108, 113
  %v4956 = vpop.permute.xlu0 %4955
  %4957 = vrot.lane.b32.xlu0 %v4110, 113
  %v4958 = vpop.permute.xlu0 %4957
  %4959 = vrot.lane.b32.xlu0 %v4112, 113
  %v4960 = vpop.permute.xlu0 %4959
  %4961 = vrot.lane.b32.xlu0 %v4114, 113
  %v4962 = vpop.permute.xlu0 %4961
  %4963 = vrot.lane.b32.xlu0 %v4283, 113
  %v4964 = vpop.permute.xlu0 %4963
  %4965 = vrot.lane.b32.xlu0 %v4285, 113
  %v4966 = vpop.permute.xlu0 %4965
  %4967 = vrot.lane.b32.xlu0 %v4287, 113
  %v4968 = vpop.permute.xlu0 %4967
  %4969 = vrot.lane.b32.xlu0 %v4289, 113
  %v4970 = vpop.permute.xlu0 %4969
  %4971 = vrot.lane.b32.xlu0 %v4284, 113
  %v4972 = vpop.permute.xlu0 %4971
  %4973 = vrot.lane.b32.xlu0 %v4286, 113
  %v4974 = vpop.permute.xlu0 %4973
  %4975 = vrot.lane.b32.xlu0 %v4288, 113
  %v4976 = vpop.permute.xlu0 %4975
  %4977 = vrot.lane.b32.xlu0 %v4290, 113
  %v4978 = vpop.permute.xlu0 %4977
  %v4979 = vsel %vm521, %v4964, %v4972
  %v4980 = vsel %vm521, %v4966, %v4974
  %v4981 = vsel %vm521, %v4968, %v4976
  %v4982 = vsel %vm521, %v4970, %v4978
  %v4983 = vsel %vm521, %v4956, %v4964
  %v4984 = vsel %vm521, %v4958, %v4966
  %v4985 = vsel %vm521, %v4960, %v4968
  %v4986 = vsel %vm521, %v4962, %v4970
  %v4987 = vsel %vm521, %v4948, %v4956
  %v4988 = vsel %vm521, %v4950, %v4958
  %v4989 = vsel %vm521, %v4952, %v4960
  %v4990 = vsel %vm521, %v4954, %v4962
  %v4991 = vsel %vm521, %v4972, %v4948
  %v4992 = vsel %vm521, %v4974, %v4950
  %v4993 = vsel %vm521, %v4976, %v4952
  %v4994 = vsel %vm521, %v4978, %v4954
  %v4995 = vmul.f32 %v4987, %v533
  %v4996 = vmul.f32 %v4983, %v537
  %v4997 = vmul.f32 %v4979, %v541
  %v4998 = vmul.f32 %v4991, %v545
  %v4999 = vmul.f32 %v4988, %v533
  %v5000 = vmul.f32 %v4984, %v537
  %v5001 = vmul.f32 %v4980, %v541
  %v5002 = vmul.f32 %v4992, %v545
  %v5003 = vmul.f32 %v4989, %v533
  %v5004 = vmul.f32 %v4985, %v537
  %v5005 = vmul.f32 %v4981, %v541
  %v5006 = vmul.f32 %v4993, %v545
  %v5007 = vmul.f32 %v4990, %v533
  %v5008 = vmul.f32 %v4986, %v537
  %v5009 = vmul.f32 %v4982, %v541
  %v5010 = vmul.f32 %v4994, %v545
  %v5011 = vpack.c.bf16 %v4999, %v4995
  %v5012 = vpack.c.bf16 %v5000, %v4996
  %v5013 = vpack.c.bf16 %v5001, %v4997
  %v5014 = vpack.c.bf16 %v5002, %v4998
  %v5015 = vpack.c.bf16 %v5007, %v5003
  %v5016 = vpack.c.bf16 %v5008, %v5004
  %v5017 = vpack.c.bf16 %v5009, %v5005
  %v5018 = vpack.c.bf16 %v5010, %v5006
  %v5027 = vunpack.c.l.b16 %v5011
  %v5028 = vunpack.c.l.b16 %v5012
  %v5029 = vunpack.c.l.b16 %v5013
  %v5030 = vunpack.c.l.b16 %v5014
  %v5031 = vunpack.c.h.b16 %v5011
  %v5032 = vunpack.c.h.b16 %v5012
  %v5033 = vunpack.c.h.b16 %v5013
  %v5034 = vunpack.c.h.b16 %v5014
  %v5035 = vunpack.c.l.b16 %v5015
  %v5036 = vunpack.c.l.b16 %v5016
  %v5037 = vunpack.c.l.b16 %v5017
  %v5038 = vunpack.c.l.b16 %v5018
  %v5039 = vunpack.c.h.b16 %v5015
  %v5040 = vunpack.c.h.b16 %v5016
  %v5041 = vunpack.c.h.b16 %v5017
  %v5042 = vunpack.c.h.b16 %v5018
  %v5043 = vpack.c.b16 %v5028, %v5027
  %v5044 = vpack.c.b16 %v5030, %v5029
  %v5045 = vpack.c.b16 %v5032, %v5031
  %v5046 = vpack.c.b16 %v5034, %v5033
  %v5047 = vpack.c.b16 %v5036, %v5035
  %v5048 = vpack.c.b16 %v5038, %v5037
  %v5049 = vpack.c.b16 %v5040, %v5039
  %v5050 = vpack.c.b16 %v5042, %v5041
  %5059 = vst [vmem:[#allocation2 + $0x1a0] sm:$0xff] %v5043
  %5060 = vst [vmem:[#allocation2 + $0x1a8] sm:$0xff] %v5044
  %5061 = vst [vmem:[#allocation2 + $0x1b0] sm:$0xff] %v5045
  %5062 = vst [vmem:[#allocation2 + $0x1b8] sm:$0xff] %v5046
  %5063 = vst [vmem:[#allocation2 + $0x1c0] sm:$0xff] %v5047
  %5064 = vst [vmem:[#allocation2 + $0x1c8] sm:$0xff] %v5048
  %5065 = vst [vmem:[#allocation2 + $0x1d0] sm:$0xff] %v5049
  %5066 = vst [vmem:[#allocation2 + $0x1d8] sm:$0xff] %v5050
  %5067 = vrot.lane.b32.xlu0 %v4107, 112
  %v5068 = vpop.permute.xlu0 %5067
  %5069 = vrot.lane.b32.xlu0 %v4109, 112
  %v5070 = vpop.permute.xlu0 %5069
  %5071 = vrot.lane.b32.xlu0 %v4111, 112
  %v5072 = vpop.permute.xlu0 %5071
  %5073 = vrot.lane.b32.xlu0 %v4113, 112
  %v5074 = vpop.permute.xlu0 %5073
  %5075 = vrot.lane.b32.xlu0 %v4108, 112
  %v5076 = vpop.permute.xlu0 %5075
  %5077 = vrot.lane.b32.xlu0 %v4110, 112
  %v5078 = vpop.permute.xlu0 %5077
  %5079 = vrot.lane.b32.xlu0 %v4112, 112
  %v5080 = vpop.permute.xlu0 %5079
  %5081 = vrot.lane.b32.xlu0 %v4114, 112
  %v5082 = vpop.permute.xlu0 %5081
  %5083 = vrot.lane.b32.xlu0 %v4283, 112
  %v5084 = vpop.permute.xlu0 %5083
  %5085 = vrot.lane.b32.xlu0 %v4285, 112
  %v5086 = vpop.permute.xlu0 %5085
  %5087 = vrot.lane.b32.xlu0 %v4287, 112
  %v5088 = vpop.permute.xlu0 %5087
  %5089 = vrot.lane.b32.xlu0 %v4289, 112
  %v5090 = vpop.permute.xlu0 %5089
  %5091 = vrot.lane.b32.xlu0 %v4284, 112
  %v5092 = vpop.permute.xlu0 %5091
  %5093 = vrot.lane.b32.xlu0 %v4286, 112
  %v5094 = vpop.permute.xlu0 %5093
  %5095 = vrot.lane.b32.xlu0 %v4288, 112
  %v5096 = vpop.permute.xlu0 %5095
  %5097 = vrot.lane.b32.xlu0 %v4290, 112
  %v5098 = vpop.permute.xlu0 %5097
  %v5099 = vsel %vm598, %v5084, %v5092
  %v5100 = vsel %vm598, %v5086, %v5094
  %v5101 = vsel %vm598, %v5088, %v5096
  %v5102 = vsel %vm598, %v5090, %v5098
  %v5103 = vsel %vm598, %v5076, %v5084
  %v5104 = vsel %vm598, %v5078, %v5086
  %v5105 = vsel %vm598, %v5080, %v5088
  %v5106 = vsel %vm598, %v5082, %v5090
  %v5107 = vsel %vm598, %v5068, %v5076
  %v5108 = vsel %vm598, %v5070, %v5078
  %v5109 = vsel %vm598, %v5072, %v5080
  %v5110 = vsel %vm598, %v5074, %v5082
  %v5111 = vsel %vm598, %v5092, %v5068
  %v5112 = vsel %vm598, %v5094, %v5070
  %v5113 = vsel %vm598, %v5096, %v5072
  %v5114 = vsel %vm598, %v5098, %v5074
  %v5115 = vmul.f32 %v5107, %v610
  %v5116 = vmul.f32 %v5103, %v614
  %v5117 = vmul.f32 %v5099, %v618
  %v5118 = vmul.f32 %v5111, %v622
  %v5119 = vmul.f32 %v5108, %v610
  %v5120 = vmul.f32 %v5104, %v614
  %v5121 = vmul.f32 %v5100, %v618
  %v5122 = vmul.f32 %v5112, %v622
  %v5123 = vmul.f32 %v5109, %v610
  %v5124 = vmul.f32 %v5105, %v614
  %v5125 = vmul.f32 %v5101, %v618
  %v5126 = vmul.f32 %v5113, %v622
  %v5127 = vmul.f32 %v5110, %v610
  %v5128 = vmul.f32 %v5106, %v614
  %v5129 = vmul.f32 %v5102, %v618
  %v5130 = vmul.f32 %v5114, %v622
  %v5131 = vpack.c.bf16 %v5119, %v5115
  %v5132 = vpack.c.bf16 %v5120, %v5116
  %v5133 = vpack.c.bf16 %v5121, %v5117
  %v5134 = vpack.c.bf16 %v5122, %v5118
  %v5135 = vpack.c.bf16 %v5127, %v5123
  %v5136 = vpack.c.bf16 %v5128, %v5124
  %v5137 = vpack.c.bf16 %v5129, %v5125
  %v5138 = vpack.c.bf16 %v5130, %v5126
  %v5147 = vunpack.c.l.b16 %v5131
  %v5148 = vunpack.c.l.b16 %v5132
  %v5149 = vunpack.c.l.b16 %v5133
  %v5150 = vunpack.c.l.b16 %v5134
  %v5151 = vunpack.c.h.b16 %v5131
  %v5152 = vunpack.c.h.b16 %v5132
  %v5153 = vunpack.c.h.b16 %v5133
  %v5154 = vunpack.c.h.b16 %v5134
  %v5155 = vunpack.c.l.b16 %v5135
  %v5156 = vunpack.c.l.b16 %v5136
  %v5157 = vunpack.c.l.b16 %v5137
  %v5158 = vunpack.c.l.b16 %v5138
  %v5159 = vunpack.c.h.b16 %v5135
  %v5160 = vunpack.c.h.b16 %v5136
  %v5161 = vunpack.c.h.b16 %v5137
  %v5162 = vunpack.c.h.b16 %v5138
  %v5163 = vpack.c.b16 %v5148, %v5147
  %v5164 = vpack.c.b16 %v5150, %v5149
  %v5165 = vpack.c.b16 %v5152, %v5151
  %v5166 = vpack.c.b16 %v5154, %v5153
  %v5167 = vpack.c.b16 %v5156, %v5155
  %v5168 = vpack.c.b16 %v5158, %v5157
  %v5169 = vpack.c.b16 %v5160, %v5159
  %v5170 = vpack.c.b16 %v5162, %v5161
  %5179 = vst [vmem:[#allocation2 + $0x1e0] sm:$0xff] %v5163
  %5180 = vst [vmem:[#allocation2 + $0x1e8] sm:$0xff] %v5164
  %5181 = vst [vmem:[#allocation2 + $0x1f0] sm:$0xff] %v5165
  %5182 = vst [vmem:[#allocation2 + $0x1f8] sm:$0xff] %v5166
  %5183 = vst [vmem:[#allocation2 + $0x200] sm:$0xff] %v5167
  %5184 = vst [vmem:[#allocation2 + $0x208] sm:$0xff] %v5168
  %5185 = vst [vmem:[#allocation2 + $0x210] sm:$0xff] %v5169
  %5186 = vst [vmem:[#allocation2 + $0x218] sm:$0xff] %v5170
  %5187 = vrot.lane.b32.xlu0 %v4107, 111
  %v5188 = vpop.permute.xlu0 %5187
  %5189 = vrot.lane.b32.xlu0 %v4109, 111
  %v5190 = vpop.permute.xlu0 %5189
  %5191 = vrot.lane.b32.xlu0 %v4111, 111
  %v5192 = vpop.permute.xlu0 %5191
  %5193 = vrot.lane.b32.xlu0 %v4113, 111
  %v5194 = vpop.permute.xlu0 %5193
  %5195 = vrot.lane.b32.xlu0 %v4108, 111
  %v5196 = vpop.permute.xlu0 %5195
  %5197 = vrot.lane.b32.xlu0 %v4110, 111
  %v5198 = vpop.permute.xlu0 %5197
  %5199 = vrot.lane.b32.xlu0 %v4112, 111
  %v5200 = vpop.permute.xlu0 %5199
  %5201 = vrot.lane.b32.xlu0 %v4114, 111
  %v5202 = vpop.permute.xlu0 %5201
  %5203 = vrot.lane.b32.xlu0 %v4283, 111
  %v5204 = vpop.permute.xlu0 %5203
  %5205 = vrot.lane.b32.xlu0 %v4285, 111
  %v5206 = vpop.permute.xlu0 %5205
  %5207 = vrot.lane.b32.xlu0 %v4287, 111
  %v5208 = vpop.permute.xlu0 %5207
  %5209 = vrot.lane.b32.xlu0 %v4289, 111
  %v5210 = vpop.permute.xlu0 %5209
  %5211 = vrot.lane.b32.xlu0 %v4284, 111
  %v5212 = vpop.permute.xlu0 %5211
  %5213 = vrot.lane.b32.xlu0 %v4286, 111
  %v5214 = vpop.permute.xlu0 %5213
  %5215 = vrot.lane.b32.xlu0 %v4288, 111
  %v5216 = vpop.permute.xlu0 %5215
  %5217 = vrot.lane.b32.xlu0 %v4290, 111
  %v5218 = vpop.permute.xlu0 %5217
  %v5219 = vsel %vm675, %v5204, %v5212
  %v5220 = vsel %vm675, %v5206, %v5214
  %v5221 = vsel %vm675, %v5208, %v5216
  %v5222 = vsel %vm675, %v5210, %v5218
  %v5223 = vsel %vm675, %v5196, %v5204
  %v5224 = vsel %vm675, %v5198, %v5206
  %v5225 = vsel %vm675, %v5200, %v5208
  %v5226 = vsel %vm675, %v5202, %v5210
  %v5227 = vsel %vm675, %v5188, %v5196
  %v5228 = vsel %vm675, %v5190, %v5198
  %v5229 = vsel %vm675, %v5192, %v5200
  %v5230 = vsel %vm675, %v5194, %v5202
  %v5231 = vsel %vm675, %v5212, %v5188
  %v5232 = vsel %vm675, %v5214, %v5190
  %v5233 = vsel %vm675, %v5216, %v5192
  %v5234 = vsel %vm675, %v5218, %v5194
  %v5235 = vmul.f32 %v5227, %v687
  %v5236 = vmul.f32 %v5223, %v691
  %v5237 = vmul.f32 %v5219, %v695
  %v5238 = vmul.f32 %v5231, %v699
  %v5239 = vmul.f32 %v5228, %v687
  %v5240 = vmul.f32 %v5224, %v691
  %v5241 = vmul.f32 %v5220, %v695
  %v5242 = vmul.f32 %v5232, %v699
  %v5243 = vmul.f32 %v5229, %v687
  %v5244 = vmul.f32 %v5225, %v691
  %v5245 = vmul.f32 %v5221, %v695
  %v5246 = vmul.f32 %v5233, %v699
  %v5247 = vmul.f32 %v5230, %v687
  %v5248 = vmul.f32 %v5226, %v691
  %v5249 = vmul.f32 %v5222, %v695
  %v5250 = vmul.f32 %v5234, %v699
  %v5251 = vpack.c.bf16 %v5239, %v5235
  %v5252 = vpack.c.bf16 %v5240, %v5236
  %v5253 = vpack.c.bf16 %v5241, %v5237
  %v5254 = vpack.c.bf16 %v5242, %v5238
  %v5255 = vpack.c.bf16 %v5247, %v5243
  %v5256 = vpack.c.bf16 %v5248, %v5244
  %v5257 = vpack.c.bf16 %v5249, %v5245
  %v5258 = vpack.c.bf16 %v5250, %v5246
  %v5267 = vunpack.c.l.b16 %v5251
  %v5268 = vunpack.c.l.b16 %v5252
  %v5269 = vunpack.c.l.b16 %v5253
  %v5270 = vunpack.c.l.b16 %v5254
  %v5271 = vunpack.c.h.b16 %v5251
  %v5272 = vunpack.c.h.b16 %v5252
  %v5273 = vunpack.c.h.b16 %v5253
  %v5274 = vunpack.c.h.b16 %v5254
  %v5275 = vunpack.c.l.b16 %v5255
  %v5276 = vunpack.c.l.b16 %v5256
  %v5277 = vunpack.c.l.b16 %v5257
  %v5278 = vunpack.c.l.b16 %v5258
  %v5279 = vunpack.c.h.b16 %v5255
  %v5280 = vunpack.c.h.b16 %v5256
  %v5281 = vunpack.c.h.b16 %v5257
  %v5282 = vunpack.c.h.b16 %v5258
  %v5283 = vpack.c.b16 %v5268, %v5267
  %v5284 = vpack.c.b16 %v5270, %v5269
  %v5285 = vpack.c.b16 %v5272, %v5271
  %v5286 = vpack.c.b16 %v5274, %v5273
  %v5287 = vpack.c.b16 %v5276, %v5275
  %v5288 = vpack.c.b16 %v5278, %v5277
  %v5289 = vpack.c.b16 %v5280, %v5279
  %v5290 = vpack.c.b16 %v5282, %v5281
  %5299 = vst [vmem:[#allocation2 + $0x220] sm:$0xff] %v5283
  %5300 = vst [vmem:[#allocation2 + $0x228] sm:$0xff] %v5284
  %5301 = vst [vmem:[#allocation2 + $0x230] sm:$0xff] %v5285
  %5302 = vst [vmem:[#allocation2 + $0x238] sm:$0xff] %v5286
  %5303 = vst [vmem:[#allocation2 + $0x240] sm:$0xff] %v5287
  %5304 = vst [vmem:[#allocation2 + $0x248] sm:$0xff] %v5288
  %5305 = vst [vmem:[#allocation2 + $0x250] sm:$0xff] %v5289
  %5306 = vst [vmem:[#allocation2 + $0x258] sm:$0xff] %v5290
  %v5307 = vld [vmem:[%s9] sm:$0xff]
  %v5308 = vld [vmem:[%s9 + $0x8] sm:$0xf]
  %v5309 = vld [vmem:[%s9 + $0xc] sm:$0xff]
  %v5310 = vld [vmem:[%s9 + $0x14] sm:$0xf]
  %v5311 = vld [vmem:[#allocation2] sm:$0xff]
  %v5312 = vld [vmem:[#allocation2 + $0x8] sm:$0xff]
  %v5313 = vld [vmem:[#allocation2 + $0x10] sm:$0xff]
  %v5314 = vld [vmem:[#allocation2 + $0x18] sm:$0xff]
  %v5315 = vld [vmem:[#allocation2 + $0x20] sm:$0xff]
  %v5316 = vld [vmem:[#allocation2 + $0x28] sm:$0xff]
  %v5317 = vld [vmem:[#allocation2 + $0x30] sm:$0xff]
  %v5318 = vld [vmem:[#allocation2 + $0x38] sm:$0xff]
  %v5319 = vld [vmem:[#allocation2 + $0x40] sm:$0xff]
  %v5320 = vld [vmem:[#allocation2 + $0x48] sm:$0xff]
  %v5321 = vld [vmem:[#allocation2 + $0x50] sm:$0xff]
  %v5322 = vld [vmem:[#allocation2 + $0x58] sm:$0xff]
  %v5323 = vld [vmem:[#allocation2 + $0x60] sm:$0xff]
  %v5324 = vld [vmem:[#allocation2 + $0x68] sm:$0xff]
  %v5325 = vld [vmem:[#allocation2 + $0x70] sm:$0xff]
  %v5326 = vld [vmem:[#allocation2 + $0x78] sm:$0xff]
  %v5327 = vld [vmem:[#allocation2 + $0x80] sm:$0xff]
  %v5328 = vld [vmem:[#allocation2 + $0x88] sm:$0xff]
  %v5329 = vld [vmem:[#allocation2 + $0x90] sm:$0xff]
  %v5330 = vld [vmem:[#allocation2 + $0x98] sm:$0xff]
  %v5331 = vld [vmem:[#allocation2 + $0xa0] sm:$0xff]
  %v5332 = vld [vmem:[#allocation2 + $0xa8] sm:$0xff]
  %v5333 = vld [vmem:[#allocation2 + $0xb0] sm:$0xff]
  %v5334 = vld [vmem:[#allocation2 + $0xb8] sm:$0xff]
  %v5335 = vld [vmem:[#allocation2 + $0xc0] sm:$0xff]
  %v5336 = vld [vmem:[#allocation2 + $0xc8] sm:$0xff]
  %v5337 = vld [vmem:[#allocation2 + $0xd0] sm:$0xff]
  %v5338 = vld [vmem:[#allocation2 + $0xd8] sm:$0xff]
  %v5339 = vld [vmem:[#allocation2 + $0xe0] sm:$0xff]
  %v5340 = vld [vmem:[#allocation2 + $0xe8] sm:$0xff]
  %v5341 = vld [vmem:[#allocation2 + $0xf0] sm:$0xff]
  %v5342 = vld [vmem:[#allocation2 + $0xf8] sm:$0xff]
  %v5343 = vld [vmem:[#allocation2 + $0x100] sm:$0xff]
  %v5344 = vld [vmem:[#allocation2 + $0x108] sm:$0xff]
  %v5345 = vld [vmem:[#allocation2 + $0x110] sm:$0xff]
  %v5346 = vld [vmem:[#allocation2 + $0x118] sm:$0xff]
  %v5347 = vld [vmem:[#allocation2 + $0x120] sm:$0xff]
  %v5348 = vld [vmem:[#allocation2 + $0x128] sm:$0xff]
  %v5349 = vld [vmem:[#allocation2 + $0x130] sm:$0xff]
  %v5350 = vld [vmem:[#allocation2 + $0x138] sm:$0xff]
  %v5351 = vld [vmem:[#allocation2 + $0x140] sm:$0xff]
  %v5352 = vld [vmem:[#allocation2 + $0x148] sm:$0xff]
  %v5353 = vld [vmem:[#allocation2 + $0x150] sm:$0xff]
  %v5354 = vld [vmem:[#allocation2 + $0x158] sm:$0xff]
  %v5355 = vld [vmem:[#allocation2 + $0x160] sm:$0xff]
  %v5356 = vld [vmem:[#allocation2 + $0x168] sm:$0xff]
  %v5357 = vld [vmem:[#allocation2 + $0x170] sm:$0xff]
  %v5358 = vld [vmem:[#allocation2 + $0x178] sm:$0xff]
  %v5359 = vld [vmem:[#allocation2 + $0x180] sm:$0xff]
  %v5360 = vld [vmem:[#allocation2 + $0x188] sm:$0xff]
  %v5361 = vld [vmem:[#allocation2 + $0x190] sm:$0xff]
  %v5362 = vld [vmem:[#allocation2 + $0x198] sm:$0xff]
  %v5363 = vld [vmem:[#allocation2 + $0x1a0] sm:$0xff]
  %v5364 = vld [vmem:[#allocation2 + $0x1a8] sm:$0xff]
  %v5365 = vld [vmem:[#allocation2 + $0x1b0] sm:$0xff]
  %v5366 = vld [vmem:[#allocation2 + $0x1b8] sm:$0xff]
  %v5367 = vld [vmem:[#allocation2 + $0x1c0] sm:$0xff]
  %v5368 = vld [vmem:[#allocation2 + $0x1c8] sm:$0xff]
  %v5369 = vld [vmem:[#allocation2 + $0x1d0] sm:$0xff]
  %v5370 = vld [vmem:[#allocation2 + $0x1d8] sm:$0xff]
  %v5371 = vld [vmem:[#allocation2 + $0x1e0] sm:$0xff]
  %v5372 = vld [vmem:[#allocation2 + $0x1e8] sm:$0xff]
  %v5373 = vld [vmem:[#allocation2 + $0x1f0] sm:$0xff]
  %v5374 = vld [vmem:[#allocation2 + $0x1f8] sm:$0xff]
  %v5375 = vld [vmem:[#allocation2 + $0x200] sm:$0xff]
  %v5376 = vld [vmem:[#allocation2 + $0x208] sm:$0xff]
  %v5377 = vld [vmem:[#allocation2 + $0x210] sm:$0xff]
  %v5378 = vld [vmem:[#allocation2 + $0x218] sm:$0xff]
  %v5379 = vld [vmem:[#allocation2 + $0x220] sm:$0xff]
  %v5380 = vld [vmem:[#allocation2 + $0x228] sm:$0xff]
  %v5381 = vld [vmem:[#allocation2 + $0x230] sm:$0xff]
  %v5382 = vld [vmem:[#allocation2 + $0x238] sm:$0xff]
  %v5383 = vld [vmem:[#allocation2 + $0x240] sm:$0xff]
  %v5384 = vld [vmem:[#allocation2 + $0x248] sm:$0xff]
  %v5385 = vld [vmem:[#allocation2 + $0x250] sm:$0xff]
  %v5386 = vld [vmem:[#allocation2 + $0x258] sm:$0xff]
  %v5391 = vunpack.c.l.b16 %v5307
  %v5392 = vunpack.c.h.b16 %v5307
  %v5393 = vunpack.c.l.b16 %v5308
  %v5394 = vunpack.c.l.b16 %v5309
  %v5395 = vunpack.c.h.b16 %v5309
  %v5396 = vunpack.c.l.b16 %v5310
  %v5397 = vpack.c.b16 %v5394, %v5391
  %v5398 = vpack.c.b16 %v5395, %v5392
  %v5399 = vpack.c.b16 %v5396, %v5393
  %v5478 = vunpack.c.l.b16 %v5311
  %v5479 = vunpack.c.h.b16 %v5311
  %v5480 = vunpack.c.l.b16 %v5312
  %v5481 = vunpack.c.h.b16 %v5312
  %v5482 = vunpack.c.l.b16 %v5313
  %v5483 = vunpack.c.h.b16 %v5313
  %v5484 = vunpack.c.l.b16 %v5314
  %v5485 = vunpack.c.h.b16 %v5314
  %v5486 = vunpack.c.l.b16 %v5315
  %v5487 = vunpack.c.h.b16 %v5315
  %v5488 = vunpack.c.l.b16 %v5316
  %v5489 = vunpack.c.h.b16 %v5316
  %v5490 = vunpack.c.l.b16 %v5317
  %v5491 = vunpack.c.h.b16 %v5317
  %v5492 = vunpack.c.l.b16 %v5318
  %v5493 = vunpack.c.h.b16 %v5318
  %v5494 = vunpack.c.l.b16 %v5319
  %v5495 = vunpack.c.h.b16 %v5319
  %v5496 = vunpack.c.l.b16 %v5320
  %v5497 = vunpack.c.h.b16 %v5320
  %v5498 = vunpack.c.l.b16 %v5321
  %v5499 = vunpack.c.h.b16 %v5321
  %v5500 = vunpack.c.l.b16 %v5322
  %v5501 = vunpack.c.h.b16 %v5322
  %v5502 = vunpack.c.l.b16 %v5323
  %v5503 = vunpack.c.h.b16 %v5323
  %v5504 = vunpack.c.l.b16 %v5324
  %v5505 = vunpack.c.h.b16 %v5324
  %v5506 = vunpack.c.l.b16 %v5325
  %v5507 = vunpack.c.h.b16 %v5325
  %v5508 = vunpack.c.l.b16 %v5326
  %v5509 = vunpack.c.h.b16 %v5326
  %v5510 = vunpack.c.l.b16 %v5327
  %v5511 = vunpack.c.h.b16 %v5327
  %v5512 = vunpack.c.l.b16 %v5328
  %v5513 = vunpack.c.h.b16 %v5328
  %v5514 = vunpack.c.l.b16 %v5329
  %v5515 = vunpack.c.h.b16 %v5329
  %v5516 = vunpack.c.l.b16 %v5330
  %v5517 = vunpack.c.h.b16 %v5330
  %v5518 = vunpack.c.l.b16 %v5331
  %v5519 = vunpack.c.h.b16 %v5331
  %v5520 = vunpack.c.l.b16 %v5332
  %v5521 = vunpack.c.h.b16 %v5332
  %v5522 = vunpack.c.l.b16 %v5333
  %v5523 = vunpack.c.h.b16 %v5333
  %v5524 = vunpack.c.l.b16 %v5334
  %v5525 = vunpack.c.h.b16 %v5334
  %v5526 = vunpack.c.l.b16 %v5335
  %v5527 = vunpack.c.h.b16 %v5335
  %v5528 = vunpack.c.l.b16 %v5336
  %v5529 = vunpack.c.h.b16 %v5336
  %v5530 = vunpack.c.l.b16 %v5337
  %v5531 = vunpack.c.h.b16 %v5337
  %v5532 = vunpack.c.l.b16 %v5338
  %v5533 = vunpack.c.h.b16 %v5338
  %v5534 = vunpack.c.l.b16 %v5339
  %v5535 = vunpack.c.h.b16 %v5339
  %v5536 = vunpack.c.l.b16 %v5340
  %v5537 = vunpack.c.h.b16 %v5340
  %v5538 = vunpack.c.l.b16 %v5341
  %v5539 = vunpack.c.h.b16 %v5341
  %v5540 = vunpack.c.l.b16 %v5342
  %v5541 = vunpack.c.h.b16 %v5342
  %v5542 = vunpack.c.l.b16 %v5343
  %v5543 = vunpack.c.h.b16 %v5343
  %v5544 = vunpack.c.l.b16 %v5344
  %v5545 = vunpack.c.h.b16 %v5344
  %v5546 = vunpack.c.l.b16 %v5345
  %v5547 = vunpack.c.h.b16 %v5345
  %v5548 = vunpack.c.l.b16 %v5346
  %v5549 = vunpack.c.h.b16 %v5346
  %v5550 = vunpack.c.l.b16 %v5347
  %v5551 = vunpack.c.h.b16 %v5347
  %v5552 = vunpack.c.l.b16 %v5348
  %v5553 = vunpack.c.h.b16 %v5348
  %v5554 = vunpack.c.l.b16 %v5349
  %v5555 = vunpack.c.h.b16 %v5349
  %v5556 = vunpack.c.l.b16 %v5350
  %v5557 = vunpack.c.h.b16 %v5350
  %v5558 = vunpack.c.l.b16 %v5351
  %v5559 = vunpack.c.h.b16 %v5351
  %v5560 = vunpack.c.l.b16 %v5352
  %v5561 = vunpack.c.h.b16 %v5352
  %v5562 = vunpack.c.l.b16 %v5353
  %v5563 = vunpack.c.h.b16 %v5353
  %v5564 = vunpack.c.l.b16 %v5354
  %v5565 = vunpack.c.h.b16 %v5354
  %v5566 = vunpack.c.l.b16 %v5355
  %v5567 = vunpack.c.h.b16 %v5355
  %v5568 = vunpack.c.l.b16 %v5356
  %v5569 = vunpack.c.h.b16 %v5356
  %v5570 = vunpack.c.l.b16 %v5357
  %v5571 = vunpack.c.h.b16 %v5357
  %v5572 = vunpack.c.l.b16 %v5358
  %v5573 = vunpack.c.h.b16 %v5358
  %v5574 = vunpack.c.l.b16 %v5359
  %v5575 = vunpack.c.h.b16 %v5359
  %v5576 = vunpack.c.l.b16 %v5360
  %v5577 = vunpack.c.h.b16 %v5360
  %v5578 = vunpack.c.l.b16 %v5361
  %v5579 = vunpack.c.h.b16 %v5361
  %v5580 = vunpack.c.l.b16 %v5362
  %v5581 = vunpack.c.h.b16 %v5362
  %v5582 = vunpack.c.l.b16 %v5363
  %v5583 = vunpack.c.h.b16 %v5363
  %v5584 = vunpack.c.l.b16 %v5364
  %v5585 = vunpack.c.h.b16 %v5364
  %v5586 = vunpack.c.l.b16 %v5365
  %v5587 = vunpack.c.h.b16 %v5365
  %v5588 = vunpack.c.l.b16 %v5366
  %v5589 = vunpack.c.h.b16 %v5366
  %v5590 = vunpack.c.l.b16 %v5367
  %v5591 = vunpack.c.h.b16 %v5367
  %v5592 = vunpack.c.l.b16 %v5368
  %v5593 = vunpack.c.h.b16 %v5368
  %v5594 = vunpack.c.l.b16 %v5369
  %v5595 = vunpack.c.h.b16 %v5369
  %v5596 = vunpack.c.l.b16 %v5370
  %v5597 = vunpack.c.h.b16 %v5370
  %v5598 = vunpack.c.l.b16 %v5371
  %v5599 = vunpack.c.h.b16 %v5371
  %v5600 = vunpack.c.l.b16 %v5372
  %v5601 = vunpack.c.h.b16 %v5372
  %v5602 = vunpack.c.l.b16 %v5373
  %v5603 = vunpack.c.h.b16 %v5373
  %v5604 = vunpack.c.l.b16 %v5374
  %v5605 = vunpack.c.h.b16 %v5374
  %v5606 = vunpack.c.l.b16 %v5375
  %v5607 = vunpack.c.h.b16 %v5375
  %v5608 = vunpack.c.l.b16 %v5376
  %v5609 = vunpack.c.h.b16 %v5376
  %v5610 = vunpack.c.l.b16 %v5377
  %v5611 = vunpack.c.h.b16 %v5377
  %v5612 = vunpack.c.l.b16 %v5378
  %v5613 = vunpack.c.h.b16 %v5378
  %v5614 = vunpack.c.l.b16 %v5379
  %v5615 = vunpack.c.h.b16 %v5379
  %v5616 = vunpack.c.l.b16 %v5380
  %v5617 = vunpack.c.h.b16 %v5380
  %v5618 = vunpack.c.l.b16 %v5381
  %v5619 = vunpack.c.h.b16 %v5381
  %v5620 = vunpack.c.l.b16 %v5382
  %v5621 = vunpack.c.h.b16 %v5382
  %v5622 = vunpack.c.l.b16 %v5383
  %v5623 = vunpack.c.h.b16 %v5383
  %v5624 = vunpack.c.l.b16 %v5384
  %v5625 = vunpack.c.h.b16 %v5384
  %v5626 = vunpack.c.l.b16 %v5385
  %v5627 = vunpack.c.h.b16 %v5385
  %v5628 = vunpack.c.l.b16 %v5386
  %v5629 = vunpack.c.h.b16 %v5386
  %v5630 = vpack.c.b16 %v5482, %v5478
  %v5631 = vpack.c.b16 %v5483, %v5479
  %v5632 = vpack.c.b16 %v5484, %v5480
  %v5633 = vpack.c.b16 %v5485, %v5481
  %v5634 = vpack.c.b16 %v5490, %v5486
  %v5635 = vpack.c.b16 %v5491, %v5487
  %v5636 = vpack.c.b16 %v5492, %v5488
  %v5637 = vpack.c.b16 %v5493, %v5489
  %v5638 = vpack.c.b16 %v5498, %v5494
  %v5639 = vpack.c.b16 %v5499, %v5495
  %v5640 = vpack.c.b16 %v5500, %v5496
  %v5641 = vpack.c.b16 %v5501, %v5497
  %v5642 = vpack.c.b16 %v5506, %v5502
  %v5643 = vpack.c.b16 %v5507, %v5503
  %v5644 = vpack.c.b16 %v5508, %v5504
  %v5645 = vpack.c.b16 %v5509, %v5505
  %v5646 = vpack.c.b16 %v5514, %v5510
  %v5647 = vpack.c.b16 %v5515, %v5511
  %v5648 = vpack.c.b16 %v5516, %v5512
  %v5649 = vpack.c.b16 %v5517, %v5513
  %v5650 = vpack.c.b16 %v5522, %v5518
  %v5651 = vpack.c.b16 %v5523, %v5519
  %v5652 = vpack.c.b16 %v5524, %v5520
  %v5653 = vpack.c.b16 %v5525, %v5521
  %v5654 = vpack.c.b16 %v5530, %v5526
  %v5655 = vpack.c.b16 %v5531, %v5527
  %v5656 = vpack.c.b16 %v5532, %v5528
  %v5657 = vpack.c.b16 %v5533, %v5529
  %v5658 = vpack.c.b16 %v5538, %v5534
  %v5659 = vpack.c.b16 %v5539, %v5535
  %v5660 = vpack.c.b16 %v5540, %v5536
  %v5661 = vpack.c.b16 %v5541, %v5537
  %v5662 = vpack.c.b16 %v5546, %v5542
  %v5663 = vpack.c.b16 %v5547, %v5543
  %v5664 = vpack.c.b16 %v5548, %v5544
  %v5665 = vpack.c.b16 %v5549, %v5545
  %v5666 = vpack.c.b16 %v5554, %v5550
  %v5667 = vpack.c.b16 %v5555, %v5551
  %v5668 = vpack.c.b16 %v5556, %v5552
  %v5669 = vpack.c.b16 %v5557, %v5553
  %v5670 = vpack.c.b16 %v5562, %v5558
  %v5671 = vpack.c.b16 %v5563, %v5559
  %v5672 = vpack.c.b16 %v5564, %v5560
  %v5673 = vpack.c.b16 %v5565, %v5561
  %v5674 = vpack.c.b16 %v5570, %v5566
  %v5675 = vpack.c.b16 %v5571, %v5567
  %v5676 = vpack.c.b16 %v5572, %v5568
  %v5677 = vpack.c.b16 %v5573, %v5569
  %v5678 = vpack.c.b16 %v5578, %v5574
  %v5679 = vpack.c.b16 %v5579, %v5575
  %v5680 = vpack.c.b16 %v5580, %v5576
  %v5681 = vpack.c.b16 %v5581, %v5577
  %v5682 = vpack.c.b16 %v5586, %v5582
  %v5683 = vpack.c.b16 %v5587, %v5583
  %v5684 = vpack.c.b16 %v5588, %v5584
  %v5685 = vpack.c.b16 %v5589, %v5585
  %v5686 = vpack.c.b16 %v5594, %v5590
  %v5687 = vpack.c.b16 %v5595, %v5591
  %v5688 = vpack.c.b16 %v5596, %v5592
  %v5689 = vpack.c.b16 %v5597, %v5593
  %v5690 = vpack.c.b16 %v5602, %v5598
  %v5691 = vpack.c.b16 %v5603, %v5599
  %v5692 = vpack.c.b16 %v5604, %v5600
  %v5693 = vpack.c.b16 %v5605, %v5601
  %v5694 = vpack.c.b16 %v5610, %v5606
  %v5695 = vpack.c.b16 %v5611, %v5607
  %v5696 = vpack.c.b16 %v5612, %v5608
  %v5697 = vpack.c.b16 %v5613, %v5609
  %v5698 = vpack.c.b16 %v5618, %v5614
  %v5699 = vpack.c.b16 %v5619, %v5615
  %v5700 = vpack.c.b16 %v5620, %v5616
  %v5701 = vpack.c.b16 %v5621, %v5617
  %v5702 = vpack.c.b16 %v5626, %v5622
  %v5703 = vpack.c.b16 %v5627, %v5623
  %v5704 = vpack.c.b16 %v5628, %v5624
  %v5705 = vpack.c.b16 %v5629, %v5625
  %vm5782 = vcmask 392192
  %v5784 = vsel %vm5782, %v5399, 0
  %5786 = vmatprep.subr.bf16.mxu0 %v5659
  %5787 = vmatpush1.bf16.msra.mxu0 %v5658
  %5788 = vmatprep.subr.bf16.mxu0 %v5655
  %5789 = vmatpush1.bf16.msra.mxu0 %v5654
  %5790 = vmatprep.subr.bf16.mxu0 %v5651
  %5791 = vmatpush1.bf16.msra.mxu0 %v5650
  %5792 = vmatprep.subr.bf16.mxu0 %v5647
  %5793 = vmatpush1.bf16.msra.mxu0 %v5646
  %5794 = vmatprep.subr.bf16.mxu0 %v5643
  %5795 = vmatpush1.bf16.msra.mxu0 %v5642
  %5796 = vmatprep.subr.bf16.mxu0 %v5639
  %5797 = vmatpush1.bf16.msra.mxu0 %v5638
  %5798 = vmatprep.subr.bf16.mxu0 %v5635
  %5799 = vmatpush1.bf16.msra.mxu0 %v5634
  %5800 = vmatprep.subr.bf16.mxu0 %v5631
  %5801 = vmatpush1.bf16.msra.mxu0 %v5630
  %5802 = vmatprep.subr.bf16.mxu0 %v5691
  %5803 = vmatpush2.bf16.msra.mxu0 %v5690
  %5804 = vmatprep.subr.bf16.mxu0 %v5687
  %5805 = vmatpush2.bf16.msra.mxu0 %v5686
  %5806 = vmatprep.subr.bf16.mxu0 %v5683
  %5807 = vmatpush2.bf16.msra.mxu0 %v5682
  %5808 = vmatprep.subr.bf16.mxu0 %v5679
  %5809 = vmatpush2.bf16.msra.mxu0 %v5678
  %5810 = vmatprep.subr.bf16.mxu0 %v5675
  %5811 = vmatpush2.bf16.msra.mxu0 %v5674
  %5812 = vmatprep.subr.bf16.mxu0 %v5671
  %5813 = vmatpush2.bf16.msra.mxu0 %v5670
  %5814 = vmatprep.subr.bf16.mxu0 %v5667
  %5815 = vmatpush2.bf16.msra.mxu0 %v5666
  %5816 = vmatprep.subr.bf16.mxu0 %v5663
  %5817 = vmatpush2.bf16.msra.mxu0 %v5662
  %5818 = vmatprep.mubr.bf16.mxu0 %v5398
  %5819 = vmatmul.mubr.bf16.gmra.mxu0 %v5397
  %v5820 = vpop.f32.mrf.mxu0
  %v5821 = vadd.f32 0.0, %v5820
  %v5822 = vpop.f32.mrf.mxu0
  %v5823 = vadd.f32 0.0, %v5822
  %v5824 = vpop.f32.mrf.mxu0
  %v5825 = vadd.f32 0.0, %v5824
  %v5826 = vpop.f32.mrf.mxu0
  %v5827 = vadd.f32 0.0, %v5826
  %5828 = vdwg.mxu0
  %5829 = vmatprep.subr.bf16.mxu0 0
  %5830 = vmatpush1.bf16.msra.mxu0 0
  %5831 = vmatprep.subr.bf16.mxu0 0
  %5832 = vmatpush1.bf16.msra.mxu0 0
  %5833 = vmatprep.subr.bf16.mxu0 0
  %5834 = vmatpush1.bf16.msra.mxu0 0
  %5835 = vmatprep.subr.bf16.mxu0 0
  %5836 = vmatpush1.bf16.msra.mxu0 0
  %5837 = vmatprep.subr.bf16.mxu0 0
  %5838 = vmatpush1.bf16.msra.mxu0 0
  %5839 = vmatprep.subr.bf16.mxu0 %v5703
  %5840 = vmatpush1.bf16.msra.mxu0 %v5702
  %5841 = vmatprep.subr.bf16.mxu0 %v5699
  %5842 = vmatpush1.bf16.msra.mxu0 %v5698
  %5843 = vmatprep.subr.bf16.mxu0 %v5695
  %5844 = vmatpush1.bf16.msra.mxu0 %v5694
  %5845 = vmatprep.subr.bf16.mxu0 0
  %5846 = vmatpush2.bf16.msra.mxu0 0
  %5847 = vmatprep.subr.bf16.mxu0 0
  %5848 = vmatpush2.bf16.msra.mxu0 0
  %5849 = vmatprep.subr.bf16.mxu0 0
  %5850 = vmatpush2.bf16.msra.mxu0 0
  %5851 = vmatprep.subr.bf16.mxu0 0
  %5852 = vmatpush2.bf16.msra.mxu0 0
  %5853 = vmatprep.subr.bf16.mxu0 0
  %5854 = vmatpush2.bf16.msra.mxu0 0
  %5855 = vmatprep.subr.bf16.mxu0 0
  %5856 = vmatpush2.bf16.msra.mxu0 0
  %5857 = vmatprep.subr.bf16.mxu0 0
  %5858 = vmatpush2.bf16.msra.mxu0 0
  %5859 = vmatprep.subr.bf16.mxu0 0
  %5860 = vmatpush2.bf16.msra.mxu0 0
  %5861 = vmatprep.mubr.bf16.mxu0 0
  %5862 = vmatmul.mubr.bf16.gmra.mxu0 %v5784
  %v5863 = vpop.f32.mrf.mxu0
  %v5864 = vadd.f32 %v5821, %v5863
  %v5865 = vpop.f32.mrf.mxu0
  %v5866 = vadd.f32 %v5823, %v5865
  %v5867 = vpop.f32.mrf.mxu0
  %v5868 = vadd.f32 %v5825, %v5867
  %v5869 = vpop.f32.mrf.mxu0
  %v5870 = vadd.f32 %v5827, %v5869
  %5871 = vdwg.mxu0
  %5872 = vmatprep.subr.bf16.mxu0 %v5661
  %5873 = vmatpush1.bf16.msra.mxu0 %v5660
  %5874 = vmatprep.subr.bf16.mxu0 %v5657
  %5875 = vmatpush1.bf16.msra.mxu0 %v5656
  %5876 = vmatprep.subr.bf16.mxu0 %v5653
  %5877 = vmatpush1.bf16.msra.mxu0 %v5652
  %5878 = vmatprep.subr.bf16.mxu0 %v5649
  %5879 = vmatpush1.bf16.msra.mxu0 %v5648
  %5880 = vmatprep.subr.bf16.mxu0 %v5645
  %5881 = vmatpush1.bf16.msra.mxu0 %v5644
  %5882 = vmatprep.subr.bf16.mxu0 %v5641
  %5883 = vmatpush1.bf16.msra.mxu0 %v5640
  %5884 = vmatprep.subr.bf16.mxu0 %v5637
  %5885 = vmatpush1.bf16.msra.mxu0 %v5636
  %5886 = vmatprep.subr.bf16.mxu0 %v5633
  %5887 = vmatpush1.bf16.msra.mxu0 %v5632
  %5888 = vmatprep.subr.bf16.mxu0 %v5693
  %5889 = vmatpush2.bf16.msra.mxu0 %v5692
  %5890 = vmatprep.subr.bf16.mxu0 %v5689
  %5891 = vmatpush2.bf16.msra.mxu0 %v5688
  %5892 = vmatprep.subr.bf16.mxu0 %v5685
  %5893 = vmatpush2.bf16.msra.mxu0 %v5684
  %5894 = vmatprep.subr.bf16.mxu0 %v5681
  %5895 = vmatpush2.bf16.msra.mxu0 %v5680
  %5896 = vmatprep.subr.bf16.mxu0 %v5677
  %5897 = vmatpush2.bf16.msra.mxu0 %v5676
  %5898 = vmatprep.subr.bf16.mxu0 %v5673
  %5899 = vmatpush2.bf16.msra.mxu0 %v5672
  %5900 = vmatprep.subr.bf16.mxu0 %v5669
  %5901 = vmatpush2.bf16.msra.mxu0 %v5668
  %5902 = vmatprep.subr.bf16.mxu0 %v5665
  %5903 = vmatpush2.bf16.msra.mxu0 %v5664
  %5904 = vmatprep.mubr.bf16.mxu0 %v5398
  %5905 = vmatmul.mubr.bf16.gmra.mxu0 %v5397
  %v5906 = vpop.f32.mrf.mxu0
  %v5907 = vadd.f32 0.0, %v5906
  %v5908 = vpop.f32.mrf.mxu0
  %v5909 = vadd.f32 0.0, %v5908
  %v5910 = vpop.f32.mrf.mxu0
  %v5911 = vadd.f32 0.0, %v5910
  %v5912 = vpop.f32.mrf.mxu0
  %v5913 = vadd.f32 0.0, %v5912
  %5914 = vdwg.mxu0
  %5915 = vmatprep.subr.bf16.mxu0 0
  %5916 = vmatpush1.bf16.msra.mxu0 0
  %5917 = vmatprep.subr.bf16.mxu0 0
  %5918 = vmatpush1.bf16.msra.mxu0 0
  %5919 = vmatprep.subr.bf16.mxu0 0
  %5920 = vmatpush1.bf16.msra.mxu0 0
  %5921 = vmatprep.subr.bf16.mxu0 0
  %5922 = vmatpush1.bf16.msra.mxu0 0
  %5923 = vmatprep.subr.bf16.mxu0 0
  %5924 = vmatpush1.bf16.msra.mxu0 0
  %5925 = vmatprep.subr.bf16.mxu0 %v5705
  %5926 = vmatpush1.bf16.msra.mxu0 %v5704
  %5927 = vmatprep.subr.bf16.mxu0 %v5701
  %5928 = vmatpush1.bf16.msra.mxu0 %v5700
  %5929 = vmatprep.subr.bf16.mxu0 %v5697
  %5930 = vmatpush1.bf16.msra.mxu0 %v5696
  %5931 = vmatprep.subr.bf16.mxu0 0
  %5932 = vmatpush2.bf16.msra.mxu0 0
  %5933 = vmatprep.subr.bf16.mxu0 0
  %5934 = vmatpush2.bf16.msra.mxu0 0
  %5935 = vmatprep.subr.bf16.mxu0 0
  %5936 = vmatpush2.bf16.msra.mxu0 0
  %5937 = vmatprep.subr.bf16.mxu0 0
  %5938 = vmatpush2.bf16.msra.mxu0 0
  %5939 = vmatprep.subr.bf16.mxu0 0
  %5940 = vmatpush2.bf16.msra.mxu0 0
  %5941 = vmatprep.subr.bf16.mxu0 0
  %5942 = vmatpush2.bf16.msra.mxu0 0
  %5943 = vmatprep.subr.bf16.mxu0 0
  %5944 = vmatpush2.bf16.msra.mxu0 0
  %5945 = vmatprep.subr.bf16.mxu0 0
  %5946 = vmatpush2.bf16.msra.mxu0 0
  %5947 = vmatprep.mubr.bf16.mxu0 0
  %5948 = vmatmul.mubr.bf16.gmra.mxu0 %v5784
  %v5949 = vpop.f32.mrf.mxu0
  %v5950 = vadd.f32 %v5907, %v5949
  %v5951 = vpop.f32.mrf.mxu0
  %v5952 = vadd.f32 %v5909, %v5951
  %v5953 = vpop.f32.mrf.mxu0
  %v5954 = vadd.f32 %v5911, %v5953
  %v5955 = vpop.f32.mrf.mxu0
  %v5956 = vadd.f32 %v5913, %v5955
  %5957 = vdwg.mxu0
  %v5958 = vmax.f32 %v5864, 0.0
  %v5959 = vmax.f32 %v5866, 0.0
  %v5960 = vmax.f32 %v5950, 0.0
  %v5961 = vmax.f32 %v5952, 0.0
  %v5962 = vmax.f32 %v5868, 0.0
  %v5963 = vmax.f32 %v5870, 0.0
  %v5964 = vmax.f32 %v5954, 0.0
  %v5965 = vmax.f32 %v5956, 0.0
  %5966 = vrot.lane.b32.xlu0 %v5958, 17
  %v5967 = vpop.permute.xlu0 %5966
  %5968 = vrot.lane.b32.xlu0 %v5962, 17
  %v5969 = vpop.permute.xlu0 %5968
  %5970 = vrot.lane.b32.xlu0 %v5959, 17
  %v5971 = vpop.permute.xlu0 %5970
  %5972 = vrot.lane.b32.xlu0 %v5963, 17
  %v5973 = vpop.permute.xlu0 %5972
  %5974 = vrot.lane.b32.xlu0 %v5960, 17
  %v5975 = vpop.permute.xlu0 %5974
  %5976 = vrot.lane.b32.xlu0 %v5964, 17
  %v5977 = vpop.permute.xlu0 %5976
  %5978 = vrot.lane.b32.xlu0 %v5961, 17
  %v5979 = vpop.permute.xlu0 %5978
  %5980 = vrot.lane.b32.xlu0 %v5965, 17
  %v5981 = vpop.permute.xlu0 %5980
  %v5982 = vsel %vm108, %v5975, %v5979
  %v5983 = vsel %vm108, %v5977, %v5981
  %v5984 = vsel %vm108, %v5971, %v5975
  %v5985 = vsel %vm108, %v5973, %v5977
  %v5986 = vsel %vm108, %v5967, %v5971
  %v5987 = vsel %vm108, %v5969, %v5973
  %v5988 = vsel %vm108, %v5979, %v5967
  %v5989 = vsel %vm108, %v5981, %v5969
  %v5990 = vmul.f32 %v5988, %v120
  %v5991 = vmul.f32 %v5986, %v124
  %v5992 = vmul.f32 %v5984, %v128
  %v5993 = vmul.f32 %v5982, %v132
  %v5994 = vmul.f32 %v5989, %v120
  %v5995 = vmul.f32 %v5987, %v124
  %v5996 = vmul.f32 %v5985, %v128
  %v5997 = vmul.f32 %v5983, %v132
  %v5998 = vpack.c.bf16 %v5994, %v5990
  %v5999 = vpack.c.bf16 %v5995, %v5991
  %v6000 = vpack.c.bf16 %v5996, %v5992
  %v6001 = vpack.c.bf16 %v5997, %v5993
  %v6006 = vunpack.c.l.b16 %v5998
  %v6007 = vunpack.c.l.b16 %v5999
  %v6008 = vunpack.c.l.b16 %v6000
  %v6009 = vunpack.c.l.b16 %v6001
  %v6010 = vunpack.c.h.b16 %v5998
  %v6011 = vunpack.c.h.b16 %v5999
  %v6012 = vunpack.c.h.b16 %v6000
  %v6013 = vunpack.c.h.b16 %v6001
  %v6014 = vpack.c.b16 %v6007, %v6006
  %v6015 = vpack.c.b16 %v6009, %v6008
  %v6016 = vpack.c.b16 %v6011, %v6010
  %v6017 = vpack.c.b16 %v6013, %v6012
  %6022 = vst [vmem:[#allocation2 + $0x20] sm:$0xff] %v6014
  %6023 = vst [vmem:[#allocation2 + $0x28] sm:$0xff] %v6015
  %6024 = vst [vmem:[#allocation2 + $0x30] sm:$0xff] %v6016
  %6025 = vst [vmem:[#allocation2 + $0x38] sm:$0xff] %v6017
  %6026 = vrot.lane.b32.xlu0 %v5958, 16
  %v6027 = vpop.permute.xlu0 %6026
  %6028 = vrot.lane.b32.xlu0 %v5962, 16
  %v6029 = vpop.permute.xlu0 %6028
  %6030 = vrot.lane.b32.xlu0 %v5959, 16
  %v6031 = vpop.permute.xlu0 %6030
  %6032 = vrot.lane.b32.xlu0 %v5963, 16
  %v6033 = vpop.permute.xlu0 %6032
  %6034 = vrot.lane.b32.xlu0 %v5960, 16
  %v6035 = vpop.permute.xlu0 %6034
  %6036 = vrot.lane.b32.xlu0 %v5964, 16
  %v6037 = vpop.permute.xlu0 %6036
  %6038 = vrot.lane.b32.xlu0 %v5961, 16
  %v6039 = vpop.permute.xlu0 %6038
  %6040 = vrot.lane.b32.xlu0 %v5965, 16
  %v6041 = vpop.permute.xlu0 %6040
  %v6042 = vsel %vm185, %v6035, %v6039
  %v6043 = vsel %vm185, %v6037, %v6041
  %v6044 = vsel %vm185, %v6031, %v6035
  %v6045 = vsel %vm185, %v6033, %v6037
  %v6046 = vsel %vm185, %v6027, %v6031
  %v6047 = vsel %vm185, %v6029, %v6033
  %v6048 = vsel %vm185, %v6039, %v6027
  %v6049 = vsel %vm185, %v6041, %v6029
  %v6050 = vmul.f32 %v6048, %v197
  %v6051 = vmul.f32 %v6046, %v201
  %v6052 = vmul.f32 %v6044, %v205
  %v6053 = vmul.f32 %v6042, %v209
  %v6054 = vmul.f32 %v6049, %v197
  %v6055 = vmul.f32 %v6047, %v201
  %v6056 = vmul.f32 %v6045, %v205
  %v6057 = vmul.f32 %v6043, %v209
  %v6058 = vpack.c.bf16 %v6054, %v6050
  %v6059 = vpack.c.bf16 %v6055, %v6051
  %v6060 = vpack.c.bf16 %v6056, %v6052
  %v6061 = vpack.c.bf16 %v6057, %v6053
  %v6066 = vunpack.c.l.b16 %v6058
  %v6067 = vunpack.c.l.b16 %v6059
  %v6068 = vunpack.c.l.b16 %v6060
  %v6069 = vunpack.c.l.b16 %v6061
  %v6070 = vunpack.c.h.b16 %v6058
  %v6071 = vunpack.c.h.b16 %v6059
  %v6072 = vunpack.c.h.b16 %v6060
  %v6073 = vunpack.c.h.b16 %v6061
  %v6074 = vpack.c.b16 %v6067, %v6066
  %v6075 = vpack.c.b16 %v6069, %v6068
  %v6076 = vpack.c.b16 %v6071, %v6070
  %v6077 = vpack.c.b16 %v6073, %v6072
  %6082 = vst [vmem:[#allocation2 + $0x40] sm:$0xff] %v6074
  %6083 = vst [vmem:[#allocation2 + $0x48] sm:$0xff] %v6075
  %6084 = vst [vmem:[#allocation2 + $0x50] sm:$0xff] %v6076
  %6085 = vst [vmem:[#allocation2 + $0x58] sm:$0xff] %v6077
  %6086 = vrot.lane.b32.xlu0 %v5958, 15
  %v6087 = vpop.permute.xlu0 %6086
  %6088 = vrot.lane.b32.xlu0 %v5962, 15
  %v6089 = vpop.permute.xlu0 %6088
  %6090 = vrot.lane.b32.xlu0 %v5959, 15
  %v6091 = vpop.permute.xlu0 %6090
  %6092 = vrot.lane.b32.xlu0 %v5963, 15
  %v6093 = vpop.permute.xlu0 %6092
  %6094 = vrot.lane.b32.xlu0 %v5960, 15
  %v6095 = vpop.permute.xlu0 %6094
  %6096 = vrot.lane.b32.xlu0 %v5964, 15
  %v6097 = vpop.permute.xlu0 %6096
  %6098 = vrot.lane.b32.xlu0 %v5961, 15
  %v6099 = vpop.permute.xlu0 %6098
  %6100 = vrot.lane.b32.xlu0 %v5965, 15
  %v6101 = vpop.permute.xlu0 %6100
  %v6102 = vsel %vm262, %v6095, %v6099
  %v6103 = vsel %vm262, %v6097, %v6101
  %v6104 = vsel %vm262, %v6091, %v6095
  %v6105 = vsel %vm262, %v6093, %v6097
  %v6106 = vsel %vm262, %v6087, %v6091
  %v6107 = vsel %vm262, %v6089, %v6093
  %v6108 = vsel %vm262, %v6099, %v6087
  %v6109 = vsel %vm262, %v6101, %v6089
  %v6110 = vmul.f32 %v6108, %v274
  %v6111 = vmul.f32 %v6106, %v278
  %v6112 = vmul.f32 %v6104, %v282
  %v6113 = vmul.f32 %v6102, %v286
  %v6114 = vmul.f32 %v6109, %v274
  %v6115 = vmul.f32 %v6107, %v278
  %v6116 = vmul.f32 %v6105, %v282
  %v6117 = vmul.f32 %v6103, %v286
  %v6118 = vpack.c.bf16 %v6114, %v6110
  %v6119 = vpack.c.bf16 %v6115, %v6111
  %v6120 = vpack.c.bf16 %v6116, %v6112
  %v6121 = vpack.c.bf16 %v6117, %v6113
  %v6126 = vunpack.c.l.b16 %v6118
  %v6127 = vunpack.c.l.b16 %v6119
  %v6128 = vunpack.c.l.b16 %v6120
  %v6129 = vunpack.c.l.b16 %v6121
  %v6130 = vunpack.c.h.b16 %v6118
  %v6131 = vunpack.c.h.b16 %v6119
  %v6132 = vunpack.c.h.b16 %v6120
  %v6133 = vunpack.c.h.b16 %v6121
  %v6134 = vpack.c.b16 %v6127, %v6126
  %v6135 = vpack.c.b16 %v6129, %v6128
  %v6136 = vpack.c.b16 %v6131, %v6130
  %v6137 = vpack.c.b16 %v6133, %v6132
  %6142 = vst [vmem:[#allocation2 + $0x60] sm:$0xff] %v6134
  %6143 = vst [vmem:[#allocation2 + $0x68] sm:$0xff] %v6135
  %6144 = vst [vmem:[#allocation2 + $0x70] sm:$0xff] %v6136
  %6145 = vst [vmem:[#allocation2 + $0x78] sm:$0xff] %v6137
  %6146 = vrot.lane.b32.xlu0 %v5958, 1
  %v6147 = vpop.permute.xlu0 %6146
  %6148 = vrot.lane.b32.xlu0 %v5962, 1
  %v6149 = vpop.permute.xlu0 %6148
  %6150 = vrot.lane.b32.xlu0 %v5959, 1
  %v6151 = vpop.permute.xlu0 %6150
  %6152 = vrot.lane.b32.xlu0 %v5963, 1
  %v6153 = vpop.permute.xlu0 %6152
  %6154 = vrot.lane.b32.xlu0 %v5960, 1
  %v6155 = vpop.permute.xlu0 %6154
  %6156 = vrot.lane.b32.xlu0 %v5964, 1
  %v6157 = vpop.permute.xlu0 %6156
  %6158 = vrot.lane.b32.xlu0 %v5961, 1
  %v6159 = vpop.permute.xlu0 %6158
  %6160 = vrot.lane.b32.xlu0 %v5965, 1
  %v6161 = vpop.permute.xlu0 %6160
  %v6162 = vsel %vm339, %v6155, %v6159
  %v6163 = vsel %vm339, %v6157, %v6161
  %v6164 = vsel %vm339, %v6151, %v6155
  %v6165 = vsel %vm339, %v6153, %v6157
  %v6166 = vsel %vm339, %v6147, %v6151
  %v6167 = vsel %vm339, %v6149, %v6153
  %v6168 = vsel %vm339, %v6159, %v6147
  %v6169 = vsel %vm339, %v6161, %v6149
  %v6170 = vmul.f32 %v6168, %v351
  %v6171 = vmul.f32 %v6166, %v355
  %v6172 = vmul.f32 %v6164, %v359
  %v6173 = vmul.f32 %v6162, %v363
  %v6174 = vmul.f32 %v6169, %v351
  %v6175 = vmul.f32 %v6167, %v355
  %v6176 = vmul.f32 %v6165, %v359
  %v6177 = vmul.f32 %v6163, %v363
  %v6178 = vpack.c.bf16 %v6174, %v6170
  %v6179 = vpack.c.bf16 %v6175, %v6171
  %v6180 = vpack.c.bf16 %v6176, %v6172
  %v6181 = vpack.c.bf16 %v6177, %v6173
  %v6186 = vunpack.c.l.b16 %v6178
  %v6187 = vunpack.c.l.b16 %v6179
  %v6188 = vunpack.c.l.b16 %v6180
  %v6189 = vunpack.c.l.b16 %v6181
  %v6190 = vunpack.c.h.b16 %v6178
  %v6191 = vunpack.c.h.b16 %v6179
  %v6192 = vunpack.c.h.b16 %v6180
  %v6193 = vunpack.c.h.b16 %v6181
  %v6194 = vpack.c.b16 %v6187, %v6186
  %v6195 = vpack.c.b16 %v6189, %v6188
  %v6196 = vpack.c.b16 %v6191, %v6190
  %v6197 = vpack.c.b16 %v6193, %v6192
  %6202 = vst [vmem:[#allocation2 + $0x80] sm:$0xff] %v6194
  %6203 = vst [vmem:[#allocation2 + $0x88] sm:$0xff] %v6195
  %6204 = vst [vmem:[#allocation2 + $0x90] sm:$0xff] %v6196
  %6205 = vst [vmem:[#allocation2 + $0x98] sm:$0xff] %v6197
  %v6206 = vpack.c.bf16 %v5962, %v5958
  %v6207 = vpack.c.bf16 %v5963, %v5959
  %v6208 = vpack.c.bf16 %v5964, %v5960
  %v6209 = vpack.c.bf16 %v5965, %v5961
  %v6214 = vunpack.c.l.b16 %v6206
  %v6215 = vunpack.c.l.b16 %v6207
  %v6216 = vunpack.c.l.b16 %v6208
  %v6217 = vunpack.c.l.b16 %v6209
  %v6218 = vunpack.c.h.b16 %v6206
  %v6219 = vunpack.c.h.b16 %v6207
  %v6220 = vunpack.c.h.b16 %v6208
  %v6221 = vunpack.c.h.b16 %v6209
  %v6222 = vpack.c.b16 %v6215, %v6214
  %v6223 = vpack.c.b16 %v6217, %v6216
  %v6224 = vpack.c.b16 %v6219, %v6218
  %v6225 = vpack.c.b16 %v6221, %v6220
  %6230 = vst [vmem:[#allocation2 + $0xa0] sm:$0xff] %v6222
  %6231 = vst [vmem:[#allocation2 + $0xa8] sm:$0xff] %v6223
  %6232 = vst [vmem:[#allocation2 + $0xb0] sm:$0xff] %v6224
  %6233 = vst [vmem:[#allocation2 + $0xb8] sm:$0xff] %v6225
  %6234 = vrot.lane.b32.xlu0 %v5958, 127
  %v6235 = vpop.permute.xlu0 %6234
  %6236 = vrot.lane.b32.xlu0 %v5962, 127
  %v6237 = vpop.permute.xlu0 %6236
  %6238 = vrot.lane.b32.xlu0 %v5959, 127
  %v6239 = vpop.permute.xlu0 %6238
  %6240 = vrot.lane.b32.xlu0 %v5963, 127
  %v6241 = vpop.permute.xlu0 %6240
  %6242 = vrot.lane.b32.xlu0 %v5960, 127
  %v6243 = vpop.permute.xlu0 %6242
  %6244 = vrot.lane.b32.xlu0 %v5964, 127
  %v6245 = vpop.permute.xlu0 %6244
  %6246 = vrot.lane.b32.xlu0 %v5961, 127
  %v6247 = vpop.permute.xlu0 %6246
  %6248 = vrot.lane.b32.xlu0 %v5965, 127
  %v6249 = vpop.permute.xlu0 %6248
  %v6250 = vsel %vm444, %v6243, %v6247
  %v6251 = vsel %vm444, %v6245, %v6249
  %v6252 = vsel %vm444, %v6239, %v6243
  %v6253 = vsel %vm444, %v6241, %v6245
  %v6254 = vsel %vm444, %v6235, %v6239
  %v6255 = vsel %vm444, %v6237, %v6241
  %v6256 = vsel %vm444, %v6247, %v6235
  %v6257 = vsel %vm444, %v6249, %v6237
  %v6258 = vmul.f32 %v6254, %v456
  %v6259 = vmul.f32 %v6252, %v460
  %v6260 = vmul.f32 %v6250, %v464
  %v6261 = vmul.f32 %v6256, %v468
  %v6262 = vmul.f32 %v6255, %v456
  %v6263 = vmul.f32 %v6253, %v460
  %v6264 = vmul.f32 %v6251, %v464
  %v6265 = vmul.f32 %v6257, %v468
  %v6266 = vpack.c.bf16 %v6262, %v6258
  %v6267 = vpack.c.bf16 %v6263, %v6259
  %v6268 = vpack.c.bf16 %v6264, %v6260
  %v6269 = vpack.c.bf16 %v6265, %v6261
  %v6274 = vunpack.c.l.b16 %v6266
  %v6275 = vunpack.c.l.b16 %v6267
  %v6276 = vunpack.c.l.b16 %v6268
  %v6277 = vunpack.c.l.b16 %v6269
  %v6278 = vunpack.c.h.b16 %v6266
  %v6279 = vunpack.c.h.b16 %v6267
  %v6280 = vunpack.c.h.b16 %v6268
  %v6281 = vunpack.c.h.b16 %v6269
  %v6282 = vpack.c.b16 %v6275, %v6274
  %v6283 = vpack.c.b16 %v6277, %v6276
  %v6284 = vpack.c.b16 %v6279, %v6278
  %v6285 = vpack.c.b16 %v6281, %v6280
  %6290 = vst [vmem:[#allocation2 + $0xc0] sm:$0xff] %v6282
  %6291 = vst [vmem:[#allocation2 + $0xc8] sm:$0xff] %v6283
  %6292 = vst [vmem:[#allocation2 + $0xd0] sm:$0xff] %v6284
  %6293 = vst [vmem:[#allocation2 + $0xd8] sm:$0xff] %v6285
  %6294 = vrot.lane.b32.xlu0 %v5958, 113
  %v6295 = vpop.permute.xlu0 %6294
  %6296 = vrot.lane.b32.xlu0 %v5962, 113
  %v6297 = vpop.permute.xlu0 %6296
  %6298 = vrot.lane.b32.xlu0 %v5959, 113
  %v6299 = vpop.permute.xlu0 %6298
  %6300 = vrot.lane.b32.xlu0 %v5963, 113
  %v6301 = vpop.permute.xlu0 %6300
  %6302 = vrot.lane.b32.xlu0 %v5960, 113
  %v6303 = vpop.permute.xlu0 %6302
  %6304 = vrot.lane.b32.xlu0 %v5964, 113
  %v6305 = vpop.permute.xlu0 %6304
  %6306 = vrot.lane.b32.xlu0 %v5961, 113
  %v6307 = vpop.permute.xlu0 %6306
  %6308 = vrot.lane.b32.xlu0 %v5965, 113
  %v6309 = vpop.permute.xlu0 %6308
  %v6310 = vsel %vm521, %v6303, %v6307
  %v6311 = vsel %vm521, %v6305, %v6309
  %v6312 = vsel %vm521, %v6299, %v6303
  %v6313 = vsel %vm521, %v6301, %v6305
  %v6314 = vsel %vm521, %v6295, %v6299
  %v6315 = vsel %vm521, %v6297, %v6301
  %v6316 = vsel %vm521, %v6307, %v6295
  %v6317 = vsel %vm521, %v6309, %v6297
  %v6318 = vmul.f32 %v6314, %v533
  %v6319 = vmul.f32 %v6312, %v537
  %v6320 = vmul.f32 %v6310, %v541
  %v6321 = vmul.f32 %v6316, %v545
  %v6322 = vmul.f32 %v6315, %v533
  %v6323 = vmul.f32 %v6313, %v537
  %v6324 = vmul.f32 %v6311, %v541
  %v6325 = vmul.f32 %v6317, %v545
  %v6326 = vpack.c.bf16 %v6322, %v6318
  %v6327 = vpack.c.bf16 %v6323, %v6319
  %v6328 = vpack.c.bf16 %v6324, %v6320
  %v6329 = vpack.c.bf16 %v6325, %v6321
  %v6334 = vunpack.c.l.b16 %v6326
  %v6335 = vunpack.c.l.b16 %v6327
  %v6336 = vunpack.c.l.b16 %v6328
  %v6337 = vunpack.c.l.b16 %v6329
  %v6338 = vunpack.c.h.b16 %v6326
  %v6339 = vunpack.c.h.b16 %v6327
  %v6340 = vunpack.c.h.b16 %v6328
  %v6341 = vunpack.c.h.b16 %v6329
  %v6342 = vpack.c.b16 %v6335, %v6334
  %v6343 = vpack.c.b16 %v6337, %v6336
  %v6344 = vpack.c.b16 %v6339, %v6338
  %v6345 = vpack.c.b16 %v6341, %v6340
  %6350 = vst [vmem:[#allocation2 + $0xe0] sm:$0xff] %v6342
  %6351 = vst [vmem:[#allocation2 + $0xe8] sm:$0xff] %v6343
  %6352 = vst [vmem:[#allocation2 + $0xf0] sm:$0xff] %v6344
  %6353 = vst [vmem:[#allocation2 + $0xf8] sm:$0xff] %v6345
  %6354 = vrot.lane.b32.xlu0 %v5958, 112
  %v6355 = vpop.permute.xlu0 %6354
  %6356 = vrot.lane.b32.xlu0 %v5962, 112
  %v6357 = vpop.permute.xlu0 %6356
  %6358 = vrot.lane.b32.xlu0 %v5959, 112
  %v6359 = vpop.permute.xlu0 %6358
  %6360 = vrot.lane.b32.xlu0 %v5963, 112
  %v6361 = vpop.permute.xlu0 %6360
  %6362 = vrot.lane.b32.xlu0 %v5960, 112
  %v6363 = vpop.permute.xlu0 %6362
  %6364 = vrot.lane.b32.xlu0 %v5964, 112
  %v6365 = vpop.permute.xlu0 %6364
  %6366 = vrot.lane.b32.xlu0 %v5961, 112
  %v6367 = vpop.permute.xlu0 %6366
  %6368 = vrot.lane.b32.xlu0 %v5965, 112
  %v6369 = vpop.permute.xlu0 %6368
  %v6370 = vsel %vm598, %v6363, %v6367
  %v6371 = vsel %vm598, %v6365, %v6369
  %v6372 = vsel %vm598, %v6359, %v6363
  %v6373 = vsel %vm598, %v6361, %v6365
  %v6374 = vsel %vm598, %v6355, %v6359
  %v6375 = vsel %vm598, %v6357, %v6361
  %v6376 = vsel %vm598, %v6367, %v6355
  %v6377 = vsel %vm598, %v6369, %v6357
  %v6378 = vmul.f32 %v6374, %v610
  %v6379 = vmul.f32 %v6372, %v614
  %v6380 = vmul.f32 %v6370, %v618
  %v6381 = vmul.f32 %v6376, %v622
  %v6382 = vmul.f32 %v6375, %v610
  %v6383 = vmul.f32 %v6373, %v614
  %v6384 = vmul.f32 %v6371, %v618
  %v6385 = vmul.f32 %v6377, %v622
  %v6386 = vpack.c.bf16 %v6382, %v6378
  %v6387 = vpack.c.bf16 %v6383, %v6379
  %v6388 = vpack.c.bf16 %v6384, %v6380
  %v6389 = vpack.c.bf16 %v6385, %v6381
  %v6394 = vunpack.c.l.b16 %v6386
  %v6395 = vunpack.c.l.b16 %v6387
  %v6396 = vunpack.c.l.b16 %v6388
  %v6397 = vunpack.c.l.b16 %v6389
  %v6398 = vunpack.c.h.b16 %v6386
  %v6399 = vunpack.c.h.b16 %v6387
  %v6400 = vunpack.c.h.b16 %v6388
  %v6401 = vunpack.c.h.b16 %v6389
  %v6402 = vpack.c.b16 %v6395, %v6394
  %v6403 = vpack.c.b16 %v6397, %v6396
  %v6404 = vpack.c.b16 %v6399, %v6398
  %v6405 = vpack.c.b16 %v6401, %v6400
  %6410 = vst [vmem:[#allocation2 + $0x100] sm:$0xff] %v6402
  %6411 = vst [vmem:[#allocation2 + $0x108] sm:$0xff] %v6403
  %6412 = vst [vmem:[#allocation2 + $0x110] sm:$0xff] %v6404
  %6413 = vst [vmem:[#allocation2 + $0x118] sm:$0xff] %v6405
  %6414 = vrot.lane.b32.xlu0 %v5958, 111
  %v6415 = vpop.permute.xlu0 %6414
  %6416 = vrot.lane.b32.xlu0 %v5962, 111
  %v6417 = vpop.permute.xlu0 %6416
  %6418 = vrot.lane.b32.xlu0 %v5959, 111
  %v6419 = vpop.permute.xlu0 %6418
  %6420 = vrot.lane.b32.xlu0 %v5963, 111
  %v6421 = vpop.permute.xlu0 %6420
  %6422 = vrot.lane.b32.xlu0 %v5960, 111
  %v6423 = vpop.permute.xlu0 %6422
  %6424 = vrot.lane.b32.xlu0 %v5964, 111
  %v6425 = vpop.permute.xlu0 %6424
  %6426 = vrot.lane.b32.xlu0 %v5961, 111
  %v6427 = vpop.permute.xlu0 %6426
  %6428 = vrot.lane.b32.xlu0 %v5965, 111
  %v6429 = vpop.permute.xlu0 %6428
  %v6430 = vsel %vm675, %v6423, %v6427
  %v6431 = vsel %vm675, %v6425, %v6429
  %v6432 = vsel %vm675, %v6419, %v6423
  %v6433 = vsel %vm675, %v6421, %v6425
  %v6434 = vsel %vm675, %v6415, %v6419
  %v6435 = vsel %vm675, %v6417, %v6421
  %v6436 = vsel %vm675, %v6427, %v6415
  %v6437 = vsel %vm675, %v6429, %v6417
  %v6438 = vmul.f32 %v6434, %v687
  %v6439 = vmul.f32 %v6432, %v691
  %v6440 = vmul.f32 %v6430, %v695
  %v6441 = vmul.f32 %v6436, %v699
  %v6442 = vmul.f32 %v6435, %v687
  %v6443 = vmul.f32 %v6433, %v691
  %v6444 = vmul.f32 %v6431, %v695
  %v6445 = vmul.f32 %v6437, %v699
  %v6446 = vpack.c.bf16 %v6442, %v6438
  %v6447 = vpack.c.bf16 %v6443, %v6439
  %v6448 = vpack.c.bf16 %v6444, %v6440
  %v6449 = vpack.c.bf16 %v6445, %v6441
  %v6454 = vunpack.c.l.b16 %v6446
  %v6455 = vunpack.c.l.b16 %v6447
  %v6456 = vunpack.c.l.b16 %v6448
  %v6457 = vunpack.c.l.b16 %v6449
  %v6458 = vunpack.c.h.b16 %v6446
  %v6459 = vunpack.c.h.b16 %v6447
  %v6460 = vunpack.c.h.b16 %v6448
  %v6461 = vunpack.c.h.b16 %v6449
  %v6462 = vpack.c.b16 %v6455, %v6454
  %v6463 = vpack.c.b16 %v6457, %v6456
  %v6464 = vpack.c.b16 %v6459, %v6458
  %v6465 = vpack.c.b16 %v6461, %v6460
  %6470 = vst [vmem:[#allocation2 + $0x120] sm:$0xff] %v6462
  %6471 = vst [vmem:[#allocation2 + $0x128] sm:$0xff] %v6463
  %6472 = vst [vmem:[#allocation2 + $0x130] sm:$0xff] %v6464
  %6473 = vst [vmem:[#allocation2 + $0x138] sm:$0xff] %v6465
  %v6474 = vld [vmem:[%s10] sm:$0xf]
  %v6475 = vld [vmem:[#allocation2] sm:$0xff]
  %v6476 = vld [vmem:[#allocation2 + $0x8] sm:$0xff]
  %v6477 = vld [vmem:[#allocation2 + $0x10] sm:$0xff]
  %v6478 = vld [vmem:[#allocation2 + $0x18] sm:$0xff]
  %v6479 = vld [vmem:[#allocation2 + $0x20] sm:$0xff]
  %v6480 = vld [vmem:[#allocation2 + $0x28] sm:$0xff]
  %v6481 = vld [vmem:[#allocation2 + $0x30] sm:$0xff]
  %v6482 = vld [vmem:[#allocation2 + $0x38] sm:$0xff]
  %v6483 = vld [vmem:[#allocation2 + $0x40] sm:$0xff]
  %v6484 = vld [vmem:[#allocation2 + $0x48] sm:$0xff]
  %v6485 = vld [vmem:[#allocation2 + $0x50] sm:$0xff]
  %v6486 = vld [vmem:[#allocation2 + $0x58] sm:$0xff]
  %v6487 = vld [vmem:[#allocation2 + $0x60] sm:$0xff]
  %v6488 = vld [vmem:[#allocation2 + $0x68] sm:$0xff]
  %v6489 = vld [vmem:[#allocation2 + $0x70] sm:$0xff]
  %v6490 = vld [vmem:[#allocation2 + $0x78] sm:$0xff]
  %v6491 = vld [vmem:[#allocation2 + $0x80] sm:$0xff]
  %v6492 = vld [vmem:[#allocation2 + $0x88] sm:$0xff]
  %v6493 = vld [vmem:[#allocation2 + $0x90] sm:$0xff]
  %v6494 = vld [vmem:[#allocation2 + $0x98] sm:$0xff]
  %v6495 = vld [vmem:[#allocation2 + $0xa0] sm:$0xff]
  %v6496 = vld [vmem:[#allocation2 + $0xa8] sm:$0xff]
  %v6497 = vld [vmem:[#allocation2 + $0xb0] sm:$0xff]
  %v6498 = vld [vmem:[#allocation2 + $0xb8] sm:$0xff]
  %v6499 = vld [vmem:[#allocation2 + $0xc0] sm:$0xff]
  %v6500 = vld [vmem:[#allocation2 + $0xc8] sm:$0xff]
  %v6501 = vld [vmem:[#allocation2 + $0xd0] sm:$0xff]
  %v6502 = vld [vmem:[#allocation2 + $0xd8] sm:$0xff]
  %v6503 = vld [vmem:[#allocation2 + $0xe0] sm:$0xff]
  %v6504 = vld [vmem:[#allocation2 + $0xe8] sm:$0xff]
  %v6505 = vld [vmem:[#allocation2 + $0xf0] sm:$0xff]
  %v6506 = vld [vmem:[#allocation2 + $0xf8] sm:$0xff]
  %v6507 = vld [vmem:[#allocation2 + $0x100] sm:$0xff]
  %v6508 = vld [vmem:[#allocation2 + $0x108] sm:$0xff]
  %v6509 = vld [vmem:[#allocation2 + $0x110] sm:$0xff]
  %v6510 = vld [vmem:[#allocation2 + $0x118] sm:$0xff]
  %v6511 = vld [vmem:[#allocation2 + $0x120] sm:$0xff]
  %v6512 = vld [vmem:[#allocation2 + $0x128] sm:$0xff]
  %v6513 = vld [vmem:[#allocation2 + $0x130] sm:$0xff]
  %v6514 = vld [vmem:[#allocation2 + $0x138] sm:$0xff]
  %v6517 = vunpack.c.l.s4 1983009808
  %v6518 = vunpack.c.0.s8 %v6517
  %v6519 = vlaneseq
  %v6520 = vshrl.u32 %v6519, 7
  %v6521 = vsub.s32 %v6518, %v6520
  %v6522 = vrot.slane %v6474, %v6521
  %v6523 = vcombine.high %v6522, %v6522
  %v6565 = vunpack.c.l.b16 %v6475
  %v6566 = vunpack.c.h.b16 %v6475
  %v6567 = vunpack.c.l.b16 %v6476
  %v6568 = vunpack.c.h.b16 %v6476
  %v6569 = vunpack.c.l.b16 %v6477
  %v6570 = vunpack.c.h.b16 %v6477
  %v6571 = vunpack.c.l.b16 %v6478
  %v6572 = vunpack.c.h.b16 %v6478
  %v6573 = vunpack.c.l.b16 %v6479
  %v6574 = vunpack.c.h.b16 %v6479
  %v6575 = vunpack.c.l.b16 %v6480
  %v6576 = vunpack.c.h.b16 %v6480
  %v6577 = vunpack.c.l.b16 %v6481
  %v6578 = vunpack.c.h.b16 %v6481
  %v6579 = vunpack.c.l.b16 %v6482
  %v6580 = vunpack.c.h.b16 %v6482
  %v6581 = vunpack.c.l.b16 %v6483
  %v6582 = vunpack.c.h.b16 %v6483
  %v6583 = vunpack.c.l.b16 %v6484
  %v6584 = vunpack.c.h.b16 %v6484
  %v6585 = vunpack.c.l.b16 %v6485
  %v6586 = vunpack.c.h.b16 %v6485
  %v6587 = vunpack.c.l.b16 %v6486
  %v6588 = vunpack.c.h.b16 %v6486
  %v6589 = vunpack.c.l.b16 %v6487
  %v6590 = vunpack.c.h.b16 %v6487
  %v6591 = vunpack.c.l.b16 %v6488
  %v6592 = vunpack.c.h.b16 %v6488
  %v6593 = vunpack.c.l.b16 %v6489
  %v6594 = vunpack.c.h.b16 %v6489
  %v6595 = vunpack.c.l.b16 %v6490
  %v6596 = vunpack.c.h.b16 %v6490
  %v6597 = vunpack.c.l.b16 %v6491
  %v6598 = vunpack.c.h.b16 %v6491
  %v6599 = vunpack.c.l.b16 %v6492
  %v6600 = vunpack.c.h.b16 %v6492
  %v6601 = vunpack.c.l.b16 %v6493
  %v6602 = vunpack.c.h.b16 %v6493
  %v6603 = vunpack.c.l.b16 %v6494
  %v6604 = vunpack.c.h.b16 %v6494
  %v6605 = vunpack.c.l.b16 %v6495
  %v6606 = vunpack.c.h.b16 %v6495
  %v6607 = vunpack.c.l.b16 %v6496
  %v6608 = vunpack.c.h.b16 %v6496
  %v6609 = vunpack.c.l.b16 %v6497
  %v6610 = vunpack.c.h.b16 %v6497
  %v6611 = vunpack.c.l.b16 %v6498
  %v6612 = vunpack.c.h.b16 %v6498
  %v6613 = vunpack.c.l.b16 %v6499
  %v6614 = vunpack.c.h.b16 %v6499
  %v6615 = vunpack.c.l.b16 %v6500
  %v6616 = vunpack.c.h.b16 %v6500
  %v6617 = vunpack.c.l.b16 %v6501
  %v6618 = vunpack.c.h.b16 %v6501
  %v6619 = vunpack.c.l.b16 %v6502
  %v6620 = vunpack.c.h.b16 %v6502
  %v6621 = vunpack.c.l.b16 %v6503
  %v6622 = vunpack.c.h.b16 %v6503
  %v6623 = vunpack.c.l.b16 %v6504
  %v6624 = vunpack.c.h.b16 %v6504
  %v6625 = vunpack.c.l.b16 %v6505
  %v6626 = vunpack.c.h.b16 %v6505
  %v6627 = vunpack.c.l.b16 %v6506
  %v6628 = vunpack.c.h.b16 %v6506
  %v6629 = vunpack.c.l.b16 %v6507
  %v6630 = vunpack.c.h.b16 %v6507
  %v6631 = vunpack.c.l.b16 %v6508
  %v6632 = vunpack.c.h.b16 %v6508
  %v6633 = vunpack.c.l.b16 %v6509
  %v6634 = vunpack.c.h.b16 %v6509
  %v6635 = vunpack.c.l.b16 %v6510
  %v6636 = vunpack.c.h.b16 %v6510
  %v6637 = vunpack.c.l.b16 %v6511
  %v6638 = vunpack.c.h.b16 %v6511
  %v6639 = vunpack.c.l.b16 %v6512
  %v6640 = vunpack.c.h.b16 %v6512
  %v6641 = vunpack.c.l.b16 %v6513
  %v6642 = vunpack.c.h.b16 %v6513
  %v6643 = vunpack.c.l.b16 %v6514
  %v6644 = vunpack.c.h.b16 %v6514
  %v6645 = vpack.c.b16 %v6569, %v6565
  %v6646 = vpack.c.b16 %v6570, %v6566
  %v6647 = vpack.c.b16 %v6571, %v6567
  %v6648 = vpack.c.b16 %v6572, %v6568
  %v6649 = vpack.c.b16 %v6577, %v6573
  %v6650 = vpack.c.b16 %v6578, %v6574
  %v6651 = vpack.c.b16 %v6579, %v6575
  %v6652 = vpack.c.b16 %v6580, %v6576
  %v6653 = vpack.c.b16 %v6585, %v6581
  %v6654 = vpack.c.b16 %v6586, %v6582
  %v6655 = vpack.c.b16 %v6587, %v6583
  %v6656 = vpack.c.b16 %v6588, %v6584
  %v6657 = vpack.c.b16 %v6593, %v6589
  %v6658 = vpack.c.b16 %v6594, %v6590
  %v6659 = vpack.c.b16 %v6595, %v6591
  %v6660 = vpack.c.b16 %v6596, %v6592
  %v6661 = vpack.c.b16 %v6601, %v6597
  %v6662 = vpack.c.b16 %v6602, %v6598
  %v6663 = vpack.c.b16 %v6603, %v6599
  %v6664 = vpack.c.b16 %v6604, %v6600
  %v6665 = vpack.c.b16 %v6609, %v6605
  %v6666 = vpack.c.b16 %v6610, %v6606
  %v6667 = vpack.c.b16 %v6611, %v6607
  %v6668 = vpack.c.b16 %v6612, %v6608
  %v6669 = vpack.c.b16 %v6617, %v6613
  %v6670 = vpack.c.b16 %v6618, %v6614
  %v6671 = vpack.c.b16 %v6619, %v6615
  %v6672 = vpack.c.b16 %v6620, %v6616
  %v6673 = vpack.c.b16 %v6625, %v6621
  %v6674 = vpack.c.b16 %v6626, %v6622
  %v6675 = vpack.c.b16 %v6627, %v6623
  %v6676 = vpack.c.b16 %v6628, %v6624
  %v6677 = vpack.c.b16 %v6633, %v6629
  %v6678 = vpack.c.b16 %v6634, %v6630
  %v6679 = vpack.c.b16 %v6635, %v6631
  %v6680 = vpack.c.b16 %v6636, %v6632
  %v6681 = vpack.c.b16 %v6641, %v6637
  %v6682 = vpack.c.b16 %v6642, %v6638
  %v6683 = vpack.c.b16 %v6643, %v6639
  %v6684 = vpack.c.b16 %v6644, %v6640
  %v6726 = vsel %vm987, %v6523, 0
  %6728 = vmatprep.subr.bf16.mxu0 %v6674
  %6729 = vmatpush1.bf16.msra.mxu0 %v6673
  %6730 = vmatprep.subr.bf16.mxu0 %v6670
  %6731 = vmatpush1.bf16.msra.mxu0 %v6669
  %6732 = vmatprep.subr.bf16.mxu0 %v6666
  %6733 = vmatpush1.bf16.msra.mxu0 %v6665
  %6734 = vmatprep.subr.bf16.mxu0 %v6662
  %6735 = vmatpush1.bf16.msra.mxu0 %v6661
  %6736 = vmatprep.subr.bf16.mxu0 %v6658
  %6737 = vmatpush1.bf16.msra.mxu0 %v6657
  %6738 = vmatprep.subr.bf16.mxu0 %v6654
  %6739 = vmatpush1.bf16.msra.mxu0 %v6653
  %6740 = vmatprep.subr.bf16.mxu0 %v6650
  %6741 = vmatpush1.bf16.msra.mxu0 %v6649
  %6742 = vmatprep.subr.bf16.mxu0 %v6646
  %6743 = vmatpush1.bf16.msra.mxu0 %v6645
  %6744 = vmatprep.subr.bf16.mxu0 0
  %6745 = vmatpush2.bf16.msra.mxu0 0
  %6746 = vmatprep.subr.bf16.mxu0 0
  %6747 = vmatpush2.bf16.msra.mxu0 0
  %6748 = vmatprep.subr.bf16.mxu0 0
  %6749 = vmatpush2.bf16.msra.mxu0 0
  %6750 = vmatprep.subr.bf16.mxu0 0
  %6751 = vmatpush2.bf16.msra.mxu0 0
  %6752 = vmatprep.subr.bf16.mxu0 0
  %6753 = vmatpush2.bf16.msra.mxu0 0
  %6754 = vmatprep.subr.bf16.mxu0 0
  %6755 = vmatpush2.bf16.msra.mxu0 0
  %6756 = vmatprep.subr.bf16.mxu0 %v6682
  %6757 = vmatpush2.bf16.msra.mxu0 %v6681
  %6758 = vmatprep.subr.bf16.mxu0 %v6678
  %6759 = vmatpush2.bf16.msra.mxu0 %v6677
  %6760 = vmatprep.mubr.bf16.mxu0 %v6726
  %6761 = vmatmul.mubr.bf16.gmra.mxu0 %v6522
  %v6762 = vpop.f32.mrf.mxu0
  %v6763 = vadd.f32 0.0, %v6762
  %v6764 = vpop.f32.mrf.mxu0
  %v6765 = vadd.f32 0.0, %v6764
  %v6766 = vpop.f32.mrf.mxu0
  %v6767 = vpop.f32.mrf.mxu0
  %6768 = vdwg.mxu0
  %6769 = vmatprep.subr.bf16.mxu0 %v6676
  %6770 = vmatpush1.bf16.msra.mxu0 %v6675
  %6771 = vmatprep.subr.bf16.mxu0 %v6672
  %6772 = vmatpush1.bf16.msra.mxu0 %v6671
  %6773 = vmatprep.subr.bf16.mxu0 %v6668
  %6774 = vmatpush1.bf16.msra.mxu0 %v6667
  %6775 = vmatprep.subr.bf16.mxu0 %v6664
  %6776 = vmatpush1.bf16.msra.mxu0 %v6663
  %6777 = vmatprep.subr.bf16.mxu0 %v6660
  %6778 = vmatpush1.bf16.msra.mxu0 %v6659
  %6779 = vmatprep.subr.bf16.mxu0 %v6656
  %6780 = vmatpush1.bf16.msra.mxu0 %v6655
  %6781 = vmatprep.subr.bf16.mxu0 %v6652
  %6782 = vmatpush1.bf16.msra.mxu0 %v6651
  %6783 = vmatprep.subr.bf16.mxu0 %v6648
  %6784 = vmatpush1.bf16.msra.mxu0 %v6647
  %6785 = vmatprep.subr.bf16.mxu0 0
  %6786 = vmatpush2.bf16.msra.mxu0 0
  %6787 = vmatprep.subr.bf16.mxu0 0
  %6788 = vmatpush2.bf16.msra.mxu0 0
  %6789 = vmatprep.subr.bf16.mxu0 0
  %6790 = vmatpush2.bf16.msra.mxu0 0
  %6791 = vmatprep.subr.bf16.mxu0 0
  %6792 = vmatpush2.bf16.msra.mxu0 0
  %6793 = vmatprep.subr.bf16.mxu0 0
  %6794 = vmatpush2.bf16.msra.mxu0 0
  %6795 = vmatprep.subr.bf16.mxu0 0
  %6796 = vmatpush2.bf16.msra.mxu0 0
  %6797 = vmatprep.subr.bf16.mxu0 %v6684
  %6798 = vmatpush2.bf16.msra.mxu0 %v6683
  %6799 = vmatprep.subr.bf16.mxu0 %v6680
  %6800 = vmatpush2.bf16.msra.mxu0 %v6679
  %6801 = vmatprep.mubr.bf16.mxu0 %v6726
  %6802 = vmatmul.mubr.bf16.gmra.mxu0 %v6522
  %v6803 = vpop.f32.mrf.mxu0
  %v6804 = vadd.f32 0.0, %v6803
  %v6805 = vpop.f32.mrf.mxu0
  %v6806 = vadd.f32 0.0, %v6805
  %v6807 = vpop.f32.mrf.mxu0
  %v6808 = vpop.f32.mrf.mxu0
  %6809 = vdwg.mxu0
  %v6810 = vtanh.pop %v6763
  %v6811 = vtanh.pop %v6765
  %v6812 = vtanh.pop %v6804
  %v6813 = vtanh.pop %v6806
  %v6816 = vcombine.low %v6810, %v6811
  %6818 = vst [vmem:[%s11] sm:$0x77] %v6816
  %v6821 = vcombine.low %v6812, %v6813
  %s6823 = scalar_lea.vmem %s11, 8
  %6824 = vst [vmem:[%s6823] sm:$0x77] %v6821
  // Predicated region
  $region46: #{generator_forward.1} parent=0 // pred_check
    _
  $region47: #{generator_forward.1} parent=0 // pred_check_branch
    %6826 = sbr.rel (0) target = $region49
  $region48: #{generator_forward.1} parent=0 // pred_region
    _
  $region49: #{generator_forward.1} parent=0 // pred_fallthru
    _
  // Predicated region
  $region50: #{generator_forward.1} parent=0 // pred_check
    _
  $region51: #{generator_forward.1} parent=0 // pred_check_branch
    %6828 = sbr.rel (0) target = $region53
  $region52: #{generator_forward.1} parent=0 // pred_region
    _
  $region53: #{generator_forward.1} parent=0 // pred_fallthru
    _

</llo_original>
